<compile_context>
chip_gen: v5e
topology: v5e:2x2
jax: 0.10.0
libtpu: 0.0.40
codegen_flags: <defaults>
</compile_context>

<pallas_src>
import functools

import jax
import jax.numpy as jnp
from jax.experimental import pallas as pl
from jax.experimental.pallas import tpu as pltpu

EPS = 1e-5
MATMUL_DTYPE = jnp.bfloat16      # MXU-native operands for the 3x3x3 taps
VMEM_LIMIT = 32 * 1024 * 1024    # explicit scoped-VMEM limit, safe on v5e/v6e/v7x


def _elu(y):
    return jnp.where(y > 0, y, jnp.exp(jnp.minimum(y, 0.0)) - 1.0)


def _round_up(x, m):
    return (x + m - 1) // m * m


# -----------------------------------------------------------------------------
# Pass 1 (used for conv1 and conv5): 3x3x3 conv as 27 shifted accumulating
# matmuls over a prev/cur/next halo window + pad-row masking + per-tile BN
# partial sums.  Row layout: flattened zero-padded volume, 16 channels.
# -----------------------------------------------------------------------------
def _conv3d_stats_kernel(prev_ref, cur_ref, nxt_ref, mask_ref, w_ref,
                         y_ref, stats_ref, *, TR, Hp, Wp):
    window = jnp.concatenate(
        [prev_ref[...], cur_ref[...], nxt_ref[...]], axis=0)      # (3*TR, 16)
    w = w_ref[...]                                                # (27, 16, 16)

    acc = jnp.zeros((TR, 16), jnp.float32)
    k = 0
    for kd in range(3):
        for kh in range(3):
            for kw in range(3):
                off = (kd - 1) * Hp * Wp + (kh - 1) * Wp + (kw - 1)
                tap = window[TR + off: TR + off + TR, :]          # static slice
                acc = acc + jnp.dot(tap, w[k],
                                    preferred_element_type=jnp.float32)
                k += 1

    # Zero the padding rows: keeps the next conv's implicit zero padding exact
    # and restricts the BN statistics to valid voxels.
    y = acc * mask_ref[...]                                       # (TR,1) bcast
    y_ref[...] = y
    s1 = jnp.sum(y, axis=0, keepdims=True)                        # (1, 16)
    s2 = jnp.sum(y * y, axis=0, keepdims=True)                    # (1, 16)
    stats_ref[0] = jnp.concatenate([s1, s2], axis=0)              # (2, 16)


def _conv3d_pass(x_flat, mask_rows, w_taps, *, TR, Hp, Wp):
    Rp_pad, C = x_flat.shape
    nblk = Rp_pad // TR
    kern = functools.partial(_conv3d_stats_kernel, TR=TR, Hp=Hp, Wp=Wp)
    flops = 2 * Rp_pad * 27 * C * 16
    bytes_accessed = (3 * Rp_pad * C * x_flat.dtype.itemsize
                      + Rp_pad * 16 * 4 + Rp_pad * 4 + w_taps.size * 2)
    return pl.pallas_call(
        kern,
        grid=(nblk,),
        in_specs=[
            pl.BlockSpec((TR, C), lambda i: (jnp.maximum(i - 1, 0), 0)),
            pl.BlockSpec((TR, C), lambda i: (i, 0)),
            pl.BlockSpec((TR, C), lambda i: (jnp.minimum(i + 1, nblk - 1), 0)),
            pl.BlockSpec((TR, 1), lambda i: (i, 0)),
            pl.BlockSpec((27, C, 16), lambda i: (0, 0, 0)),
        ],
        out_specs=[
            pl.BlockSpec((TR, 16), lambda i: (i, 0)),
            pl.BlockSpec((1, 2, 16), lambda i: (i, 0, 0)),
        ],
        out_shape=[
            jax.ShapeDtypeStruct((Rp_pad, 16), jnp.float32),
            jax.ShapeDtypeStruct((nblk, 2, 16), jnp.float32),
        ],
        compiler_params=pltpu.CompilerParams(
            dimension_semantics=("parallel",),
            vmem_limit_bytes=VMEM_LIMIT),
        cost_estimate=pl.CostEstimate(flops=int(flops), transcendentals=0,
                                      bytes_accessed=int(bytes_accessed)),
    )(x_flat, x_flat, x_flat, mask_rows, w_taps)


# -----------------------------------------------------------------------------
# Pass 2 (packed, lane-dense): BN affine + ELU + 1x1 conv on (rows/8, 128) slabs.
# -----------------------------------------------------------------------------
def _bn_elu_conv_elu_kernel(y_ref, mask_ref, scale_ref, shift_ref, w_ref, b_ref,
                            out_ref):
    z = _elu(y_ref[...] * scale_ref[...] + shift_ref[...])        # bn1 + relu1
    h = _elu(jnp.dot(z, w_ref[...],                               # conv2.conv3
                     preferred_element_type=jnp.float32) + b_ref[...])
    out_ref[...] = (h * mask_ref[...]).astype(out_ref.dtype)      # re-zero pads


def _bn_elu_conv_kernel(y_ref, mask_ref, scale_ref, shift_ref, w_ref, b_ref,
                        out_ref):
    del mask_ref                              # pad rows are discarded on host
    z = _elu(y_ref[...] * scale_ref[...] + shift_ref[...])        # bn5 + relu5
    h = jnp.dot(z, w_ref[...], preferred_element_type=jnp.float32) + b_ref[...]
    out_ref[...] = h.astype(out_ref.dtype)                        # conv6


def _packed_pass(kern, y_packed, mask_packed, scale_t, shift_t, w_big, b_t,
                 out_dtype, *, TRp, transcendentals):
    RpP, _ = y_packed.shape
    nblk = RpP // TRp
    n_out = w_big.shape[1]
    flops = 2 * RpP * 128 * n_out
    bytes_accessed = (RpP * 128 * (y_packed.dtype.itemsize + 4)
                      + RpP * n_out * jnp.dtype(out_dtype).itemsize
                      + w_big.size * 4)
    return pl.pallas_call(
        kern,
        grid=(nblk,),
        in_specs=[
            pl.BlockSpec((TRp, 128), lambda i: (i, 0)),
            pl.BlockSpec((TRp, 128), lambda i: (i, 0)),
            pl.BlockSpec((1, 128), lambda i: (0, 0)),
            pl.BlockSpec((1, 128), lambda i: (0, 0)),
            pl.BlockSpec((128, n_out), lambda i: (0, 0)),
            pl.BlockSpec((1, n_out), lambda i: (0, 0)),
        ],
        out_specs=pl.BlockSpec((TRp, n_out), lambda i: (i, 0)),
        out_shape=jax.ShapeDtypeStruct((RpP, n_out), out_dtype),
        compiler_params=pltpu.CompilerParams(
            dimension_semantics=("parallel",),
            vmem_limit_bytes=VMEM_LIMIT),
        cost_estimate=pl.CostEstimate(flops=int(flops),
                                      transcendentals=int(transcendentals),
                                      bytes_accessed=int(bytes_accessed)),
    )(y_packed, mask_packed, scale_t, shift_t, w_big, b_t)


# -----------------------------------------------------------------------------
# host-side parameter folding / glue
# -----------------------------------------------------------------------------
def _w3x3_to_taps(w):
    # torch conv weight (O, I, 3, 3, 3) -> (27, I, O), tap order (kd, kh, kw)
    return jnp.transpose(w, (2, 3, 4, 1, 0)).reshape(27, w.shape[1], w.shape[0])


def _w1x1_to_mat(w):
    # (O, I, 1, 1, 1) -> (I, O)
    return jnp.transpose(w.reshape(w.shape[0], w.shape[1]), (1, 0))


def _bn_fold(stats, n_valid, gamma, beta):
    s = jnp.sum(stats, axis=0)                      # (2, 16) global sums
    mean = s[0] / n_valid
    var = jnp.maximum(s[1] / n_valid - mean * mean, 0.0)   # biased variance
    scale = gamma * jax.lax.rsqrt(var + EPS)
    shift = beta - mean * scale
    return scale, shift


def output_transition_edge_forward(x_ncdhw, p, *, tile_rows=512):
    """x_ncdhw: (N, 16, D, H, W) float32 -> (N, outChans, D, H, W) float32."""
    N, C, D, H, W = x_ncdhw.shape
    assert C == 16, "conv1 expects 16 input channels"
    Hp, Wp, Dp = H + 2, W + 2, D + 2
    R = N * D * H * W                       # valid voxels (BN divisor)
    Rp = N * Dp * Hp * Wp                   # rows of the padded layout
    S = Hp * Wp + Wp + 1                    # max |row shift| of a 3x3x3 tap
    TR = max(_round_up(tile_rows, 8), _round_up(S, 8))
    assert TR >= S
    Rp_pad = _round_up(Rp, TR)
    TRp = TR // 8

    # ---------- layout prep (single zero-pad; reshapes are free) ----------
    x = jnp.transpose(x_ncdhw, (0, 2, 3, 4, 1))                  # NDHWC
    xf = jnp.pad(x, ((0, 0), (1, 1), (1, 1), (1, 1), (0, 0))).reshape(Rp, C)
    xf = jnp.pad(xf, ((0, Rp_pad - Rp), (0, 0))).astype(MATMUL_DTYPE)

    # validity mask of the padded row layout (1.0 on real voxels, 0.0 on pads)
    rr = jnp.arange(Rp_pad, dtype=jnp.int32)
    wi = rr % Wp
    hi = (rr // Wp) % Hp
    di = (rr // (Wp * Hp)) % Dp
    valid = ((wi >= 1) & (wi <= W) & (hi >= 1) & (hi <= H) &
             (di >= 1) & (di <= D) & (rr < Rp)).astype(jnp.float32)
    mask_rows = valid[:, None]                                   # (Rp_pad, 1)
    mask_packed = jnp.repeat(valid, 16).reshape(Rp_pad // 8, 128)

    # ---------- parameter folding ----------
    w1_taps = _w3x3_to_taps(p['conv1_w']).astype(MATMUL_DTYPE)   # (27,16,16)
    w5_taps = _w3x3_to_taps(p['conv5_w']).astype(MATMUL_DTYPE)
    # conv1_b / conv5_b dropped: constants before batch-stat BN cancel exactly.
    w2c = _w1x1_to_mat(p['conv2_w'])
    w3c = _w1x1_to_mat(p['conv3_w'])
    w23 = w2c @ w3c                                              # conv2 . conv3
    b23 = p['conv2_b'] @ w3c + p['conv3_b']
    w6c = _w1x1_to_mat(p['conv6_w'])
    out_chans = w6c.shape[1]

    eye8 = jnp.eye(8, dtype=jnp.float32)
    w23_big = jnp.kron(eye8, w23)                                # (128, 128)
    b23_t = jnp.tile(b23, 8)[None, :]                            # (1, 128)
    w6_big = jnp.kron(eye8, w6c)                                 # (128, 8*outC)
    b6_t = jnp.tile(p['conv6_b'], 8)[None, :]                    # (1, 8*outC)

    # ---------- stage A: conv1 -> bn1 -> elu -> (conv2.conv3) -> elu ----------
    y1, st1 = _conv3d_pass(xf, mask_rows, w1_taps, TR=TR, Hp=Hp, Wp=Wp)
    sc1, sh1 = _bn_fold(st1, R, p['bn1_w'], p['bn1_b'])
    out3p = _packed_pass(
        _bn_elu_conv_elu_kernel,
        y1.reshape(Rp_pad // 8, 128), mask_packed,
        jnp.tile(sc1, 8)[None, :], jnp.tile(sh1, 8)[None, :],
        w23_big, b23_t, MATMUL_DTYPE,
        TRp=TRp, transcendentals=2 * Rp_pad * 16)
    out3 = out3p.reshape(Rp_pad, 16)            # bf16, exact zeros on pad rows

    # ---------- stage B: conv5 -> bn5 -> elu -> conv6 ----------
    y5, st5 = _conv3d_pass(out3, mask_rows, w5_taps, TR=TR, Hp=Hp, Wp=Wp)
    sc5, sh5 = _bn_fold(st5, R, p['bn5_w'], p['bn5_b'])
    out6p = _packed_pass(
        _bn_elu_conv_kernel,
        y5.reshape(Rp_pad // 8, 128), mask_packed,
        jnp.tile(sc5, 8)[None, :], jnp.tile(sh5, 8)[None, :],
        w6_big, b6_t, jnp.float32,
        TRp=TRp, transcendentals=Rp_pad * 16)

    out6 = out6p.reshape(Rp_pad, out_chans)[:Rp]
    out6 = out6.reshape(N, Dp, Hp, Wp, out_chans)[:, 1:D + 1, 1:H + 1, 1:W + 1, :]
    return jnp.transpose(out6, (0, 4, 1, 2, 3))


# -----------------------------------------------------------------------------
# pure-JAX reference (f32, HIGHEST precision) matching the PyTorch module
# -----------------------------------------------------------------------------
def _ref_forward(x, p):
    hi = jax.lax.Precision.HIGHEST

    def conv(x, w, b, pad):
        y = jax.lax.conv_general_dilated(
            x, w, (1, 1, 1), [(pad, pad)] * 3,
            dimension_numbers=('NCDHW', 'OIDHW', 'NCDHW'), precision=hi)
        return y + b[None, :, None, None, None]

    def bn(x, g, be):
        mu = jnp.mean(x, axis=(0, 2, 3, 4), keepdims=True)
        var = jnp.mean((x - mu) ** 2, axis=(0, 2, 3, 4), keepdims=True)
        return ((x - mu) * jax.lax.rsqrt(var + EPS)
                * g[None, :, None, None, None] + be[None, :, None, None, None])

    def elu(x):
        return jnp.where(x > 0, x, jnp.exp(jnp.minimum(x, 0.0)) - 1.0)

    y = conv(x, p['conv1_w'], p['conv1_b'], 1)
    y = elu(bn(y, p['bn1_w'], p['bn1_b']))
    y = conv(y, p['conv2_w'], p['conv2_b'], 0)
    y = elu(conv(y, p['conv3_w'], p['conv3_b'], 0))
    y = conv(y, p['conv5_w'], p['conv5_b'], 1)
    y = elu(bn(y, p['bn5_w'], p['bn5_b']))
    return conv(y, p['conv6_w'], p['conv6_b'], 0)


# -----------------------------------------------------------------------------
if __name__ == "__main__":
    key = jax.random.PRNGKey(0)
    N, IN_CHANS, D, H, W = 2, 16, 8, 8, 8
    OUT_CHANS = 4

    ks = jax.random.split(key, 16)
    f32 = jnp.float32
    params = {
        'conv1_w': 0.1 * jax.random.normal(ks[0], (16, 16, 3, 3, 3), f32),
        'conv1_b': 0.1 * jax.random.normal(ks[1], (16,), f32),
        'bn1_w':   1.0 + 0.1 * jax.random.normal(ks[2], (16,), f32),
        'bn1_b':   0.1 * jax.random.normal(ks[3], (16,), f32),
        'conv2_w': 0.1 * jax.random.normal(ks[4], (16, 16, 1, 1, 1), f32),
        'conv2_b': 0.1 * jax.random.normal(ks[5], (16,), f32),
        'conv3_w': 0.1 * jax.random.normal(ks[6], (16, IN_CHANS, 1, 1, 1), f32),
        'conv3_b': 0.1 * jax.random.normal(ks[7], (16,), f32),
        'conv5_w': 0.1 * jax.random.normal(ks[8], (16, 16, 3, 3, 3), f32),
        'conv5_b': 0.1 * jax.random.normal(ks[9], (16,), f32),
        'bn5_w':   1.0 + 0.1 * jax.random.normal(ks[10], (16,), f32),
        'bn5_b':   0.1 * jax.random.normal(ks[11], (16,), f32),
        'conv6_w': 0.1 * jax.random.normal(ks[12], (OUT_CHANS, 16, 1, 1, 1), f32),
        'conv6_b': 0.1 * jax.random.normal(ks[13], (OUT_CHANS,), f32),
    }

    x = jax.random.normal(ks[14], (N, IN_CHANS, D, H, W), f32)

    out = jax.jit(output_transition_edge_forward)(x, params)
    out = jax.block_until_ready(out)

    ref = jax.block_until_ready(_ref_forward(x, params))
    assert out.shape == (N, OUT_CHANS, D, H, W)
    err = float(jnp.max(jnp.abs(out - ref)))
    # bf16 MXU operands for the 3x3x3 taps (per the perf review) -> slightly
    # looser tolerance than the pure-f32 path (which meets 1e-2).
    assert err < 2e-2, f"max abs error {err}"

    print("KERNEL_OK")
</pallas_src>

<mosaic_0001>
module attributes {stable_mosaic.version = 11 : i64} {
  func.func @_conv3d_stats_kernel(%arg0: i32, %arg1: memref<512x16xbf16, #tpu.memory_space<vmem>>, %arg2: memref<512x16xbf16, #tpu.memory_space<vmem>>, %arg3: memref<512x16xbf16, #tpu.memory_space<vmem>>, %arg4: memref<512x1xf32, #tpu.memory_space<vmem>>, %arg5: memref<27x16x16xbf16, #tpu.memory_space<vmem>>, %arg6: memref<512x16xf32, #tpu.memory_space<vmem>>, %arg7: memref<1x2x16xf32, #tpu.memory_space<vmem>>) attributes {dimension_semantics = [#tpu.dimension_semantics<parallel>], iteration_bounds = array<i64: 4>, scalar_prefetch = 0 : i64, scratch_operands = 0 : i64, tpu.core_type = #tpu.core_type<tc>, window_params = [{transform_indices = @transform_0, window_bounds = array<i64: 512, 16>}, {transform_indices = @transform_1, window_bounds = array<i64: 512, 16>}, {transform_indices = @transform_2, window_bounds = array<i64: 512, 16>}, {transform_indices = @transform_3, window_bounds = array<i64: 512, 1>}, {pipeline_mode = #tpu.pipeline_mode<synchronous>, transform_indices = @transform_4, window_bounds = array<i64: 27, 16, 16>}, {transform_indices = @transform_5, window_bounds = array<i64: 512, 16>}, {transform_indices = @transform_6, window_bounds = array<i64: 1, 2, 16>}]} {
    %c0 = arith.constant 0 : index
    %c0_0 = arith.constant 0 : index
    %0 = vector.load %arg1[%c0, %c0_0] : memref<512x16xbf16, #tpu.memory_space<vmem>>, vector<512x16xbf16>
    %c0_1 = arith.constant 0 : index
    %c0_2 = arith.constant 0 : index
    %1 = vector.load %arg2[%c0_1, %c0_2] : memref<512x16xbf16, #tpu.memory_space<vmem>>, vector<512x16xbf16>
    %c0_3 = arith.constant 0 : index
    %c0_4 = arith.constant 0 : index
    %2 = vector.load %arg3[%c0_3, %c0_4] : memref<512x16xbf16, #tpu.memory_space<vmem>>, vector<512x16xbf16>
    %3 = tpu.concatenate %0, %1, %2 in 0 : vector<512x16xbf16>, vector<512x16xbf16>, vector<512x16xbf16> -> vector<1536x16xbf16>
    %c0_5 = arith.constant 0 : index
    %c0_6 = arith.constant 0 : index
    %c0_7 = arith.constant 0 : index
    %4 = vector.load %arg5[%c0_5, %c0_6, %c0_7] : memref<27x16x16xbf16, #tpu.memory_space<vmem>>, vector<27x16x16xbf16>
    %cst = arith.constant 0.000000e+00 : f32
    %5 = vector.broadcast %cst : f32 to vector<512x16xf32>
    %6 = vector.extract_strided_slice %3 {offsets = [401, 0], sizes = [512, 16], strides = [1, 1]} : vector<1536x16xbf16> to vector<512x16xbf16>
    %7 = vector.extract_strided_slice %4 {offsets = [0, 0, 0], sizes = [1, 16, 16], strides = [1, 1, 1]} : vector<27x16x16xbf16> to vector<1x16x16xbf16>
    %8 = vector.shape_cast %7 : vector<1x16x16xbf16> to vector<16x16xbf16>
    %cst_8 = arith.constant dense<0.000000e+00> : vector<512x16xf32>
    %9 = tpu.matmul %6, %8, %cst_8 {dimension_numbers = #tpu.dot_dimension_numbers<[1], [0], [0], [1], [0, 0, 1, 1], [], []>} : vector<512x16xbf16>, vector<16x16xbf16>, vector<512x16xf32> -> vector<512x16xf32>
    %10 = arith.addf %5, %9 : vector<512x16xf32>
    %11 = vector.extract_strided_slice %3 {offsets = [402, 0], sizes = [512, 16], strides = [1, 1]} : vector<1536x16xbf16> to vector<512x16xbf16>
    %12 = vector.extract_strided_slice %4 {offsets = [1, 0, 0], sizes = [1, 16, 16], strides = [1, 1, 1]} : vector<27x16x16xbf16> to vector<1x16x16xbf16>
    %13 = vector.shape_cast %12 : vector<1x16x16xbf16> to vector<16x16xbf16>
    %cst_9 = arith.constant dense<0.000000e+00> : vector<512x16xf32>
    %14 = tpu.matmul %11, %13, %cst_9 {dimension_numbers = #tpu.dot_dimension_numbers<[1], [0], [0], [1], [0, 0, 1, 1], [], []>} : vector<512x16xbf16>, vector<16x16xbf16>, vector<512x16xf32> -> vector<512x16xf32>
    %15 = arith.addf %10, %14 : vector<512x16xf32>
    %16 = vector.extract_strided_slice %3 {offsets = [403, 0], sizes = [512, 16], strides = [1, 1]} : vector<1536x16xbf16> to vector<512x16xbf16>
    %17 = vector.extract_strided_slice %4 {offsets = [2, 0, 0], sizes = [1, 16, 16], strides = [1, 1, 1]} : vector<27x16x16xbf16> to vector<1x16x16xbf16>
    %18 = vector.shape_cast %17 : vector<1x16x16xbf16> to vector<16x16xbf16>
    %cst_10 = arith.constant dense<0.000000e+00> : vector<512x16xf32>
    %19 = tpu.matmul %16, %18, %cst_10 {dimension_numbers = #tpu.dot_dimension_numbers<[1], [0], [0], [1], [0, 0, 1, 1], [], []>} : vector<512x16xbf16>, vector<16x16xbf16>, vector<512x16xf32> -> vector<512x16xf32>
    %20 = arith.addf %15, %19 : vector<512x16xf32>
    %21 = vector.extract_strided_slice %3 {offsets = [411, 0], sizes = [512, 16], strides = [1, 1]} : vector<1536x16xbf16> to vector<512x16xbf16>
    %22 = vector.extract_strided_slice %4 {offsets = [3, 0, 0], sizes = [1, 16, 16], strides = [1, 1, 1]} : vector<27x16x16xbf16> to vector<1x16x16xbf16>
    %23 = vector.shape_cast %22 : vector<1x16x16xbf16> to vector<16x16xbf16>
    %cst_11 = arith.constant dense<0.000000e+00> : vector<512x16xf32>
    %24 = tpu.matmul %21, %23, %cst_11 {dimension_numbers = #tpu.dot_dimension_numbers<[1], [0], [0], [1], [0, 0, 1, 1], [], []>} : vector<512x16xbf16>, vector<16x16xbf16>, vector<512x16xf32> -> vector<512x16xf32>
    %25 = arith.addf %20, %24 : vector<512x16xf32>
    %26 = vector.extract_strided_slice %3 {offsets = [412, 0], sizes = [512, 16], strides = [1, 1]} : vector<1536x16xbf16> to vector<512x16xbf16>
    %27 = vector.extract_strided_slice %4 {offsets = [4, 0, 0], sizes = [1, 16, 16], strides = [1, 1, 1]} : vector<27x16x16xbf16> to vector<1x16x16xbf16>
    %28 = vector.shape_cast %27 : vector<1x16x16xbf16> to vector<16x16xbf16>
    %cst_12 = arith.constant dense<0.000000e+00> : vector<512x16xf32>
    %29 = tpu.matmul %26, %28, %cst_12 {dimension_numbers = #tpu.dot_dimension_numbers<[1], [0], [0], [1], [0, 0, 1, 1], [], []>} : vector<512x16xbf16>, vector<16x16xbf16>, vector<512x16xf32> -> vector<512x16xf32>
    %30 = arith.addf %25, %29 : vector<512x16xf32>
    %31 = vector.extract_strided_slice %3 {offsets = [413, 0], sizes = [512, 16], strides = [1, 1]} : vector<1536x16xbf16> to vector<512x16xbf16>
    %32 = vector.extract_strided_slice %4 {offsets = [5, 0, 0], sizes = [1, 16, 16], strides = [1, 1, 1]} : vector<27x16x16xbf16> to vector<1x16x16xbf16>
    %33 = vector.shape_cast %32 : vector<1x16x16xbf16> to vector<16x16xbf16>
    %cst_13 = arith.constant dense<0.000000e+00> : vector<512x16xf32>
    %34 = tpu.matmul %31, %33, %cst_13 {dimension_numbers = #tpu.dot_dimension_numbers<[1], [0], [0], [1], [0, 0, 1, 1], [], []>} : vector<512x16xbf16>, vector<16x16xbf16>, vector<512x16xf32> -> vector<512x16xf32>
    %35 = arith.addf %30, %34 : vector<512x16xf32>
    %36 = vector.extract_strided_slice %3 {offsets = [421, 0], sizes = [512, 16], strides = [1, 1]} : vector<1536x16xbf16> to vector<512x16xbf16>
    %37 = vector.extract_strided_slice %4 {offsets = [6, 0, 0], sizes = [1, 16, 16], strides = [1, 1, 1]} : vector<27x16x16xbf16> to vector<1x16x16xbf16>
    %38 = vector.shape_cast %37 : vector<1x16x16xbf16> to vector<16x16xbf16>
    %cst_14 = arith.constant dense<0.000000e+00> : vector<512x16xf32>
    %39 = tpu.matmul %36, %38, %cst_14 {dimension_numbers = #tpu.dot_dimension_numbers<[1], [0], [0], [1], [0, 0, 1, 1], [], []>} : vector<512x16xbf16>, vector<16x16xbf16>, vector<512x16xf32> -> vector<512x16xf32>
    %40 = arith.addf %35, %39 : vector<512x16xf32>
    %41 = vector.extract_strided_slice %3 {offsets = [422, 0], sizes = [512, 16], strides = [1, 1]} : vector<1536x16xbf16> to vector<512x16xbf16>
    %42 = vector.extract_strided_slice %4 {offsets = [7, 0, 0], sizes = [1, 16, 16], strides = [1, 1, 1]} : vector<27x16x16xbf16> to vector<1x16x16xbf16>
    %43 = vector.shape_cast %42 : vector<1x16x16xbf16> to vector<16x16xbf16>
    %cst_15 = arith.constant dense<0.000000e+00> : vector<512x16xf32>
    %44 = tpu.matmul %41, %43, %cst_15 {dimension_numbers = #tpu.dot_dimension_numbers<[1], [0], [0], [1], [0, 0, 1, 1], [], []>} : vector<512x16xbf16>, vector<16x16xbf16>, vector<512x16xf32> -> vector<512x16xf32>
    %45 = arith.addf %40, %44 : vector<512x16xf32>
    %46 = vector.extract_strided_slice %3 {offsets = [423, 0], sizes = [512, 16], strides = [1, 1]} : vector<1536x16xbf16> to vector<512x16xbf16>
    %47 = vector.extract_strided_slice %4 {offsets = [8, 0, 0], sizes = [1, 16, 16], strides = [1, 1, 1]} : vector<27x16x16xbf16> to vector<1x16x16xbf16>
    %48 = vector.shape_cast %47 : vector<1x16x16xbf16> to vector<16x16xbf16>
    %cst_16 = arith.constant dense<0.000000e+00> : vector<512x16xf32>
    %49 = tpu.matmul %46, %48, %cst_16 {dimension_numbers = #tpu.dot_dimension_numbers<[1], [0], [0], [1], [0, 0, 1, 1], [], []>} : vector<512x16xbf16>, vector<16x16xbf16>, vector<512x16xf32> -> vector<512x16xf32>
    %50 = arith.addf %45, %49 : vector<512x16xf32>
    %51 = vector.extract_strided_slice %3 {offsets = [501, 0], sizes = [512, 16], strides = [1, 1]} : vector<1536x16xbf16> to vector<512x16xbf16>
    %52 = vector.extract_strided_slice %4 {offsets = [9, 0, 0], sizes = [1, 16, 16], strides = [1, 1, 1]} : vector<27x16x16xbf16> to vector<1x16x16xbf16>
    %53 = vector.shape_cast %52 : vector<1x16x16xbf16> to vector<16x16xbf16>
    %cst_17 = arith.constant dense<0.000000e+00> : vector<512x16xf32>
    %54 = tpu.matmul %51, %53, %cst_17 {dimension_numbers = #tpu.dot_dimension_numbers<[1], [0], [0], [1], [0, 0, 1, 1], [], []>} : vector<512x16xbf16>, vector<16x16xbf16>, vector<512x16xf32> -> vector<512x16xf32>
    %55 = arith.addf %50, %54 : vector<512x16xf32>
    %56 = vector.extract_strided_slice %3 {offsets = [502, 0], sizes = [512, 16], strides = [1, 1]} : vector<1536x16xbf16> to vector<512x16xbf16>
    %57 = vector.extract_strided_slice %4 {offsets = [10, 0, 0], sizes = [1, 16, 16], strides = [1, 1, 1]} : vector<27x16x16xbf16> to vector<1x16x16xbf16>
    %58 = vector.shape_cast %57 : vector<1x16x16xbf16> to vector<16x16xbf16>
    %cst_18 = arith.constant dense<0.000000e+00> : vector<512x16xf32>
    %59 = tpu.matmul %56, %58, %cst_18 {dimension_numbers = #tpu.dot_dimension_numbers<[1], [0], [0], [1], [0, 0, 1, 1], [], []>} : vector<512x16xbf16>, vector<16x16xbf16>, vector<512x16xf32> -> vector<512x16xf32>
    %60 = arith.addf %55, %59 : vector<512x16xf32>
    %61 = vector.extract_strided_slice %3 {offsets = [503, 0], sizes = [512, 16], strides = [1, 1]} : vector<1536x16xbf16> to vector<512x16xbf16>
    %62 = vector.extract_strided_slice %4 {offsets = [11, 0, 0], sizes = [1, 16, 16], strides = [1, 1, 1]} : vector<27x16x16xbf16> to vector<1x16x16xbf16>
    %63 = vector.shape_cast %62 : vector<1x16x16xbf16> to vector<16x16xbf16>
    %cst_19 = arith.constant dense<0.000000e+00> : vector<512x16xf32>
    %64 = tpu.matmul %61, %63, %cst_19 {dimension_numbers = #tpu.dot_dimension_numbers<[1], [0], [0], [1], [0, 0, 1, 1], [], []>} : vector<512x16xbf16>, vector<16x16xbf16>, vector<512x16xf32> -> vector<512x16xf32>
    %65 = arith.addf %60, %64 : vector<512x16xf32>
    %66 = vector.extract_strided_slice %3 {offsets = [511, 0], sizes = [512, 16], strides = [1, 1]} : vector<1536x16xbf16> to vector<512x16xbf16>
    %67 = vector.extract_strided_slice %4 {offsets = [12, 0, 0], sizes = [1, 16, 16], strides = [1, 1, 1]} : vector<27x16x16xbf16> to vector<1x16x16xbf16>
    %68 = vector.shape_cast %67 : vector<1x16x16xbf16> to vector<16x16xbf16>
    %cst_20 = arith.constant dense<0.000000e+00> : vector<512x16xf32>
    %69 = tpu.matmul %66, %68, %cst_20 {dimension_numbers = #tpu.dot_dimension_numbers<[1], [0], [0], [1], [0, 0, 1, 1], [], []>} : vector<512x16xbf16>, vector<16x16xbf16>, vector<512x16xf32> -> vector<512x16xf32>
    %70 = arith.addf %65, %69 : vector<512x16xf32>
    %71 = vector.extract_strided_slice %3 {offsets = [512, 0], sizes = [512, 16], strides = [1, 1]} : vector<1536x16xbf16> to vector<512x16xbf16>
    %72 = vector.extract_strided_slice %4 {offsets = [13, 0, 0], sizes = [1, 16, 16], strides = [1, 1, 1]} : vector<27x16x16xbf16> to vector<1x16x16xbf16>
    %73 = vector.shape_cast %72 : vector<1x16x16xbf16> to vector<16x16xbf16>
    %cst_21 = arith.constant dense<0.000000e+00> : vector<512x16xf32>
    %74 = tpu.matmul %71, %73, %cst_21 {dimension_numbers = #tpu.dot_dimension_numbers<[1], [0], [0], [1], [0, 0, 1, 1], [], []>} : vector<512x16xbf16>, vector<16x16xbf16>, vector<512x16xf32> -> vector<512x16xf32>
    %75 = arith.addf %70, %74 : vector<512x16xf32>
    %76 = vector.extract_strided_slice %3 {offsets = [513, 0], sizes = [512, 16], strides = [1, 1]} : vector<1536x16xbf16> to vector<512x16xbf16>
    %77 = vector.extract_strided_slice %4 {offsets = [14, 0, 0], sizes = [1, 16, 16], strides = [1, 1, 1]} : vector<27x16x16xbf16> to vector<1x16x16xbf16>
    %78 = vector.shape_cast %77 : vector<1x16x16xbf16> to vector<16x16xbf16>
    %cst_22 = arith.constant dense<0.000000e+00> : vector<512x16xf32>
    %79 = tpu.matmul %76, %78, %cst_22 {dimension_numbers = #tpu.dot_dimension_numbers<[1], [0], [0], [1], [0, 0, 1, 1], [], []>} : vector<512x16xbf16>, vector<16x16xbf16>, vector<512x16xf32> -> vector<512x16xf32>
    %80 = arith.addf %75, %79 : vector<512x16xf32>
    %81 = vector.extract_strided_slice %3 {offsets = [521, 0], sizes = [512, 16], strides = [1, 1]} : vector<1536x16xbf16> to vector<512x16xbf16>
    %82 = vector.extract_strided_slice %4 {offsets = [15, 0, 0], sizes = [1, 16, 16], strides = [1, 1, 1]} : vector<27x16x16xbf16> to vector<1x16x16xbf16>
    %83 = vector.shape_cast %82 : vector<1x16x16xbf16> to vector<16x16xbf16>
    %cst_23 = arith.constant dense<0.000000e+00> : vector<512x16xf32>
    %84 = tpu.matmul %81, %83, %cst_23 {dimension_numbers = #tpu.dot_dimension_numbers<[1], [0], [0], [1], [0, 0, 1, 1], [], []>} : vector<512x16xbf16>, vector<16x16xbf16>, vector<512x16xf32> -> vector<512x16xf32>
    %85 = arith.addf %80, %84 : vector<512x16xf32>
    %86 = vector.extract_strided_slice %3 {offsets = [522, 0], sizes = [512, 16], strides = [1, 1]} : vector<1536x16xbf16> to vector<512x16xbf16>
    %87 = vector.extract_strided_slice %4 {offsets = [16, 0, 0], sizes = [1, 16, 16], strides = [1, 1, 1]} : vector<27x16x16xbf16> to vector<1x16x16xbf16>
    %88 = vector.shape_cast %87 : vector<1x16x16xbf16> to vector<16x16xbf16>
    %cst_24 = arith.constant dense<0.000000e+00> : vector<512x16xf32>
    %89 = tpu.matmul %86, %88, %cst_24 {dimension_numbers = #tpu.dot_dimension_numbers<[1], [0], [0], [1], [0, 0, 1, 1], [], []>} : vector<512x16xbf16>, vector<16x16xbf16>, vector<512x16xf32> -> vector<512x16xf32>
    %90 = arith.addf %85, %89 : vector<512x16xf32>
    %91 = vector.extract_strided_slice %3 {offsets = [523, 0], sizes = [512, 16], strides = [1, 1]} : vector<1536x16xbf16> to vector<512x16xbf16>
    %92 = vector.extract_strided_slice %4 {offsets = [17, 0, 0], sizes = [1, 16, 16], strides = [1, 1, 1]} : vector<27x16x16xbf16> to vector<1x16x16xbf16>
    %93 = vector.shape_cast %92 : vector<1x16x16xbf16> to vector<16x16xbf16>
    %cst_25 = arith.constant dense<0.000000e+00> : vector<512x16xf32>
    %94 = tpu.matmul %91, %93, %cst_25 {dimension_numbers = #tpu.dot_dimension_numbers<[1], [0], [0], [1], [0, 0, 1, 1], [], []>} : vector<512x16xbf16>, vector<16x16xbf16>, vector<512x16xf32> -> vector<512x16xf32>
    %95 = arith.addf %90, %94 : vector<512x16xf32>
    %96 = vector.extract_strided_slice %3 {offsets = [601, 0], sizes = [512, 16], strides = [1, 1]} : vector<1536x16xbf16> to vector<512x16xbf16>
    %97 = vector.extract_strided_slice %4 {offsets = [18, 0, 0], sizes = [1, 16, 16], strides = [1, 1, 1]} : vector<27x16x16xbf16> to vector<1x16x16xbf16>
    %98 = vector.shape_cast %97 : vector<1x16x16xbf16> to vector<16x16xbf16>
    %cst_26 = arith.constant dense<0.000000e+00> : vector<512x16xf32>
    %99 = tpu.matmul %96, %98, %cst_26 {dimension_numbers = #tpu.dot_dimension_numbers<[1], [0], [0], [1], [0, 0, 1, 1], [], []>} : vector<512x16xbf16>, vector<16x16xbf16>, vector<512x16xf32> -> vector<512x16xf32>
    %100 = arith.addf %95, %99 : vector<512x16xf32>
    %101 = vector.extract_strided_slice %3 {offsets = [602, 0], sizes = [512, 16], strides = [1, 1]} : vector<1536x16xbf16> to vector<512x16xbf16>
    %102 = vector.extract_strided_slice %4 {offsets = [19, 0, 0], sizes = [1, 16, 16], strides = [1, 1, 1]} : vector<27x16x16xbf16> to vector<1x16x16xbf16>
    %103 = vector.shape_cast %102 : vector<1x16x16xbf16> to vector<16x16xbf16>
    %cst_27 = arith.constant dense<0.000000e+00> : vector<512x16xf32>
    %104 = tpu.matmul %101, %103, %cst_27 {dimension_numbers = #tpu.dot_dimension_numbers<[1], [0], [0], [1], [0, 0, 1, 1], [], []>} : vector<512x16xbf16>, vector<16x16xbf16>, vector<512x16xf32> -> vector<512x16xf32>
    %105 = arith.addf %100, %104 : vector<512x16xf32>
    %106 = vector.extract_strided_slice %3 {offsets = [603, 0], sizes = [512, 16], strides = [1, 1]} : vector<1536x16xbf16> to vector<512x16xbf16>
    %107 = vector.extract_strided_slice %4 {offsets = [20, 0, 0], sizes = [1, 16, 16], strides = [1, 1, 1]} : vector<27x16x16xbf16> to vector<1x16x16xbf16>
    %108 = vector.shape_cast %107 : vector<1x16x16xbf16> to vector<16x16xbf16>
    %cst_28 = arith.constant dense<0.000000e+00> : vector<512x16xf32>
    %109 = tpu.matmul %106, %108, %cst_28 {dimension_numbers = #tpu.dot_dimension_numbers<[1], [0], [0], [1], [0, 0, 1, 1], [], []>} : vector<512x16xbf16>, vector<16x16xbf16>, vector<512x16xf32> -> vector<512x16xf32>
    %110 = arith.addf %105, %109 : vector<512x16xf32>
    %111 = vector.extract_strided_slice %3 {offsets = [611, 0], sizes = [512, 16], strides = [1, 1]} : vector<1536x16xbf16> to vector<512x16xbf16>
    %112 = vector.extract_strided_slice %4 {offsets = [21, 0, 0], sizes = [1, 16, 16], strides = [1, 1, 1]} : vector<27x16x16xbf16> to vector<1x16x16xbf16>
    %113 = vector.shape_cast %112 : vector<1x16x16xbf16> to vector<16x16xbf16>
    %cst_29 = arith.constant dense<0.000000e+00> : vector<512x16xf32>
    %114 = tpu.matmul %111, %113, %cst_29 {dimension_numbers = #tpu.dot_dimension_numbers<[1], [0], [0], [1], [0, 0, 1, 1], [], []>} : vector<512x16xbf16>, vector<16x16xbf16>, vector<512x16xf32> -> vector<512x16xf32>
    %115 = arith.addf %110, %114 : vector<512x16xf32>
    %116 = vector.extract_strided_slice %3 {offsets = [612, 0], sizes = [512, 16], strides = [1, 1]} : vector<1536x16xbf16> to vector<512x16xbf16>
    %117 = vector.extract_strided_slice %4 {offsets = [22, 0, 0], sizes = [1, 16, 16], strides = [1, 1, 1]} : vector<27x16x16xbf16> to vector<1x16x16xbf16>
    %118 = vector.shape_cast %117 : vector<1x16x16xbf16> to vector<16x16xbf16>
    %cst_30 = arith.constant dense<0.000000e+00> : vector<512x16xf32>
    %119 = tpu.matmul %116, %118, %cst_30 {dimension_numbers = #tpu.dot_dimension_numbers<[1], [0], [0], [1], [0, 0, 1, 1], [], []>} : vector<512x16xbf16>, vector<16x16xbf16>, vector<512x16xf32> -> vector<512x16xf32>
    %120 = arith.addf %115, %119 : vector<512x16xf32>
    %121 = vector.extract_strided_slice %3 {offsets = [613, 0], sizes = [512, 16], strides = [1, 1]} : vector<1536x16xbf16> to vector<512x16xbf16>
    %122 = vector.extract_strided_slice %4 {offsets = [23, 0, 0], sizes = [1, 16, 16], strides = [1, 1, 1]} : vector<27x16x16xbf16> to vector<1x16x16xbf16>
    %123 = vector.shape_cast %122 : vector<1x16x16xbf16> to vector<16x16xbf16>
    %cst_31 = arith.constant dense<0.000000e+00> : vector<512x16xf32>
    %124 = tpu.matmul %121, %123, %cst_31 {dimension_numbers = #tpu.dot_dimension_numbers<[1], [0], [0], [1], [0, 0, 1, 1], [], []>} : vector<512x16xbf16>, vector<16x16xbf16>, vector<512x16xf32> -> vector<512x16xf32>
    %125 = arith.addf %120, %124 : vector<512x16xf32>
    %126 = vector.extract_strided_slice %3 {offsets = [621, 0], sizes = [512, 16], strides = [1, 1]} : vector<1536x16xbf16> to vector<512x16xbf16>
    %127 = vector.extract_strided_slice %4 {offsets = [24, 0, 0], sizes = [1, 16, 16], strides = [1, 1, 1]} : vector<27x16x16xbf16> to vector<1x16x16xbf16>
    %128 = vector.shape_cast %127 : vector<1x16x16xbf16> to vector<16x16xbf16>
    %cst_32 = arith.constant dense<0.000000e+00> : vector<512x16xf32>
    %129 = tpu.matmul %126, %128, %cst_32 {dimension_numbers = #tpu.dot_dimension_numbers<[1], [0], [0], [1], [0, 0, 1, 1], [], []>} : vector<512x16xbf16>, vector<16x16xbf16>, vector<512x16xf32> -> vector<512x16xf32>
    %130 = arith.addf %125, %129 : vector<512x16xf32>
    %131 = vector.extract_strided_slice %3 {offsets = [622, 0], sizes = [512, 16], strides = [1, 1]} : vector<1536x16xbf16> to vector<512x16xbf16>
    %132 = vector.extract_strided_slice %4 {offsets = [25, 0, 0], sizes = [1, 16, 16], strides = [1, 1, 1]} : vector<27x16x16xbf16> to vector<1x16x16xbf16>
    %133 = vector.shape_cast %132 : vector<1x16x16xbf16> to vector<16x16xbf16>
    %cst_33 = arith.constant dense<0.000000e+00> : vector<512x16xf32>
    %134 = tpu.matmul %131, %133, %cst_33 {dimension_numbers = #tpu.dot_dimension_numbers<[1], [0], [0], [1], [0, 0, 1, 1], [], []>} : vector<512x16xbf16>, vector<16x16xbf16>, vector<512x16xf32> -> vector<512x16xf32>
    %135 = arith.addf %130, %134 : vector<512x16xf32>
    %136 = vector.extract_strided_slice %3 {offsets = [623, 0], sizes = [512, 16], strides = [1, 1]} : vector<1536x16xbf16> to vector<512x16xbf16>
    %137 = vector.extract_strided_slice %4 {offsets = [26, 0, 0], sizes = [1, 16, 16], strides = [1, 1, 1]} : vector<27x16x16xbf16> to vector<1x16x16xbf16>
    %138 = vector.shape_cast %137 : vector<1x16x16xbf16> to vector<16x16xbf16>
    %cst_34 = arith.constant dense<0.000000e+00> : vector<512x16xf32>
    %139 = tpu.matmul %136, %138, %cst_34 {dimension_numbers = #tpu.dot_dimension_numbers<[1], [0], [0], [1], [0, 0, 1, 1], [], []>} : vector<512x16xbf16>, vector<16x16xbf16>, vector<512x16xf32> -> vector<512x16xf32>
    %140 = arith.addf %135, %139 : vector<512x16xf32>
    %c0_35 = arith.constant 0 : index
    %c0_36 = arith.constant 0 : index
    %141 = vector.load %arg4[%c0_35, %c0_36] : memref<512x1xf32, #tpu.memory_space<vmem>>, vector<512x1xf32>
    %142 = vector.broadcast %141 : vector<512x1xf32> to vector<512x16xf32>
    %143 = arith.mulf %140, %142 : vector<512x16xf32>
    %c0_37 = arith.constant 0 : index
    %c0_38 = arith.constant 0 : index
    %144 = vector.load %arg6[%c0_37, %c0_38] : memref<512x16xf32, #tpu.memory_space<vmem>>, vector<512x16xf32>
    tpu.vector_store %arg6[%c0_37, %c0_38], %143 {strides = array<i32>} : memref<512x16xf32, #tpu.memory_space<vmem>>, vector<512x16xf32>,
    %cst_39 = arith.constant dense<0.000000e+00> : vector<16xf32>
    %145 = vector.multi_reduction <add>, %143, %cst_39 [0] : vector<512x16xf32> to vector<16xf32>
    %146 = vector.shape_cast %145 : vector<16xf32> to vector<1x16xf32>
    %147 = arith.mulf %143, %143 : vector<512x16xf32>
    %cst_40 = arith.constant dense<0.000000e+00> : vector<16xf32>
    %148 = vector.multi_reduction <add>, %147, %cst_40 [0] : vector<512x16xf32> to vector<16xf32>
    %149 = vector.shape_cast %148 : vector<16xf32> to vector<1x16xf32>
    %150 = tpu.concatenate %146, %149 in 0 : vector<1x16xf32>, vector<1x16xf32> -> vector<2x16xf32>
    %c0_41 = arith.constant 0 : index
    %c0_42 = arith.constant 0 : index
    %c0_43 = arith.constant 0 : index
    %151 = vector.load %arg7[%c0_41, %c0_42, %c0_43] : memref<1x2x16xf32, #tpu.memory_space<vmem>>, vector<1x2x16xf32>
    %152 = vector.shape_cast %151 : vector<1x2x16xf32> to vector<2x16xf32>
    %153 = vector.shape_cast %150 : vector<2x16xf32> to vector<1x2x16xf32>
    tpu.vector_store %arg7[%c0_41, %c0_42, %c0_43], %153 {strides = array<i32>} : memref<1x2x16xf32, #tpu.memory_space<vmem>>, vector<1x2x16xf32>,
    return
  }
  func.func @transform_0(%arg0: i32) -> (i32, i32) {
    %c1_i32 = arith.constant 1 : i32
    %0 = arith.subi %arg0, %c1_i32 : i32
    %c0_i32 = arith.constant 0 : i32
    %1 = arith.maxsi %0, %c0_i32 : i32
    %c0_i32_0 = arith.constant 0 : i32
    %c0_i32_1 = arith.constant 0 : i32
    return %1, %c0_i32_0 : i32, i32
  }
  func.func @transform_1(%arg0: i32) -> (i32, i32) {
    %c0_i32 = arith.constant 0 : i32
    %c0_i32_0 = arith.constant 0 : i32
    return %arg0, %c0_i32 : i32, i32
  }
  func.func @transform_2(%arg0: i32) -> (i32, i32) {
    %c1_i32 = arith.constant 1 : i32
    %0 = arith.addi %arg0, %c1_i32 : i32
    %c3_i32 = arith.constant 3 : i32
    %1 = arith.minsi %0, %c3_i32 : i32
    %c0_i32 = arith.constant 0 : i32
    %c0_i32_0 = arith.constant 0 : i32
    return %1, %c0_i32 : i32, i32
  }
  func.func @transform_3(%arg0: i32) -> (i32, i32) {
    %c0_i32 = arith.constant 0 : i32
    %c0_i32_0 = arith.constant 0 : i32
    return %arg0, %c0_i32 : i32, i32
  }
  func.func @transform_4(%arg0: i32) -> (i32, i32, i32) {
    %c0_i32 = arith.constant 0 : i32
    %c0_i32_0 = arith.constant 0 : i32
    %c0_i32_1 = arith.constant 0 : i32
    %c0_i32_2 = arith.constant 0 : i32
    return %c0_i32, %c0_i32_0, %c0_i32_1 : i32, i32, i32
  }
  func.func @transform_5(%arg0: i32) -> (i32, i32) {
    %c0_i32 = arith.constant 0 : i32
    %c0_i32_0 = arith.constant 0 : i32
    return %arg0, %c0_i32 : i32, i32
  }
  func.func @transform_6(%arg0: i32) -> (i32, i32, i32) {
    %c0_i32 = arith.constant 0 : i32
    %c0_i32_0 = arith.constant 0 : i32
    %c0_i32_1 = arith.constant 0 : i32
    return %arg0, %c0_i32, %c0_i32_0 : i32, i32, i32
  }
}

module attributes {stable_mosaic.version = 11 : i64} {
  func.func @_bn_elu_conv_elu_kernel(%arg0: i32, %arg1: memref<64x128xf32, #tpu.memory_space<vmem>>, %arg2: memref<64x128xf32, #tpu.memory_space<vmem>>, %arg3: memref<1x128xf32, #tpu.memory_space<vmem>>, %arg4: memref<1x128xf32, #tpu.memory_space<vmem>>, %arg5: memref<128x128xf32, #tpu.memory_space<vmem>>, %arg6: memref<1x128xf32, #tpu.memory_space<vmem>>, %arg7: memref<64x128xbf16, #tpu.memory_space<vmem>>) attributes {dimension_semantics = [#tpu.dimension_semantics<parallel>], iteration_bounds = array<i64: 4>, scalar_prefetch = 0 : i64, scratch_operands = 0 : i64, tpu.core_type = #tpu.core_type<tc>, window_params = [{transform_indices = @transform_0, window_bounds = array<i64: 64, 128>}, {transform_indices = @transform_1, window_bounds = array<i64: 64, 128>}, {pipeline_mode = #tpu.pipeline_mode<synchronous>, transform_indices = @transform_2, window_bounds = array<i64: 1, 128>}, {pipeline_mode = #tpu.pipeline_mode<synchronous>, transform_indices = @transform_3, window_bounds = array<i64: 1, 128>}, {pipeline_mode = #tpu.pipeline_mode<synchronous>, transform_indices = @transform_4, window_bounds = array<i64: 128, 128>}, {pipeline_mode = #tpu.pipeline_mode<synchronous>, transform_indices = @transform_5, window_bounds = array<i64: 1, 128>}, {transform_indices = @transform_6, window_bounds = array<i64: 64, 128>}]} {
    %c0 = arith.constant 0 : index
    %c0_0 = arith.constant 0 : index
    %0 = vector.load %arg1[%c0, %c0_0] : memref<64x128xf32, #tpu.memory_space<vmem>>, vector<64x128xf32>
    %c0_1 = arith.constant 0 : index
    %c0_2 = arith.constant 0 : index
    %1 = vector.load %arg3[%c0_1, %c0_2] : memref<1x128xf32, #tpu.memory_space<vmem>>, vector<1x128xf32>
    %2 = vector.broadcast %1 : vector<1x128xf32> to vector<64x128xf32>
    %3 = arith.mulf %0, %2 : vector<64x128xf32>
    %c0_3 = arith.constant 0 : index
    %c0_4 = arith.constant 0 : index
    %4 = vector.load %arg4[%c0_3, %c0_4] : memref<1x128xf32, #tpu.memory_space<vmem>>, vector<1x128xf32>
    %5 = vector.broadcast %4 : vector<1x128xf32> to vector<64x128xf32>
    %6 = arith.addf %3, %5 : vector<64x128xf32>
    %cst = arith.constant 0.000000e+00 : f32
    %7 = vector.broadcast %cst : f32 to vector<64x128xf32>
    %8 = arith.cmpf ogt, %6, %7 : vector<64x128xf32>
    %cst_5 = arith.constant 0.000000e+00 : f32
    %9 = vector.broadcast %cst_5 : f32 to vector<64x128xf32>
    %10 = arith.minimumf %6, %9 : vector<64x128xf32>
    %11 = math.exp %10 : vector<64x128xf32>
    %cst_6 = arith.constant 1.000000e+00 : f32
    %12 = vector.broadcast %cst_6 : f32 to vector<64x128xf32>
    %13 = arith.subf %11, %12 : vector<64x128xf32>
    %14 = arith.select %8, %6, %13 : vector<64x128xi1>, vector<64x128xf32>
    %c0_7 = arith.constant 0 : index
    %c0_8 = arith.constant 0 : index
    %15 = vector.load %arg5[%c0_7, %c0_8] : memref<128x128xf32, #tpu.memory_space<vmem>>, vector<128x128xf32>
    %cst_9 = arith.constant dense<0.000000e+00> : vector<64x128xf32>
    %16 = tpu.matmul %14, %15, %cst_9 {dimension_numbers = #tpu.dot_dimension_numbers<[1], [0], [0], [1], [0, 0, 1, 1], [], []>} : vector<64x128xf32>, vector<128x128xf32>, vector<64x128xf32> -> vector<64x128xf32>
    %c0_10 = arith.constant 0 : index
    %c0_11 = arith.constant 0 : index
    %17 = vector.load %arg6[%c0_10, %c0_11] : memref<1x128xf32, #tpu.memory_space<vmem>>, vector<1x128xf32>
    %18 = vector.broadcast %17 : vector<1x128xf32> to vector<64x128xf32>
    %19 = arith.addf %16, %18 : vector<64x128xf32>
    %cst_12 = arith.constant 0.000000e+00 : f32
    %20 = vector.broadcast %cst_12 : f32 to vector<64x128xf32>
    %21 = arith.cmpf ogt, %19, %20 : vector<64x128xf32>
    %cst_13 = arith.constant 0.000000e+00 : f32
    %22 = vector.broadcast %cst_13 : f32 to vector<64x128xf32>
    %23 = arith.minimumf %19, %22 : vector<64x128xf32>
    %24 = math.exp %23 : vector<64x128xf32>
    %cst_14 = arith.constant 1.000000e+00 : f32
    %25 = vector.broadcast %cst_14 : f32 to vector<64x128xf32>
    %26 = arith.subf %24, %25 : vector<64x128xf32>
    %27 = arith.select %21, %19, %26 : vector<64x128xi1>, vector<64x128xf32>
    %c0_15 = arith.constant 0 : index
    %c0_16 = arith.constant 0 : index
    %28 = vector.load %arg2[%c0_15, %c0_16] : memref<64x128xf32, #tpu.memory_space<vmem>>, vector<64x128xf32>
    %29 = arith.mulf %27, %28 : vector<64x128xf32>
    %30 = arith.truncf %29 : vector<64x128xf32> to vector<64x128xbf16>
    %c0_17 = arith.constant 0 : index
    %c0_18 = arith.constant 0 : index
    %31 = vector.load %arg7[%c0_17, %c0_18] : memref<64x128xbf16, #tpu.memory_space<vmem>>, vector<64x128xbf16>
    tpu.vector_store %arg7[%c0_17, %c0_18], %30 {strides = array<i32>} : memref<64x128xbf16, #tpu.memory_space<vmem>>, vector<64x128xbf16>,
    return
  }
  func.func @transform_0(%arg0: i32) -> (i32, i32) {
    %c0_i32 = arith.constant 0 : i32
    %c0_i32_0 = arith.constant 0 : i32
    return %arg0, %c0_i32 : i32, i32
  }
  func.func @transform_1(%arg0: i32) -> (i32, i32) {
    %c0_i32 = arith.constant 0 : i32
    %c0_i32_0 = arith.constant 0 : i32
    return %arg0, %c0_i32 : i32, i32
  }
  func.func @transform_2(%arg0: i32) -> (i32, i32) {
    %c0_i32 = arith.constant 0 : i32
    %c0_i32_0 = arith.constant 0 : i32
    %c0_i32_1 = arith.constant 0 : i32
    return %c0_i32, %c0_i32_0 : i32, i32
  }
  func.func @transform_3(%arg0: i32) -> (i32, i32) {
    %c0_i32 = arith.constant 0 : i32
    %c0_i32_0 = arith.constant 0 : i32
    %c0_i32_1 = arith.constant 0 : i32
    return %c0_i32, %c0_i32_0 : i32, i32
  }
  func.func @transform_4(%arg0: i32) -> (i32, i32) {
    %c0_i32 = arith.constant 0 : i32
    %c0_i32_0 = arith.constant 0 : i32
    %c0_i32_1 = arith.constant 0 : i32
    return %c0_i32, %c0_i32_0 : i32, i32
  }
  func.func @transform_5(%arg0: i32) -> (i32, i32) {
    %c0_i32 = arith.constant 0 : i32
    %c0_i32_0 = arith.constant 0 : i32
    %c0_i32_1 = arith.constant 0 : i32
    return %c0_i32, %c0_i32_0 : i32, i32
  }
  func.func @transform_6(%arg0: i32) -> (i32, i32) {
    %c0_i32 = arith.constant 0 : i32
    %c0_i32_0 = arith.constant 0 : i32
    return %arg0, %c0_i32 : i32, i32
  }
}

module attributes {stable_mosaic.version = 11 : i64} {
  func.func @_bn_elu_conv_kernel(%arg0: i32, %arg1: memref<64x128xf32, #tpu.memory_space<vmem>>, %arg2: memref<64x128xf32, #tpu.memory_space<vmem>>, %arg3: memref<1x128xf32, #tpu.memory_space<vmem>>, %arg4: memref<1x128xf32, #tpu.memory_space<vmem>>, %arg5: memref<128x32xf32, #tpu.memory_space<vmem>>, %arg6: memref<1x32xf32, #tpu.memory_space<vmem>>, %arg7: memref<64x32xf32, #tpu.memory_space<vmem>>) attributes {dimension_semantics = [#tpu.dimension_semantics<parallel>], iteration_bounds = array<i64: 4>, scalar_prefetch = 0 : i64, scratch_operands = 0 : i64, tpu.core_type = #tpu.core_type<tc>, window_params = [{transform_indices = @transform_0, window_bounds = array<i64: 64, 128>}, {transform_indices = @transform_1, window_bounds = array<i64: 64, 128>}, {pipeline_mode = #tpu.pipeline_mode<synchronous>, transform_indices = @transform_2, window_bounds = array<i64: 1, 128>}, {pipeline_mode = #tpu.pipeline_mode<synchronous>, transform_indices = @transform_3, window_bounds = array<i64: 1, 128>}, {pipeline_mode = #tpu.pipeline_mode<synchronous>, transform_indices = @transform_4, window_bounds = array<i64: 128, 32>}, {pipeline_mode = #tpu.pipeline_mode<synchronous>, transform_indices = @transform_5, window_bounds = array<i64: 1, 32>}, {transform_indices = @transform_6, window_bounds = array<i64: 64, 32>}]} {
    %c0 = arith.constant 0 : index
    %c0_0 = arith.constant 0 : index
    %0 = vector.load %arg1[%c0, %c0_0] : memref<64x128xf32, #tpu.memory_space<vmem>>, vector<64x128xf32>
    %c0_1 = arith.constant 0 : index
    %c0_2 = arith.constant 0 : index
    %1 = vector.load %arg3[%c0_1, %c0_2] : memref<1x128xf32, #tpu.memory_space<vmem>>, vector<1x128xf32>
    %2 = vector.broadcast %1 : vector<1x128xf32> to vector<64x128xf32>
    %3 = arith.mulf %0, %2 : vector<64x128xf32>
    %c0_3 = arith.constant 0 : index
    %c0_4 = arith.constant 0 : index
    %4 = vector.load %arg4[%c0_3, %c0_4] : memref<1x128xf32, #tpu.memory_space<vmem>>, vector<1x128xf32>
    %5 = vector.broadcast %4 : vector<1x128xf32> to vector<64x128xf32>
    %6 = arith.addf %3, %5 : vector<64x128xf32>
    %cst = arith.constant 0.000000e+00 : f32
    %7 = vector.broadcast %cst : f32 to vector<64x128xf32>
    %8 = arith.cmpf ogt, %6, %7 : vector<64x128xf32>
    %cst_5 = arith.constant 0.000000e+00 : f32
    %9 = vector.broadcast %cst_5 : f32 to vector<64x128xf32>
    %10 = arith.minimumf %6, %9 : vector<64x128xf32>
    %11 = math.exp %10 : vector<64x128xf32>
    %cst_6 = arith.constant 1.000000e+00 : f32
    %12 = vector.broadcast %cst_6 : f32 to vector<64x128xf32>
    %13 = arith.subf %11, %12 : vector<64x128xf32>
    %14 = arith.select %8, %6, %13 : vector<64x128xi1>, vector<64x128xf32>
    %c0_7 = arith.constant 0 : index
    %c0_8 = arith.constant 0 : index
    %15 = vector.load %arg5[%c0_7, %c0_8] : memref<128x32xf32, #tpu.memory_space<vmem>>, vector<128x32xf32>
    %cst_9 = arith.constant dense<0.000000e+00> : vector<64x32xf32>
    %16 = tpu.matmul %14, %15, %cst_9 {dimension_numbers = #tpu.dot_dimension_numbers<[1], [0], [0], [1], [0, 0, 1, 1], [], []>} : vector<64x128xf32>, vector<128x32xf32>, vector<64x32xf32> -> vector<64x32xf32>
    %c0_10 = arith.constant 0 : index
    %c0_11 = arith.constant 0 : index
    %17 = vector.load %arg6[%c0_10, %c0_11] : memref<1x32xf32, #tpu.memory_space<vmem>>, vector<1x32xf32>
    %18 = vector.broadcast %17 : vector<1x32xf32> to vector<64x32xf32>
    %19 = arith.addf %16, %18 : vector<64x32xf32>
    %c0_12 = arith.constant 0 : index
    %c0_13 = arith.constant 0 : index
    %20 = vector.load %arg7[%c0_12, %c0_13] : memref<64x32xf32, #tpu.memory_space<vmem>>, vector<64x32xf32>
    tpu.vector_store %arg7[%c0_12, %c0_13], %19 {strides = array<i32>} : memref<64x32xf32, #tpu.memory_space<vmem>>, vector<64x32xf32>,
    return
  }
  func.func @transform_0(%arg0: i32) -> (i32, i32) {
    %c0_i32 = arith.constant 0 : i32
    %c0_i32_0 = arith.constant 0 : i32
    return %arg0, %c0_i32 : i32, i32
  }
  func.func @transform_1(%arg0: i32) -> (i32, i32) {
    %c0_i32 = arith.constant 0 : i32
    %c0_i32_0 = arith.constant 0 : i32
    return %arg0, %c0_i32 : i32, i32
  }
  func.func @transform_2(%arg0: i32) -> (i32, i32) {
    %c0_i32 = arith.constant 0 : i32
    %c0_i32_0 = arith.constant 0 : i32
    %c0_i32_1 = arith.constant 0 : i32
    return %c0_i32, %c0_i32_0 : i32, i32
  }
  func.func @transform_3(%arg0: i32) -> (i32, i32) {
    %c0_i32 = arith.constant 0 : i32
    %c0_i32_0 = arith.constant 0 : i32
    %c0_i32_1 = arith.constant 0 : i32
    return %c0_i32, %c0_i32_0 : i32, i32
  }
  func.func @transform_4(%arg0: i32) -> (i32, i32) {
    %c0_i32 = arith.constant 0 : i32
    %c0_i32_0 = arith.constant 0 : i32
    %c0_i32_1 = arith.constant 0 : i32
    return %c0_i32, %c0_i32_0 : i32, i32
  }
  func.func @transform_5(%arg0: i32) -> (i32, i32) {
    %c0_i32 = arith.constant 0 : i32
    %c0_i32_0 = arith.constant 0 : i32
    %c0_i32_1 = arith.constant 0 : i32
    return %c0_i32, %c0_i32_0 : i32, i32
  }
  func.func @transform_6(%arg0: i32) -> (i32, i32) {
    %c0_i32 = arith.constant 0 : i32
    %c0_i32_0 = arith.constant 0 : i32
    return %arg0, %c0_i32 : i32, i32
  }
}

</mosaic_0001>

<llo_original>
// kernel: tile.43
$region0: #{tile.43}
  #allocation0 [shape = 's32[1]{0}', space=sflag, size = 0x4, scoped, tag = 'scoped memory for tile.43']
  %s0 = inlined_call_operand.vmem [shape: f32[16], index: 0, kind: input, shape index: {}]
  %s1 = inlined_call_operand.vmem [shape: f32[8,16], index: 1, kind: output, shape index: {}]
  // Predicated region
  $region2: #{tile.43} parent=0 // pred_check
    _
  $region3: #{tile.43} parent=0 // pred_check_branch
    %3 = sbr.rel (0) target = $region5
  $region4: #{tile.43} parent=0 // pred_region
    _
  $region5: #{tile.43} parent=0 // pred_fallthru
    _
  %v4 = vld [vmem:[%s0] ss:$0 sm:$0xff]
  %5 = vst [vmem:[%s1] sm:$0xff] %v4

// kernel: tile.44
$region0: #{tile.44}
  %s0 = inlined_call_operand.vmem [shape: f32[8,16], index: 0, kind: input, shape index: {}]
  %s1 = inlined_call_operand.vmem [shape: f32[1,128], index: 1, kind: output, shape index: {}]
  $region1: #{tile.44} parent=0
    #allocation0 [shape = 'u8[4096]{0}', space=vmem, size = 0x1000, scoped, tag = 'scoped mem for output reshape']
    %v2 = vld [vmem:[%s0] sm:$0x1]
    %vm3 = vcmask 130048
    %4 = vst.msk [vmem:[#allocation0] sm:$0x1] %vm3, %v2
    %s5 = scalar_lea.vmem %s0, 7
    %v6 = vld [vmem:[%s5] sm:$0x1]
    %7 = vrot.lane.b32.xlu0 %v6, 112
    %v8 = vpop.permute.xlu0 %7
    %vm9 = vcmask 1048448
    %10 = vst.msk [vmem:[#allocation0] sm:$0x1] %vm9, %v8
    %s11 = scalar_lea.vmem %s0, 6
    %v12 = vld [vmem:[%s11] sm:$0x1]
    %13 = vrot.lane.b32.xlu0 %v12, 96
    %v14 = vpop.permute.xlu0 %13
    %vm15 = vcmask 917248
    %16 = vst.msk [vmem:[#allocation0] sm:$0x1] %vm15, %v14
    %s17 = scalar_lea.vmem %s0, 5
    %v18 = vld [vmem:[%s17] sm:$0x1]
    %19 = vrot.lane.b32.xlu0 %v18, 80
    %v20 = vpop.permute.xlu0 %19
    %vm21 = vcmask 786048
    %22 = vst.msk [vmem:[#allocation0] sm:$0x1] %vm21, %v20
    %s23 = scalar_lea.vmem %s0, 4
    %v24 = vld [vmem:[%s23] sm:$0x1]
    %25 = vrot.lane.b32.xlu0 %v24, 64
    %v26 = vpop.permute.xlu0 %25
    %vm27 = vcmask 654848
    %28 = vst.msk [vmem:[#allocation0] sm:$0x1] %vm27, %v26
    %s29 = scalar_lea.vmem %s0, 3
    %v30 = vld [vmem:[%s29] sm:$0x1]
    %31 = vrot.lane.b32.xlu0 %v30, 48
    %v32 = vpop.permute.xlu0 %31
    %vm33 = vcmask 523648
    %34 = vst.msk [vmem:[#allocation0] sm:$0x1] %vm33, %v32
    %s35 = scalar_lea.vmem %s0, 2
    %v36 = vld [vmem:[%s35] sm:$0x1]
    %37 = vrot.lane.b32.xlu0 %v36, 32
    %v38 = vpop.permute.xlu0 %37
    %vm39 = vcmask 392448
    %40 = vst.msk [vmem:[#allocation0] sm:$0x1] %vm39, %v38
    %s41 = scalar_lea.vmem %s0, 1
    %v42 = vld [vmem:[%s41] sm:$0x1]
    %43 = vrot.lane.b32.xlu0 %v42, 16
    %v44 = vpop.permute.xlu0 %43
    %vm45 = vcmask 261248
    %46 = vst.msk [vmem:[#allocation0] sm:$0x1] %vm45, %v44
    %s48 = ssub.s32 2, 1
    %v49 = vld [vmem:[#allocation0] sm:%s48]
    %s51 = ssub.s32 2, 1
    %52 = vst [vmem:[%s1] sm:%s51] %v49

// kernel: output_transition_edge_forward.5
$region0: #{output_transition_edge_forward.5}
  #allocation0 [shape = 'u32[]', space=smem, size = 0x4, offset = 0x4, fixed_abs, tag = 'smem constant byte address 0x4 - core index']
  #allocation1 [shape = 'u32[72,128]{1,0:T(1,128)}', space=vmem, size = 0x9000, scoped, tag = 'internal scratch']
  %s0 = inlined_call_operand.vmem [shape: f32[256,128], index: 0, kind: input, shape index: {}]
  %s1 = inlined_call_operand.vmem [shape: f32[256,128], index: 1, kind: input, shape index: {}]
  %s2 = inlined_call_operand.vmem [shape: f32[1,128], index: 2, kind: input, shape index: {}]
  %s3 = inlined_call_operand.vmem [shape: f32[1,128], index: 3, kind: input, shape index: {}]
  %s4 = inlined_call_operand.vmem [shape: f32[128,128], index: 4, kind: input, shape index: {}]
  %s5 = inlined_call_operand.vmem [shape: f32[1,128], index: 5, kind: input, shape index: {}]
  %s6 = inlined_call_operand.vmem [shape: bf16[256,128], index: 6, kind: output, shape index: {}]
  %s7 = sld [smem:[#allocation0]]
  $region57: #{output_transition_edge_forward.5} parent=0
    _
  %s9 = ssub.s32 1, %s7
  %s10 = scalar_select 0, %s9, %s7
  loop: start=0, step=1, limit=6
  $region2: #{output_transition_edge_forward.5} parent=0 // loop_pre_header
    _
  $region3: #{output_transition_edge_forward.5} parent=0 // loop_header
    %s12 = sphi 0, %s16
    %p13 = scmp.ge.s32.totalorder %s12, 6
    %s22 = sphi 0, %s24
    %s25 = sphi 0, %s22
    %s26 = sphi 0, %s25
    %s42 = sphi 0, %s26
    %s48 = sphi 0, %s50
    %s51 = sphi 0, %s48
    %s52 = sphi 0, %s51
    %s68 = sphi 0, %s52
    %s72 = sphi 0, %s72
    %s74 = sphi 0, %s72
    %s75 = sphi 0, %s74
    %s89 = sphi 0, %s75
    %s93 = sphi 0, %s93
    %s95 = sphi 0, %s93
    %s96 = sphi 0, %s95
    %s110 = sphi 0, %s96
    %s114 = sphi 0, %s114
    %s116 = sphi 0, %s114
    %s117 = sphi 0, %s116
    %s131 = sphi 0, %s117
    %s135 = sphi 0, %s135
    %s137 = sphi 0, %s135
    %s138 = sphi 0, %s137
    %s152 = sphi 0, %s138
    %s158 = sphi 0, %s160
    %s161 = sphi 0, %s158
    %s162 = sphi 0, %s161
    %s178 = sphi 0, %s162
  $region4: #{output_transition_edge_forward.5} parent=0 // loop_header_branch
    %15 = sbr.rel (%p13) target = $region8
  $region5: #{output_transition_edge_forward.5} parent=0 // loop_body
    %s17 = ssub.s32 %s12, 1
    %s18 = ssub.s32 %s12, 2
    %s19 = sadd.s32 %s12, 1
    %s20 = ssub.s32 %s12, %s19
    %p21 = scmp.eq.s32.totalorder %s20, 0
    %s23 = sadd.s32 %s22, 1
    %s24 = scalar_select %p21, %s22, %s23
    %p27 = pneg %p21
    %p28 = scmp.eq.s32.totalorder %s12, 3
    %p29 = por %p27, %p28
    %p30 = scmp.ne.s32.totalorder %s22, %s25
    %p31 = scmp.eq.s32.totalorder %s12, 0
    %p32 = por %p30, %p31
    %p33 = scmp.ne.s32.totalorder %s22, %s25
    %p34 = scmp.eq.s32.totalorder %s17, 3
    %p35 = por %p33, %p34
    %p36 = scmp.ne.s32.totalorder %s25, %s26
    %p37 = scmp.eq.s32.totalorder %s17, 0
    %p38 = por %p36, %p37
    %p39 = scmp.ne.s32.totalorder %s25, %s26
    %p40 = scmp.eq.s32.totalorder %s18, 3
    %p41 = por %p39, %p40
    %p43 = scmp.ne.s32.totalorder %s26, %s42
    %p44 = scmp.eq.s32.totalorder %s18, 0
    %p45 = por %p43, %p44
    %s46 = ssub.s32 %s12, %s19
    %p47 = scmp.eq.s32.totalorder %s46, 0
    %s49 = sadd.s32 %s48, 1
    %s50 = scalar_select %p47, %s48, %s49
    %p53 = pneg %p47
    %p54 = scmp.eq.s32.totalorder %s12, 3
    %p55 = por %p53, %p54
    %p56 = scmp.ne.s32.totalorder %s48, %s51
    %p57 = scmp.eq.s32.totalorder %s12, 0
    %p58 = por %p56, %p57
    %p59 = scmp.ne.s32.totalorder %s48, %s51
    %p60 = scmp.eq.s32.totalorder %s17, 3
    %p61 = por %p59, %p60
    %p62 = scmp.ne.s32.totalorder %s51, %s52
    %p63 = scmp.eq.s32.totalorder %s17, 0
    %p64 = por %p62, %p63
    %p65 = scmp.ne.s32.totalorder %s51, %s52
    %p66 = scmp.eq.s32.totalorder %s18, 3
    %p67 = por %p65, %p66
    %p69 = scmp.ne.s32.totalorder %s52, %s68
    %p70 = scmp.eq.s32.totalorder %s18, 0
    %p71 = por %p69, %p70
    %s73 = sadd.s32 %s72, 1
    %p76 = scmp.eq.s32.totalorder %s12, 3
    %p77 = scmp.ne.s32.totalorder %s72, %s74
    %p78 = scmp.eq.s32.totalorder %s12, 0
    %p79 = por %p77, %p78
    %p80 = scmp.ne.s32.totalorder %s72, %s74
    %p81 = scmp.eq.s32.totalorder %s17, 3
    %p82 = por %p80, %p81
    %p83 = scmp.ne.s32.totalorder %s74, %s75
    %p84 = scmp.eq.s32.totalorder %s17, 0
    %p85 = por %p83, %p84
    %p86 = scmp.ne.s32.totalorder %s74, %s75
    %p87 = scmp.eq.s32.totalorder %s18, 3
    %p88 = por %p86, %p87
    %p90 = scmp.ne.s32.totalorder %s75, %s89
    %p91 = scmp.eq.s32.totalorder %s18, 0
    %p92 = por %p90, %p91
    %s94 = sadd.s32 %s93, 1
    %p97 = scmp.eq.s32.totalorder %s12, 3
    %p98 = scmp.ne.s32.totalorder %s93, %s95
    %p99 = scmp.eq.s32.totalorder %s12, 0
    %p100 = por %p98, %p99
    %p101 = scmp.ne.s32.totalorder %s93, %s95
    %p102 = scmp.eq.s32.totalorder %s17, 3
    %p103 = por %p101, %p102
    %p104 = scmp.ne.s32.totalorder %s95, %s96
    %p105 = scmp.eq.s32.totalorder %s17, 0
    %p106 = por %p104, %p105
    %p107 = scmp.ne.s32.totalorder %s95, %s96
    %p108 = scmp.eq.s32.totalorder %s18, 3
    %p109 = por %p107, %p108
    %p111 = scmp.ne.s32.totalorder %s96, %s110
    %p112 = scmp.eq.s32.totalorder %s18, 0
    %p113 = por %p111, %p112
    %s115 = sadd.s32 %s114, 1
    %p118 = scmp.eq.s32.totalorder %s12, 3
    %p119 = scmp.ne.s32.totalorder %s114, %s116
    %p120 = scmp.eq.s32.totalorder %s12, 0
    %p121 = por %p119, %p120
    %p122 = scmp.ne.s32.totalorder %s114, %s116
    %p123 = scmp.eq.s32.totalorder %s17, 3
    %p124 = por %p122, %p123
    %p125 = scmp.ne.s32.totalorder %s116, %s117
    %p126 = scmp.eq.s32.totalorder %s17, 0
    %p127 = por %p125, %p126
    %p128 = scmp.ne.s32.totalorder %s116, %s117
    %p129 = scmp.eq.s32.totalorder %s18, 3
    %p130 = por %p128, %p129
    %p132 = scmp.ne.s32.totalorder %s117, %s131
    %p133 = scmp.eq.s32.totalorder %s18, 0
    %p134 = por %p132, %p133
    %s136 = sadd.s32 %s135, 1
    %p139 = scmp.eq.s32.totalorder %s12, 3
    %p140 = scmp.ne.s32.totalorder %s135, %s137
    %p141 = scmp.eq.s32.totalorder %s12, 0
    %p142 = por %p140, %p141
    %p143 = scmp.ne.s32.totalorder %s135, %s137
    %p144 = scmp.eq.s32.totalorder %s17, 3
    %p145 = por %p143, %p144
    %p146 = scmp.ne.s32.totalorder %s137, %s138
    %p147 = scmp.eq.s32.totalorder %s17, 0
    %p148 = por %p146, %p147
    %p149 = scmp.ne.s32.totalorder %s137, %s138
    %p150 = scmp.eq.s32.totalorder %s18, 3
    %p151 = por %p149, %p150
    %p153 = scmp.ne.s32.totalorder %s138, %s152
    %p154 = scmp.eq.s32.totalorder %s18, 0
    %p155 = por %p153, %p154
    %s156 = ssub.s32 %s12, %s19
    %p157 = scmp.eq.s32.totalorder %s156, 0
    %s159 = sadd.s32 %s158, 1
    %s160 = scalar_select %p157, %s158, %s159
    %p163 = pneg %p157
    %p164 = scmp.eq.s32.totalorder %s12, 3
    %p165 = por %p163, %p164
    %p166 = scmp.ne.s32.totalorder %s158, %s161
    %p167 = scmp.eq.s32.totalorder %s12, 0
    %p168 = por %p166, %p167
    %p169 = scmp.ne.s32.totalorder %s158, %s161
    %p170 = scmp.eq.s32.totalorder %s17, 3
    %p171 = por %p169, %p170
    %p172 = scmp.ne.s32.totalorder %s161, %s162
    %p173 = scmp.eq.s32.totalorder %s17, 0
    %p174 = por %p172, %p173
    %p175 = scmp.ne.s32.totalorder %s161, %s162
    %p176 = scmp.eq.s32.totalorder %s18, 3
    %p177 = por %p175, %p176
    %p179 = scmp.ne.s32.totalorder %s162, %s178
    %p180 = scmp.eq.s32.totalorder %s18, 0
    %p181 = por %p179, %p180
    %p182 = scmp.le.s32.totalorder 1, %s12
    %p183 = scmp.lt.s32.totalorder %s12, 5
    %p184 = pnand %p182, %p183
    %p185 = pneg %p184
    // Predicated region
    $region9: #{output_transition_edge_forward.5} parent=5 // pred_check
      _
    $region10: #{output_transition_edge_forward.5} parent=5 // pred_check_branch
      %187 = sbr.rel (%p184) target = $region12
    $region11: #{output_transition_edge_forward.5} parent=5 // pred_region
      %s188 = ssub.s32 %s12, 1
      // Predicated region
      $region13: #{output_transition_edge_forward.5} parent=11 // pred_check
        %p189 = pneg %p85
      $region14: #{output_transition_edge_forward.5} parent=11 // pred_check_branch
        %191 = sbr.rel (%p189) target = $region16
      $region15: #{output_transition_edge_forward.5} parent=11 // pred_region
        _
      $region16: #{output_transition_edge_forward.5} parent=11 // pred_fallthru
        _
      // Predicated region
      $region17: #{output_transition_edge_forward.5} parent=11 // pred_check
        %p192 = pneg %p106
      $region18: #{output_transition_edge_forward.5} parent=11 // pred_check_branch
        %194 = sbr.rel (%p192) target = $region20
      $region19: #{output_transition_edge_forward.5} parent=11 // pred_region
        _
      $region20: #{output_transition_edge_forward.5} parent=11 // pred_fallthru
        _
      // Predicated region
      $region21: #{output_transition_edge_forward.5} parent=11 // pred_check
        %p195 = pneg %p127
      $region22: #{output_transition_edge_forward.5} parent=11 // pred_check_branch
        %197 = sbr.rel (%p195) target = $region24
      $region23: #{output_transition_edge_forward.5} parent=11 // pred_region
        _
      $region24: #{output_transition_edge_forward.5} parent=11 // pred_fallthru
        _
      // Predicated region
      $region25: #{output_transition_edge_forward.5} parent=11 // pred_check
        %p198 = pneg %p148
      $region26: #{output_transition_edge_forward.5} parent=11 // pred_check_branch
        %200 = sbr.rel (%p198) target = $region28
      $region27: #{output_transition_edge_forward.5} parent=11 // pred_region
        _
      $region28: #{output_transition_edge_forward.5} parent=11 // pred_fallthru
        _
    $region12: #{output_transition_edge_forward.5} parent=5 // pred_fallthru
      _
    %p201 = scmp.lt.s32.totalorder %s12, 4
    // Predicated region
    $region29: #{output_transition_edge_forward.5} parent=5 // pred_check
      %p202 = pneg %p201
    $region30: #{output_transition_edge_forward.5} parent=5 // pred_check_branch
      %204 = sbr.rel (%p202) target = $region32
    $region31: #{output_transition_edge_forward.5} parent=5 // pred_region
      // Predicated region
      $region33: #{output_transition_edge_forward.5} parent=31 // pred_check
        %p205 = pneg %p32
      $region34: #{output_transition_edge_forward.5} parent=31 // pred_check_branch
        %207 = sbr.rel (%p205) target = $region36
      $region35: #{output_transition_edge_forward.5} parent=31 // pred_region
        %s208 = smul.u32 8, %s12
        %p209 = scmp.lt.s32.totalorder %s208, 31
        %s210 = scalar_select %p209, %s208, 31
        %s211 = smul.addr %s210, 8
        %s212 = scalar_lea.vmem %s0, %s211
        %s213 = smul.u32 8, %s12
      $region36: #{output_transition_edge_forward.5} parent=31 // pred_fallthru
        _
      // Predicated region
      $region37: #{output_transition_edge_forward.5} parent=31 // pred_check
        %p214 = pneg %p58
      $region38: #{output_transition_edge_forward.5} parent=31 // pred_check_branch
        %216 = sbr.rel (%p214) target = $region40
      $region39: #{output_transition_edge_forward.5} parent=31 // pred_region
        %s217 = smul.u32 8, %s12
        %p218 = scmp.lt.s32.totalorder %s217, 31
        %s219 = scalar_select %p218, %s217, 31
        %s220 = smul.addr %s219, 8
        %s221 = scalar_lea.vmem %s1, %s220
        %s222 = smul.u32 8, %s12
      $region40: #{output_transition_edge_forward.5} parent=31 // pred_fallthru
        _
    $region32: #{output_transition_edge_forward.5} parent=5 // pred_fallthru
      _
    %p223 = scmp.le.s32.totalorder 1, %s12
    %p224 = scmp.lt.s32.totalorder %s12, 5
    %p225 = pnand %p223, %p224
    %p226 = pneg %p225
    // Predicated region
    $region41: #{output_transition_edge_forward.5} parent=5 // pred_check
      _
    $region42: #{output_transition_edge_forward.5} parent=5 // pred_check_branch
      %228 = sbr.rel (%p225) target = $region44
    $region43: #{output_transition_edge_forward.5} parent=5 // pred_region
      %s229 = ssub.s32 %s12, 1
      %s230 = smul.u32 8, %s17
      %p231 = scmp.lt.s32.totalorder %s230, 31
      %s232 = scalar_select %p231, %s230, 31
      %s233 = smul.addr %s232, 8
      %s234 = scalar_lea.vmem %s0, %s233
      %p235 = pneg %p38
      %p236 = pneg %p35
      %s237 = smul.u32 8, %s17
      %p238 = scmp.lt.s32.totalorder %s237, 31
      %s239 = scalar_select %p238, %s237, 31
      %s240 = smul.addr %s239, 8
      %s241 = scalar_lea.vmem %s1, %s240
      %p242 = pneg %p64
      %p243 = pneg %p61
      %p244 = pneg %p85
      %p245 = pneg %p82
      %p246 = pneg %p106
      %p247 = pneg %p103
      %p248 = pneg %p127
      %p249 = pneg %p124
      %p250 = pneg %p148
      %p251 = pneg %p145
      %p252 = pneg %p174
      %p253 = pneg %p171
      %s254 = smul.u32 8, %s17
      %p255 = scmp.lt.s32.totalorder %s254, 31
      %s256 = scalar_select %p255, %s254, 31
      %s257 = smul.addr %s256, 4
      %s258 = scalar_lea.vmem %s6, %s257
      %s259 = smul.u32 8, %s17
      %p260 = scmp.lt.s32.totalorder %s259, 31
      %s261 = scalar_select %p260, %s259, 31
      %s262 = smul.addr %s261, 8
      %s263 = scalar_lea.vmem %s0, %s262
      %s264 = smul.u32 8, %s17
      %s265 = smul.u32 8, %s17
      %p266 = scmp.lt.s32.totalorder %s265, 31
      %s267 = scalar_select %p266, %s265, 31
      %s268 = smul.addr %s267, 8
      %s269 = scalar_lea.vmem %s1, %s268
      %s270 = smul.u32 8, %s17
      %s271 = smul.u32 8, %s17
      %p272 = scmp.lt.s32.totalorder %s271, 31
      %s273 = scalar_select %p272, %s271, 31
      %s274 = smul.addr %s273, 4
      %s275 = scalar_lea.vmem %s6, %s274
      %s276 = smul.u32 8, %s17
      %v277 = vld [vmem:[%s263] sm:$0xff]
      %v278 = vld [vmem:[%s263 + $0x8] sm:$0xff]
      %v279 = vld [vmem:[%s263 + $0x10] sm:$0xff]
      %v280 = vld [vmem:[%s263 + $0x18] sm:$0xff]
      %v281 = vld [vmem:[%s263 + $0x20] sm:$0xff]
      %v282 = vld [vmem:[%s263 + $0x28] sm:$0xff]
      %v283 = vld [vmem:[%s263 + $0x30] sm:$0xff]
      %v284 = vld [vmem:[%s263 + $0x38] sm:$0xff]
      %v285 = vld [vmem:[%s2] sm:$0x1]
      %v287 = vperm.slane %v285, 0
      %v289 = vmul.f32 %v277, %v287
      %v290 = vmul.f32 %v278, %v287
      %v291 = vmul.f32 %v279, %v287
      %v292 = vmul.f32 %v280, %v287
      %v293 = vmul.f32 %v281, %v287
      %v294 = vmul.f32 %v282, %v287
      %v295 = vmul.f32 %v283, %v287
      %v296 = vmul.f32 %v284, %v287
      %v297 = vld [vmem:[%s3] sm:$0x1]
      %v299 = vperm.slane %v297, 0
      %v301 = vadd.f32 %v289, %v299
      %v302 = vadd.f32 %v290, %v299
      %v303 = vadd.f32 %v291, %v299
      %v304 = vadd.f32 %v292, %v299
      %v305 = vadd.f32 %v293, %v299
      %v306 = vadd.f32 %v294, %v299
      %v307 = vadd.f32 %v295, %v299
      %v308 = vadd.f32 %v296, %v299
      %vm309 = vcmp.gt.f32.partialorder %v301, 0.0
      %vm310 = vcmp.gt.f32.partialorder %v302, 0.0
      %vm311 = vcmp.gt.f32.partialorder %v303, 0.0
      %vm312 = vcmp.gt.f32.partialorder %v304, 0.0
      %vm313 = vcmp.gt.f32.partialorder %v305, 0.0
      %vm314 = vcmp.gt.f32.partialorder %v306, 0.0
      %vm315 = vcmp.gt.f32.partialorder %v307, 0.0
      %vm316 = vcmp.gt.f32.partialorder %v308, 0.0
      %v317 = vmin.f32 %v301, 0.0
      %v318 = vmin.f32 %v302, 0.0
      %v319 = vmin.f32 %v303, 0.0
      %v320 = vmin.f32 %v304, 0.0
      %v321 = vmin.f32 %v305, 0.0
      %v322 = vmin.f32 %v306, 0.0
      %v323 = vmin.f32 %v307, 0.0
      %v324 = vmin.f32 %v308, 0.0
      %v325 = vmul.f32 %v317, 1.442695
      %v326 = vpow.pop %v325
      %v327 = vmul.f32 %v318, 1.442695
      %v328 = vpow.pop %v327
      %v329 = vmul.f32 %v319, 1.442695
      %v330 = vpow.pop %v329
      %v331 = vmul.f32 %v320, 1.442695
      %v332 = vpow.pop %v331
      %v333 = vmul.f32 %v321, 1.442695
      %v334 = vpow.pop %v333
      %v335 = vmul.f32 %v322, 1.442695
      %v336 = vpow.pop %v335
      %v337 = vmul.f32 %v323, 1.442695
      %v338 = vpow.pop %v337
      %v339 = vmul.f32 %v324, 1.442695
      %v340 = vpow.pop %v339
      %v341 = vsub.f32 %v326, 1.0
      %v342 = vsub.f32 %v328, 1.0
      %v343 = vsub.f32 %v330, 1.0
      %v344 = vsub.f32 %v332, 1.0
      %v345 = vsub.f32 %v334, 1.0
      %v346 = vsub.f32 %v336, 1.0
      %v347 = vsub.f32 %v338, 1.0
      %v348 = vsub.f32 %v340, 1.0
      %v349 = vsel %vm309, %v301, %v341
      %v350 = vsel %vm310, %v302, %v342
      %v351 = vsel %vm311, %v303, %v343
      %v352 = vsel %vm312, %v304, %v344
      %v353 = vsel %vm313, %v305, %v345
      %v354 = vsel %vm314, %v306, %v346
      %v355 = vsel %vm315, %v307, %v347
      %v356 = vsel %vm316, %v308, %v348
      %v357 = vld [vmem:[%s4] sm:$0xff]
      %v358 = vld [vmem:[%s4 + $0x8] sm:$0xff]
      %v359 = vld [vmem:[%s4 + $0x10] sm:$0xff]
      %v360 = vld [vmem:[%s4 + $0x18] sm:$0xff]
      %v361 = vld [vmem:[%s4 + $0x20] sm:$0xff]
      %v362 = vld [vmem:[%s4 + $0x28] sm:$0xff]
      %v363 = vld [vmem:[%s4 + $0x30] sm:$0xff]
      %v364 = vld [vmem:[%s4 + $0x38] sm:$0xff]
      %v365 = vld [vmem:[%s4 + $0x40] sm:$0xff]
      %v366 = vld [vmem:[%s4 + $0x48] sm:$0xff]
      %v367 = vld [vmem:[%s4 + $0x50] sm:$0xff]
      %v368 = vld [vmem:[%s4 + $0x58] sm:$0xff]
      %v369 = vld [vmem:[%s4 + $0x60] sm:$0xff]
      %v370 = vld [vmem:[%s4 + $0x68] sm:$0xff]
      %v371 = vld [vmem:[%s4 + $0x70] sm:$0xff]
      %v372 = vld [vmem:[%s4 + $0x78] sm:$0xff]
      %v373 = vld [vmem:[%s5] sm:$0x1]
      %v375 = vperm.slane %v373, 0
      %377 = vmatpush.msra.mxu0 %v372
      %378 = vmatpush.msra.mxu0 %v371
      %379 = vmatpush.msra.mxu0 %v370
      %380 = vmatpush.msra.mxu0 %v369
      %381 = vmatpush.msra.mxu0 %v368
      %382 = vmatpush.msra.mxu0 %v367
      %383 = vmatpush.msra.mxu0 %v366
      %384 = vmatpush.msra.mxu0 %v365
      %385 = vmatpush.msra.mxu0 %v364
      %386 = vmatpush.msra.mxu0 %v363
      %387 = vmatpush.msra.mxu0 %v362
      %388 = vmatpush.msra.mxu0 %v361
      %389 = vmatpush.msra.mxu0 %v360
      %390 = vmatpush.msra.mxu0 %v359
      %391 = vmatpush.msra.mxu0 %v358
      %392 = vmatpush.msra.mxu0 %v357
      %393 = vmatmul.f32.gmra.mxu0 %v349
      %v394 = vpop.f32.mrf.mxu0
      %v395 = vadd.f32 %v375, %v394
      %396 = vmatmul.f32.gmra.mxu0 %v350
      %v397 = vpop.f32.mrf.mxu0
      %v398 = vadd.f32 %v375, %v397
      %399 = vmatmul.f32.gmra.mxu0 %v351
      %v400 = vpop.f32.mrf.mxu0
      %v401 = vadd.f32 %v375, %v400
      %402 = vmatmul.f32.gmra.mxu0 %v352
      %v403 = vpop.f32.mrf.mxu0
      %v404 = vadd.f32 %v375, %v403
      %405 = vmatmul.f32.gmra.mxu0 %v353
      %v406 = vpop.f32.mrf.mxu0
      %v407 = vadd.f32 %v375, %v406
      %408 = vmatmul.f32.gmra.mxu0 %v354
      %v409 = vpop.f32.mrf.mxu0
      %v410 = vadd.f32 %v375, %v409
      %411 = vmatmul.f32.gmra.mxu0 %v355
      %v412 = vpop.f32.mrf.mxu0
      %v413 = vadd.f32 %v375, %v412
      %414 = vmatmul.f32.gmra.mxu0 %v356
      %v415 = vpop.f32.mrf.mxu0
      %v416 = vadd.f32 %v375, %v415
      %417 = vdwg.mxu0
      %vm418 = vcmp.gt.f32.partialorder %v395, 0.0
      %vm419 = vcmp.gt.f32.partialorder %v398, 0.0
      %vm420 = vcmp.gt.f32.partialorder %v401, 0.0
      %vm421 = vcmp.gt.f32.partialorder %v404, 0.0
      %vm422 = vcmp.gt.f32.partialorder %v407, 0.0
      %vm423 = vcmp.gt.f32.partialorder %v410, 0.0
      %vm424 = vcmp.gt.f32.partialorder %v413, 0.0
      %vm425 = vcmp.gt.f32.partialorder %v416, 0.0
      %v426 = vmin.f32 %v395, 0.0
      %v427 = vmin.f32 %v398, 0.0
      %v428 = vmin.f32 %v401, 0.0
      %v429 = vmin.f32 %v404, 0.0
      %v430 = vmin.f32 %v407, 0.0
      %v431 = vmin.f32 %v410, 0.0
      %v432 = vmin.f32 %v413, 0.0
      %v433 = vmin.f32 %v416, 0.0
      %v434 = vmul.f32 %v426, 1.442695
      %v435 = vpow.pop %v434
      %v436 = vmul.f32 %v427, 1.442695
      %v437 = vpow.pop %v436
      %v438 = vmul.f32 %v428, 1.442695
      %v439 = vpow.pop %v438
      %v440 = vmul.f32 %v429, 1.442695
      %v441 = vpow.pop %v440
      %v442 = vmul.f32 %v430, 1.442695
      %v443 = vpow.pop %v442
      %v444 = vmul.f32 %v431, 1.442695
      %v445 = vpow.pop %v444
      %v446 = vmul.f32 %v432, 1.442695
      %v447 = vpow.pop %v446
      %v448 = vmul.f32 %v433, 1.442695
      %v449 = vpow.pop %v448
      %v450 = vsub.f32 %v435, 1.0
      %v451 = vsub.f32 %v437, 1.0
      %v452 = vsub.f32 %v439, 1.0
      %v453 = vsub.f32 %v441, 1.0
      %v454 = vsub.f32 %v443, 1.0
      %v455 = vsub.f32 %v445, 1.0
      %v456 = vsub.f32 %v447, 1.0
      %v457 = vsub.f32 %v449, 1.0
      %v458 = vsel %vm418, %v395, %v450
      %v459 = vsel %vm419, %v398, %v451
      %v460 = vsel %vm420, %v401, %v452
      %v461 = vsel %vm421, %v404, %v453
      %v462 = vsel %vm422, %v407, %v454
      %v463 = vsel %vm423, %v410, %v455
      %v464 = vsel %vm424, %v413, %v456
      %v465 = vsel %vm425, %v416, %v457
      %v466 = vld [vmem:[%s269] sm:$0xff]
      %v467 = vld [vmem:[%s269 + $0x8] sm:$0xff]
      %v468 = vld [vmem:[%s269 + $0x10] sm:$0xff]
      %v469 = vld [vmem:[%s269 + $0x18] sm:$0xff]
      %v470 = vld [vmem:[%s269 + $0x20] sm:$0xff]
      %v471 = vld [vmem:[%s269 + $0x28] sm:$0xff]
      %v472 = vld [vmem:[%s269 + $0x30] sm:$0xff]
      %v473 = vld [vmem:[%s269 + $0x38] sm:$0xff]
      %v474 = vmul.f32 %v458, %v466
      %v475 = vmul.f32 %v459, %v467
      %v476 = vmul.f32 %v460, %v468
      %v477 = vmul.f32 %v461, %v469
      %v478 = vmul.f32 %v462, %v470
      %v479 = vmul.f32 %v463, %v471
      %v480 = vmul.f32 %v464, %v472
      %v481 = vmul.f32 %v465, %v473
      %v482 = vpack.c.bf16 %v474, %v474
      %v483 = vpack.c.bf16 %v475, %v475
      %v484 = vpack.c.bf16 %v476, %v476
      %v485 = vpack.c.bf16 %v477, %v477
      %v486 = vpack.c.bf16 %v478, %v478
      %v487 = vpack.c.bf16 %v479, %v479
      %v488 = vpack.c.bf16 %v480, %v480
      %v489 = vpack.c.bf16 %v481, %v481
      %490 = vst [vmem:[%s275] sm:$0xf] %v482
      %491 = vst [vmem:[%s275 + $0x4] sm:$0xf] %v483
      %492 = vst [vmem:[%s275 + $0x8] sm:$0xf] %v484
      %493 = vst [vmem:[%s275 + $0xc] sm:$0xf] %v485
      %494 = vst [vmem:[%s275 + $0x10] sm:$0xf] %v486
      %495 = vst [vmem:[%s275 + $0x14] sm:$0xf] %v487
      %496 = vst [vmem:[%s275 + $0x18] sm:$0xf] %v488
      %497 = vst [vmem:[%s275 + $0x1c] sm:$0xf] %v489
      %s498 = smul.u32 8, %s17
      %p499 = scmp.lt.s32.totalorder %s498, 31
      %s500 = scalar_select %p499, %s498, 31
      %s501 = smul.addr %s500, 4
      %s502 = scalar_lea.vmem %s6, %s501
      // Predicated region
      $region45: #{output_transition_edge_forward.5} parent=43 // pred_check
        %p503 = pneg %p171
      $region46: #{output_transition_edge_forward.5} parent=43 // pred_check_branch
        %505 = sbr.rel (%p503) target = $region48
      $region47: #{output_transition_edge_forward.5} parent=43 // pred_region
        %s506 = smul.u32 8, %s17
      $region48: #{output_transition_edge_forward.5} parent=43 // pred_fallthru
        _
    $region44: #{output_transition_edge_forward.5} parent=5 // pred_fallthru
      _
    %p507 = scmp.le.s32.totalorder 2, %s12
    // Predicated region
    $region49: #{output_transition_edge_forward.5} parent=5 // pred_check
      %p508 = pneg %p507
    $region50: #{output_transition_edge_forward.5} parent=5 // pred_check_branch
      %510 = sbr.rel (%p508) target = $region52
    $region51: #{output_transition_edge_forward.5} parent=5 // pred_region
      %s511 = ssub.s32 %s12, 2
      // Predicated region
      $region53: #{output_transition_edge_forward.5} parent=51 // pred_check
        %p512 = pneg %p177
      $region54: #{output_transition_edge_forward.5} parent=51 // pred_check_branch
        %514 = sbr.rel (%p512) target = $region56
      $region55: #{output_transition_edge_forward.5} parent=51 // pred_region
        %s515 = smul.u32 8, %s18
        %p516 = scmp.lt.s32.totalorder %s515, 31
        %s517 = scalar_select %p516, %s515, 31
        %s518 = smul.addr %s517, 4
        %s519 = scalar_lea.vmem %s6, %s518
      $region56: #{output_transition_edge_forward.5} parent=51 // pred_fallthru
        _
    $region52: #{output_transition_edge_forward.5} parent=5 // pred_fallthru
      _
  $region6: #{output_transition_edge_forward.5} parent=0 // loop_footer
    %s16 = sadd.s32 1, %s12
  $region7: #{output_transition_edge_forward.5} parent=0 // loop_footer_branch
    %11 = sbr.rel target = $region3
  $region8: #{output_transition_edge_forward.5} parent=0 // loop_exit
    _

// kernel: tile.38
$region0: #{tile.38}
  #allocation0 [shape = 's32[1]{0}', space=sflag, size = 0x4, scoped, tag = 'scoped memory for tile.38']
  %s0 = inlined_call_operand.vmem [shape: f32[4], index: 0, kind: input, shape index: {}]
  %s1 = inlined_call_operand.vmem [shape: f32[8,4], index: 1, kind: output, shape index: {}]
  // Predicated region
  $region2: #{tile.38} parent=0 // pred_check
    _
  $region3: #{tile.38} parent=0 // pred_check_branch
    %3 = sbr.rel (0) target = $region5
  $region4: #{tile.38} parent=0 // pred_region
    _
  $region5: #{tile.38} parent=0 // pred_fallthru
    _
  %v4 = vld [vmem:[%s0] ss:$0 sm:$0xff]
  %5 = vst [vmem:[%s1] sm:$0xff] %v4

// kernel: tile.39
$region0: #{tile.39}
  %s0 = inlined_call_operand.vmem [shape: f32[8,4], index: 0, kind: input, shape index: {}]
  %s1 = inlined_call_operand.vmem [shape: f32[1,32], index: 1, kind: output, shape index: {}]
  $region1: #{tile.39} parent=0
    #allocation0 [shape = 'u8[4096]{0}', space=vmem, size = 0x1000, scoped, tag = 'scoped mem for output reshape']
    %v2 = vld [vmem:[%s0] sm:$0x1]
    %vm3 = vcmask 31744
    %4 = vst.msk [vmem:[#allocation0] sm:$0x1] %vm3, %v2
    %s5 = scalar_lea.vmem %s0, 7
    %v6 = vld [vmem:[%s5] sm:$0x1]
    %7 = vrot.lane.b32.xlu0 %v6, 28
    %v8 = vpop.permute.xlu0 %7
    %vm9 = vcmask 261344
    %10 = vst.msk [vmem:[#allocation0] sm:$0x1] %vm9, %v8
    %s11 = scalar_lea.vmem %s0, 6
    %v12 = vld [vmem:[%s11] sm:$0x1]
    %13 = vrot.lane.b32.xlu0 %v12, 24
    %v14 = vpop.permute.xlu0 %13
    %vm15 = vcmask 228544
    %16 = vst.msk [vmem:[#allocation0] sm:$0x1] %vm15, %v14
    %s17 = scalar_lea.vmem %s0, 5
    %v18 = vld [vmem:[%s17] sm:$0x1]
    %19 = vrot.lane.b32.xlu0 %v18, 20
    %v20 = vpop.permute.xlu0 %19
    %vm21 = vcmask 195744
    %22 = vst.msk [vmem:[#allocation0] sm:$0x1] %vm21, %v20
    %s23 = scalar_lea.vmem %s0, 4
    %v24 = vld [vmem:[%s23] sm:$0x1]
    %25 = vrot.lane.b32.xlu0 %v24, 16
    %v26 = vpop.permute.xlu0 %25
    %vm27 = vcmask 162944
    %28 = vst.msk [vmem:[#allocation0] sm:$0x1] %vm27, %v26
    %s29 = scalar_lea.vmem %s0, 3
    %v30 = vld [vmem:[%s29] sm:$0x1]
    %31 = vrot.lane.b32.xlu0 %v30, 12
    %v32 = vpop.permute.xlu0 %31
    %vm33 = vcmask 130144
    %34 = vst.msk [vmem:[#allocation0] sm:$0x1] %vm33, %v32
    %s35 = scalar_lea.vmem %s0, 2
    %v36 = vld [vmem:[%s35] sm:$0x1]
    %37 = vrot.lane.b32.xlu0 %v36, 8
    %v38 = vpop.permute.xlu0 %37
    %vm39 = vcmask 97344
    %40 = vst.msk [vmem:[#allocation0] sm:$0x1] %vm39, %v38
    %s41 = scalar_lea.vmem %s0, 1
    %v42 = vld [vmem:[%s41] sm:$0x1]
    %43 = vrot.lane.b32.xlu0 %v42, 4
    %v44 = vpop.permute.xlu0 %43
    %vm45 = vcmask 64544
    %46 = vst.msk [vmem:[#allocation0] sm:$0x1] %vm45, %v44
    %s48 = ssub.s32 2, 1
    %v49 = vld [vmem:[#allocation0] sm:%s48]
    %s51 = ssub.s32 2, 1
    %52 = vst [vmem:[%s1] sm:%s51] %v49

// kernel: output_transition_edge_forward.7
$region0: #{output_transition_edge_forward.7}
  #allocation0 [shape = 'u32[]', space=smem, size = 0x4, offset = 0x4, fixed_abs, tag = 'smem constant byte address 0x4 - core index']
  #allocation1 [shape = 'u32[72,128]{1,0:T(1,128)}', space=vmem, size = 0x9000, scoped, tag = 'internal scratch']
  %s0 = inlined_call_operand.vmem [shape: f32[256,128], index: 0, kind: input, shape index: {}]
  %s1 = inlined_call_operand.vmem [shape: f32[256,128], index: 1, kind: input, shape index: {}]
  %s2 = inlined_call_operand.vmem [shape: f32[1,128], index: 2, kind: input, shape index: {}]
  %s3 = inlined_call_operand.vmem [shape: f32[1,128], index: 3, kind: input, shape index: {}]
  %s4 = inlined_call_operand.vmem [shape: f32[128,32], index: 4, kind: input, shape index: {}]
  %s5 = inlined_call_operand.vmem [shape: f32[1,32], index: 5, kind: input, shape index: {}]
  %s6 = inlined_call_operand.vmem [shape: f32[256,32], index: 6, kind: output, shape index: {}]
  %s7 = sld [smem:[#allocation0]]
  $region57: #{output_transition_edge_forward.7} parent=0
    _
  %s9 = ssub.s32 1, %s7
  %s10 = scalar_select 0, %s9, %s7
  loop: start=0, step=1, limit=6
  $region2: #{output_transition_edge_forward.7} parent=0 // loop_pre_header
    _
  $region3: #{output_transition_edge_forward.7} parent=0 // loop_header
    %s12 = sphi 0, %s16
    %p13 = scmp.ge.s32.totalorder %s12, 6
    %s22 = sphi 0, %s24
    %s25 = sphi 0, %s22
    %s26 = sphi 0, %s25
    %s42 = sphi 0, %s26
    %s48 = sphi 0, %s50
    %s51 = sphi 0, %s48
    %s52 = sphi 0, %s51
    %s68 = sphi 0, %s52
    %s72 = sphi 0, %s72
    %s74 = sphi 0, %s72
    %s75 = sphi 0, %s74
    %s89 = sphi 0, %s75
    %s93 = sphi 0, %s93
    %s95 = sphi 0, %s93
    %s96 = sphi 0, %s95
    %s110 = sphi 0, %s96
    %s114 = sphi 0, %s114
    %s116 = sphi 0, %s114
    %s117 = sphi 0, %s116
    %s131 = sphi 0, %s117
    %s135 = sphi 0, %s135
    %s137 = sphi 0, %s135
    %s138 = sphi 0, %s137
    %s152 = sphi 0, %s138
    %s158 = sphi 0, %s160
    %s161 = sphi 0, %s158
    %s162 = sphi 0, %s161
    %s178 = sphi 0, %s162
  $region4: #{output_transition_edge_forward.7} parent=0 // loop_header_branch
    %15 = sbr.rel (%p13) target = $region8
  $region5: #{output_transition_edge_forward.7} parent=0 // loop_body
    %s17 = ssub.s32 %s12, 1
    %s18 = ssub.s32 %s12, 2
    %s19 = sadd.s32 %s12, 1
    %s20 = ssub.s32 %s12, %s19
    %p21 = scmp.eq.s32.totalorder %s20, 0
    %s23 = sadd.s32 %s22, 1
    %s24 = scalar_select %p21, %s22, %s23
    %p27 = pneg %p21
    %p28 = scmp.eq.s32.totalorder %s12, 3
    %p29 = por %p27, %p28
    %p30 = scmp.ne.s32.totalorder %s22, %s25
    %p31 = scmp.eq.s32.totalorder %s12, 0
    %p32 = por %p30, %p31
    %p33 = scmp.ne.s32.totalorder %s22, %s25
    %p34 = scmp.eq.s32.totalorder %s17, 3
    %p35 = por %p33, %p34
    %p36 = scmp.ne.s32.totalorder %s25, %s26
    %p37 = scmp.eq.s32.totalorder %s17, 0
    %p38 = por %p36, %p37
    %p39 = scmp.ne.s32.totalorder %s25, %s26
    %p40 = scmp.eq.s32.totalorder %s18, 3
    %p41 = por %p39, %p40
    %p43 = scmp.ne.s32.totalorder %s26, %s42
    %p44 = scmp.eq.s32.totalorder %s18, 0
    %p45 = por %p43, %p44
    %s46 = ssub.s32 %s12, %s19
    %p47 = scmp.eq.s32.totalorder %s46, 0
    %s49 = sadd.s32 %s48, 1
    %s50 = scalar_select %p47, %s48, %s49
    %p53 = pneg %p47
    %p54 = scmp.eq.s32.totalorder %s12, 3
    %p55 = por %p53, %p54
    %p56 = scmp.ne.s32.totalorder %s48, %s51
    %p57 = scmp.eq.s32.totalorder %s12, 0
    %p58 = por %p56, %p57
    %p59 = scmp.ne.s32.totalorder %s48, %s51
    %p60 = scmp.eq.s32.totalorder %s17, 3
    %p61 = por %p59, %p60
    %p62 = scmp.ne.s32.totalorder %s51, %s52
    %p63 = scmp.eq.s32.totalorder %s17, 0
    %p64 = por %p62, %p63
    %p65 = scmp.ne.s32.totalorder %s51, %s52
    %p66 = scmp.eq.s32.totalorder %s18, 3
    %p67 = por %p65, %p66
    %p69 = scmp.ne.s32.totalorder %s52, %s68
    %p70 = scmp.eq.s32.totalorder %s18, 0
    %p71 = por %p69, %p70
    %s73 = sadd.s32 %s72, 1
    %p76 = scmp.eq.s32.totalorder %s12, 3
    %p77 = scmp.ne.s32.totalorder %s72, %s74
    %p78 = scmp.eq.s32.totalorder %s12, 0
    %p79 = por %p77, %p78
    %p80 = scmp.ne.s32.totalorder %s72, %s74
    %p81 = scmp.eq.s32.totalorder %s17, 3
    %p82 = por %p80, %p81
    %p83 = scmp.ne.s32.totalorder %s74, %s75
    %p84 = scmp.eq.s32.totalorder %s17, 0
    %p85 = por %p83, %p84
    %p86 = scmp.ne.s32.totalorder %s74, %s75
    %p87 = scmp.eq.s32.totalorder %s18, 3
    %p88 = por %p86, %p87
    %p90 = scmp.ne.s32.totalorder %s75, %s89
    %p91 = scmp.eq.s32.totalorder %s18, 0
    %p92 = por %p90, %p91
    %s94 = sadd.s32 %s93, 1
    %p97 = scmp.eq.s32.totalorder %s12, 3
    %p98 = scmp.ne.s32.totalorder %s93, %s95
    %p99 = scmp.eq.s32.totalorder %s12, 0
    %p100 = por %p98, %p99
    %p101 = scmp.ne.s32.totalorder %s93, %s95
    %p102 = scmp.eq.s32.totalorder %s17, 3
    %p103 = por %p101, %p102
    %p104 = scmp.ne.s32.totalorder %s95, %s96
    %p105 = scmp.eq.s32.totalorder %s17, 0
    %p106 = por %p104, %p105
    %p107 = scmp.ne.s32.totalorder %s95, %s96
    %p108 = scmp.eq.s32.totalorder %s18, 3
    %p109 = por %p107, %p108
    %p111 = scmp.ne.s32.totalorder %s96, %s110
    %p112 = scmp.eq.s32.totalorder %s18, 0
    %p113 = por %p111, %p112
    %s115 = sadd.s32 %s114, 1
    %p118 = scmp.eq.s32.totalorder %s12, 3
    %p119 = scmp.ne.s32.totalorder %s114, %s116
    %p120 = scmp.eq.s32.totalorder %s12, 0
    %p121 = por %p119, %p120
    %p122 = scmp.ne.s32.totalorder %s114, %s116
    %p123 = scmp.eq.s32.totalorder %s17, 3
    %p124 = por %p122, %p123
    %p125 = scmp.ne.s32.totalorder %s116, %s117
    %p126 = scmp.eq.s32.totalorder %s17, 0
    %p127 = por %p125, %p126
    %p128 = scmp.ne.s32.totalorder %s116, %s117
    %p129 = scmp.eq.s32.totalorder %s18, 3
    %p130 = por %p128, %p129
    %p132 = scmp.ne.s32.totalorder %s117, %s131
    %p133 = scmp.eq.s32.totalorder %s18, 0
    %p134 = por %p132, %p133
    %s136 = sadd.s32 %s135, 1
    %p139 = scmp.eq.s32.totalorder %s12, 3
    %p140 = scmp.ne.s32.totalorder %s135, %s137
    %p141 = scmp.eq.s32.totalorder %s12, 0
    %p142 = por %p140, %p141
    %p143 = scmp.ne.s32.totalorder %s135, %s137
    %p144 = scmp.eq.s32.totalorder %s17, 3
    %p145 = por %p143, %p144
    %p146 = scmp.ne.s32.totalorder %s137, %s138
    %p147 = scmp.eq.s32.totalorder %s17, 0
    %p148 = por %p146, %p147
    %p149 = scmp.ne.s32.totalorder %s137, %s138
    %p150 = scmp.eq.s32.totalorder %s18, 3
    %p151 = por %p149, %p150
    %p153 = scmp.ne.s32.totalorder %s138, %s152
    %p154 = scmp.eq.s32.totalorder %s18, 0
    %p155 = por %p153, %p154
    %s156 = ssub.s32 %s12, %s19
    %p157 = scmp.eq.s32.totalorder %s156, 0
    %s159 = sadd.s32 %s158, 1
    %s160 = scalar_select %p157, %s158, %s159
    %p163 = pneg %p157
    %p164 = scmp.eq.s32.totalorder %s12, 3
    %p165 = por %p163, %p164
    %p166 = scmp.ne.s32.totalorder %s158, %s161
    %p167 = scmp.eq.s32.totalorder %s12, 0
    %p168 = por %p166, %p167
    %p169 = scmp.ne.s32.totalorder %s158, %s161
    %p170 = scmp.eq.s32.totalorder %s17, 3
    %p171 = por %p169, %p170
    %p172 = scmp.ne.s32.totalorder %s161, %s162
    %p173 = scmp.eq.s32.totalorder %s17, 0
    %p174 = por %p172, %p173
    %p175 = scmp.ne.s32.totalorder %s161, %s162
    %p176 = scmp.eq.s32.totalorder %s18, 3
    %p177 = por %p175, %p176
    %p179 = scmp.ne.s32.totalorder %s162, %s178
    %p180 = scmp.eq.s32.totalorder %s18, 0
    %p181 = por %p179, %p180
    %p182 = scmp.le.s32.totalorder 1, %s12
    %p183 = scmp.lt.s32.totalorder %s12, 5
    %p184 = pnand %p182, %p183
    %p185 = pneg %p184
    // Predicated region
    $region9: #{output_transition_edge_forward.7} parent=5 // pred_check
      _
    $region10: #{output_transition_edge_forward.7} parent=5 // pred_check_branch
      %187 = sbr.rel (%p184) target = $region12
    $region11: #{output_transition_edge_forward.7} parent=5 // pred_region
      %s188 = ssub.s32 %s12, 1
      // Predicated region
      $region13: #{output_transition_edge_forward.7} parent=11 // pred_check
        %p189 = pneg %p85
      $region14: #{output_transition_edge_forward.7} parent=11 // pred_check_branch
        %191 = sbr.rel (%p189) target = $region16
      $region15: #{output_transition_edge_forward.7} parent=11 // pred_region
        _
      $region16: #{output_transition_edge_forward.7} parent=11 // pred_fallthru
        _
      // Predicated region
      $region17: #{output_transition_edge_forward.7} parent=11 // pred_check
        %p192 = pneg %p106
      $region18: #{output_transition_edge_forward.7} parent=11 // pred_check_branch
        %194 = sbr.rel (%p192) target = $region20
      $region19: #{output_transition_edge_forward.7} parent=11 // pred_region
        _
      $region20: #{output_transition_edge_forward.7} parent=11 // pred_fallthru
        _
      // Predicated region
      $region21: #{output_transition_edge_forward.7} parent=11 // pred_check
        %p195 = pneg %p127
      $region22: #{output_transition_edge_forward.7} parent=11 // pred_check_branch
        %197 = sbr.rel (%p195) target = $region24
      $region23: #{output_transition_edge_forward.7} parent=11 // pred_region
        _
      $region24: #{output_transition_edge_forward.7} parent=11 // pred_fallthru
        _
      // Predicated region
      $region25: #{output_transition_edge_forward.7} parent=11 // pred_check
        %p198 = pneg %p148
      $region26: #{output_transition_edge_forward.7} parent=11 // pred_check_branch
        %200 = sbr.rel (%p198) target = $region28
      $region27: #{output_transition_edge_forward.7} parent=11 // pred_region
        _
      $region28: #{output_transition_edge_forward.7} parent=11 // pred_fallthru
        _
    $region12: #{output_transition_edge_forward.7} parent=5 // pred_fallthru
      _
    %p201 = scmp.lt.s32.totalorder %s12, 4
    // Predicated region
    $region29: #{output_transition_edge_forward.7} parent=5 // pred_check
      %p202 = pneg %p201
    $region30: #{output_transition_edge_forward.7} parent=5 // pred_check_branch
      %204 = sbr.rel (%p202) target = $region32
    $region31: #{output_transition_edge_forward.7} parent=5 // pred_region
      // Predicated region
      $region33: #{output_transition_edge_forward.7} parent=31 // pred_check
        %p205 = pneg %p32
      $region34: #{output_transition_edge_forward.7} parent=31 // pred_check_branch
        %207 = sbr.rel (%p205) target = $region36
      $region35: #{output_transition_edge_forward.7} parent=31 // pred_region
        %s208 = smul.u32 8, %s12
        %p209 = scmp.lt.s32.totalorder %s208, 31
        %s210 = scalar_select %p209, %s208, 31
        %s211 = smul.addr %s210, 8
        %s212 = scalar_lea.vmem %s0, %s211
        %s213 = smul.u32 8, %s12
      $region36: #{output_transition_edge_forward.7} parent=31 // pred_fallthru
        _
      // Predicated region
      $region37: #{output_transition_edge_forward.7} parent=31 // pred_check
        %p214 = pneg %p58
      $region38: #{output_transition_edge_forward.7} parent=31 // pred_check_branch
        %216 = sbr.rel (%p214) target = $region40
      $region39: #{output_transition_edge_forward.7} parent=31 // pred_region
        %s217 = smul.u32 8, %s12
        %p218 = scmp.lt.s32.totalorder %s217, 31
        %s219 = scalar_select %p218, %s217, 31
        %s220 = smul.addr %s219, 8
        %s221 = scalar_lea.vmem %s1, %s220
        %s222 = smul.u32 8, %s12
      $region40: #{output_transition_edge_forward.7} parent=31 // pred_fallthru
        _
    $region32: #{output_transition_edge_forward.7} parent=5 // pred_fallthru
      _
    %p223 = scmp.le.s32.totalorder 1, %s12
    %p224 = scmp.lt.s32.totalorder %s12, 5
    %p225 = pnand %p223, %p224
    %p226 = pneg %p225
    // Predicated region
    $region41: #{output_transition_edge_forward.7} parent=5 // pred_check
      _
    $region42: #{output_transition_edge_forward.7} parent=5 // pred_check_branch
      %228 = sbr.rel (%p225) target = $region44
    $region43: #{output_transition_edge_forward.7} parent=5 // pred_region
      %s229 = ssub.s32 %s12, 1
      %s230 = smul.u32 8, %s17
      %p231 = scmp.lt.s32.totalorder %s230, 31
      %s232 = scalar_select %p231, %s230, 31
      %s233 = smul.addr %s232, 8
      %s234 = scalar_lea.vmem %s0, %s233
      %p235 = pneg %p38
      %p236 = pneg %p35
      %s237 = smul.u32 8, %s17
      %p238 = scmp.lt.s32.totalorder %s237, 31
      %s239 = scalar_select %p238, %s237, 31
      %s240 = smul.addr %s239, 8
      %s241 = scalar_lea.vmem %s1, %s240
      %p242 = pneg %p64
      %p243 = pneg %p61
      %p244 = pneg %p85
      %p245 = pneg %p82
      %p246 = pneg %p106
      %p247 = pneg %p103
      %p248 = pneg %p127
      %p249 = pneg %p124
      %p250 = pneg %p148
      %p251 = pneg %p145
      %p252 = pneg %p174
      %p253 = pneg %p171
      %s254 = smul.u32 8, %s17
      %p255 = scmp.lt.s32.totalorder %s254, 31
      %s256 = scalar_select %p255, %s254, 31
      %s257 = smul.addr %s256, 8
      %s258 = scalar_lea.vmem %s6, %s257
      %s259 = smul.u32 8, %s17
      %p260 = scmp.lt.s32.totalorder %s259, 31
      %s261 = scalar_select %p260, %s259, 31
      %s262 = smul.addr %s261, 8
      %s263 = scalar_lea.vmem %s0, %s262
      %s264 = smul.u32 8, %s17
      %s265 = smul.u32 8, %s17
      %p266 = scmp.lt.s32.totalorder %s265, 31
      %s267 = scalar_select %p266, %s265, 31
      %s268 = smul.addr %s267, 8
      %s269 = scalar_lea.vmem %s1, %s268
      %s270 = smul.u32 8, %s17
      %s271 = smul.u32 8, %s17
      %p272 = scmp.lt.s32.totalorder %s271, 31
      %s273 = scalar_select %p272, %s271, 31
      %s274 = smul.addr %s273, 8
      %s275 = scalar_lea.vmem %s6, %s274
      %s276 = smul.u32 8, %s17
      %v277 = vld [vmem:[%s263] sm:$0xff]
      %v278 = vld [vmem:[%s263 + $0x8] sm:$0xff]
      %v279 = vld [vmem:[%s263 + $0x10] sm:$0xff]
      %v280 = vld [vmem:[%s263 + $0x18] sm:$0xff]
      %v281 = vld [vmem:[%s263 + $0x20] sm:$0xff]
      %v282 = vld [vmem:[%s263 + $0x28] sm:$0xff]
      %v283 = vld [vmem:[%s263 + $0x30] sm:$0xff]
      %v284 = vld [vmem:[%s263 + $0x38] sm:$0xff]
      %v285 = vld [vmem:[%s2] sm:$0x1]
      %v287 = vperm.slane %v285, 0
      %v289 = vmul.f32 %v277, %v287
      %v290 = vmul.f32 %v278, %v287
      %v291 = vmul.f32 %v279, %v287
      %v292 = vmul.f32 %v280, %v287
      %v293 = vmul.f32 %v281, %v287
      %v294 = vmul.f32 %v282, %v287
      %v295 = vmul.f32 %v283, %v287
      %v296 = vmul.f32 %v284, %v287
      %v297 = vld [vmem:[%s3] sm:$0x1]
      %v299 = vperm.slane %v297, 0
      %v301 = vadd.f32 %v289, %v299
      %v302 = vadd.f32 %v290, %v299
      %v303 = vadd.f32 %v291, %v299
      %v304 = vadd.f32 %v292, %v299
      %v305 = vadd.f32 %v293, %v299
      %v306 = vadd.f32 %v294, %v299
      %v307 = vadd.f32 %v295, %v299
      %v308 = vadd.f32 %v296, %v299
      %vm309 = vcmp.gt.f32.partialorder %v301, 0.0
      %vm310 = vcmp.gt.f32.partialorder %v302, 0.0
      %vm311 = vcmp.gt.f32.partialorder %v303, 0.0
      %vm312 = vcmp.gt.f32.partialorder %v304, 0.0
      %vm313 = vcmp.gt.f32.partialorder %v305, 0.0
      %vm314 = vcmp.gt.f32.partialorder %v306, 0.0
      %vm315 = vcmp.gt.f32.partialorder %v307, 0.0
      %vm316 = vcmp.gt.f32.partialorder %v308, 0.0
      %v317 = vmin.f32 %v301, 0.0
      %v318 = vmin.f32 %v302, 0.0
      %v319 = vmin.f32 %v303, 0.0
      %v320 = vmin.f32 %v304, 0.0
      %v321 = vmin.f32 %v305, 0.0
      %v322 = vmin.f32 %v306, 0.0
      %v323 = vmin.f32 %v307, 0.0
      %v324 = vmin.f32 %v308, 0.0
      %v325 = vmul.f32 %v317, 1.442695
      %v326 = vpow.pop %v325
      %v327 = vmul.f32 %v318, 1.442695
      %v328 = vpow.pop %v327
      %v329 = vmul.f32 %v319, 1.442695
      %v330 = vpow.pop %v329
      %v331 = vmul.f32 %v320, 1.442695
      %v332 = vpow.pop %v331
      %v333 = vmul.f32 %v321, 1.442695
      %v334 = vpow.pop %v333
      %v335 = vmul.f32 %v322, 1.442695
      %v336 = vpow.pop %v335
      %v337 = vmul.f32 %v323, 1.442695
      %v338 = vpow.pop %v337
      %v339 = vmul.f32 %v324, 1.442695
      %v340 = vpow.pop %v339
      %v341 = vsub.f32 %v326, 1.0
      %v342 = vsub.f32 %v328, 1.0
      %v343 = vsub.f32 %v330, 1.0
      %v344 = vsub.f32 %v332, 1.0
      %v345 = vsub.f32 %v334, 1.0
      %v346 = vsub.f32 %v336, 1.0
      %v347 = vsub.f32 %v338, 1.0
      %v348 = vsub.f32 %v340, 1.0
      %v349 = vsel %vm309, %v301, %v341
      %v350 = vsel %vm310, %v302, %v342
      %v351 = vsel %vm311, %v303, %v343
      %v352 = vsel %vm312, %v304, %v344
      %v353 = vsel %vm313, %v305, %v345
      %v354 = vsel %vm314, %v306, %v346
      %v355 = vsel %vm315, %v307, %v347
      %v356 = vsel %vm316, %v308, %v348
      %v357 = vld [vmem:[%s4] sm:$0xff]
      %v358 = vld [vmem:[%s4 + $0x8] sm:$0xff]
      %v359 = vld [vmem:[%s4 + $0x10] sm:$0xff]
      %v360 = vld [vmem:[%s4 + $0x18] sm:$0xff]
      %v361 = vld [vmem:[%s4 + $0x20] sm:$0xff]
      %v362 = vld [vmem:[%s4 + $0x28] sm:$0xff]
      %v363 = vld [vmem:[%s4 + $0x30] sm:$0xff]
      %v364 = vld [vmem:[%s4 + $0x38] sm:$0xff]
      %v365 = vld [vmem:[%s4 + $0x40] sm:$0xff]
      %v366 = vld [vmem:[%s4 + $0x48] sm:$0xff]
      %v367 = vld [vmem:[%s4 + $0x50] sm:$0xff]
      %v368 = vld [vmem:[%s4 + $0x58] sm:$0xff]
      %v369 = vld [vmem:[%s4 + $0x60] sm:$0xff]
      %v370 = vld [vmem:[%s4 + $0x68] sm:$0xff]
      %v371 = vld [vmem:[%s4 + $0x70] sm:$0xff]
      %v372 = vld [vmem:[%s4 + $0x78] sm:$0xff]
      %v373 = vld [vmem:[%s5] sm:$0x1]
      %v375 = vperm.slane %v373, 0
      %377 = vmatpush.msra.mxu0 %v372
      %378 = vmatpush.msra.mxu0 %v371
      %379 = vmatpush.msra.mxu0 %v370
      %380 = vmatpush.msra.mxu0 %v369
      %381 = vmatpush.msra.mxu0 %v368
      %382 = vmatpush.msra.mxu0 %v367
      %383 = vmatpush.msra.mxu0 %v366
      %384 = vmatpush.msra.mxu0 %v365
      %385 = vmatpush.msra.mxu0 %v364
      %386 = vmatpush.msra.mxu0 %v363
      %387 = vmatpush.msra.mxu0 %v362
      %388 = vmatpush.msra.mxu0 %v361
      %389 = vmatpush.msra.mxu0 %v360
      %390 = vmatpush.msra.mxu0 %v359
      %391 = vmatpush.msra.mxu0 %v358
      %392 = vmatpush.msra.mxu0 %v357
      %393 = vmatmul.f32.gmra.mxu0 %v349
      %v394 = vpop.f32.mrf.mxu0
      %v395 = vadd.f32 %v375, %v394
      %396 = vmatmul.f32.gmra.mxu0 %v350
      %v397 = vpop.f32.mrf.mxu0
      %v398 = vadd.f32 %v375, %v397
      %399 = vmatmul.f32.gmra.mxu0 %v351
      %v400 = vpop.f32.mrf.mxu0
      %v401 = vadd.f32 %v375, %v400
      %402 = vmatmul.f32.gmra.mxu0 %v352
      %v403 = vpop.f32.mrf.mxu0
      %v404 = vadd.f32 %v375, %v403
      %405 = vmatmul.f32.gmra.mxu0 %v353
      %v406 = vpop.f32.mrf.mxu0
      %v407 = vadd.f32 %v375, %v406
      %408 = vmatmul.f32.gmra.mxu0 %v354
      %v409 = vpop.f32.mrf.mxu0
      %v410 = vadd.f32 %v375, %v409
      %411 = vmatmul.f32.gmra.mxu0 %v355
      %v412 = vpop.f32.mrf.mxu0
      %v413 = vadd.f32 %v375, %v412
      %414 = vmatmul.f32.gmra.mxu0 %v356
      %v415 = vpop.f32.mrf.mxu0
      %v416 = vadd.f32 %v375, %v415
      %417 = vdwg.mxu0
      %vm418 = vcmask 261120
      %419 = vst.msk [vmem:[%s275] sm:$0xff] %vm418, %v395
      %420 = vst.msk [vmem:[%s275 + $0x8] sm:$0xff] %vm418, %v398
      %421 = vst.msk [vmem:[%s275 + $0x10] sm:$0xff] %vm418, %v401
      %422 = vst.msk [vmem:[%s275 + $0x18] sm:$0xff] %vm418, %v404
      %423 = vst.msk [vmem:[%s275 + $0x20] sm:$0xff] %vm418, %v407
      %424 = vst.msk [vmem:[%s275 + $0x28] sm:$0xff] %vm418, %v410
      %425 = vst.msk [vmem:[%s275 + $0x30] sm:$0xff] %vm418, %v413
      %426 = vst.msk [vmem:[%s275 + $0x38] sm:$0xff] %vm418, %v416
      %s427 = smul.u32 8, %s17
      %p428 = scmp.lt.s32.totalorder %s427, 31
      %s429 = scalar_select %p428, %s427, 31
      %s430 = smul.addr %s429, 8
      %s431 = scalar_lea.vmem %s6, %s430
      // Predicated region
      $region45: #{output_transition_edge_forward.7} parent=43 // pred_check
        %p432 = pneg %p171
      $region46: #{output_transition_edge_forward.7} parent=43 // pred_check_branch
        %434 = sbr.rel (%p432) target = $region48
      $region47: #{output_transition_edge_forward.7} parent=43 // pred_region
        %s435 = smul.u32 8, %s17
      $region48: #{output_transition_edge_forward.7} parent=43 // pred_fallthru
        _
    $region44: #{output_transition_edge_forward.7} parent=5 // pred_fallthru
      _
    %p436 = scmp.le.s32.totalorder 2, %s12
    // Predicated region
    $region49: #{output_transition_edge_forward.7} parent=5 // pred_check
      %p437 = pneg %p436
    $region50: #{output_transition_edge_forward.7} parent=5 // pred_check_branch
      %439 = sbr.rel (%p437) target = $region52
    $region51: #{output_transition_edge_forward.7} parent=5 // pred_region
      %s440 = ssub.s32 %s12, 2
      // Predicated region
      $region53: #{output_transition_edge_forward.7} parent=51 // pred_check
        %p441 = pneg %p177
      $region54: #{output_transition_edge_forward.7} parent=51 // pred_check_branch
        %443 = sbr.rel (%p441) target = $region56
      $region55: #{output_transition_edge_forward.7} parent=51 // pred_region
        %s444 = smul.u32 8, %s18
        %p445 = scmp.lt.s32.totalorder %s444, 31
        %s446 = scalar_select %p445, %s444, 31
        %s447 = smul.addr %s446, 8
        %s448 = scalar_lea.vmem %s6, %s447
      $region56: #{output_transition_edge_forward.7} parent=51 // pred_fallthru
        _
    $region52: #{output_transition_edge_forward.7} parent=5 // pred_fallthru
      _
  $region6: #{output_transition_edge_forward.7} parent=0 // loop_footer
    %s16 = sadd.s32 1, %s12
  $region7: #{output_transition_edge_forward.7} parent=0 // loop_footer_branch
    %11 = sbr.rel target = $region3
  $region8: #{output_transition_edge_forward.7} parent=0 // loop_exit
    _

// kernel: output_transition_edge_forward.4
$region0: #{output_transition_edge_forward.4}
  #allocation0 [shape = 'u32[]', space=smem, size = 0x4, offset = 0x4, fixed_abs, tag = 'smem constant byte address 0x4 - core index']
  #allocation1 [shape = 'u32[72,128]{1,0:T(1,128)}', space=vmem, size = 0x9000, scoped, tag = 'internal scratch']
  %s0 = inlined_call_operand.vmem [shape: bf16[2048,16], index: 0, kind: input, shape index: {}, may-alias: {0,1,2}]
  %s1 = inlined_call_operand.vmem [shape: bf16[2048,16], index: 1, kind: input, shape index: {}, may-alias: {0,1,2}]
  %s2 = inlined_call_operand.vmem [shape: bf16[2048,16], index: 2, kind: input, shape index: {}, may-alias: {0,1,2}]
  %s3 = inlined_call_operand.vmem [shape: f32[2048,1], index: 3, kind: input, shape index: {}]
  %s4 = inlined_call_operand.vmem [shape: bf16[27,16,16], index: 4, kind: input, shape index: {}]
  %s5 = inlined_call_operand.vmem [shape: f32[2048,16], index: 5, kind: output, shape index: {0}]
  %s6 = inlined_call_operand.vmem [shape: f32[4,2,16], index: 6, kind: output, shape index: {1}]
  %7 = xla_tuple %s5, %s6
  %s8 = sld [smem:[#allocation0]]
  $region61: #{output_transition_edge_forward.4} parent=0
    _
  %s10 = ssub.s32 1, %s8
  %s11 = scalar_select 0, %s10, %s8
  loop: start=0, step=1, limit=6
  $region2: #{output_transition_edge_forward.4} parent=0 // loop_pre_header
    _
  $region3: #{output_transition_edge_forward.4} parent=0 // loop_header
    %s13 = sphi 0, %s17
    %p14 = scmp.ge.s32.totalorder %s13, 6
    %s29 = sphi 0, %s31
    %s32 = sphi 0, %s29
    %s33 = sphi 0, %s32
    %s49 = sphi 0, %s33
    %s55 = sphi 0, %s57
    %s58 = sphi 0, %s55
    %s59 = sphi 0, %s58
    %s75 = sphi 0, %s59
    %s87 = sphi 0, %s89
    %s90 = sphi 0, %s87
    %s91 = sphi 0, %s90
    %s107 = sphi 0, %s91
    %s113 = sphi 0, %s115
    %s116 = sphi 0, %s113
    %s117 = sphi 0, %s116
    %s133 = sphi 0, %s117
    %s137 = sphi 0, %s137
    %s139 = sphi 0, %s137
    %s140 = sphi 0, %s139
    %s154 = sphi 0, %s140
    %s160 = sphi 0, %s162
    %s163 = sphi 0, %s160
    %s164 = sphi 0, %s163
    %s180 = sphi 0, %s164
    %s186 = sphi 0, %s188
    %s189 = sphi 0, %s186
    %s190 = sphi 0, %s189
    %s206 = sphi 0, %s190
  $region4: #{output_transition_edge_forward.4} parent=0 // loop_header_branch
    %16 = sbr.rel (%p14) target = $region8
  $region5: #{output_transition_edge_forward.4} parent=0 // loop_body
    %s18 = ssub.s32 %s13, 1
    %s19 = ssub.s32 %s13, 2
    %s20 = sadd.s32 %s13, 1
    %s21 = ssub.s32 %s13, 1
    %p22 = scmp.gt.s32.totalorder %s21, 0
    %s23 = scalar_select %p22, %s21, 0
    %s24 = ssub.s32 %s20, 1
    %p25 = scmp.gt.s32.totalorder %s24, 0
    %s26 = scalar_select %p25, %s24, 0
    %s27 = ssub.s32 %s23, %s26
    %p28 = scmp.eq.s32.totalorder %s27, 0
    %s30 = sadd.s32 %s29, 1
    %s31 = scalar_select %p28, %s29, %s30
    %p34 = pneg %p28
    %p35 = scmp.eq.s32.totalorder %s13, 3
    %p36 = por %p34, %p35
    %p37 = scmp.ne.s32.totalorder %s29, %s32
    %p38 = scmp.eq.s32.totalorder %s13, 0
    %p39 = por %p37, %p38
    %p40 = scmp.ne.s32.totalorder %s29, %s32
    %p41 = scmp.eq.s32.totalorder %s18, 3
    %p42 = por %p40, %p41
    %p43 = scmp.ne.s32.totalorder %s32, %s33
    %p44 = scmp.eq.s32.totalorder %s18, 0
    %p45 = por %p43, %p44
    %p46 = scmp.ne.s32.totalorder %s32, %s33
    %p47 = scmp.eq.s32.totalorder %s19, 3
    %p48 = por %p46, %p47
    %p50 = scmp.ne.s32.totalorder %s33, %s49
    %p51 = scmp.eq.s32.totalorder %s19, 0
    %p52 = por %p50, %p51
    %s53 = ssub.s32 %s13, %s20
    %p54 = scmp.eq.s32.totalorder %s53, 0
    %s56 = sadd.s32 %s55, 1
    %s57 = scalar_select %p54, %s55, %s56
    %p60 = pneg %p54
    %p61 = scmp.eq.s32.totalorder %s13, 3
    %p62 = por %p60, %p61
    %p63 = scmp.ne.s32.totalorder %s55, %s58
    %p64 = scmp.eq.s32.totalorder %s13, 0
    %p65 = por %p63, %p64
    %p66 = scmp.ne.s32.totalorder %s55, %s58
    %p67 = scmp.eq.s32.totalorder %s18, 3
    %p68 = por %p66, %p67
    %p69 = scmp.ne.s32.totalorder %s58, %s59
    %p70 = scmp.eq.s32.totalorder %s18, 0
    %p71 = por %p69, %p70
    %p72 = scmp.ne.s32.totalorder %s58, %s59
    %p73 = scmp.eq.s32.totalorder %s19, 3
    %p74 = por %p72, %p73
    %p76 = scmp.ne.s32.totalorder %s59, %s75
    %p77 = scmp.eq.s32.totalorder %s19, 0
    %p78 = por %p76, %p77
    %s79 = sadd.s32 %s13, 1
    %p80 = scmp.lt.s32.totalorder %s79, 3
    %s81 = scalar_select %p80, %s79, 3
    %s82 = sadd.s32 %s20, 1
    %p83 = scmp.lt.s32.totalorder %s82, 3
    %s84 = scalar_select %p83, %s82, 3
    %s85 = ssub.s32 %s81, %s84
    %p86 = scmp.eq.s32.totalorder %s85, 0
    %s88 = sadd.s32 %s87, 1
    %s89 = scalar_select %p86, %s87, %s88
    %p92 = pneg %p86
    %p93 = scmp.eq.s32.totalorder %s13, 3
    %p94 = por %p92, %p93
    %p95 = scmp.ne.s32.totalorder %s87, %s90
    %p96 = scmp.eq.s32.totalorder %s13, 0
    %p97 = por %p95, %p96
    %p98 = scmp.ne.s32.totalorder %s87, %s90
    %p99 = scmp.eq.s32.totalorder %s18, 3
    %p100 = por %p98, %p99
    %p101 = scmp.ne.s32.totalorder %s90, %s91
    %p102 = scmp.eq.s32.totalorder %s18, 0
    %p103 = por %p101, %p102
    %p104 = scmp.ne.s32.totalorder %s90, %s91
    %p105 = scmp.eq.s32.totalorder %s19, 3
    %p106 = por %p104, %p105
    %p108 = scmp.ne.s32.totalorder %s91, %s107
    %p109 = scmp.eq.s32.totalorder %s19, 0
    %p110 = por %p108, %p109
    %s111 = ssub.s32 %s13, %s20
    %p112 = scmp.eq.s32.totalorder %s111, 0
    %s114 = sadd.s32 %s113, 1
    %s115 = scalar_select %p112, %s113, %s114
    %p118 = pneg %p112
    %p119 = scmp.eq.s32.totalorder %s13, 3
    %p120 = por %p118, %p119
    %p121 = scmp.ne.s32.totalorder %s113, %s116
    %p122 = scmp.eq.s32.totalorder %s13, 0
    %p123 = por %p121, %p122
    %p124 = scmp.ne.s32.totalorder %s113, %s116
    %p125 = scmp.eq.s32.totalorder %s18, 3
    %p126 = por %p124, %p125
    %p127 = scmp.ne.s32.totalorder %s116, %s117
    %p128 = scmp.eq.s32.totalorder %s18, 0
    %p129 = por %p127, %p128
    %p130 = scmp.ne.s32.totalorder %s116, %s117
    %p131 = scmp.eq.s32.totalorder %s19, 3
    %p132 = por %p130, %p131
    %p134 = scmp.ne.s32.totalorder %s117, %s133
    %p135 = scmp.eq.s32.totalorder %s19, 0
    %p136 = por %p134, %p135
    %s138 = sadd.s32 %s137, 1
    %p141 = scmp.eq.s32.totalorder %s13, 3
    %p142 = scmp.ne.s32.totalorder %s137, %s139
    %p143 = scmp.eq.s32.totalorder %s13, 0
    %p144 = por %p142, %p143
    %p145 = scmp.ne.s32.totalorder %s137, %s139
    %p146 = scmp.eq.s32.totalorder %s18, 3
    %p147 = por %p145, %p146
    %p148 = scmp.ne.s32.totalorder %s139, %s140
    %p149 = scmp.eq.s32.totalorder %s18, 0
    %p150 = por %p148, %p149
    %p151 = scmp.ne.s32.totalorder %s139, %s140
    %p152 = scmp.eq.s32.totalorder %s19, 3
    %p153 = por %p151, %p152
    %p155 = scmp.ne.s32.totalorder %s140, %s154
    %p156 = scmp.eq.s32.totalorder %s19, 0
    %p157 = por %p155, %p156
    %s158 = ssub.s32 %s13, %s20
    %p159 = scmp.eq.s32.totalorder %s158, 0
    %s161 = sadd.s32 %s160, 1
    %s162 = scalar_select %p159, %s160, %s161
    %p165 = pneg %p159
    %p166 = scmp.eq.s32.totalorder %s13, 3
    %p167 = por %p165, %p166
    %p168 = scmp.ne.s32.totalorder %s160, %s163
    %p169 = scmp.eq.s32.totalorder %s13, 0
    %p170 = por %p168, %p169
    %p171 = scmp.ne.s32.totalorder %s160, %s163
    %p172 = scmp.eq.s32.totalorder %s18, 3
    %p173 = por %p171, %p172
    %p174 = scmp.ne.s32.totalorder %s163, %s164
    %p175 = scmp.eq.s32.totalorder %s18, 0
    %p176 = por %p174, %p175
    %p177 = scmp.ne.s32.totalorder %s163, %s164
    %p178 = scmp.eq.s32.totalorder %s19, 3
    %p179 = por %p177, %p178
    %p181 = scmp.ne.s32.totalorder %s164, %s180
    %p182 = scmp.eq.s32.totalorder %s19, 0
    %p183 = por %p181, %p182
    %s184 = ssub.s32 %s13, %s20
    %p185 = scmp.eq.s32.totalorder %s184, 0
    %s187 = sadd.s32 %s186, 1
    %s188 = scalar_select %p185, %s186, %s187
    %p191 = pneg %p185
    %p192 = scmp.eq.s32.totalorder %s13, 3
    %p193 = por %p191, %p192
    %p194 = scmp.ne.s32.totalorder %s186, %s189
    %p195 = scmp.eq.s32.totalorder %s13, 0
    %p196 = por %p194, %p195
    %p197 = scmp.ne.s32.totalorder %s186, %s189
    %p198 = scmp.eq.s32.totalorder %s18, 3
    %p199 = por %p197, %p198
    %p200 = scmp.ne.s32.totalorder %s189, %s190
    %p201 = scmp.eq.s32.totalorder %s18, 0
    %p202 = por %p200, %p201
    %p203 = scmp.ne.s32.totalorder %s189, %s190
    %p204 = scmp.eq.s32.totalorder %s19, 3
    %p205 = por %p203, %p204
    %p207 = scmp.ne.s32.totalorder %s190, %s206
    %p208 = scmp.eq.s32.totalorder %s19, 0
    %p209 = por %p207, %p208
    %p210 = scmp.le.s32.totalorder 1, %s13
    %p211 = scmp.lt.s32.totalorder %s13, 5
    %p212 = pnand %p210, %p211
    %p213 = pneg %p212
    // Predicated region
    $region9: #{output_transition_edge_forward.4} parent=5 // pred_check
      _
    $region10: #{output_transition_edge_forward.4} parent=5 // pred_check_branch
      %215 = sbr.rel (%p212) target = $region12
    $region11: #{output_transition_edge_forward.4} parent=5 // pred_region
      %s216 = ssub.s32 %s13, 1
      // Predicated region
      $region13: #{output_transition_edge_forward.4} parent=11 // pred_check
        %p217 = pneg %p150
      $region14: #{output_transition_edge_forward.4} parent=11 // pred_check_branch
        %219 = sbr.rel (%p217) target = $region16
      $region15: #{output_transition_edge_forward.4} parent=11 // pred_region
        _
      $region16: #{output_transition_edge_forward.4} parent=11 // pred_fallthru
        _
    $region12: #{output_transition_edge_forward.4} parent=5 // pred_fallthru
      _
    %p220 = scmp.lt.s32.totalorder %s13, 4
    // Predicated region
    $region17: #{output_transition_edge_forward.4} parent=5 // pred_check
      %p221 = pneg %p220
    $region18: #{output_transition_edge_forward.4} parent=5 // pred_check_branch
      %223 = sbr.rel (%p221) target = $region20
    $region19: #{output_transition_edge_forward.4} parent=5 // pred_region
      // Predicated region
      $region21: #{output_transition_edge_forward.4} parent=19 // pred_check
        %p224 = pneg %p39
      $region22: #{output_transition_edge_forward.4} parent=19 // pred_check_branch
        %226 = sbr.rel (%p224) target = $region24
      $region23: #{output_transition_edge_forward.4} parent=19 // pred_region
        %s227 = ssub.s32 %s13, 1
        %p228 = scmp.gt.s32.totalorder %s227, 0
        %s229 = scalar_select %p228, %s227, 0
        %s230 = smul.u32 64, %s229
        %p231 = scmp.lt.s32.totalorder %s230, 255
        %s232 = scalar_select %p231, %s230, 255
        %s233 = smul.addr %s232, 4
        %s234 = scalar_lea.vmem %s0, %s233
        %s235 = ssub.s32 %s13, 1
        %p236 = scmp.gt.s32.totalorder %s235, 0
        %s237 = scalar_select %p236, %s235, 0
        %s238 = smul.u32 64, %s237
      $region24: #{output_transition_edge_forward.4} parent=19 // pred_fallthru
        _
      // Predicated region
      $region25: #{output_transition_edge_forward.4} parent=19 // pred_check
        %p239 = pneg %p65
      $region26: #{output_transition_edge_forward.4} parent=19 // pred_check_branch
        %241 = sbr.rel (%p239) target = $region28
      $region27: #{output_transition_edge_forward.4} parent=19 // pred_region
        %s242 = smul.u32 64, %s13
        %p243 = scmp.lt.s32.totalorder %s242, 255
        %s244 = scalar_select %p243, %s242, 255
        %s245 = smul.addr %s244, 4
        %s246 = scalar_lea.vmem %s1, %s245
        %s247 = smul.u32 64, %s13
      $region28: #{output_transition_edge_forward.4} parent=19 // pred_fallthru
        _
      // Predicated region
      $region29: #{output_transition_edge_forward.4} parent=19 // pred_check
        %p248 = pneg %p97
      $region30: #{output_transition_edge_forward.4} parent=19 // pred_check_branch
        %250 = sbr.rel (%p248) target = $region32
      $region31: #{output_transition_edge_forward.4} parent=19 // pred_region
        %s251 = sadd.s32 %s13, 1
        %p252 = scmp.lt.s32.totalorder %s251, 3
        %s253 = scalar_select %p252, %s251, 3
        %s254 = smul.u32 64, %s253
        %p255 = scmp.lt.s32.totalorder %s254, 255
        %s256 = scalar_select %p255, %s254, 255
        %s257 = smul.addr %s256, 4
        %s258 = scalar_lea.vmem %s2, %s257
        %s259 = sadd.s32 %s13, 1
        %p260 = scmp.lt.s32.totalorder %s259, 3
        %s261 = scalar_select %p260, %s259, 3
        %s262 = smul.u32 64, %s261
      $region32: #{output_transition_edge_forward.4} parent=19 // pred_fallthru
        _
      // Predicated region
      $region33: #{output_transition_edge_forward.4} parent=19 // pred_check
        %p263 = pneg %p123
      $region34: #{output_transition_edge_forward.4} parent=19 // pred_check_branch
        %265 = sbr.rel (%p263) target = $region36
      $region35: #{output_transition_edge_forward.4} parent=19 // pred_region
        %s266 = smul.u32 64, %s13
        %p267 = scmp.lt.s32.totalorder %s266, 255
        %s268 = scalar_select %p267, %s266, 255
        %s269 = smul.addr %s268, 8
        %s270 = scalar_lea.vmem %s3, %s269
        %s271 = smul.u32 64, %s13
      $region36: #{output_transition_edge_forward.4} parent=19 // pred_fallthru
        _
    $region20: #{output_transition_edge_forward.4} parent=5 // pred_fallthru
      _
    %p272 = scmp.le.s32.totalorder 1, %s13
    %p273 = scmp.lt.s32.totalorder %s13, 5
    %p274 = pnand %p272, %p273
    %p275 = pneg %p274
    // Predicated region
    $region37: #{output_transition_edge_forward.4} parent=5 // pred_check
      _
    $region38: #{output_transition_edge_forward.4} parent=5 // pred_check_branch
      %277 = sbr.rel (%p274) target = $region40
    $region39: #{output_transition_edge_forward.4} parent=5 // pred_region
      %s278 = ssub.s32 %s13, 1
      %s279 = ssub.s32 %s18, 1
      %p280 = scmp.gt.s32.totalorder %s279, 0
      %s281 = scalar_select %p280, %s279, 0
      %s282 = smul.u32 64, %s281
      %p283 = scmp.lt.s32.totalorder %s282, 255
      %s284 = scalar_select %p283, %s282, 255
      %s285 = smul.addr %s284, 4
      %s286 = scalar_lea.vmem %s0, %s285
      %p287 = pneg %p45
      %p288 = pneg %p42
      %s289 = smul.u32 64, %s18
      %p290 = scmp.lt.s32.totalorder %s289, 255
      %s291 = scalar_select %p290, %s289, 255
      %s292 = smul.addr %s291, 4
      %s293 = scalar_lea.vmem %s1, %s292
      %p294 = pneg %p71
      %p295 = pneg %p68
      %s296 = sadd.s32 %s18, 1
      %p297 = scmp.lt.s32.totalorder %s296, 3
      %s298 = scalar_select %p297, %s296, 3
      %s299 = smul.u32 64, %s298
      %p300 = scmp.lt.s32.totalorder %s299, 255
      %s301 = scalar_select %p300, %s299, 255
      %s302 = smul.addr %s301, 4
      %s303 = scalar_lea.vmem %s2, %s302
      %p304 = pneg %p103
      %p305 = pneg %p100
      %s306 = smul.u32 64, %s18
      %p307 = scmp.lt.s32.totalorder %s306, 255
      %s308 = scalar_select %p307, %s306, 255
      %s309 = smul.addr %s308, 8
      %s310 = scalar_lea.vmem %s3, %s309
      %p311 = pneg %p129
      %p312 = pneg %p126
      %p313 = pneg %p150
      %p314 = pneg %p147
      %p315 = pneg %p176
      %p316 = pneg %p173
      %s317 = smul.u32 64, %s18
      %p318 = scmp.lt.s32.totalorder %s317, 255
      %s319 = scalar_select %p318, %s317, 255
      %s320 = smul.addr %s319, 8
      %s321 = scalar_lea.vmem %s5, %s320
      %p322 = pneg %p202
      %p323 = pneg %p199
      %p324 = scmp.lt.s32.totalorder %s18, 3
      %s325 = scalar_select %p324, %s18, 3
      %s326 = smul.addr %s325, 2
      %s327 = scalar_lea.vmem %s6, %s326
      %s328 = ssub.s32 %s18, 1
      %p329 = scmp.gt.s32.totalorder %s328, 0
      %s330 = scalar_select %p329, %s328, 0
      %s331 = smul.u32 64, %s330
      %p332 = scmp.lt.s32.totalorder %s331, 255
      %s333 = scalar_select %p332, %s331, 255
      %s334 = smul.addr %s333, 4
      %s335 = scalar_lea.vmem %s0, %s334
      %s336 = ssub.s32 %s18, 1
      %p337 = scmp.gt.s32.totalorder %s336, 0
      %s338 = scalar_select %p337, %s336, 0
      %s339 = smul.u32 64, %s338
      %s340 = smul.u32 64, %s18
      %p341 = scmp.lt.s32.totalorder %s340, 255
      %s342 = scalar_select %p341, %s340, 255
      %s343 = smul.addr %s342, 4
      %s344 = scalar_lea.vmem %s1, %s343
      %s345 = smul.u32 64, %s18
      %s346 = sadd.s32 %s18, 1
      %p347 = scmp.lt.s32.totalorder %s346, 3
      %s348 = scalar_select %p347, %s346, 3
      %s349 = smul.u32 64, %s348
      %p350 = scmp.lt.s32.totalorder %s349, 255
      %s351 = scalar_select %p350, %s349, 255
      %s352 = smul.addr %s351, 4
      %s353 = scalar_lea.vmem %s2, %s352
      %s354 = sadd.s32 %s18, 1
      %p355 = scmp.lt.s32.totalorder %s354, 3
      %s356 = scalar_select %p355, %s354, 3
      %s357 = smul.u32 64, %s356
      %s358 = smul.u32 64, %s18
      %p359 = scmp.lt.s32.totalorder %s358, 255
      %s360 = scalar_select %p359, %s358, 255
      %s361 = smul.addr %s360, 8
      %s362 = scalar_lea.vmem %s3, %s361
      %s363 = smul.u32 64, %s18
      %s364 = smul.u32 64, %s18
      %p365 = scmp.lt.s32.totalorder %s364, 255
      %s366 = scalar_select %p365, %s364, 255
      %s367 = smul.addr %s366, 8
      %s368 = scalar_lea.vmem %s5, %s367
      %s369 = smul.u32 64, %s18
      %p370 = scmp.lt.s32.totalorder %s18, 3
      %s371 = scalar_select %p370, %s18, 3
      %s372 = smul.addr %s371, 2
      %s373 = scalar_lea.vmem %s6, %s372
      %v375 = vld [vmem:[%s335 + $0xc8] sm:$0xf]
      %v376 = vld [vmem:[%s335 + $0xcc] sm:$0xf]
      %v377 = vld [vmem:[%s335 + $0xd0] sm:$0xf]
      %v378 = vld [vmem:[%s335 + $0xd4] sm:$0xf]
      %v379 = vld [vmem:[%s335 + $0xd8] sm:$0xf]
      %v380 = vld [vmem:[%s335 + $0xdc] sm:$0xf]
      %v381 = vld [vmem:[%s335 + $0xe0] sm:$0xf]
      %v382 = vld [vmem:[%s335 + $0xe4] sm:$0xf]
      %v383 = vld [vmem:[%s335 + $0xe8] sm:$0xf]
      %v384 = vld [vmem:[%s335 + $0xec] sm:$0xf]
      %v385 = vld [vmem:[%s335 + $0xf0] sm:$0xf]
      %v386 = vld [vmem:[%s335 + $0xf4] sm:$0xf]
      %v387 = vld [vmem:[%s335 + $0xf8] sm:$0xf]
      %v388 = vld [vmem:[%s335 + $0xfc] sm:$0xf]
      %v389 = vld [vmem:[%s344] sm:$0xf]
      %v390 = vld [vmem:[%s344 + $0x4] sm:$0xf]
      %v391 = vld [vmem:[%s344 + $0x8] sm:$0xf]
      %v392 = vld [vmem:[%s344 + $0xc] sm:$0xf]
      %v393 = vld [vmem:[%s344 + $0x10] sm:$0xf]
      %v394 = vld [vmem:[%s344 + $0x14] sm:$0xf]
      %v395 = vld [vmem:[%s344 + $0x18] sm:$0xf]
      %v396 = vld [vmem:[%s344 + $0x1c] sm:$0xf]
      %v397 = vld [vmem:[%s344 + $0x20] sm:$0xf]
      %v398 = vld [vmem:[%s344 + $0x24] sm:$0xf]
      %v399 = vld [vmem:[%s344 + $0x28] sm:$0xf]
      %v400 = vld [vmem:[%s344 + $0x2c] sm:$0xf]
      %v401 = vld [vmem:[%s344 + $0x30] sm:$0xf]
      %v402 = vld [vmem:[%s344 + $0x34] sm:$0xf]
      %v403 = vld [vmem:[%s344 + $0x38] sm:$0xf]
      %v404 = vld [vmem:[%s344 + $0x3c] sm:$0xf]
      %v405 = vld [vmem:[%s344 + $0x40] sm:$0xf]
      %v406 = vld [vmem:[%s344 + $0x44] sm:$0xf]
      %v407 = vld [vmem:[%s344 + $0x48] sm:$0xf]
      %v408 = vld [vmem:[%s344 + $0x4c] sm:$0xf]
      %v409 = vld [vmem:[%s344 + $0x50] sm:$0xf]
      %v410 = vld [vmem:[%s344 + $0x54] sm:$0xf]
      %v411 = vld [vmem:[%s344 + $0x58] sm:$0xf]
      %v412 = vld [vmem:[%s344 + $0x5c] sm:$0xf]
      %v413 = vld [vmem:[%s344 + $0x60] sm:$0xf]
      %v414 = vld [vmem:[%s344 + $0x64] sm:$0xf]
      %v415 = vld [vmem:[%s344 + $0x68] sm:$0xf]
      %v416 = vld [vmem:[%s344 + $0x6c] sm:$0xf]
      %v417 = vld [vmem:[%s344 + $0x70] sm:$0xf]
      %v418 = vld [vmem:[%s344 + $0x74] sm:$0xf]
      %v419 = vld [vmem:[%s344 + $0x78] sm:$0xf]
      %v420 = vld [vmem:[%s344 + $0x7c] sm:$0xf]
      %v421 = vld [vmem:[%s344 + $0x80] sm:$0xf]
      %v422 = vld [vmem:[%s344 + $0x84] sm:$0xf]
      %v423 = vld [vmem:[%s344 + $0x88] sm:$0xf]
      %v424 = vld [vmem:[%s344 + $0x8c] sm:$0xf]
      %v425 = vld [vmem:[%s344 + $0x90] sm:$0xf]
      %v426 = vld [vmem:[%s344 + $0x94] sm:$0xf]
      %v427 = vld [vmem:[%s344 + $0x98] sm:$0xf]
      %v428 = vld [vmem:[%s344 + $0x9c] sm:$0xf]
      %v429 = vld [vmem:[%s344 + $0xa0] sm:$0xf]
      %v430 = vld [vmem:[%s344 + $0xa4] sm:$0xf]
      %v431 = vld [vmem:[%s344 + $0xa8] sm:$0xf]
      %v432 = vld [vmem:[%s344 + $0xac] sm:$0xf]
      %v433 = vld [vmem:[%s344 + $0xb0] sm:$0xf]
      %v434 = vld [vmem:[%s344 + $0xb4] sm:$0xf]
      %v435 = vld [vmem:[%s344 + $0xb8] sm:$0xf]
      %v436 = vld [vmem:[%s344 + $0xbc] sm:$0xf]
      %v437 = vld [vmem:[%s344 + $0xc0] sm:$0xf]
      %v438 = vld [vmem:[%s344 + $0xc4] sm:$0xf]
      %v439 = vld [vmem:[%s344 + $0xc8] sm:$0xf]
      %v440 = vld [vmem:[%s344 + $0xcc] sm:$0xf]
      %v441 = vld [vmem:[%s344 + $0xd0] sm:$0xf]
      %v442 = vld [vmem:[%s344 + $0xd4] sm:$0xf]
      %v443 = vld [vmem:[%s344 + $0xd8] sm:$0xf]
      %v444 = vld [vmem:[%s344 + $0xdc] sm:$0xf]
      %v445 = vld [vmem:[%s344 + $0xe0] sm:$0xf]
      %v446 = vld [vmem:[%s344 + $0xe4] sm:$0xf]
      %v447 = vld [vmem:[%s344 + $0xe8] sm:$0xf]
      %v448 = vld [vmem:[%s344 + $0xec] sm:$0xf]
      %v449 = vld [vmem:[%s344 + $0xf0] sm:$0xf]
      %v450 = vld [vmem:[%s344 + $0xf4] sm:$0xf]
      %v451 = vld [vmem:[%s344 + $0xf8] sm:$0xf]
      %v452 = vld [vmem:[%s344 + $0xfc] sm:$0xf]
      %v453 = vld [vmem:[%s353] sm:$0xf]
      %v454 = vld [vmem:[%s353 + $0x4] sm:$0xf]
      %v455 = vld [vmem:[%s353 + $0x8] sm:$0xf]
      %v456 = vld [vmem:[%s353 + $0xc] sm:$0xf]
      %v457 = vld [vmem:[%s353 + $0x10] sm:$0xf]
      %v458 = vld [vmem:[%s353 + $0x14] sm:$0xf]
      %v459 = vld [vmem:[%s353 + $0x18] sm:$0xf]
      %v460 = vld [vmem:[%s353 + $0x1c] sm:$0xf]
      %v461 = vld [vmem:[%s353 + $0x20] sm:$0xf]
      %v462 = vld [vmem:[%s353 + $0x24] sm:$0xf]
      %v463 = vld [vmem:[%s353 + $0x28] sm:$0xf]
      %v464 = vld [vmem:[%s353 + $0x2c] sm:$0xf]
      %v465 = vld [vmem:[%s353 + $0x30] sm:$0xf]
      %v466 = vld [vmem:[%s353 + $0x34] sm:$0xf]
      %v481 = vunpack.c.l.b16 %v375
      %v482 = vunpack.c.l.b16 %v376
      %v483 = vunpack.c.l.b16 %v377
      %v484 = vunpack.c.l.b16 %v378
      %v485 = vunpack.c.l.b16 %v379
      %v486 = vunpack.c.l.b16 %v380
      %v487 = vunpack.c.l.b16 %v381
      %v488 = vunpack.c.l.b16 %v382
      %v489 = vunpack.c.l.b16 %v383
      %v490 = vunpack.c.l.b16 %v384
      %v491 = vunpack.c.l.b16 %v385
      %v492 = vunpack.c.l.b16 %v386
      %v493 = vunpack.c.l.b16 %v387
      %v494 = vunpack.c.l.b16 %v388
      %v495 = vpack.c.b16 %v482, %v481
      %v496 = vpack.c.b16 %v484, %v483
      %v497 = vpack.c.b16 %v486, %v485
      %v498 = vpack.c.b16 %v488, %v487
      %v499 = vpack.c.b16 %v490, %v489
      %v500 = vpack.c.b16 %v492, %v491
      %v501 = vpack.c.b16 %v494, %v493
      %v566 = vunpack.c.l.b16 %v389
      %v567 = vunpack.c.l.b16 %v390
      %v568 = vunpack.c.l.b16 %v391
      %v569 = vunpack.c.l.b16 %v392
      %v570 = vunpack.c.l.b16 %v393
      %v571 = vunpack.c.l.b16 %v394
      %v572 = vunpack.c.l.b16 %v395
      %v573 = vunpack.c.l.b16 %v396
      %v574 = vunpack.c.l.b16 %v397
      %v575 = vunpack.c.l.b16 %v398
      %v576 = vunpack.c.l.b16 %v399
      %v577 = vunpack.c.l.b16 %v400
      %v578 = vunpack.c.l.b16 %v401
      %v579 = vunpack.c.l.b16 %v402
      %v580 = vunpack.c.l.b16 %v403
      %v581 = vunpack.c.l.b16 %v404
      %v582 = vunpack.c.l.b16 %v405
      %v583 = vunpack.c.l.b16 %v406
      %v584 = vunpack.c.l.b16 %v407
      %v585 = vunpack.c.l.b16 %v408
      %v586 = vunpack.c.l.b16 %v409
      %v587 = vunpack.c.l.b16 %v410
      %v588 = vunpack.c.l.b16 %v411
      %v589 = vunpack.c.l.b16 %v412
      %v590 = vunpack.c.l.b16 %v413
      %v591 = vunpack.c.l.b16 %v414
      %v592 = vunpack.c.l.b16 %v415
      %v593 = vunpack.c.l.b16 %v416
      %v594 = vunpack.c.l.b16 %v417
      %v595 = vunpack.c.l.b16 %v418
      %v596 = vunpack.c.l.b16 %v419
      %v597 = vunpack.c.l.b16 %v420
      %v598 = vunpack.c.l.b16 %v421
      %v599 = vunpack.c.l.b16 %v422
      %v600 = vunpack.c.l.b16 %v423
      %v601 = vunpack.c.l.b16 %v424
      %v602 = vunpack.c.l.b16 %v425
      %v603 = vunpack.c.l.b16 %v426
      %v604 = vunpack.c.l.b16 %v427
      %v605 = vunpack.c.l.b16 %v428
      %v606 = vunpack.c.l.b16 %v429
      %v607 = vunpack.c.l.b16 %v430
      %v608 = vunpack.c.l.b16 %v431
      %v609 = vunpack.c.l.b16 %v432
      %v610 = vunpack.c.l.b16 %v433
      %v611 = vunpack.c.l.b16 %v434
      %v612 = vunpack.c.l.b16 %v435
      %v613 = vunpack.c.l.b16 %v436
      %v614 = vunpack.c.l.b16 %v437
      %v615 = vunpack.c.l.b16 %v438
      %v616 = vunpack.c.l.b16 %v439
      %v617 = vunpack.c.l.b16 %v440
      %v618 = vunpack.c.l.b16 %v441
      %v619 = vunpack.c.l.b16 %v442
      %v620 = vunpack.c.l.b16 %v443
      %v621 = vunpack.c.l.b16 %v444
      %v622 = vunpack.c.l.b16 %v445
      %v623 = vunpack.c.l.b16 %v446
      %v624 = vunpack.c.l.b16 %v447
      %v625 = vunpack.c.l.b16 %v448
      %v626 = vunpack.c.l.b16 %v449
      %v627 = vunpack.c.l.b16 %v450
      %v628 = vunpack.c.l.b16 %v451
      %v629 = vunpack.c.l.b16 %v452
      %v630 = vpack.c.b16 %v567, %v566
      %v631 = vpack.c.b16 %v569, %v568
      %v632 = vpack.c.b16 %v571, %v570
      %v633 = vpack.c.b16 %v573, %v572
      %v634 = vpack.c.b16 %v575, %v574
      %v635 = vpack.c.b16 %v577, %v576
      %v636 = vpack.c.b16 %v579, %v578
      %v637 = vpack.c.b16 %v581, %v580
      %v638 = vpack.c.b16 %v583, %v582
      %v639 = vpack.c.b16 %v585, %v584
      %v640 = vpack.c.b16 %v587, %v586
      %v641 = vpack.c.b16 %v589, %v588
      %v642 = vpack.c.b16 %v591, %v590
      %v643 = vpack.c.b16 %v593, %v592
      %v644 = vpack.c.b16 %v595, %v594
      %v645 = vpack.c.b16 %v597, %v596
      %v646 = vpack.c.b16 %v599, %v598
      %v647 = vpack.c.b16 %v601, %v600
      %v648 = vpack.c.b16 %v603, %v602
      %v649 = vpack.c.b16 %v605, %v604
      %v650 = vpack.c.b16 %v607, %v606
      %v651 = vpack.c.b16 %v609, %v608
      %v652 = vpack.c.b16 %v611, %v610
      %v653 = vpack.c.b16 %v613, %v612
      %v654 = vpack.c.b16 %v615, %v614
      %v655 = vpack.c.b16 %v617, %v616
      %v656 = vpack.c.b16 %v619, %v618
      %v657 = vpack.c.b16 %v621, %v620
      %v658 = vpack.c.b16 %v623, %v622
      %v659 = vpack.c.b16 %v625, %v624
      %v660 = vpack.c.b16 %v627, %v626
      %v661 = vpack.c.b16 %v629, %v628
      %v676 = vunpack.c.l.b16 %v453
      %v677 = vunpack.c.l.b16 %v454
      %v678 = vunpack.c.l.b16 %v455
      %v679 = vunpack.c.l.b16 %v456
      %v680 = vunpack.c.l.b16 %v457
      %v681 = vunpack.c.l.b16 %v458
      %v682 = vunpack.c.l.b16 %v459
      %v683 = vunpack.c.l.b16 %v460
      %v684 = vunpack.c.l.b16 %v461
      %v685 = vunpack.c.l.b16 %v462
      %v686 = vunpack.c.l.b16 %v463
      %v687 = vunpack.c.l.b16 %v464
      %v688 = vunpack.c.l.b16 %v465
      %v689 = vunpack.c.l.b16 %v466
      %v690 = vpack.c.b16 %v677, %v676
      %v691 = vpack.c.b16 %v679, %v678
      %v692 = vpack.c.b16 %v681, %v680
      %v693 = vpack.c.b16 %v683, %v682
      %v694 = vpack.c.b16 %v685, %v684
      %v695 = vpack.c.b16 %v687, %v686
      %v696 = vpack.c.b16 %v689, %v688
      %v697 = vld [vmem:[%s4] sm:$0xf]
      %v698 = vld [vmem:[%s4 + $0x4] sm:$0xf]
      %v699 = vld [vmem:[%s4 + $0x8] sm:$0xf]
      %v700 = vld [vmem:[%s4 + $0xc] sm:$0xf]
      %v701 = vld [vmem:[%s4 + $0x10] sm:$0xf]
      %v702 = vld [vmem:[%s4 + $0x14] sm:$0xf]
      %v703 = vld [vmem:[%s4 + $0x18] sm:$0xf]
      %v704 = vld [vmem:[%s4 + $0x1c] sm:$0xf]
      %v705 = vld [vmem:[%s4 + $0x20] sm:$0xf]
      %v706 = vld [vmem:[%s4 + $0x24] sm:$0xf]
      %v707 = vld [vmem:[%s4 + $0x28] sm:$0xf]
      %v708 = vld [vmem:[%s4 + $0x2c] sm:$0xf]
      %v709 = vld [vmem:[%s4 + $0x30] sm:$0xf]
      %v710 = vld [vmem:[%s4 + $0x34] sm:$0xf]
      %v711 = vld [vmem:[%s4 + $0x38] sm:$0xf]
      %v712 = vld [vmem:[%s4 + $0x3c] sm:$0xf]
      %v713 = vld [vmem:[%s4 + $0x40] sm:$0xf]
      %v714 = vld [vmem:[%s4 + $0x44] sm:$0xf]
      %v715 = vld [vmem:[%s4 + $0x48] sm:$0xf]
      %v716 = vld [vmem:[%s4 + $0x4c] sm:$0xf]
      %v717 = vld [vmem:[%s4 + $0x50] sm:$0xf]
      %v718 = vld [vmem:[%s4 + $0x54] sm:$0xf]
      %v719 = vld [vmem:[%s4 + $0x58] sm:$0xf]
      %v720 = vld [vmem:[%s4 + $0x5c] sm:$0xf]
      %v721 = vld [vmem:[%s4 + $0x60] sm:$0xf]
      %v722 = vld [vmem:[%s4 + $0x64] sm:$0xf]
      %v723 = vld [vmem:[%s4 + $0x68] sm:$0xf]
      %v724 = vld [vmem:[%s4 + $0x6c] sm:$0xf]
      %v725 = vld [vmem:[%s4 + $0x70] sm:$0xf]
      %v726 = vld [vmem:[%s4 + $0x74] sm:$0xf]
      %v727 = vld [vmem:[%s4 + $0x78] sm:$0xf]
      %v728 = vld [vmem:[%s4 + $0x7c] sm:$0xf]
      %v729 = vld [vmem:[%s4 + $0x80] sm:$0xf]
      %v730 = vld [vmem:[%s4 + $0x84] sm:$0xf]
      %v731 = vld [vmem:[%s4 + $0x88] sm:$0xf]
      %v732 = vld [vmem:[%s4 + $0x8c] sm:$0xf]
      %v733 = vld [vmem:[%s4 + $0x90] sm:$0xf]
      %v734 = vld [vmem:[%s4 + $0x94] sm:$0xf]
      %v735 = vld [vmem:[%s4 + $0x98] sm:$0xf]
      %v736 = vld [vmem:[%s4 + $0x9c] sm:$0xf]
      %v737 = vld [vmem:[%s4 + $0xa0] sm:$0xf]
      %v738 = vld [vmem:[%s4 + $0xa4] sm:$0xf]
      %v739 = vld [vmem:[%s4 + $0xa8] sm:$0xf]
      %v740 = vld [vmem:[%s4 + $0xac] sm:$0xf]
      %v741 = vld [vmem:[%s4 + $0xb0] sm:$0xf]
      %v742 = vld [vmem:[%s4 + $0xb4] sm:$0xf]
      %v743 = vld [vmem:[%s4 + $0xb8] sm:$0xf]
      %v744 = vld [vmem:[%s4 + $0xbc] sm:$0xf]
      %v745 = vld [vmem:[%s4 + $0xc0] sm:$0xf]
      %v746 = vld [vmem:[%s4 + $0xc4] sm:$0xf]
      %v747 = vld [vmem:[%s4 + $0xc8] sm:$0xf]
      %v748 = vld [vmem:[%s4 + $0xcc] sm:$0xf]
      %v749 = vld [vmem:[%s4 + $0xd0] sm:$0xf]
      %v750 = vld [vmem:[%s4 + $0xd4] sm:$0xf]
      %vm751 = vcmask 1046528
      %v752 = vrot.slane %v495, 1
      %v753 = vrot.slane %v496, 1
      %v754 = vsel %vm751, %v752, %v753
      %v755 = vrot.slane %v497, 1
      %v756 = vsel %vm751, %v753, %v755
      %v757 = vrot.slane %v498, 1
      %v758 = vsel %vm751, %v755, %v757
      %v759 = vrot.slane %v499, 1
      %v760 = vsel %vm751, %v757, %v759
      %v761 = vrot.slane %v500, 1
      %v762 = vsel %vm751, %v759, %v761
      %v763 = vrot.slane %v501, 1
      %v764 = vsel %vm751, %v761, %v763
      %v765 = vrot.slane %v630, 1
      %v766 = vsel %vm751, %v763, %v765
      %v767 = vrot.slane %v631, 1
      %v768 = vsel %vm751, %v765, %v767
      %v769 = vrot.slane %v632, 1
      %v770 = vsel %vm751, %v767, %v769
      %v771 = vrot.slane %v633, 1
      %v772 = vsel %vm751, %v769, %v771
      %v773 = vrot.slane %v634, 1
      %v774 = vsel %vm751, %v771, %v773
      %v775 = vrot.slane %v635, 1
      %v776 = vsel %vm751, %v773, %v775
      %v777 = vrot.slane %v636, 1
      %v778 = vsel %vm751, %v775, %v777
      %v779 = vrot.slane %v637, 1
      %v780 = vsel %vm751, %v777, %v779
      %v781 = vrot.slane %v638, 1
      %v782 = vsel %vm751, %v779, %v781
      %v783 = vrot.slane %v639, 1
      %v784 = vsel %vm751, %v781, %v783
      %v785 = vrot.slane %v640, 1
      %v786 = vsel %vm751, %v783, %v785
      %v787 = vrot.slane %v641, 1
      %v788 = vsel %vm751, %v785, %v787
      %v789 = vrot.slane %v642, 1
      %v790 = vsel %vm751, %v787, %v789
      %v791 = vrot.slane %v643, 1
      %v792 = vsel %vm751, %v789, %v791
      %v793 = vrot.slane %v644, 1
      %v794 = vsel %vm751, %v791, %v793
      %v795 = vrot.slane %v645, 1
      %v796 = vsel %vm751, %v793, %v795
      %v797 = vrot.slane %v646, 1
      %v798 = vsel %vm751, %v795, %v797
      %v799 = vrot.slane %v647, 1
      %v800 = vsel %vm751, %v797, %v799
      %v801 = vrot.slane %v648, 1
      %v802 = vsel %vm751, %v799, %v801
      %v803 = vrot.slane %v649, 1
      %v804 = vsel %vm751, %v801, %v803
      %v805 = vrot.slane %v650, 1
      %v806 = vsel %vm751, %v803, %v805
      %v807 = vrot.slane %v651, 1
      %v808 = vsel %vm751, %v805, %v807
      %v809 = vrot.slane %v652, 1
      %v810 = vsel %vm751, %v807, %v809
      %v811 = vrot.slane %v653, 1
      %v812 = vsel %vm751, %v809, %v811
      %v813 = vrot.slane %v654, 1
      %v814 = vsel %vm751, %v811, %v813
      %v815 = vrot.slane %v655, 1
      %v816 = vsel %vm751, %v813, %v815
      %v819 = vunpack.c.l.b16 %v699
      %v820 = vunpack.c.l.b16 %v700
      %v821 = vpack.c.b16 %v820, %v819
      %vm823 = vcmask 130048
      %v825 = vsel %vm823, %v754, 0
      %v828 = vsel %vm823, %v756, 0
      %v831 = vsel %vm823, %v758, 0
      %v834 = vsel %vm823, %v760, 0
      %v837 = vsel %vm823, %v762, 0
      %v840 = vsel %vm823, %v764, 0
      %v843 = vsel %vm823, %v766, 0
      %v846 = vsel %vm823, %v768, 0
      %v849 = vsel %vm823, %v770, 0
      %v852 = vsel %vm823, %v772, 0
      %v855 = vsel %vm823, %v774, 0
      %v858 = vsel %vm823, %v776, 0
      %v861 = vsel %vm823, %v778, 0
      %v864 = vsel %vm823, %v780, 0
      %v867 = vsel %vm823, %v782, 0
      %v870 = vsel %vm823, %v784, 0
      %v873 = vsel %vm823, %v786, 0
      %v876 = vsel %vm823, %v788, 0
      %v879 = vsel %vm823, %v790, 0
      %v882 = vsel %vm823, %v792, 0
      %v885 = vsel %vm823, %v794, 0
      %v888 = vsel %vm823, %v796, 0
      %v891 = vsel %vm823, %v798, 0
      %v894 = vsel %vm823, %v800, 0
      %v897 = vsel %vm823, %v802, 0
      %v900 = vsel %vm823, %v804, 0
      %v903 = vsel %vm823, %v806, 0
      %v906 = vsel %vm823, %v808, 0
      %v909 = vsel %vm823, %v810, 0
      %v912 = vsel %vm823, %v812, 0
      %v915 = vsel %vm823, %v814, 0
      %v918 = vsel %vm823, %v816, 0
      %920 = vmatpush.bf16.msra.mxu0 0
      %921 = vmatpush.bf16.msra.mxu0 0
      %922 = vmatpush.bf16.msra.mxu0 0
      %923 = vmatpush.bf16.msra.mxu0 0
      %924 = vmatpush.bf16.msra.mxu0 0
      %925 = vmatpush.bf16.msra.mxu0 0
      %926 = vmatpush.bf16.msra.mxu0 0
      %927 = vmatpush.bf16.msra.mxu0 %v821
      %928 = vmatmul.bf16.gmra.mxu0 %v825
      %v929 = vpop.f32.mrf.mxu0
      %v930 = vadd.f32 0.0, %v929
      %v931 = vpop.f32.mrf.mxu0
      %v932 = vadd.f32 0.0, %v931
      %933 = vmatmul.bf16.gmra.mxu0 %v828
      %v934 = vpop.f32.mrf.mxu0
      %v935 = vadd.f32 0.0, %v934
      %v936 = vpop.f32.mrf.mxu0
      %v937 = vadd.f32 0.0, %v936
      %938 = vmatmul.bf16.gmra.mxu0 %v831
      %v939 = vpop.f32.mrf.mxu0
      %v940 = vadd.f32 0.0, %v939
      %v941 = vpop.f32.mrf.mxu0
      %v942 = vadd.f32 0.0, %v941
      %943 = vmatmul.bf16.gmra.mxu0 %v834
      %v944 = vpop.f32.mrf.mxu0
      %v945 = vadd.f32 0.0, %v944
      %v946 = vpop.f32.mrf.mxu0
      %v947 = vadd.f32 0.0, %v946
      %948 = vmatmul.bf16.gmra.mxu0 %v837
      %v949 = vpop.f32.mrf.mxu0
      %v950 = vadd.f32 0.0, %v949
      %v951 = vpop.f32.mrf.mxu0
      %v952 = vadd.f32 0.0, %v951
      %953 = vmatmul.bf16.gmra.mxu0 %v840
      %v954 = vpop.f32.mrf.mxu0
      %v955 = vadd.f32 0.0, %v954
      %v956 = vpop.f32.mrf.mxu0
      %v957 = vadd.f32 0.0, %v956
      %958 = vmatmul.bf16.gmra.mxu0 %v843
      %v959 = vpop.f32.mrf.mxu0
      %v960 = vadd.f32 0.0, %v959
      %v961 = vpop.f32.mrf.mxu0
      %v962 = vadd.f32 0.0, %v961
      %963 = vmatmul.bf16.gmra.mxu0 %v846
      %v964 = vpop.f32.mrf.mxu0
      %v965 = vadd.f32 0.0, %v964
      %v966 = vpop.f32.mrf.mxu0
      %v967 = vadd.f32 0.0, %v966
      %968 = vmatmul.bf16.gmra.mxu0 %v849
      %v969 = vpop.f32.mrf.mxu0
      %v970 = vadd.f32 0.0, %v969
      %v971 = vpop.f32.mrf.mxu0
      %v972 = vadd.f32 0.0, %v971
      %973 = vmatmul.bf16.gmra.mxu0 %v852
      %v974 = vpop.f32.mrf.mxu0
      %v975 = vadd.f32 0.0, %v974
      %v976 = vpop.f32.mrf.mxu0
      %v977 = vadd.f32 0.0, %v976
      %978 = vmatmul.bf16.gmra.mxu0 %v855
      %v979 = vpop.f32.mrf.mxu0
      %v980 = vadd.f32 0.0, %v979
      %v981 = vpop.f32.mrf.mxu0
      %v982 = vadd.f32 0.0, %v981
      %983 = vmatmul.bf16.gmra.mxu0 %v858
      %v984 = vpop.f32.mrf.mxu0
      %v985 = vadd.f32 0.0, %v984
      %v986 = vpop.f32.mrf.mxu0
      %v987 = vadd.f32 0.0, %v986
      %988 = vmatmul.bf16.gmra.mxu0 %v861
      %v989 = vpop.f32.mrf.mxu0
      %v990 = vadd.f32 0.0, %v989
      %v991 = vpop.f32.mrf.mxu0
      %v992 = vadd.f32 0.0, %v991
      %993 = vmatmul.bf16.gmra.mxu0 %v864
      %v994 = vpop.f32.mrf.mxu0
      %v995 = vadd.f32 0.0, %v994
      %v996 = vpop.f32.mrf.mxu0
      %v997 = vadd.f32 0.0, %v996
      %998 = vmatmul.bf16.gmra.mxu0 %v867
      %v999 = vpop.f32.mrf.mxu0
      %v1000 = vadd.f32 0.0, %v999
      %v1001 = vpop.f32.mrf.mxu0
      %v1002 = vadd.f32 0.0, %v1001
      %1003 = vmatmul.bf16.gmra.mxu0 %v870
      %v1004 = vpop.f32.mrf.mxu0
      %v1005 = vadd.f32 0.0, %v1004
      %v1006 = vpop.f32.mrf.mxu0
      %v1007 = vadd.f32 0.0, %v1006
      %1008 = vmatmul.bf16.gmra.mxu0 %v873
      %v1009 = vpop.f32.mrf.mxu0
      %v1010 = vadd.f32 0.0, %v1009
      %v1011 = vpop.f32.mrf.mxu0
      %v1012 = vadd.f32 0.0, %v1011
      %1013 = vmatmul.bf16.gmra.mxu0 %v876
      %v1014 = vpop.f32.mrf.mxu0
      %v1015 = vadd.f32 0.0, %v1014
      %v1016 = vpop.f32.mrf.mxu0
      %v1017 = vadd.f32 0.0, %v1016
      %1018 = vmatmul.bf16.gmra.mxu0 %v879
      %v1019 = vpop.f32.mrf.mxu0
      %v1020 = vadd.f32 0.0, %v1019
      %v1021 = vpop.f32.mrf.mxu0
      %v1022 = vadd.f32 0.0, %v1021
      %1023 = vmatmul.bf16.gmra.mxu0 %v882
      %v1024 = vpop.f32.mrf.mxu0
      %v1025 = vadd.f32 0.0, %v1024
      %v1026 = vpop.f32.mrf.mxu0
      %v1027 = vadd.f32 0.0, %v1026
      %1028 = vmatmul.bf16.gmra.mxu0 %v885
      %v1029 = vpop.f32.mrf.mxu0
      %v1030 = vadd.f32 0.0, %v1029
      %v1031 = vpop.f32.mrf.mxu0
      %v1032 = vadd.f32 0.0, %v1031
      %1033 = vmatmul.bf16.gmra.mxu0 %v888
      %v1034 = vpop.f32.mrf.mxu0
      %v1035 = vadd.f32 0.0, %v1034
      %v1036 = vpop.f32.mrf.mxu0
      %v1037 = vadd.f32 0.0, %v1036
      %1038 = vmatmul.bf16.gmra.mxu0 %v891
      %v1039 = vpop.f32.mrf.mxu0
      %v1040 = vadd.f32 0.0, %v1039
      %v1041 = vpop.f32.mrf.mxu0
      %v1042 = vadd.f32 0.0, %v1041
      %1043 = vmatmul.bf16.gmra.mxu0 %v894
      %v1044 = vpop.f32.mrf.mxu0
      %v1045 = vadd.f32 0.0, %v1044
      %v1046 = vpop.f32.mrf.mxu0
      %v1047 = vadd.f32 0.0, %v1046
      %1048 = vmatmul.bf16.gmra.mxu0 %v897
      %v1049 = vpop.f32.mrf.mxu0
      %v1050 = vadd.f32 0.0, %v1049
      %v1051 = vpop.f32.mrf.mxu0
      %v1052 = vadd.f32 0.0, %v1051
      %1053 = vmatmul.bf16.gmra.mxu0 %v900
      %v1054 = vpop.f32.mrf.mxu0
      %v1055 = vadd.f32 0.0, %v1054
      %v1056 = vpop.f32.mrf.mxu0
      %v1057 = vadd.f32 0.0, %v1056
      %1058 = vmatmul.bf16.gmra.mxu0 %v903
      %v1059 = vpop.f32.mrf.mxu0
      %v1060 = vadd.f32 0.0, %v1059
      %v1061 = vpop.f32.mrf.mxu0
      %v1062 = vadd.f32 0.0, %v1061
      %1063 = vmatmul.bf16.gmra.mxu0 %v906
      %v1064 = vpop.f32.mrf.mxu0
      %v1065 = vadd.f32 0.0, %v1064
      %v1066 = vpop.f32.mrf.mxu0
      %v1067 = vadd.f32 0.0, %v1066
      %1068 = vmatmul.bf16.gmra.mxu0 %v909
      %v1069 = vpop.f32.mrf.mxu0
      %v1070 = vadd.f32 0.0, %v1069
      %v1071 = vpop.f32.mrf.mxu0
      %v1072 = vadd.f32 0.0, %v1071
      %1073 = vmatmul.bf16.gmra.mxu0 %v912
      %v1074 = vpop.f32.mrf.mxu0
      %v1075 = vadd.f32 0.0, %v1074
      %v1076 = vpop.f32.mrf.mxu0
      %v1077 = vadd.f32 0.0, %v1076
      %1078 = vmatmul.bf16.gmra.mxu0 %v915
      %v1079 = vpop.f32.mrf.mxu0
      %v1080 = vadd.f32 0.0, %v1079
      %v1081 = vpop.f32.mrf.mxu0
      %v1082 = vadd.f32 0.0, %v1081
      %1083 = vmatmul.bf16.gmra.mxu0 %v918
      %v1084 = vpop.f32.mrf.mxu0
      %v1085 = vadd.f32 0.0, %v1084
      %v1086 = vpop.f32.mrf.mxu0
      %v1087 = vadd.f32 0.0, %v1086
      %1088 = vdwg.mxu0
      %vm1089 = vsmask.f32 7424
      %v1091 = vshrl.u32 %v495, 16
      %v1093 = vshll.u32 %v495, 16
      %v1095 = vrot.slane %v1093, 1
      %v1096 = vor.u32 %v1091, %v1095
      %v1098 = vshll.u32 %v496, 16
      %v1100 = vrot.slane %v1098, 1
      %v1101 = vsel %vm1089, %v1096, %v1100
      %v1102 = vshrl.u32 %v496, 16
      %v1104 = vor.u32 %v1102, %v1100
      %v1106 = vshll.u32 %v497, 16
      %v1108 = vrot.slane %v1106, 1
      %v1109 = vsel %vm1089, %v1104, %v1108
      %v1110 = vshrl.u32 %v497, 16
      %v1112 = vor.u32 %v1110, %v1108
      %v1114 = vshll.u32 %v498, 16
      %v1116 = vrot.slane %v1114, 1
      %v1117 = vsel %vm1089, %v1112, %v1116
      %v1118 = vshrl.u32 %v498, 16
      %v1120 = vor.u32 %v1118, %v1116
      %v1122 = vshll.u32 %v499, 16
      %v1124 = vrot.slane %v1122, 1
      %v1125 = vsel %vm1089, %v1120, %v1124
      %v1126 = vshrl.u32 %v499, 16
      %v1128 = vor.u32 %v1126, %v1124
      %v1130 = vshll.u32 %v500, 16
      %v1132 = vrot.slane %v1130, 1
      %v1133 = vsel %vm1089, %v1128, %v1132
      %v1134 = vshrl.u32 %v500, 16
      %v1136 = vor.u32 %v1134, %v1132
      %v1138 = vshll.u32 %v501, 16
      %v1140 = vrot.slane %v1138, 1
      %v1141 = vsel %vm1089, %v1136, %v1140
      %v1142 = vshrl.u32 %v501, 16
      %v1144 = vor.u32 %v1142, %v1140
      %v1146 = vshll.u32 %v630, 16
      %v1148 = vrot.slane %v1146, 1
      %v1149 = vsel %vm1089, %v1144, %v1148
      %v1150 = vshrl.u32 %v630, 16
      %v1152 = vor.u32 %v1150, %v1148
      %v1154 = vshll.u32 %v631, 16
      %v1156 = vrot.slane %v1154, 1
      %v1157 = vsel %vm1089, %v1152, %v1156
      %v1158 = vshrl.u32 %v631, 16
      %v1160 = vor.u32 %v1158, %v1156
      %v1162 = vshll.u32 %v632, 16
      %v1164 = vrot.slane %v1162, 1
      %v1165 = vsel %vm1089, %v1160, %v1164
      %v1166 = vshrl.u32 %v632, 16
      %v1168 = vor.u32 %v1166, %v1164
      %v1170 = vshll.u32 %v633, 16
      %v1172 = vrot.slane %v1170, 1
      %v1173 = vsel %vm1089, %v1168, %v1172
      %v1174 = vshrl.u32 %v633, 16
      %v1176 = vor.u32 %v1174, %v1172
      %v1178 = vshll.u32 %v634, 16
      %v1180 = vrot.slane %v1178, 1
      %v1181 = vsel %vm1089, %v1176, %v1180
      %v1182 = vshrl.u32 %v634, 16
      %v1184 = vor.u32 %v1182, %v1180
      %v1186 = vshll.u32 %v635, 16
      %v1188 = vrot.slane %v1186, 1
      %v1189 = vsel %vm1089, %v1184, %v1188
      %v1190 = vshrl.u32 %v635, 16
      %v1192 = vor.u32 %v1190, %v1188
      %v1194 = vshll.u32 %v636, 16
      %v1196 = vrot.slane %v1194, 1
      %v1197 = vsel %vm1089, %v1192, %v1196
      %v1198 = vshrl.u32 %v636, 16
      %v1200 = vor.u32 %v1198, %v1196
      %v1202 = vshll.u32 %v637, 16
      %v1204 = vrot.slane %v1202, 1
      %v1205 = vsel %vm1089, %v1200, %v1204
      %v1206 = vshrl.u32 %v637, 16
      %v1208 = vor.u32 %v1206, %v1204
      %v1210 = vshll.u32 %v638, 16
      %v1212 = vrot.slane %v1210, 1
      %v1213 = vsel %vm1089, %v1208, %v1212
      %v1214 = vshrl.u32 %v638, 16
      %v1216 = vor.u32 %v1214, %v1212
      %v1218 = vshll.u32 %v639, 16
      %v1220 = vrot.slane %v1218, 1
      %v1221 = vsel %vm1089, %v1216, %v1220
      %v1222 = vshrl.u32 %v639, 16
      %v1224 = vor.u32 %v1222, %v1220
      %v1226 = vshll.u32 %v640, 16
      %v1228 = vrot.slane %v1226, 1
      %v1229 = vsel %vm1089, %v1224, %v1228
      %v1230 = vshrl.u32 %v640, 16
      %v1232 = vor.u32 %v1230, %v1228
      %v1234 = vshll.u32 %v641, 16
      %v1236 = vrot.slane %v1234, 1
      %v1237 = vsel %vm1089, %v1232, %v1236
      %v1238 = vshrl.u32 %v641, 16
      %v1240 = vor.u32 %v1238, %v1236
      %v1242 = vshll.u32 %v642, 16
      %v1244 = vrot.slane %v1242, 1
      %v1245 = vsel %vm1089, %v1240, %v1244
      %v1246 = vshrl.u32 %v642, 16
      %v1248 = vor.u32 %v1246, %v1244
      %v1250 = vshll.u32 %v643, 16
      %v1252 = vrot.slane %v1250, 1
      %v1253 = vsel %vm1089, %v1248, %v1252
      %v1254 = vshrl.u32 %v643, 16
      %v1256 = vor.u32 %v1254, %v1252
      %v1258 = vshll.u32 %v644, 16
      %v1260 = vrot.slane %v1258, 1
      %v1261 = vsel %vm1089, %v1256, %v1260
      %v1262 = vshrl.u32 %v644, 16
      %v1264 = vor.u32 %v1262, %v1260
      %v1266 = vshll.u32 %v645, 16
      %v1268 = vrot.slane %v1266, 1
      %v1269 = vsel %vm1089, %v1264, %v1268
      %v1270 = vshrl.u32 %v645, 16
      %v1272 = vor.u32 %v1270, %v1268
      %v1274 = vshll.u32 %v646, 16
      %v1276 = vrot.slane %v1274, 1
      %v1277 = vsel %vm1089, %v1272, %v1276
      %v1278 = vshrl.u32 %v646, 16
      %v1280 = vor.u32 %v1278, %v1276
      %v1282 = vshll.u32 %v647, 16
      %v1284 = vrot.slane %v1282, 1
      %v1285 = vsel %vm1089, %v1280, %v1284
      %v1286 = vshrl.u32 %v647, 16
      %v1288 = vor.u32 %v1286, %v1284
      %v1290 = vshll.u32 %v648, 16
      %v1292 = vrot.slane %v1290, 1
      %v1293 = vsel %vm1089, %v1288, %v1292
      %v1294 = vshrl.u32 %v648, 16
      %v1296 = vor.u32 %v1294, %v1292
      %v1298 = vshll.u32 %v649, 16
      %v1300 = vrot.slane %v1298, 1
      %v1301 = vsel %vm1089, %v1296, %v1300
      %v1302 = vshrl.u32 %v649, 16
      %v1304 = vor.u32 %v1302, %v1300
      %v1306 = vshll.u32 %v650, 16
      %v1308 = vrot.slane %v1306, 1
      %v1309 = vsel %vm1089, %v1304, %v1308
      %v1310 = vshrl.u32 %v650, 16
      %v1312 = vor.u32 %v1310, %v1308
      %v1314 = vshll.u32 %v651, 16
      %v1316 = vrot.slane %v1314, 1
      %v1317 = vsel %vm1089, %v1312, %v1316
      %v1318 = vshrl.u32 %v651, 16
      %v1320 = vor.u32 %v1318, %v1316
      %v1322 = vshll.u32 %v652, 16
      %v1324 = vrot.slane %v1322, 1
      %v1325 = vsel %vm1089, %v1320, %v1324
      %v1326 = vshrl.u32 %v652, 16
      %v1328 = vor.u32 %v1326, %v1324
      %v1330 = vshll.u32 %v653, 16
      %v1332 = vrot.slane %v1330, 1
      %v1333 = vsel %vm1089, %v1328, %v1332
      %v1334 = vshrl.u32 %v653, 16
      %v1336 = vor.u32 %v1334, %v1332
      %v1338 = vshll.u32 %v654, 16
      %v1340 = vrot.slane %v1338, 1
      %v1341 = vsel %vm1089, %v1336, %v1340
      %v1342 = vshrl.u32 %v654, 16
      %v1344 = vor.u32 %v1342, %v1340
      %v1346 = vshll.u32 %v655, 16
      %v1348 = vrot.slane %v1346, 1
      %v1349 = vsel %vm1089, %v1344, %v1348
      %v1352 = vunpack.c.l.b16 %v697
      %v1353 = vunpack.c.l.b16 %v698
      %v1354 = vpack.c.b16 %v1353, %v1352
      %v1357 = vsel %vm823, %v1101, 0
      %v1360 = vsel %vm823, %v1109, 0
      %v1363 = vsel %vm823, %v1117, 0
      %v1366 = vsel %vm823, %v1125, 0
      %v1369 = vsel %vm823, %v1133, 0
      %v1372 = vsel %vm823, %v1141, 0
      %v1375 = vsel %vm823, %v1149, 0
      %v1378 = vsel %vm823, %v1157, 0
      %v1381 = vsel %vm823, %v1165, 0
      %v1384 = vsel %vm823, %v1173, 0
      %v1387 = vsel %vm823, %v1181, 0
      %v1390 = vsel %vm823, %v1189, 0
      %v1393 = vsel %vm823, %v1197, 0
      %v1396 = vsel %vm823, %v1205, 0
      %v1399 = vsel %vm823, %v1213, 0
      %v1402 = vsel %vm823, %v1221, 0
      %v1405 = vsel %vm823, %v1229, 0
      %v1408 = vsel %vm823, %v1237, 0
      %v1411 = vsel %vm823, %v1245, 0
      %v1414 = vsel %vm823, %v1253, 0
      %v1417 = vsel %vm823, %v1261, 0
      %v1420 = vsel %vm823, %v1269, 0
      %v1423 = vsel %vm823, %v1277, 0
      %v1426 = vsel %vm823, %v1285, 0
      %v1429 = vsel %vm823, %v1293, 0
      %v1432 = vsel %vm823, %v1301, 0
      %v1435 = vsel %vm823, %v1309, 0
      %v1438 = vsel %vm823, %v1317, 0
      %v1441 = vsel %vm823, %v1325, 0
      %v1444 = vsel %vm823, %v1333, 0
      %v1447 = vsel %vm823, %v1341, 0
      %v1450 = vsel %vm823, %v1349, 0
      %1452 = vmatpush.bf16.msra.mxu0 0
      %1453 = vmatpush.bf16.msra.mxu0 0
      %1454 = vmatpush.bf16.msra.mxu0 0
      %1455 = vmatpush.bf16.msra.mxu0 0
      %1456 = vmatpush.bf16.msra.mxu0 0
      %1457 = vmatpush.bf16.msra.mxu0 0
      %1458 = vmatpush.bf16.msra.mxu0 0
      %1459 = vmatpush.bf16.msra.mxu0 %v1354
      %1460 = vmatmul.bf16.gmra.mxu0 %v1357
      %v1461 = vpop.f32.mrf.mxu0
      %v1462 = vadd.f32 %v930, %v1461
      %v1463 = vpop.f32.mrf.mxu0
      %v1464 = vadd.f32 %v932, %v1463
      %1465 = vmatmul.bf16.gmra.mxu0 %v1360
      %v1466 = vpop.f32.mrf.mxu0
      %v1467 = vadd.f32 %v935, %v1466
      %v1468 = vpop.f32.mrf.mxu0
      %v1469 = vadd.f32 %v937, %v1468
      %1470 = vmatmul.bf16.gmra.mxu0 %v1363
      %v1471 = vpop.f32.mrf.mxu0
      %v1472 = vadd.f32 %v940, %v1471
      %v1473 = vpop.f32.mrf.mxu0
      %v1474 = vadd.f32 %v942, %v1473
      %1475 = vmatmul.bf16.gmra.mxu0 %v1366
      %v1476 = vpop.f32.mrf.mxu0
      %v1477 = vadd.f32 %v945, %v1476
      %v1478 = vpop.f32.mrf.mxu0
      %v1479 = vadd.f32 %v947, %v1478
      %1480 = vmatmul.bf16.gmra.mxu0 %v1369
      %v1481 = vpop.f32.mrf.mxu0
      %v1482 = vadd.f32 %v950, %v1481
      %v1483 = vpop.f32.mrf.mxu0
      %v1484 = vadd.f32 %v952, %v1483
      %1485 = vmatmul.bf16.gmra.mxu0 %v1372
      %v1486 = vpop.f32.mrf.mxu0
      %v1487 = vadd.f32 %v955, %v1486
      %v1488 = vpop.f32.mrf.mxu0
      %v1489 = vadd.f32 %v957, %v1488
      %1490 = vmatmul.bf16.gmra.mxu0 %v1375
      %v1491 = vpop.f32.mrf.mxu0
      %v1492 = vadd.f32 %v960, %v1491
      %v1493 = vpop.f32.mrf.mxu0
      %v1494 = vadd.f32 %v962, %v1493
      %1495 = vmatmul.bf16.gmra.mxu0 %v1378
      %v1496 = vpop.f32.mrf.mxu0
      %v1497 = vadd.f32 %v965, %v1496
      %v1498 = vpop.f32.mrf.mxu0
      %v1499 = vadd.f32 %v967, %v1498
      %1500 = vmatmul.bf16.gmra.mxu0 %v1381
      %v1501 = vpop.f32.mrf.mxu0
      %v1502 = vadd.f32 %v970, %v1501
      %v1503 = vpop.f32.mrf.mxu0
      %v1504 = vadd.f32 %v972, %v1503
      %1505 = vmatmul.bf16.gmra.mxu0 %v1384
      %v1506 = vpop.f32.mrf.mxu0
      %v1507 = vadd.f32 %v975, %v1506
      %v1508 = vpop.f32.mrf.mxu0
      %v1509 = vadd.f32 %v977, %v1508
      %1510 = vmatmul.bf16.gmra.mxu0 %v1387
      %v1511 = vpop.f32.mrf.mxu0
      %v1512 = vadd.f32 %v980, %v1511
      %v1513 = vpop.f32.mrf.mxu0
      %v1514 = vadd.f32 %v982, %v1513
      %1515 = vmatmul.bf16.gmra.mxu0 %v1390
      %v1516 = vpop.f32.mrf.mxu0
      %v1517 = vadd.f32 %v985, %v1516
      %v1518 = vpop.f32.mrf.mxu0
      %v1519 = vadd.f32 %v987, %v1518
      %1520 = vmatmul.bf16.gmra.mxu0 %v1393
      %v1521 = vpop.f32.mrf.mxu0
      %v1522 = vadd.f32 %v990, %v1521
      %v1523 = vpop.f32.mrf.mxu0
      %v1524 = vadd.f32 %v992, %v1523
      %1525 = vmatmul.bf16.gmra.mxu0 %v1396
      %v1526 = vpop.f32.mrf.mxu0
      %v1527 = vadd.f32 %v995, %v1526
      %v1528 = vpop.f32.mrf.mxu0
      %v1529 = vadd.f32 %v997, %v1528
      %1530 = vmatmul.bf16.gmra.mxu0 %v1399
      %v1531 = vpop.f32.mrf.mxu0
      %v1532 = vadd.f32 %v1000, %v1531
      %v1533 = vpop.f32.mrf.mxu0
      %v1534 = vadd.f32 %v1002, %v1533
      %1535 = vmatmul.bf16.gmra.mxu0 %v1402
      %v1536 = vpop.f32.mrf.mxu0
      %v1537 = vadd.f32 %v1005, %v1536
      %v1538 = vpop.f32.mrf.mxu0
      %v1539 = vadd.f32 %v1007, %v1538
      %1540 = vmatmul.bf16.gmra.mxu0 %v1405
      %v1541 = vpop.f32.mrf.mxu0
      %v1542 = vadd.f32 %v1010, %v1541
      %v1543 = vpop.f32.mrf.mxu0
      %v1544 = vadd.f32 %v1012, %v1543
      %1545 = vmatmul.bf16.gmra.mxu0 %v1408
      %v1546 = vpop.f32.mrf.mxu0
      %v1547 = vadd.f32 %v1015, %v1546
      %v1548 = vpop.f32.mrf.mxu0
      %v1549 = vadd.f32 %v1017, %v1548
      %1550 = vmatmul.bf16.gmra.mxu0 %v1411
      %v1551 = vpop.f32.mrf.mxu0
      %v1552 = vadd.f32 %v1020, %v1551
      %v1553 = vpop.f32.mrf.mxu0
      %v1554 = vadd.f32 %v1022, %v1553
      %1555 = vmatmul.bf16.gmra.mxu0 %v1414
      %v1556 = vpop.f32.mrf.mxu0
      %v1557 = vadd.f32 %v1025, %v1556
      %v1558 = vpop.f32.mrf.mxu0
      %v1559 = vadd.f32 %v1027, %v1558
      %1560 = vmatmul.bf16.gmra.mxu0 %v1417
      %v1561 = vpop.f32.mrf.mxu0
      %v1562 = vadd.f32 %v1030, %v1561
      %v1563 = vpop.f32.mrf.mxu0
      %v1564 = vadd.f32 %v1032, %v1563
      %1565 = vmatmul.bf16.gmra.mxu0 %v1420
      %v1566 = vpop.f32.mrf.mxu0
      %v1567 = vadd.f32 %v1035, %v1566
      %v1568 = vpop.f32.mrf.mxu0
      %v1569 = vadd.f32 %v1037, %v1568
      %1570 = vmatmul.bf16.gmra.mxu0 %v1423
      %v1571 = vpop.f32.mrf.mxu0
      %v1572 = vadd.f32 %v1040, %v1571
      %v1573 = vpop.f32.mrf.mxu0
      %v1574 = vadd.f32 %v1042, %v1573
      %1575 = vmatmul.bf16.gmra.mxu0 %v1426
      %v1576 = vpop.f32.mrf.mxu0
      %v1577 = vadd.f32 %v1045, %v1576
      %v1578 = vpop.f32.mrf.mxu0
      %v1579 = vadd.f32 %v1047, %v1578
      %1580 = vmatmul.bf16.gmra.mxu0 %v1429
      %v1581 = vpop.f32.mrf.mxu0
      %v1582 = vadd.f32 %v1050, %v1581
      %v1583 = vpop.f32.mrf.mxu0
      %v1584 = vadd.f32 %v1052, %v1583
      %1585 = vmatmul.bf16.gmra.mxu0 %v1432
      %v1586 = vpop.f32.mrf.mxu0
      %v1587 = vadd.f32 %v1055, %v1586
      %v1588 = vpop.f32.mrf.mxu0
      %v1589 = vadd.f32 %v1057, %v1588
      %1590 = vmatmul.bf16.gmra.mxu0 %v1435
      %v1591 = vpop.f32.mrf.mxu0
      %v1592 = vadd.f32 %v1060, %v1591
      %v1593 = vpop.f32.mrf.mxu0
      %v1594 = vadd.f32 %v1062, %v1593
      %1595 = vmatmul.bf16.gmra.mxu0 %v1438
      %v1596 = vpop.f32.mrf.mxu0
      %v1597 = vadd.f32 %v1065, %v1596
      %v1598 = vpop.f32.mrf.mxu0
      %v1599 = vadd.f32 %v1067, %v1598
      %1600 = vmatmul.bf16.gmra.mxu0 %v1441
      %v1601 = vpop.f32.mrf.mxu0
      %v1602 = vadd.f32 %v1070, %v1601
      %v1603 = vpop.f32.mrf.mxu0
      %v1604 = vadd.f32 %v1072, %v1603
      %1605 = vmatmul.bf16.gmra.mxu0 %v1444
      %v1606 = vpop.f32.mrf.mxu0
      %v1607 = vadd.f32 %v1075, %v1606
      %v1608 = vpop.f32.mrf.mxu0
      %v1609 = vadd.f32 %v1077, %v1608
      %1610 = vmatmul.bf16.gmra.mxu0 %v1447
      %v1611 = vpop.f32.mrf.mxu0
      %v1612 = vadd.f32 %v1080, %v1611
      %v1613 = vpop.f32.mrf.mxu0
      %v1614 = vadd.f32 %v1082, %v1613
      %1615 = vmatmul.bf16.gmra.mxu0 %v1450
      %v1616 = vpop.f32.mrf.mxu0
      %v1617 = vadd.f32 %v1085, %v1616
      %v1618 = vpop.f32.mrf.mxu0
      %v1619 = vadd.f32 %v1087, %v1618
      %1620 = vdwg.mxu0
      %vm1621 = vsmask.f32 6400
      %v1622 = vrot.slane %v1091, 1
      %v1623 = vrot.slane %v1093, 2
      %v1624 = vor.u32 %v1622, %v1623
      %v1625 = vrot.slane %v1102, 1
      %v1626 = vrot.slane %v1098, 2
      %v1627 = vor.u32 %v1625, %v1626
      %v1628 = vsel %vm1621, %v1624, %v1627
      %v1629 = vrot.slane %v1110, 1
      %v1630 = vrot.slane %v1106, 2
      %v1631 = vor.u32 %v1629, %v1630
      %v1632 = vsel %vm1621, %v1627, %v1631
      %v1633 = vrot.slane %v1118, 1
      %v1634 = vrot.slane %v1114, 2
      %v1635 = vor.u32 %v1633, %v1634
      %v1636 = vsel %vm1621, %v1631, %v1635
      %v1637 = vrot.slane %v1126, 1
      %v1638 = vrot.slane %v1122, 2
      %v1639 = vor.u32 %v1637, %v1638
      %v1640 = vsel %vm1621, %v1635, %v1639
      %v1641 = vrot.slane %v1134, 1
      %v1642 = vrot.slane %v1130, 2
      %v1643 = vor.u32 %v1641, %v1642
      %v1644 = vsel %vm1621, %v1639, %v1643
      %v1645 = vrot.slane %v1142, 1
      %v1646 = vrot.slane %v1138, 2
      %v1647 = vor.u32 %v1645, %v1646
      %v1648 = vsel %vm1621, %v1643, %v1647
      %v1649 = vrot.slane %v1150, 1
      %v1650 = vrot.slane %v1146, 2
      %v1651 = vor.u32 %v1649, %v1650
      %v1652 = vsel %vm1621, %v1647, %v1651
      %v1653 = vrot.slane %v1158, 1
      %v1654 = vrot.slane %v1154, 2
      %v1655 = vor.u32 %v1653, %v1654
      %v1656 = vsel %vm1621, %v1651, %v1655
      %v1657 = vrot.slane %v1166, 1
      %v1658 = vrot.slane %v1162, 2
      %v1659 = vor.u32 %v1657, %v1658
      %v1660 = vsel %vm1621, %v1655, %v1659
      %v1661 = vrot.slane %v1174, 1
      %v1662 = vrot.slane %v1170, 2
      %v1663 = vor.u32 %v1661, %v1662
      %v1664 = vsel %vm1621, %v1659, %v1663
      %v1665 = vrot.slane %v1182, 1
      %v1666 = vrot.slane %v1178, 2
      %v1667 = vor.u32 %v1665, %v1666
      %v1668 = vsel %vm1621, %v1663, %v1667
      %v1669 = vrot.slane %v1190, 1
      %v1670 = vrot.slane %v1186, 2
      %v1671 = vor.u32 %v1669, %v1670
      %v1672 = vsel %vm1621, %v1667, %v1671
      %v1673 = vrot.slane %v1198, 1
      %v1674 = vrot.slane %v1194, 2
      %v1675 = vor.u32 %v1673, %v1674
      %v1676 = vsel %vm1621, %v1671, %v1675
      %v1677 = vrot.slane %v1206, 1
      %v1678 = vrot.slane %v1202, 2
      %v1679 = vor.u32 %v1677, %v1678
      %v1680 = vsel %vm1621, %v1675, %v1679
      %v1681 = vrot.slane %v1214, 1
      %v1682 = vrot.slane %v1210, 2
      %v1683 = vor.u32 %v1681, %v1682
      %v1684 = vsel %vm1621, %v1679, %v1683
      %v1685 = vrot.slane %v1222, 1
      %v1686 = vrot.slane %v1218, 2
      %v1687 = vor.u32 %v1685, %v1686
      %v1688 = vsel %vm1621, %v1683, %v1687
      %v1689 = vrot.slane %v1230, 1
      %v1690 = vrot.slane %v1226, 2
      %v1691 = vor.u32 %v1689, %v1690
      %v1692 = vsel %vm1621, %v1687, %v1691
      %v1693 = vrot.slane %v1238, 1
      %v1694 = vrot.slane %v1234, 2
      %v1695 = vor.u32 %v1693, %v1694
      %v1696 = vsel %vm1621, %v1691, %v1695
      %v1697 = vrot.slane %v1246, 1
      %v1698 = vrot.slane %v1242, 2
      %v1699 = vor.u32 %v1697, %v1698
      %v1700 = vsel %vm1621, %v1695, %v1699
      %v1701 = vrot.slane %v1254, 1
      %v1702 = vrot.slane %v1250, 2
      %v1703 = vor.u32 %v1701, %v1702
      %v1704 = vsel %vm1621, %v1699, %v1703
      %v1705 = vrot.slane %v1262, 1
      %v1706 = vrot.slane %v1258, 2
      %v1707 = vor.u32 %v1705, %v1706
      %v1708 = vsel %vm1621, %v1703, %v1707
      %v1709 = vrot.slane %v1270, 1
      %v1710 = vrot.slane %v1266, 2
      %v1711 = vor.u32 %v1709, %v1710
      %v1712 = vsel %vm1621, %v1707, %v1711
      %v1713 = vrot.slane %v1278, 1
      %v1714 = vrot.slane %v1274, 2
      %v1715 = vor.u32 %v1713, %v1714
      %v1716 = vsel %vm1621, %v1711, %v1715
      %v1717 = vrot.slane %v1286, 1
      %v1718 = vrot.slane %v1282, 2
      %v1719 = vor.u32 %v1717, %v1718
      %v1720 = vsel %vm1621, %v1715, %v1719
      %v1721 = vrot.slane %v1294, 1
      %v1722 = vrot.slane %v1290, 2
      %v1723 = vor.u32 %v1721, %v1722
      %v1724 = vsel %vm1621, %v1719, %v1723
      %v1725 = vrot.slane %v1302, 1
      %v1726 = vrot.slane %v1298, 2
      %v1727 = vor.u32 %v1725, %v1726
      %v1728 = vsel %vm1621, %v1723, %v1727
      %v1729 = vrot.slane %v1310, 1
      %v1730 = vrot.slane %v1306, 2
      %v1731 = vor.u32 %v1729, %v1730
      %v1732 = vsel %vm1621, %v1727, %v1731
      %v1733 = vrot.slane %v1318, 1
      %v1734 = vrot.slane %v1314, 2
      %v1735 = vor.u32 %v1733, %v1734
      %v1736 = vsel %vm1621, %v1731, %v1735
      %v1737 = vrot.slane %v1326, 1
      %v1738 = vrot.slane %v1322, 2
      %v1739 = vor.u32 %v1737, %v1738
      %v1740 = vsel %vm1621, %v1735, %v1739
      %v1741 = vrot.slane %v1334, 1
      %v1742 = vrot.slane %v1330, 2
      %v1743 = vor.u32 %v1741, %v1742
      %v1744 = vsel %vm1621, %v1739, %v1743
      %v1745 = vrot.slane %v1342, 1
      %v1746 = vrot.slane %v1338, 2
      %v1747 = vor.u32 %v1745, %v1746
      %v1748 = vsel %vm1621, %v1743, %v1747
      %v1749 = vshrl.u32 %v655, 16
      %v1751 = vrot.slane %v1749, 1
      %v1752 = vrot.slane %v1346, 2
      %v1753 = vor.u32 %v1751, %v1752
      %v1754 = vsel %vm1621, %v1747, %v1753
      %v1757 = vunpack.c.l.b16 %v701
      %v1758 = vunpack.c.l.b16 %v702
      %v1759 = vpack.c.b16 %v1758, %v1757
      %v1762 = vsel %vm823, %v1628, 0
      %v1765 = vsel %vm823, %v1632, 0
      %v1768 = vsel %vm823, %v1636, 0
      %v1771 = vsel %vm823, %v1640, 0
      %v1774 = vsel %vm823, %v1644, 0
      %v1777 = vsel %vm823, %v1648, 0
      %v1780 = vsel %vm823, %v1652, 0
      %v1783 = vsel %vm823, %v1656, 0
      %v1786 = vsel %vm823, %v1660, 0
      %v1789 = vsel %vm823, %v1664, 0
      %v1792 = vsel %vm823, %v1668, 0
      %v1795 = vsel %vm823, %v1672, 0
      %v1798 = vsel %vm823, %v1676, 0
      %v1801 = vsel %vm823, %v1680, 0
      %v1804 = vsel %vm823, %v1684, 0
      %v1807 = vsel %vm823, %v1688, 0
      %v1810 = vsel %vm823, %v1692, 0
      %v1813 = vsel %vm823, %v1696, 0
      %v1816 = vsel %vm823, %v1700, 0
      %v1819 = vsel %vm823, %v1704, 0
      %v1822 = vsel %vm823, %v1708, 0
      %v1825 = vsel %vm823, %v1712, 0
      %v1828 = vsel %vm823, %v1716, 0
      %v1831 = vsel %vm823, %v1720, 0
      %v1834 = vsel %vm823, %v1724, 0
      %v1837 = vsel %vm823, %v1728, 0
      %v1840 = vsel %vm823, %v1732, 0
      %v1843 = vsel %vm823, %v1736, 0
      %v1846 = vsel %vm823, %v1740, 0
      %v1849 = vsel %vm823, %v1744, 0
      %v1852 = vsel %vm823, %v1748, 0
      %v1855 = vsel %vm823, %v1754, 0
      %1857 = vmatpush.bf16.msra.mxu0 0
      %1858 = vmatpush.bf16.msra.mxu0 0
      %1859 = vmatpush.bf16.msra.mxu0 0
      %1860 = vmatpush.bf16.msra.mxu0 0
      %1861 = vmatpush.bf16.msra.mxu0 0
      %1862 = vmatpush.bf16.msra.mxu0 0
      %1863 = vmatpush.bf16.msra.mxu0 0
      %1864 = vmatpush.bf16.msra.mxu0 %v1759
      %1865 = vmatmul.bf16.gmra.mxu0 %v1762
      %v1866 = vpop.f32.mrf.mxu0
      %v1867 = vadd.f32 0.0, %v1866
      %v1868 = vpop.f32.mrf.mxu0
      %v1869 = vadd.f32 0.0, %v1868
      %1870 = vmatmul.bf16.gmra.mxu0 %v1765
      %v1871 = vpop.f32.mrf.mxu0
      %v1872 = vadd.f32 0.0, %v1871
      %v1873 = vpop.f32.mrf.mxu0
      %v1874 = vadd.f32 0.0, %v1873
      %1875 = vmatmul.bf16.gmra.mxu0 %v1768
      %v1876 = vpop.f32.mrf.mxu0
      %v1877 = vadd.f32 0.0, %v1876
      %v1878 = vpop.f32.mrf.mxu0
      %v1879 = vadd.f32 0.0, %v1878
      %1880 = vmatmul.bf16.gmra.mxu0 %v1771
      %v1881 = vpop.f32.mrf.mxu0
      %v1882 = vadd.f32 0.0, %v1881
      %v1883 = vpop.f32.mrf.mxu0
      %v1884 = vadd.f32 0.0, %v1883
      %1885 = vmatmul.bf16.gmra.mxu0 %v1774
      %v1886 = vpop.f32.mrf.mxu0
      %v1887 = vadd.f32 0.0, %v1886
      %v1888 = vpop.f32.mrf.mxu0
      %v1889 = vadd.f32 0.0, %v1888
      %1890 = vmatmul.bf16.gmra.mxu0 %v1777
      %v1891 = vpop.f32.mrf.mxu0
      %v1892 = vadd.f32 0.0, %v1891
      %v1893 = vpop.f32.mrf.mxu0
      %v1894 = vadd.f32 0.0, %v1893
      %1895 = vmatmul.bf16.gmra.mxu0 %v1780
      %v1896 = vpop.f32.mrf.mxu0
      %v1897 = vadd.f32 0.0, %v1896
      %v1898 = vpop.f32.mrf.mxu0
      %v1899 = vadd.f32 0.0, %v1898
      %1900 = vmatmul.bf16.gmra.mxu0 %v1783
      %v1901 = vpop.f32.mrf.mxu0
      %v1902 = vadd.f32 0.0, %v1901
      %v1903 = vpop.f32.mrf.mxu0
      %v1904 = vadd.f32 0.0, %v1903
      %1905 = vmatmul.bf16.gmra.mxu0 %v1786
      %v1906 = vpop.f32.mrf.mxu0
      %v1907 = vadd.f32 0.0, %v1906
      %v1908 = vpop.f32.mrf.mxu0
      %v1909 = vadd.f32 0.0, %v1908
      %1910 = vmatmul.bf16.gmra.mxu0 %v1789
      %v1911 = vpop.f32.mrf.mxu0
      %v1912 = vadd.f32 0.0, %v1911
      %v1913 = vpop.f32.mrf.mxu0
      %v1914 = vadd.f32 0.0, %v1913
      %1915 = vmatmul.bf16.gmra.mxu0 %v1792
      %v1916 = vpop.f32.mrf.mxu0
      %v1917 = vadd.f32 0.0, %v1916
      %v1918 = vpop.f32.mrf.mxu0
      %v1919 = vadd.f32 0.0, %v1918
      %1920 = vmatmul.bf16.gmra.mxu0 %v1795
      %v1921 = vpop.f32.mrf.mxu0
      %v1922 = vadd.f32 0.0, %v1921
      %v1923 = vpop.f32.mrf.mxu0
      %v1924 = vadd.f32 0.0, %v1923
      %1925 = vmatmul.bf16.gmra.mxu0 %v1798
      %v1926 = vpop.f32.mrf.mxu0
      %v1927 = vadd.f32 0.0, %v1926
      %v1928 = vpop.f32.mrf.mxu0
      %v1929 = vadd.f32 0.0, %v1928
      %1930 = vmatmul.bf16.gmra.mxu0 %v1801
      %v1931 = vpop.f32.mrf.mxu0
      %v1932 = vadd.f32 0.0, %v1931
      %v1933 = vpop.f32.mrf.mxu0
      %v1934 = vadd.f32 0.0, %v1933
      %1935 = vmatmul.bf16.gmra.mxu0 %v1804
      %v1936 = vpop.f32.mrf.mxu0
      %v1937 = vadd.f32 0.0, %v1936
      %v1938 = vpop.f32.mrf.mxu0
      %v1939 = vadd.f32 0.0, %v1938
      %1940 = vmatmul.bf16.gmra.mxu0 %v1807
      %v1941 = vpop.f32.mrf.mxu0
      %v1942 = vadd.f32 0.0, %v1941
      %v1943 = vpop.f32.mrf.mxu0
      %v1944 = vadd.f32 0.0, %v1943
      %1945 = vmatmul.bf16.gmra.mxu0 %v1810
      %v1946 = vpop.f32.mrf.mxu0
      %v1947 = vadd.f32 0.0, %v1946
      %v1948 = vpop.f32.mrf.mxu0
      %v1949 = vadd.f32 0.0, %v1948
      %1950 = vmatmul.bf16.gmra.mxu0 %v1813
      %v1951 = vpop.f32.mrf.mxu0
      %v1952 = vadd.f32 0.0, %v1951
      %v1953 = vpop.f32.mrf.mxu0
      %v1954 = vadd.f32 0.0, %v1953
      %1955 = vmatmul.bf16.gmra.mxu0 %v1816
      %v1956 = vpop.f32.mrf.mxu0
      %v1957 = vadd.f32 0.0, %v1956
      %v1958 = vpop.f32.mrf.mxu0
      %v1959 = vadd.f32 0.0, %v1958
      %1960 = vmatmul.bf16.gmra.mxu0 %v1819
      %v1961 = vpop.f32.mrf.mxu0
      %v1962 = vadd.f32 0.0, %v1961
      %v1963 = vpop.f32.mrf.mxu0
      %v1964 = vadd.f32 0.0, %v1963
      %1965 = vmatmul.bf16.gmra.mxu0 %v1822
      %v1966 = vpop.f32.mrf.mxu0
      %v1967 = vadd.f32 0.0, %v1966
      %v1968 = vpop.f32.mrf.mxu0
      %v1969 = vadd.f32 0.0, %v1968
      %1970 = vmatmul.bf16.gmra.mxu0 %v1825
      %v1971 = vpop.f32.mrf.mxu0
      %v1972 = vadd.f32 0.0, %v1971
      %v1973 = vpop.f32.mrf.mxu0
      %v1974 = vadd.f32 0.0, %v1973
      %1975 = vmatmul.bf16.gmra.mxu0 %v1828
      %v1976 = vpop.f32.mrf.mxu0
      %v1977 = vadd.f32 0.0, %v1976
      %v1978 = vpop.f32.mrf.mxu0
      %v1979 = vadd.f32 0.0, %v1978
      %1980 = vmatmul.bf16.gmra.mxu0 %v1831
      %v1981 = vpop.f32.mrf.mxu0
      %v1982 = vadd.f32 0.0, %v1981
      %v1983 = vpop.f32.mrf.mxu0
      %v1984 = vadd.f32 0.0, %v1983
      %1985 = vmatmul.bf16.gmra.mxu0 %v1834
      %v1986 = vpop.f32.mrf.mxu0
      %v1987 = vadd.f32 0.0, %v1986
      %v1988 = vpop.f32.mrf.mxu0
      %v1989 = vadd.f32 0.0, %v1988
      %1990 = vmatmul.bf16.gmra.mxu0 %v1837
      %v1991 = vpop.f32.mrf.mxu0
      %v1992 = vadd.f32 0.0, %v1991
      %v1993 = vpop.f32.mrf.mxu0
      %v1994 = vadd.f32 0.0, %v1993
      %1995 = vmatmul.bf16.gmra.mxu0 %v1840
      %v1996 = vpop.f32.mrf.mxu0
      %v1997 = vadd.f32 0.0, %v1996
      %v1998 = vpop.f32.mrf.mxu0
      %v1999 = vadd.f32 0.0, %v1998
      %2000 = vmatmul.bf16.gmra.mxu0 %v1843
      %v2001 = vpop.f32.mrf.mxu0
      %v2002 = vadd.f32 0.0, %v2001
      %v2003 = vpop.f32.mrf.mxu0
      %v2004 = vadd.f32 0.0, %v2003
      %2005 = vmatmul.bf16.gmra.mxu0 %v1846
      %v2006 = vpop.f32.mrf.mxu0
      %v2007 = vadd.f32 0.0, %v2006
      %v2008 = vpop.f32.mrf.mxu0
      %v2009 = vadd.f32 0.0, %v2008
      %2010 = vmatmul.bf16.gmra.mxu0 %v1849
      %v2011 = vpop.f32.mrf.mxu0
      %v2012 = vadd.f32 0.0, %v2011
      %v2013 = vpop.f32.mrf.mxu0
      %v2014 = vadd.f32 0.0, %v2013
      %2015 = vmatmul.bf16.gmra.mxu0 %v1852
      %v2016 = vpop.f32.mrf.mxu0
      %v2017 = vadd.f32 0.0, %v2016
      %v2018 = vpop.f32.mrf.mxu0
      %v2019 = vadd.f32 0.0, %v2018
      %2020 = vmatmul.bf16.gmra.mxu0 %v1855
      %v2021 = vpop.f32.mrf.mxu0
      %v2022 = vadd.f32 0.0, %v2021
      %v2023 = vpop.f32.mrf.mxu0
      %v2024 = vadd.f32 0.0, %v2023
      %2025 = vdwg.mxu0
      %v2026 = vadd.f32 %v1462, %v1867
      %v2027 = vadd.f32 %v1464, %v1869
      %v2028 = vadd.f32 %v1467, %v1872
      %v2029 = vadd.f32 %v1469, %v1874
      %v2030 = vadd.f32 %v1472, %v1877
      %v2031 = vadd.f32 %v1474, %v1879
      %v2032 = vadd.f32 %v1477, %v1882
      %v2033 = vadd.f32 %v1479, %v1884
      %v2034 = vadd.f32 %v1482, %v1887
      %v2035 = vadd.f32 %v1484, %v1889
      %v2036 = vadd.f32 %v1487, %v1892
      %v2037 = vadd.f32 %v1489, %v1894
      %v2038 = vadd.f32 %v1492, %v1897
      %v2039 = vadd.f32 %v1494, %v1899
      %v2040 = vadd.f32 %v1497, %v1902
      %v2041 = vadd.f32 %v1499, %v1904
      %v2042 = vadd.f32 %v1502, %v1907
      %v2043 = vadd.f32 %v1504, %v1909
      %v2044 = vadd.f32 %v1507, %v1912
      %v2045 = vadd.f32 %v1509, %v1914
      %v2046 = vadd.f32 %v1512, %v1917
      %v2047 = vadd.f32 %v1514, %v1919
      %v2048 = vadd.f32 %v1517, %v1922
      %v2049 = vadd.f32 %v1519, %v1924
      %v2050 = vadd.f32 %v1522, %v1927
      %v2051 = vadd.f32 %v1524, %v1929
      %v2052 = vadd.f32 %v1527, %v1932
      %v2053 = vadd.f32 %v1529, %v1934
      %v2054 = vadd.f32 %v1532, %v1937
      %v2055 = vadd.f32 %v1534, %v1939
      %v2056 = vadd.f32 %v1537, %v1942
      %v2057 = vadd.f32 %v1539, %v1944
      %v2058 = vadd.f32 %v1542, %v1947
      %v2059 = vadd.f32 %v1544, %v1949
      %v2060 = vadd.f32 %v1547, %v1952
      %v2061 = vadd.f32 %v1549, %v1954
      %v2062 = vadd.f32 %v1552, %v1957
      %v2063 = vadd.f32 %v1554, %v1959
      %v2064 = vadd.f32 %v1557, %v1962
      %v2065 = vadd.f32 %v1559, %v1964
      %v2066 = vadd.f32 %v1562, %v1967
      %v2067 = vadd.f32 %v1564, %v1969
      %v2068 = vadd.f32 %v1567, %v1972
      %v2069 = vadd.f32 %v1569, %v1974
      %v2070 = vadd.f32 %v1572, %v1977
      %v2071 = vadd.f32 %v1574, %v1979
      %v2072 = vadd.f32 %v1577, %v1982
      %v2073 = vadd.f32 %v1579, %v1984
      %v2074 = vadd.f32 %v1582, %v1987
      %v2075 = vadd.f32 %v1584, %v1989
      %v2076 = vadd.f32 %v1587, %v1992
      %v2077 = vadd.f32 %v1589, %v1994
      %v2078 = vadd.f32 %v1592, %v1997
      %v2079 = vadd.f32 %v1594, %v1999
      %v2080 = vadd.f32 %v1597, %v2002
      %v2081 = vadd.f32 %v1599, %v2004
      %v2082 = vadd.f32 %v1602, %v2007
      %v2083 = vadd.f32 %v1604, %v2009
      %v2084 = vadd.f32 %v1607, %v2012
      %v2085 = vadd.f32 %v1609, %v2014
      %v2086 = vadd.f32 %v1612, %v2017
      %v2087 = vadd.f32 %v1614, %v2019
      %v2088 = vadd.f32 %v1617, %v2022
      %v2089 = vadd.f32 %v1619, %v2024
      %vm2090 = vsmask.f32 2304
      %v2091 = vrot.slane %v1091, 5
      %v2092 = vrot.slane %v1093, 6
      %v2093 = vor.u32 %v2091, %v2092
      %v2094 = vrot.slane %v1102, 5
      %v2095 = vrot.slane %v1098, 6
      %v2096 = vor.u32 %v2094, %v2095
      %v2097 = vsel %vm2090, %v2093, %v2096
      %v2098 = vrot.slane %v1110, 5
      %v2099 = vrot.slane %v1106, 6
      %v2100 = vor.u32 %v2098, %v2099
      %v2101 = vsel %vm2090, %v2096, %v2100
      %v2102 = vrot.slane %v1118, 5
      %v2103 = vrot.slane %v1114, 6
      %v2104 = vor.u32 %v2102, %v2103
      %v2105 = vsel %vm2090, %v2100, %v2104
      %v2106 = vrot.slane %v1126, 5
      %v2107 = vrot.slane %v1122, 6
      %v2108 = vor.u32 %v2106, %v2107
      %v2109 = vsel %vm2090, %v2104, %v2108
      %v2110 = vrot.slane %v1134, 5
      %v2111 = vrot.slane %v1130, 6
      %v2112 = vor.u32 %v2110, %v2111
      %v2113 = vsel %vm2090, %v2108, %v2112
      %v2114 = vrot.slane %v1142, 5
      %v2115 = vrot.slane %v1138, 6
      %v2116 = vor.u32 %v2114, %v2115
      %v2117 = vsel %vm2090, %v2112, %v2116
      %v2118 = vrot.slane %v1150, 5
      %v2119 = vrot.slane %v1146, 6
      %v2120 = vor.u32 %v2118, %v2119
      %v2121 = vsel %vm2090, %v2116, %v2120
      %v2122 = vrot.slane %v1158, 5
      %v2123 = vrot.slane %v1154, 6
      %v2124 = vor.u32 %v2122, %v2123
      %v2125 = vsel %vm2090, %v2120, %v2124
      %v2126 = vrot.slane %v1166, 5
      %v2127 = vrot.slane %v1162, 6
      %v2128 = vor.u32 %v2126, %v2127
      %v2129 = vsel %vm2090, %v2124, %v2128
      %v2130 = vrot.slane %v1174, 5
      %v2131 = vrot.slane %v1170, 6
      %v2132 = vor.u32 %v2130, %v2131
      %v2133 = vsel %vm2090, %v2128, %v2132
      %v2134 = vrot.slane %v1182, 5
      %v2135 = vrot.slane %v1178, 6
      %v2136 = vor.u32 %v2134, %v2135
      %v2137 = vsel %vm2090, %v2132, %v2136
      %v2138 = vrot.slane %v1190, 5
      %v2139 = vrot.slane %v1186, 6
      %v2140 = vor.u32 %v2138, %v2139
      %v2141 = vsel %vm2090, %v2136, %v2140
      %v2142 = vrot.slane %v1198, 5
      %v2143 = vrot.slane %v1194, 6
      %v2144 = vor.u32 %v2142, %v2143
      %v2145 = vsel %vm2090, %v2140, %v2144
      %v2146 = vrot.slane %v1206, 5
      %v2147 = vrot.slane %v1202, 6
      %v2148 = vor.u32 %v2146, %v2147
      %v2149 = vsel %vm2090, %v2144, %v2148
      %v2150 = vrot.slane %v1214, 5
      %v2151 = vrot.slane %v1210, 6
      %v2152 = vor.u32 %v2150, %v2151
      %v2153 = vsel %vm2090, %v2148, %v2152
      %v2154 = vrot.slane %v1222, 5
      %v2155 = vrot.slane %v1218, 6
      %v2156 = vor.u32 %v2154, %v2155
      %v2157 = vsel %vm2090, %v2152, %v2156
      %v2158 = vrot.slane %v1230, 5
      %v2159 = vrot.slane %v1226, 6
      %v2160 = vor.u32 %v2158, %v2159
      %v2161 = vsel %vm2090, %v2156, %v2160
      %v2162 = vrot.slane %v1238, 5
      %v2163 = vrot.slane %v1234, 6
      %v2164 = vor.u32 %v2162, %v2163
      %v2165 = vsel %vm2090, %v2160, %v2164
      %v2166 = vrot.slane %v1246, 5
      %v2167 = vrot.slane %v1242, 6
      %v2168 = vor.u32 %v2166, %v2167
      %v2169 = vsel %vm2090, %v2164, %v2168
      %v2170 = vrot.slane %v1254, 5
      %v2171 = vrot.slane %v1250, 6
      %v2172 = vor.u32 %v2170, %v2171
      %v2173 = vsel %vm2090, %v2168, %v2172
      %v2174 = vrot.slane %v1262, 5
      %v2175 = vrot.slane %v1258, 6
      %v2176 = vor.u32 %v2174, %v2175
      %v2177 = vsel %vm2090, %v2172, %v2176
      %v2178 = vrot.slane %v1270, 5
      %v2179 = vrot.slane %v1266, 6
      %v2180 = vor.u32 %v2178, %v2179
      %v2181 = vsel %vm2090, %v2176, %v2180
      %v2182 = vrot.slane %v1278, 5
      %v2183 = vrot.slane %v1274, 6
      %v2184 = vor.u32 %v2182, %v2183
      %v2185 = vsel %vm2090, %v2180, %v2184
      %v2186 = vrot.slane %v1286, 5
      %v2187 = vrot.slane %v1282, 6
      %v2188 = vor.u32 %v2186, %v2187
      %v2189 = vsel %vm2090, %v2184, %v2188
      %v2190 = vrot.slane %v1294, 5
      %v2191 = vrot.slane %v1290, 6
      %v2192 = vor.u32 %v2190, %v2191
      %v2193 = vsel %vm2090, %v2188, %v2192
      %v2194 = vrot.slane %v1302, 5
      %v2195 = vrot.slane %v1298, 6
      %v2196 = vor.u32 %v2194, %v2195
      %v2197 = vsel %vm2090, %v2192, %v2196
      %v2198 = vrot.slane %v1310, 5
      %v2199 = vrot.slane %v1306, 6
      %v2200 = vor.u32 %v2198, %v2199
      %v2201 = vsel %vm2090, %v2196, %v2200
      %v2202 = vrot.slane %v1318, 5
      %v2203 = vrot.slane %v1314, 6
      %v2204 = vor.u32 %v2202, %v2203
      %v2205 = vsel %vm2090, %v2200, %v2204
      %v2206 = vrot.slane %v1326, 5
      %v2207 = vrot.slane %v1322, 6
      %v2208 = vor.u32 %v2206, %v2207
      %v2209 = vsel %vm2090, %v2204, %v2208
      %v2210 = vrot.slane %v1334, 5
      %v2211 = vrot.slane %v1330, 6
      %v2212 = vor.u32 %v2210, %v2211
      %v2213 = vsel %vm2090, %v2208, %v2212
      %v2214 = vrot.slane %v1342, 5
      %v2215 = vrot.slane %v1338, 6
      %v2216 = vor.u32 %v2214, %v2215
      %v2217 = vsel %vm2090, %v2212, %v2216
      %v2218 = vrot.slane %v1749, 5
      %v2219 = vrot.slane %v1346, 6
      %v2220 = vor.u32 %v2218, %v2219
      %v2221 = vsel %vm2090, %v2216, %v2220
      %v2224 = vunpack.c.l.b16 %v703
      %v2225 = vunpack.c.l.b16 %v704
      %v2226 = vpack.c.b16 %v2225, %v2224
      %v2229 = vsel %vm823, %v2097, 0
      %v2232 = vsel %vm823, %v2101, 0
      %v2235 = vsel %vm823, %v2105, 0
      %v2238 = vsel %vm823, %v2109, 0
      %v2241 = vsel %vm823, %v2113, 0
      %v2244 = vsel %vm823, %v2117, 0
      %v2247 = vsel %vm823, %v2121, 0
      %v2250 = vsel %vm823, %v2125, 0
      %v2253 = vsel %vm823, %v2129, 0
      %v2256 = vsel %vm823, %v2133, 0
      %v2259 = vsel %vm823, %v2137, 0
      %v2262 = vsel %vm823, %v2141, 0
      %v2265 = vsel %vm823, %v2145, 0
      %v2268 = vsel %vm823, %v2149, 0
      %v2271 = vsel %vm823, %v2153, 0
      %v2274 = vsel %vm823, %v2157, 0
      %v2277 = vsel %vm823, %v2161, 0
      %v2280 = vsel %vm823, %v2165, 0
      %v2283 = vsel %vm823, %v2169, 0
      %v2286 = vsel %vm823, %v2173, 0
      %v2289 = vsel %vm823, %v2177, 0
      %v2292 = vsel %vm823, %v2181, 0
      %v2295 = vsel %vm823, %v2185, 0
      %v2298 = vsel %vm823, %v2189, 0
      %v2301 = vsel %vm823, %v2193, 0
      %v2304 = vsel %vm823, %v2197, 0
      %v2307 = vsel %vm823, %v2201, 0
      %v2310 = vsel %vm823, %v2205, 0
      %v2313 = vsel %vm823, %v2209, 0
      %v2316 = vsel %vm823, %v2213, 0
      %v2319 = vsel %vm823, %v2217, 0
      %v2322 = vsel %vm823, %v2221, 0
      %2324 = vmatpush.bf16.msra.mxu0 0
      %2325 = vmatpush.bf16.msra.mxu0 0
      %2326 = vmatpush.bf16.msra.mxu0 0
      %2327 = vmatpush.bf16.msra.mxu0 0
      %2328 = vmatpush.bf16.msra.mxu0 0
      %2329 = vmatpush.bf16.msra.mxu0 0
      %2330 = vmatpush.bf16.msra.mxu0 0
      %2331 = vmatpush.bf16.msra.mxu0 %v2226
      %2332 = vmatmul.bf16.gmra.mxu0 %v2229
      %v2333 = vpop.f32.mrf.mxu0
      %v2334 = vadd.f32 0.0, %v2333
      %v2335 = vpop.f32.mrf.mxu0
      %v2336 = vadd.f32 0.0, %v2335
      %2337 = vmatmul.bf16.gmra.mxu0 %v2232
      %v2338 = vpop.f32.mrf.mxu0
      %v2339 = vadd.f32 0.0, %v2338
      %v2340 = vpop.f32.mrf.mxu0
      %v2341 = vadd.f32 0.0, %v2340
      %2342 = vmatmul.bf16.gmra.mxu0 %v2235
      %v2343 = vpop.f32.mrf.mxu0
      %v2344 = vadd.f32 0.0, %v2343
      %v2345 = vpop.f32.mrf.mxu0
      %v2346 = vadd.f32 0.0, %v2345
      %2347 = vmatmul.bf16.gmra.mxu0 %v2238
      %v2348 = vpop.f32.mrf.mxu0
      %v2349 = vadd.f32 0.0, %v2348
      %v2350 = vpop.f32.mrf.mxu0
      %v2351 = vadd.f32 0.0, %v2350
      %2352 = vmatmul.bf16.gmra.mxu0 %v2241
      %v2353 = vpop.f32.mrf.mxu0
      %v2354 = vadd.f32 0.0, %v2353
      %v2355 = vpop.f32.mrf.mxu0
      %v2356 = vadd.f32 0.0, %v2355
      %2357 = vmatmul.bf16.gmra.mxu0 %v2244
      %v2358 = vpop.f32.mrf.mxu0
      %v2359 = vadd.f32 0.0, %v2358
      %v2360 = vpop.f32.mrf.mxu0
      %v2361 = vadd.f32 0.0, %v2360
      %2362 = vmatmul.bf16.gmra.mxu0 %v2247
      %v2363 = vpop.f32.mrf.mxu0
      %v2364 = vadd.f32 0.0, %v2363
      %v2365 = vpop.f32.mrf.mxu0
      %v2366 = vadd.f32 0.0, %v2365
      %2367 = vmatmul.bf16.gmra.mxu0 %v2250
      %v2368 = vpop.f32.mrf.mxu0
      %v2369 = vadd.f32 0.0, %v2368
      %v2370 = vpop.f32.mrf.mxu0
      %v2371 = vadd.f32 0.0, %v2370
      %2372 = vmatmul.bf16.gmra.mxu0 %v2253
      %v2373 = vpop.f32.mrf.mxu0
      %v2374 = vadd.f32 0.0, %v2373
      %v2375 = vpop.f32.mrf.mxu0
      %v2376 = vadd.f32 0.0, %v2375
      %2377 = vmatmul.bf16.gmra.mxu0 %v2256
      %v2378 = vpop.f32.mrf.mxu0
      %v2379 = vadd.f32 0.0, %v2378
      %v2380 = vpop.f32.mrf.mxu0
      %v2381 = vadd.f32 0.0, %v2380
      %2382 = vmatmul.bf16.gmra.mxu0 %v2259
      %v2383 = vpop.f32.mrf.mxu0
      %v2384 = vadd.f32 0.0, %v2383
      %v2385 = vpop.f32.mrf.mxu0
      %v2386 = vadd.f32 0.0, %v2385
      %2387 = vmatmul.bf16.gmra.mxu0 %v2262
      %v2388 = vpop.f32.mrf.mxu0
      %v2389 = vadd.f32 0.0, %v2388
      %v2390 = vpop.f32.mrf.mxu0
      %v2391 = vadd.f32 0.0, %v2390
      %2392 = vmatmul.bf16.gmra.mxu0 %v2265
      %v2393 = vpop.f32.mrf.mxu0
      %v2394 = vadd.f32 0.0, %v2393
      %v2395 = vpop.f32.mrf.mxu0
      %v2396 = vadd.f32 0.0, %v2395
      %2397 = vmatmul.bf16.gmra.mxu0 %v2268
      %v2398 = vpop.f32.mrf.mxu0
      %v2399 = vadd.f32 0.0, %v2398
      %v2400 = vpop.f32.mrf.mxu0
      %v2401 = vadd.f32 0.0, %v2400
      %2402 = vmatmul.bf16.gmra.mxu0 %v2271
      %v2403 = vpop.f32.mrf.mxu0
      %v2404 = vadd.f32 0.0, %v2403
      %v2405 = vpop.f32.mrf.mxu0
      %v2406 = vadd.f32 0.0, %v2405
      %2407 = vmatmul.bf16.gmra.mxu0 %v2274
      %v2408 = vpop.f32.mrf.mxu0
      %v2409 = vadd.f32 0.0, %v2408
      %v2410 = vpop.f32.mrf.mxu0
      %v2411 = vadd.f32 0.0, %v2410
      %2412 = vmatmul.bf16.gmra.mxu0 %v2277
      %v2413 = vpop.f32.mrf.mxu0
      %v2414 = vadd.f32 0.0, %v2413
      %v2415 = vpop.f32.mrf.mxu0
      %v2416 = vadd.f32 0.0, %v2415
      %2417 = vmatmul.bf16.gmra.mxu0 %v2280
      %v2418 = vpop.f32.mrf.mxu0
      %v2419 = vadd.f32 0.0, %v2418
      %v2420 = vpop.f32.mrf.mxu0
      %v2421 = vadd.f32 0.0, %v2420
      %2422 = vmatmul.bf16.gmra.mxu0 %v2283
      %v2423 = vpop.f32.mrf.mxu0
      %v2424 = vadd.f32 0.0, %v2423
      %v2425 = vpop.f32.mrf.mxu0
      %v2426 = vadd.f32 0.0, %v2425
      %2427 = vmatmul.bf16.gmra.mxu0 %v2286
      %v2428 = vpop.f32.mrf.mxu0
      %v2429 = vadd.f32 0.0, %v2428
      %v2430 = vpop.f32.mrf.mxu0
      %v2431 = vadd.f32 0.0, %v2430
      %2432 = vmatmul.bf16.gmra.mxu0 %v2289
      %v2433 = vpop.f32.mrf.mxu0
      %v2434 = vadd.f32 0.0, %v2433
      %v2435 = vpop.f32.mrf.mxu0
      %v2436 = vadd.f32 0.0, %v2435
      %2437 = vmatmul.bf16.gmra.mxu0 %v2292
      %v2438 = vpop.f32.mrf.mxu0
      %v2439 = vadd.f32 0.0, %v2438
      %v2440 = vpop.f32.mrf.mxu0
      %v2441 = vadd.f32 0.0, %v2440
      %2442 = vmatmul.bf16.gmra.mxu0 %v2295
      %v2443 = vpop.f32.mrf.mxu0
      %v2444 = vadd.f32 0.0, %v2443
      %v2445 = vpop.f32.mrf.mxu0
      %v2446 = vadd.f32 0.0, %v2445
      %2447 = vmatmul.bf16.gmra.mxu0 %v2298
      %v2448 = vpop.f32.mrf.mxu0
      %v2449 = vadd.f32 0.0, %v2448
      %v2450 = vpop.f32.mrf.mxu0
      %v2451 = vadd.f32 0.0, %v2450
      %2452 = vmatmul.bf16.gmra.mxu0 %v2301
      %v2453 = vpop.f32.mrf.mxu0
      %v2454 = vadd.f32 0.0, %v2453
      %v2455 = vpop.f32.mrf.mxu0
      %v2456 = vadd.f32 0.0, %v2455
      %2457 = vmatmul.bf16.gmra.mxu0 %v2304
      %v2458 = vpop.f32.mrf.mxu0
      %v2459 = vadd.f32 0.0, %v2458
      %v2460 = vpop.f32.mrf.mxu0
      %v2461 = vadd.f32 0.0, %v2460
      %2462 = vmatmul.bf16.gmra.mxu0 %v2307
      %v2463 = vpop.f32.mrf.mxu0
      %v2464 = vadd.f32 0.0, %v2463
      %v2465 = vpop.f32.mrf.mxu0
      %v2466 = vadd.f32 0.0, %v2465
      %2467 = vmatmul.bf16.gmra.mxu0 %v2310
      %v2468 = vpop.f32.mrf.mxu0
      %v2469 = vadd.f32 0.0, %v2468
      %v2470 = vpop.f32.mrf.mxu0
      %v2471 = vadd.f32 0.0, %v2470
      %2472 = vmatmul.bf16.gmra.mxu0 %v2313
      %v2473 = vpop.f32.mrf.mxu0
      %v2474 = vadd.f32 0.0, %v2473
      %v2475 = vpop.f32.mrf.mxu0
      %v2476 = vadd.f32 0.0, %v2475
      %2477 = vmatmul.bf16.gmra.mxu0 %v2316
      %v2478 = vpop.f32.mrf.mxu0
      %v2479 = vadd.f32 0.0, %v2478
      %v2480 = vpop.f32.mrf.mxu0
      %v2481 = vadd.f32 0.0, %v2480
      %2482 = vmatmul.bf16.gmra.mxu0 %v2319
      %v2483 = vpop.f32.mrf.mxu0
      %v2484 = vadd.f32 0.0, %v2483
      %v2485 = vpop.f32.mrf.mxu0
      %v2486 = vadd.f32 0.0, %v2485
      %2487 = vmatmul.bf16.gmra.mxu0 %v2322
      %v2488 = vpop.f32.mrf.mxu0
      %v2489 = vadd.f32 0.0, %v2488
      %v2490 = vpop.f32.mrf.mxu0
      %v2491 = vadd.f32 0.0, %v2490
      %2492 = vdwg.mxu0
      %v2493 = vadd.f32 %v2026, %v2334
      %v2494 = vadd.f32 %v2027, %v2336
      %v2495 = vadd.f32 %v2028, %v2339
      %v2496 = vadd.f32 %v2029, %v2341
      %v2497 = vadd.f32 %v2030, %v2344
      %v2498 = vadd.f32 %v2031, %v2346
      %v2499 = vadd.f32 %v2032, %v2349
      %v2500 = vadd.f32 %v2033, %v2351
      %v2501 = vadd.f32 %v2034, %v2354
      %v2502 = vadd.f32 %v2035, %v2356
      %v2503 = vadd.f32 %v2036, %v2359
      %v2504 = vadd.f32 %v2037, %v2361
      %v2505 = vadd.f32 %v2038, %v2364
      %v2506 = vadd.f32 %v2039, %v2366
      %v2507 = vadd.f32 %v2040, %v2369
      %v2508 = vadd.f32 %v2041, %v2371
      %v2509 = vadd.f32 %v2042, %v2374
      %v2510 = vadd.f32 %v2043, %v2376
      %v2511 = vadd.f32 %v2044, %v2379
      %v2512 = vadd.f32 %v2045, %v2381
      %v2513 = vadd.f32 %v2046, %v2384
      %v2514 = vadd.f32 %v2047, %v2386
      %v2515 = vadd.f32 %v2048, %v2389
      %v2516 = vadd.f32 %v2049, %v2391
      %v2517 = vadd.f32 %v2050, %v2394
      %v2518 = vadd.f32 %v2051, %v2396
      %v2519 = vadd.f32 %v2052, %v2399
      %v2520 = vadd.f32 %v2053, %v2401
      %v2521 = vadd.f32 %v2054, %v2404
      %v2522 = vadd.f32 %v2055, %v2406
      %v2523 = vadd.f32 %v2056, %v2409
      %v2524 = vadd.f32 %v2057, %v2411
      %v2525 = vadd.f32 %v2058, %v2414
      %v2526 = vadd.f32 %v2059, %v2416
      %v2527 = vadd.f32 %v2060, %v2419
      %v2528 = vadd.f32 %v2061, %v2421
      %v2529 = vadd.f32 %v2062, %v2424
      %v2530 = vadd.f32 %v2063, %v2426
      %v2531 = vadd.f32 %v2064, %v2429
      %v2532 = vadd.f32 %v2065, %v2431
      %v2533 = vadd.f32 %v2066, %v2434
      %v2534 = vadd.f32 %v2067, %v2436
      %v2535 = vadd.f32 %v2068, %v2439
      %v2536 = vadd.f32 %v2069, %v2441
      %v2537 = vadd.f32 %v2070, %v2444
      %v2538 = vadd.f32 %v2071, %v2446
      %v2539 = vadd.f32 %v2072, %v2449
      %v2540 = vadd.f32 %v2073, %v2451
      %v2541 = vadd.f32 %v2074, %v2454
      %v2542 = vadd.f32 %v2075, %v2456
      %v2543 = vadd.f32 %v2076, %v2459
      %v2544 = vadd.f32 %v2077, %v2461
      %v2545 = vadd.f32 %v2078, %v2464
      %v2546 = vadd.f32 %v2079, %v2466
      %v2547 = vadd.f32 %v2080, %v2469
      %v2548 = vadd.f32 %v2081, %v2471
      %v2549 = vadd.f32 %v2082, %v2474
      %v2550 = vadd.f32 %v2083, %v2476
      %v2551 = vadd.f32 %v2084, %v2479
      %v2552 = vadd.f32 %v2085, %v2481
      %v2553 = vadd.f32 %v2086, %v2484
      %v2554 = vadd.f32 %v2087, %v2486
      %v2555 = vadd.f32 %v2088, %v2489
      %v2556 = vadd.f32 %v2089, %v2491
      %vm2557 = vcmask 1041408
      %v2558 = vrot.slane %v495, 6
      %v2559 = vrot.slane %v496, 6
      %v2560 = vsel %vm2557, %v2558, %v2559
      %v2561 = vrot.slane %v497, 6
      %v2562 = vsel %vm2557, %v2559, %v2561
      %v2563 = vrot.slane %v498, 6
      %v2564 = vsel %vm2557, %v2561, %v2563
      %v2565 = vrot.slane %v499, 6
      %v2566 = vsel %vm2557, %v2563, %v2565
      %v2567 = vrot.slane %v500, 6
      %v2568 = vsel %vm2557, %v2565, %v2567
      %v2569 = vrot.slane %v501, 6
      %v2570 = vsel %vm2557, %v2567, %v2569
      %v2571 = vrot.slane %v630, 6
      %v2572 = vsel %vm2557, %v2569, %v2571
      %v2573 = vrot.slane %v631, 6
      %v2574 = vsel %vm2557, %v2571, %v2573
      %v2575 = vrot.slane %v632, 6
      %v2576 = vsel %vm2557, %v2573, %v2575
      %v2577 = vrot.slane %v633, 6
      %v2578 = vsel %vm2557, %v2575, %v2577
      %v2579 = vrot.slane %v634, 6
      %v2580 = vsel %vm2557, %v2577, %v2579
      %v2581 = vrot.slane %v635, 6
      %v2582 = vsel %vm2557, %v2579, %v2581
      %v2583 = vrot.slane %v636, 6
      %v2584 = vsel %vm2557, %v2581, %v2583
      %v2585 = vrot.slane %v637, 6
      %v2586 = vsel %vm2557, %v2583, %v2585
      %v2587 = vrot.slane %v638, 6
      %v2588 = vsel %vm2557, %v2585, %v2587
      %v2589 = vrot.slane %v639, 6
      %v2590 = vsel %vm2557, %v2587, %v2589
      %v2591 = vrot.slane %v640, 6
      %v2592 = vsel %vm2557, %v2589, %v2591
      %v2593 = vrot.slane %v641, 6
      %v2594 = vsel %vm2557, %v2591, %v2593
      %v2595 = vrot.slane %v642, 6
      %v2596 = vsel %vm2557, %v2593, %v2595
      %v2597 = vrot.slane %v643, 6
      %v2598 = vsel %vm2557, %v2595, %v2597
      %v2599 = vrot.slane %v644, 6
      %v2600 = vsel %vm2557, %v2597, %v2599
      %v2601 = vrot.slane %v645, 6
      %v2602 = vsel %vm2557, %v2599, %v2601
      %v2603 = vrot.slane %v646, 6
      %v2604 = vsel %vm2557, %v2601, %v2603
      %v2605 = vrot.slane %v647, 6
      %v2606 = vsel %vm2557, %v2603, %v2605
      %v2607 = vrot.slane %v648, 6
      %v2608 = vsel %vm2557, %v2605, %v2607
      %v2609 = vrot.slane %v649, 6
      %v2610 = vsel %vm2557, %v2607, %v2609
      %v2611 = vrot.slane %v650, 6
      %v2612 = vsel %vm2557, %v2609, %v2611
      %v2613 = vrot.slane %v651, 6
      %v2614 = vsel %vm2557, %v2611, %v2613
      %v2615 = vrot.slane %v652, 6
      %v2616 = vsel %vm2557, %v2613, %v2615
      %v2617 = vrot.slane %v653, 6
      %v2618 = vsel %vm2557, %v2615, %v2617
      %v2619 = vrot.slane %v654, 6
      %v2620 = vsel %vm2557, %v2617, %v2619
      %v2621 = vrot.slane %v655, 6
      %v2622 = vsel %vm2557, %v2619, %v2621
      %v2625 = vunpack.c.l.b16 %v705
      %v2626 = vunpack.c.l.b16 %v706
      %v2627 = vpack.c.b16 %v2626, %v2625
      %v2630 = vsel %vm823, %v2560, 0
      %v2633 = vsel %vm823, %v2562, 0
      %v2636 = vsel %vm823, %v2564, 0
      %v2639 = vsel %vm823, %v2566, 0
      %v2642 = vsel %vm823, %v2568, 0
      %v2645 = vsel %vm823, %v2570, 0
      %v2648 = vsel %vm823, %v2572, 0
      %v2651 = vsel %vm823, %v2574, 0
      %v2654 = vsel %vm823, %v2576, 0
      %v2657 = vsel %vm823, %v2578, 0
      %v2660 = vsel %vm823, %v2580, 0
      %v2663 = vsel %vm823, %v2582, 0
      %v2666 = vsel %vm823, %v2584, 0
      %v2669 = vsel %vm823, %v2586, 0
      %v2672 = vsel %vm823, %v2588, 0
      %v2675 = vsel %vm823, %v2590, 0
      %v2678 = vsel %vm823, %v2592, 0
      %v2681 = vsel %vm823, %v2594, 0
      %v2684 = vsel %vm823, %v2596, 0
      %v2687 = vsel %vm823, %v2598, 0
      %v2690 = vsel %vm823, %v2600, 0
      %v2693 = vsel %vm823, %v2602, 0
      %v2696 = vsel %vm823, %v2604, 0
      %v2699 = vsel %vm823, %v2606, 0
      %v2702 = vsel %vm823, %v2608, 0
      %v2705 = vsel %vm823, %v2610, 0
      %v2708 = vsel %vm823, %v2612, 0
      %v2711 = vsel %vm823, %v2614, 0
      %v2714 = vsel %vm823, %v2616, 0
      %v2717 = vsel %vm823, %v2618, 0
      %v2720 = vsel %vm823, %v2620, 0
      %v2723 = vsel %vm823, %v2622, 0
      %2725 = vmatpush.bf16.msra.mxu0 0
      %2726 = vmatpush.bf16.msra.mxu0 0
      %2727 = vmatpush.bf16.msra.mxu0 0
      %2728 = vmatpush.bf16.msra.mxu0 0
      %2729 = vmatpush.bf16.msra.mxu0 0
      %2730 = vmatpush.bf16.msra.mxu0 0
      %2731 = vmatpush.bf16.msra.mxu0 0
      %2732 = vmatpush.bf16.msra.mxu0 %v2627
      %2733 = vmatmul.bf16.gmra.mxu0 %v2630
      %v2734 = vpop.f32.mrf.mxu0
      %v2735 = vadd.f32 0.0, %v2734
      %v2736 = vpop.f32.mrf.mxu0
      %v2737 = vadd.f32 0.0, %v2736
      %2738 = vmatmul.bf16.gmra.mxu0 %v2633
      %v2739 = vpop.f32.mrf.mxu0
      %v2740 = vadd.f32 0.0, %v2739
      %v2741 = vpop.f32.mrf.mxu0
      %v2742 = vadd.f32 0.0, %v2741
      %2743 = vmatmul.bf16.gmra.mxu0 %v2636
      %v2744 = vpop.f32.mrf.mxu0
      %v2745 = vadd.f32 0.0, %v2744
      %v2746 = vpop.f32.mrf.mxu0
      %v2747 = vadd.f32 0.0, %v2746
      %2748 = vmatmul.bf16.gmra.mxu0 %v2639
      %v2749 = vpop.f32.mrf.mxu0
      %v2750 = vadd.f32 0.0, %v2749
      %v2751 = vpop.f32.mrf.mxu0
      %v2752 = vadd.f32 0.0, %v2751
      %2753 = vmatmul.bf16.gmra.mxu0 %v2642
      %v2754 = vpop.f32.mrf.mxu0
      %v2755 = vadd.f32 0.0, %v2754
      %v2756 = vpop.f32.mrf.mxu0
      %v2757 = vadd.f32 0.0, %v2756
      %2758 = vmatmul.bf16.gmra.mxu0 %v2645
      %v2759 = vpop.f32.mrf.mxu0
      %v2760 = vadd.f32 0.0, %v2759
      %v2761 = vpop.f32.mrf.mxu0
      %v2762 = vadd.f32 0.0, %v2761
      %2763 = vmatmul.bf16.gmra.mxu0 %v2648
      %v2764 = vpop.f32.mrf.mxu0
      %v2765 = vadd.f32 0.0, %v2764
      %v2766 = vpop.f32.mrf.mxu0
      %v2767 = vadd.f32 0.0, %v2766
      %2768 = vmatmul.bf16.gmra.mxu0 %v2651
      %v2769 = vpop.f32.mrf.mxu0
      %v2770 = vadd.f32 0.0, %v2769
      %v2771 = vpop.f32.mrf.mxu0
      %v2772 = vadd.f32 0.0, %v2771
      %2773 = vmatmul.bf16.gmra.mxu0 %v2654
      %v2774 = vpop.f32.mrf.mxu0
      %v2775 = vadd.f32 0.0, %v2774
      %v2776 = vpop.f32.mrf.mxu0
      %v2777 = vadd.f32 0.0, %v2776
      %2778 = vmatmul.bf16.gmra.mxu0 %v2657
      %v2779 = vpop.f32.mrf.mxu0
      %v2780 = vadd.f32 0.0, %v2779
      %v2781 = vpop.f32.mrf.mxu0
      %v2782 = vadd.f32 0.0, %v2781
      %2783 = vmatmul.bf16.gmra.mxu0 %v2660
      %v2784 = vpop.f32.mrf.mxu0
      %v2785 = vadd.f32 0.0, %v2784
      %v2786 = vpop.f32.mrf.mxu0
      %v2787 = vadd.f32 0.0, %v2786
      %2788 = vmatmul.bf16.gmra.mxu0 %v2663
      %v2789 = vpop.f32.mrf.mxu0
      %v2790 = vadd.f32 0.0, %v2789
      %v2791 = vpop.f32.mrf.mxu0
      %v2792 = vadd.f32 0.0, %v2791
      %2793 = vmatmul.bf16.gmra.mxu0 %v2666
      %v2794 = vpop.f32.mrf.mxu0
      %v2795 = vadd.f32 0.0, %v2794
      %v2796 = vpop.f32.mrf.mxu0
      %v2797 = vadd.f32 0.0, %v2796
      %2798 = vmatmul.bf16.gmra.mxu0 %v2669
      %v2799 = vpop.f32.mrf.mxu0
      %v2800 = vadd.f32 0.0, %v2799
      %v2801 = vpop.f32.mrf.mxu0
      %v2802 = vadd.f32 0.0, %v2801
      %2803 = vmatmul.bf16.gmra.mxu0 %v2672
      %v2804 = vpop.f32.mrf.mxu0
      %v2805 = vadd.f32 0.0, %v2804
      %v2806 = vpop.f32.mrf.mxu0
      %v2807 = vadd.f32 0.0, %v2806
      %2808 = vmatmul.bf16.gmra.mxu0 %v2675
      %v2809 = vpop.f32.mrf.mxu0
      %v2810 = vadd.f32 0.0, %v2809
      %v2811 = vpop.f32.mrf.mxu0
      %v2812 = vadd.f32 0.0, %v2811
      %2813 = vmatmul.bf16.gmra.mxu0 %v2678
      %v2814 = vpop.f32.mrf.mxu0
      %v2815 = vadd.f32 0.0, %v2814
      %v2816 = vpop.f32.mrf.mxu0
      %v2817 = vadd.f32 0.0, %v2816
      %2818 = vmatmul.bf16.gmra.mxu0 %v2681
      %v2819 = vpop.f32.mrf.mxu0
      %v2820 = vadd.f32 0.0, %v2819
      %v2821 = vpop.f32.mrf.mxu0
      %v2822 = vadd.f32 0.0, %v2821
      %2823 = vmatmul.bf16.gmra.mxu0 %v2684
      %v2824 = vpop.f32.mrf.mxu0
      %v2825 = vadd.f32 0.0, %v2824
      %v2826 = vpop.f32.mrf.mxu0
      %v2827 = vadd.f32 0.0, %v2826
      %2828 = vmatmul.bf16.gmra.mxu0 %v2687
      %v2829 = vpop.f32.mrf.mxu0
      %v2830 = vadd.f32 0.0, %v2829
      %v2831 = vpop.f32.mrf.mxu0
      %v2832 = vadd.f32 0.0, %v2831
      %2833 = vmatmul.bf16.gmra.mxu0 %v2690
      %v2834 = vpop.f32.mrf.mxu0
      %v2835 = vadd.f32 0.0, %v2834
      %v2836 = vpop.f32.mrf.mxu0
      %v2837 = vadd.f32 0.0, %v2836
      %2838 = vmatmul.bf16.gmra.mxu0 %v2693
      %v2839 = vpop.f32.mrf.mxu0
      %v2840 = vadd.f32 0.0, %v2839
      %v2841 = vpop.f32.mrf.mxu0
      %v2842 = vadd.f32 0.0, %v2841
      %2843 = vmatmul.bf16.gmra.mxu0 %v2696
      %v2844 = vpop.f32.mrf.mxu0
      %v2845 = vadd.f32 0.0, %v2844
      %v2846 = vpop.f32.mrf.mxu0
      %v2847 = vadd.f32 0.0, %v2846
      %2848 = vmatmul.bf16.gmra.mxu0 %v2699
      %v2849 = vpop.f32.mrf.mxu0
      %v2850 = vadd.f32 0.0, %v2849
      %v2851 = vpop.f32.mrf.mxu0
      %v2852 = vadd.f32 0.0, %v2851
      %2853 = vmatmul.bf16.gmra.mxu0 %v2702
      %v2854 = vpop.f32.mrf.mxu0
      %v2855 = vadd.f32 0.0, %v2854
      %v2856 = vpop.f32.mrf.mxu0
      %v2857 = vadd.f32 0.0, %v2856
      %2858 = vmatmul.bf16.gmra.mxu0 %v2705
      %v2859 = vpop.f32.mrf.mxu0
      %v2860 = vadd.f32 0.0, %v2859
      %v2861 = vpop.f32.mrf.mxu0
      %v2862 = vadd.f32 0.0, %v2861
      %2863 = vmatmul.bf16.gmra.mxu0 %v2708
      %v2864 = vpop.f32.mrf.mxu0
      %v2865 = vadd.f32 0.0, %v2864
      %v2866 = vpop.f32.mrf.mxu0
      %v2867 = vadd.f32 0.0, %v2866
      %2868 = vmatmul.bf16.gmra.mxu0 %v2711
      %v2869 = vpop.f32.mrf.mxu0
      %v2870 = vadd.f32 0.0, %v2869
      %v2871 = vpop.f32.mrf.mxu0
      %v2872 = vadd.f32 0.0, %v2871
      %2873 = vmatmul.bf16.gmra.mxu0 %v2714
      %v2874 = vpop.f32.mrf.mxu0
      %v2875 = vadd.f32 0.0, %v2874
      %v2876 = vpop.f32.mrf.mxu0
      %v2877 = vadd.f32 0.0, %v2876
      %2878 = vmatmul.bf16.gmra.mxu0 %v2717
      %v2879 = vpop.f32.mrf.mxu0
      %v2880 = vadd.f32 0.0, %v2879
      %v2881 = vpop.f32.mrf.mxu0
      %v2882 = vadd.f32 0.0, %v2881
      %2883 = vmatmul.bf16.gmra.mxu0 %v2720
      %v2884 = vpop.f32.mrf.mxu0
      %v2885 = vadd.f32 0.0, %v2884
      %v2886 = vpop.f32.mrf.mxu0
      %v2887 = vadd.f32 0.0, %v2886
      %2888 = vmatmul.bf16.gmra.mxu0 %v2723
      %v2889 = vpop.f32.mrf.mxu0
      %v2890 = vadd.f32 0.0, %v2889
      %v2891 = vpop.f32.mrf.mxu0
      %v2892 = vadd.f32 0.0, %v2891
      %2893 = vdwg.mxu0
      %v2894 = vadd.f32 %v2493, %v2735
      %v2895 = vadd.f32 %v2494, %v2737
      %v2896 = vadd.f32 %v2495, %v2740
      %v2897 = vadd.f32 %v2496, %v2742
      %v2898 = vadd.f32 %v2497, %v2745
      %v2899 = vadd.f32 %v2498, %v2747
      %v2900 = vadd.f32 %v2499, %v2750
      %v2901 = vadd.f32 %v2500, %v2752
      %v2902 = vadd.f32 %v2501, %v2755
      %v2903 = vadd.f32 %v2502, %v2757
      %v2904 = vadd.f32 %v2503, %v2760
      %v2905 = vadd.f32 %v2504, %v2762
      %v2906 = vadd.f32 %v2505, %v2765
      %v2907 = vadd.f32 %v2506, %v2767
      %v2908 = vadd.f32 %v2507, %v2770
      %v2909 = vadd.f32 %v2508, %v2772
      %v2910 = vadd.f32 %v2509, %v2775
      %v2911 = vadd.f32 %v2510, %v2777
      %v2912 = vadd.f32 %v2511, %v2780
      %v2913 = vadd.f32 %v2512, %v2782
      %v2914 = vadd.f32 %v2513, %v2785
      %v2915 = vadd.f32 %v2514, %v2787
      %v2916 = vadd.f32 %v2515, %v2790
      %v2917 = vadd.f32 %v2516, %v2792
      %v2918 = vadd.f32 %v2517, %v2795
      %v2919 = vadd.f32 %v2518, %v2797
      %v2920 = vadd.f32 %v2519, %v2800
      %v2921 = vadd.f32 %v2520, %v2802
      %v2922 = vadd.f32 %v2521, %v2805
      %v2923 = vadd.f32 %v2522, %v2807
      %v2924 = vadd.f32 %v2523, %v2810
      %v2925 = vadd.f32 %v2524, %v2812
      %v2926 = vadd.f32 %v2525, %v2815
      %v2927 = vadd.f32 %v2526, %v2817
      %v2928 = vadd.f32 %v2527, %v2820
      %v2929 = vadd.f32 %v2528, %v2822
      %v2930 = vadd.f32 %v2529, %v2825
      %v2931 = vadd.f32 %v2530, %v2827
      %v2932 = vadd.f32 %v2531, %v2830
      %v2933 = vadd.f32 %v2532, %v2832
      %v2934 = vadd.f32 %v2533, %v2835
      %v2935 = vadd.f32 %v2534, %v2837
      %v2936 = vadd.f32 %v2535, %v2840
      %v2937 = vadd.f32 %v2536, %v2842
      %v2938 = vadd.f32 %v2537, %v2845
      %v2939 = vadd.f32 %v2538, %v2847
      %v2940 = vadd.f32 %v2539, %v2850
      %v2941 = vadd.f32 %v2540, %v2852
      %v2942 = vadd.f32 %v2541, %v2855
      %v2943 = vadd.f32 %v2542, %v2857
      %v2944 = vadd.f32 %v2543, %v2860
      %v2945 = vadd.f32 %v2544, %v2862
      %v2946 = vadd.f32 %v2545, %v2865
      %v2947 = vadd.f32 %v2546, %v2867
      %v2948 = vadd.f32 %v2547, %v2870
      %v2949 = vadd.f32 %v2548, %v2872
      %v2950 = vadd.f32 %v2549, %v2875
      %v2951 = vadd.f32 %v2550, %v2877
      %v2952 = vadd.f32 %v2551, %v2880
      %v2953 = vadd.f32 %v2552, %v2882
      %v2954 = vadd.f32 %v2553, %v2885
      %v2955 = vadd.f32 %v2554, %v2887
      %v2956 = vadd.f32 %v2555, %v2890
      %v2957 = vadd.f32 %v2556, %v2892
      %vm2958 = vsmask.f32 1280
      %v2959 = vrot.slane %v1091, 6
      %v2960 = vrot.slane %v1093, 7
      %v2961 = vor.u32 %v2959, %v2960
      %v2962 = vrot.slane %v1102, 6
      %v2963 = vrot.slane %v1098, 7
      %v2964 = vor.u32 %v2962, %v2963
      %v2965 = vsel %vm2958, %v2961, %v2964
      %v2966 = vrot.slane %v1110, 6
      %v2967 = vrot.slane %v1106, 7
      %v2968 = vor.u32 %v2966, %v2967
      %v2969 = vsel %vm2958, %v2964, %v2968
      %v2970 = vrot.slane %v1118, 6
      %v2971 = vrot.slane %v1114, 7
      %v2972 = vor.u32 %v2970, %v2971
      %v2973 = vsel %vm2958, %v2968, %v2972
      %v2974 = vrot.slane %v1126, 6
      %v2975 = vrot.slane %v1122, 7
      %v2976 = vor.u32 %v2974, %v2975
      %v2977 = vsel %vm2958, %v2972, %v2976
      %v2978 = vrot.slane %v1134, 6
      %v2979 = vrot.slane %v1130, 7
      %v2980 = vor.u32 %v2978, %v2979
      %v2981 = vsel %vm2958, %v2976, %v2980
      %v2982 = vrot.slane %v1142, 6
      %v2983 = vrot.slane %v1138, 7
      %v2984 = vor.u32 %v2982, %v2983
      %v2985 = vsel %vm2958, %v2980, %v2984
      %v2986 = vrot.slane %v1150, 6
      %v2987 = vrot.slane %v1146, 7
      %v2988 = vor.u32 %v2986, %v2987
      %v2989 = vsel %vm2958, %v2984, %v2988
      %v2990 = vrot.slane %v1158, 6
      %v2991 = vrot.slane %v1154, 7
      %v2992 = vor.u32 %v2990, %v2991
      %v2993 = vsel %vm2958, %v2988, %v2992
      %v2994 = vrot.slane %v1166, 6
      %v2995 = vrot.slane %v1162, 7
      %v2996 = vor.u32 %v2994, %v2995
      %v2997 = vsel %vm2958, %v2992, %v2996
      %v2998 = vrot.slane %v1174, 6
      %v2999 = vrot.slane %v1170, 7
      %v3000 = vor.u32 %v2998, %v2999
      %v3001 = vsel %vm2958, %v2996, %v3000
      %v3002 = vrot.slane %v1182, 6
      %v3003 = vrot.slane %v1178, 7
      %v3004 = vor.u32 %v3002, %v3003
      %v3005 = vsel %vm2958, %v3000, %v3004
      %v3006 = vrot.slane %v1190, 6
      %v3007 = vrot.slane %v1186, 7
      %v3008 = vor.u32 %v3006, %v3007
      %v3009 = vsel %vm2958, %v3004, %v3008
      %v3010 = vrot.slane %v1198, 6
      %v3011 = vrot.slane %v1194, 7
      %v3012 = vor.u32 %v3010, %v3011
      %v3013 = vsel %vm2958, %v3008, %v3012
      %v3014 = vrot.slane %v1206, 6
      %v3015 = vrot.slane %v1202, 7
      %v3016 = vor.u32 %v3014, %v3015
      %v3017 = vsel %vm2958, %v3012, %v3016
      %v3018 = vrot.slane %v1214, 6
      %v3019 = vrot.slane %v1210, 7
      %v3020 = vor.u32 %v3018, %v3019
      %v3021 = vsel %vm2958, %v3016, %v3020
      %v3022 = vrot.slane %v1222, 6
      %v3023 = vrot.slane %v1218, 7
      %v3024 = vor.u32 %v3022, %v3023
      %v3025 = vsel %vm2958, %v3020, %v3024
      %v3026 = vrot.slane %v1230, 6
      %v3027 = vrot.slane %v1226, 7
      %v3028 = vor.u32 %v3026, %v3027
      %v3029 = vsel %vm2958, %v3024, %v3028
      %v3030 = vrot.slane %v1238, 6
      %v3031 = vrot.slane %v1234, 7
      %v3032 = vor.u32 %v3030, %v3031
      %v3033 = vsel %vm2958, %v3028, %v3032
      %v3034 = vrot.slane %v1246, 6
      %v3035 = vrot.slane %v1242, 7
      %v3036 = vor.u32 %v3034, %v3035
      %v3037 = vsel %vm2958, %v3032, %v3036
      %v3038 = vrot.slane %v1254, 6
      %v3039 = vrot.slane %v1250, 7
      %v3040 = vor.u32 %v3038, %v3039
      %v3041 = vsel %vm2958, %v3036, %v3040
      %v3042 = vrot.slane %v1262, 6
      %v3043 = vrot.slane %v1258, 7
      %v3044 = vor.u32 %v3042, %v3043
      %v3045 = vsel %vm2958, %v3040, %v3044
      %v3046 = vrot.slane %v1270, 6
      %v3047 = vrot.slane %v1266, 7
      %v3048 = vor.u32 %v3046, %v3047
      %v3049 = vsel %vm2958, %v3044, %v3048
      %v3050 = vrot.slane %v1278, 6
      %v3051 = vrot.slane %v1274, 7
      %v3052 = vor.u32 %v3050, %v3051
      %v3053 = vsel %vm2958, %v3048, %v3052
      %v3054 = vrot.slane %v1286, 6
      %v3055 = vrot.slane %v1282, 7
      %v3056 = vor.u32 %v3054, %v3055
      %v3057 = vsel %vm2958, %v3052, %v3056
      %v3058 = vrot.slane %v1294, 6
      %v3059 = vrot.slane %v1290, 7
      %v3060 = vor.u32 %v3058, %v3059
      %v3061 = vsel %vm2958, %v3056, %v3060
      %v3062 = vrot.slane %v1302, 6
      %v3063 = vrot.slane %v1298, 7
      %v3064 = vor.u32 %v3062, %v3063
      %v3065 = vsel %vm2958, %v3060, %v3064
      %v3066 = vrot.slane %v1310, 6
      %v3067 = vrot.slane %v1306, 7
      %v3068 = vor.u32 %v3066, %v3067
      %v3069 = vsel %vm2958, %v3064, %v3068
      %v3070 = vrot.slane %v1318, 6
      %v3071 = vrot.slane %v1314, 7
      %v3072 = vor.u32 %v3070, %v3071
      %v3073 = vsel %vm2958, %v3068, %v3072
      %v3074 = vrot.slane %v1326, 6
      %v3075 = vrot.slane %v1322, 7
      %v3076 = vor.u32 %v3074, %v3075
      %v3077 = vsel %vm2958, %v3072, %v3076
      %v3078 = vrot.slane %v1334, 6
      %v3079 = vrot.slane %v1330, 7
      %v3080 = vor.u32 %v3078, %v3079
      %v3081 = vsel %vm2958, %v3076, %v3080
      %v3082 = vrot.slane %v1342, 6
      %v3083 = vrot.slane %v1338, 7
      %v3084 = vor.u32 %v3082, %v3083
      %v3085 = vsel %vm2958, %v3080, %v3084
      %v3086 = vrot.slane %v1749, 6
      %v3087 = vrot.slane %v1346, 7
      %v3088 = vor.u32 %v3086, %v3087
      %v3089 = vsel %vm2958, %v3084, %v3088
      %v3092 = vunpack.c.l.b16 %v707
      %v3093 = vunpack.c.l.b16 %v708
      %v3094 = vpack.c.b16 %v3093, %v3092
      %v3097 = vsel %vm823, %v2965, 0
      %v3100 = vsel %vm823, %v2969, 0
      %v3103 = vsel %vm823, %v2973, 0
      %v3106 = vsel %vm823, %v2977, 0
      %v3109 = vsel %vm823, %v2981, 0
      %v3112 = vsel %vm823, %v2985, 0
      %v3115 = vsel %vm823, %v2989, 0
      %v3118 = vsel %vm823, %v2993, 0
      %v3121 = vsel %vm823, %v2997, 0
      %v3124 = vsel %vm823, %v3001, 0
      %v3127 = vsel %vm823, %v3005, 0
      %v3130 = vsel %vm823, %v3009, 0
      %v3133 = vsel %vm823, %v3013, 0
      %v3136 = vsel %vm823, %v3017, 0
      %v3139 = vsel %vm823, %v3021, 0
      %v3142 = vsel %vm823, %v3025, 0
      %v3145 = vsel %vm823, %v3029, 0
      %v3148 = vsel %vm823, %v3033, 0
      %v3151 = vsel %vm823, %v3037, 0
      %v3154 = vsel %vm823, %v3041, 0
      %v3157 = vsel %vm823, %v3045, 0
      %v3160 = vsel %vm823, %v3049, 0
      %v3163 = vsel %vm823, %v3053, 0
      %v3166 = vsel %vm823, %v3057, 0
      %v3169 = vsel %vm823, %v3061, 0
      %v3172 = vsel %vm823, %v3065, 0
      %v3175 = vsel %vm823, %v3069, 0
      %v3178 = vsel %vm823, %v3073, 0
      %v3181 = vsel %vm823, %v3077, 0
      %v3184 = vsel %vm823, %v3081, 0
      %v3187 = vsel %vm823, %v3085, 0
      %v3190 = vsel %vm823, %v3089, 0
      %3192 = vmatpush.bf16.msra.mxu0 0
      %3193 = vmatpush.bf16.msra.mxu0 0
      %3194 = vmatpush.bf16.msra.mxu0 0
      %3195 = vmatpush.bf16.msra.mxu0 0
      %3196 = vmatpush.bf16.msra.mxu0 0
      %3197 = vmatpush.bf16.msra.mxu0 0
      %3198 = vmatpush.bf16.msra.mxu0 0
      %3199 = vmatpush.bf16.msra.mxu0 %v3094
      %3200 = vmatmul.bf16.gmra.mxu0 %v3097
      %v3201 = vpop.f32.mrf.mxu0
      %v3202 = vadd.f32 0.0, %v3201
      %v3203 = vpop.f32.mrf.mxu0
      %v3204 = vadd.f32 0.0, %v3203
      %3205 = vmatmul.bf16.gmra.mxu0 %v3100
      %v3206 = vpop.f32.mrf.mxu0
      %v3207 = vadd.f32 0.0, %v3206
      %v3208 = vpop.f32.mrf.mxu0
      %v3209 = vadd.f32 0.0, %v3208
      %3210 = vmatmul.bf16.gmra.mxu0 %v3103
      %v3211 = vpop.f32.mrf.mxu0
      %v3212 = vadd.f32 0.0, %v3211
      %v3213 = vpop.f32.mrf.mxu0
      %v3214 = vadd.f32 0.0, %v3213
      %3215 = vmatmul.bf16.gmra.mxu0 %v3106
      %v3216 = vpop.f32.mrf.mxu0
      %v3217 = vadd.f32 0.0, %v3216
      %v3218 = vpop.f32.mrf.mxu0
      %v3219 = vadd.f32 0.0, %v3218
      %3220 = vmatmul.bf16.gmra.mxu0 %v3109
      %v3221 = vpop.f32.mrf.mxu0
      %v3222 = vadd.f32 0.0, %v3221
      %v3223 = vpop.f32.mrf.mxu0
      %v3224 = vadd.f32 0.0, %v3223
      %3225 = vmatmul.bf16.gmra.mxu0 %v3112
      %v3226 = vpop.f32.mrf.mxu0
      %v3227 = vadd.f32 0.0, %v3226
      %v3228 = vpop.f32.mrf.mxu0
      %v3229 = vadd.f32 0.0, %v3228
      %3230 = vmatmul.bf16.gmra.mxu0 %v3115
      %v3231 = vpop.f32.mrf.mxu0
      %v3232 = vadd.f32 0.0, %v3231
      %v3233 = vpop.f32.mrf.mxu0
      %v3234 = vadd.f32 0.0, %v3233
      %3235 = vmatmul.bf16.gmra.mxu0 %v3118
      %v3236 = vpop.f32.mrf.mxu0
      %v3237 = vadd.f32 0.0, %v3236
      %v3238 = vpop.f32.mrf.mxu0
      %v3239 = vadd.f32 0.0, %v3238
      %3240 = vmatmul.bf16.gmra.mxu0 %v3121
      %v3241 = vpop.f32.mrf.mxu0
      %v3242 = vadd.f32 0.0, %v3241
      %v3243 = vpop.f32.mrf.mxu0
      %v3244 = vadd.f32 0.0, %v3243
      %3245 = vmatmul.bf16.gmra.mxu0 %v3124
      %v3246 = vpop.f32.mrf.mxu0
      %v3247 = vadd.f32 0.0, %v3246
      %v3248 = vpop.f32.mrf.mxu0
      %v3249 = vadd.f32 0.0, %v3248
      %3250 = vmatmul.bf16.gmra.mxu0 %v3127
      %v3251 = vpop.f32.mrf.mxu0
      %v3252 = vadd.f32 0.0, %v3251
      %v3253 = vpop.f32.mrf.mxu0
      %v3254 = vadd.f32 0.0, %v3253
      %3255 = vmatmul.bf16.gmra.mxu0 %v3130
      %v3256 = vpop.f32.mrf.mxu0
      %v3257 = vadd.f32 0.0, %v3256
      %v3258 = vpop.f32.mrf.mxu0
      %v3259 = vadd.f32 0.0, %v3258
      %3260 = vmatmul.bf16.gmra.mxu0 %v3133
      %v3261 = vpop.f32.mrf.mxu0
      %v3262 = vadd.f32 0.0, %v3261
      %v3263 = vpop.f32.mrf.mxu0
      %v3264 = vadd.f32 0.0, %v3263
      %3265 = vmatmul.bf16.gmra.mxu0 %v3136
      %v3266 = vpop.f32.mrf.mxu0
      %v3267 = vadd.f32 0.0, %v3266
      %v3268 = vpop.f32.mrf.mxu0
      %v3269 = vadd.f32 0.0, %v3268
      %3270 = vmatmul.bf16.gmra.mxu0 %v3139
      %v3271 = vpop.f32.mrf.mxu0
      %v3272 = vadd.f32 0.0, %v3271
      %v3273 = vpop.f32.mrf.mxu0
      %v3274 = vadd.f32 0.0, %v3273
      %3275 = vmatmul.bf16.gmra.mxu0 %v3142
      %v3276 = vpop.f32.mrf.mxu0
      %v3277 = vadd.f32 0.0, %v3276
      %v3278 = vpop.f32.mrf.mxu0
      %v3279 = vadd.f32 0.0, %v3278
      %3280 = vmatmul.bf16.gmra.mxu0 %v3145
      %v3281 = vpop.f32.mrf.mxu0
      %v3282 = vadd.f32 0.0, %v3281
      %v3283 = vpop.f32.mrf.mxu0
      %v3284 = vadd.f32 0.0, %v3283
      %3285 = vmatmul.bf16.gmra.mxu0 %v3148
      %v3286 = vpop.f32.mrf.mxu0
      %v3287 = vadd.f32 0.0, %v3286
      %v3288 = vpop.f32.mrf.mxu0
      %v3289 = vadd.f32 0.0, %v3288
      %3290 = vmatmul.bf16.gmra.mxu0 %v3151
      %v3291 = vpop.f32.mrf.mxu0
      %v3292 = vadd.f32 0.0, %v3291
      %v3293 = vpop.f32.mrf.mxu0
      %v3294 = vadd.f32 0.0, %v3293
      %3295 = vmatmul.bf16.gmra.mxu0 %v3154
      %v3296 = vpop.f32.mrf.mxu0
      %v3297 = vadd.f32 0.0, %v3296
      %v3298 = vpop.f32.mrf.mxu0
      %v3299 = vadd.f32 0.0, %v3298
      %3300 = vmatmul.bf16.gmra.mxu0 %v3157
      %v3301 = vpop.f32.mrf.mxu0
      %v3302 = vadd.f32 0.0, %v3301
      %v3303 = vpop.f32.mrf.mxu0
      %v3304 = vadd.f32 0.0, %v3303
      %3305 = vmatmul.bf16.gmra.mxu0 %v3160
      %v3306 = vpop.f32.mrf.mxu0
      %v3307 = vadd.f32 0.0, %v3306
      %v3308 = vpop.f32.mrf.mxu0
      %v3309 = vadd.f32 0.0, %v3308
      %3310 = vmatmul.bf16.gmra.mxu0 %v3163
      %v3311 = vpop.f32.mrf.mxu0
      %v3312 = vadd.f32 0.0, %v3311
      %v3313 = vpop.f32.mrf.mxu0
      %v3314 = vadd.f32 0.0, %v3313
      %3315 = vmatmul.bf16.gmra.mxu0 %v3166
      %v3316 = vpop.f32.mrf.mxu0
      %v3317 = vadd.f32 0.0, %v3316
      %v3318 = vpop.f32.mrf.mxu0
      %v3319 = vadd.f32 0.0, %v3318
      %3320 = vmatmul.bf16.gmra.mxu0 %v3169
      %v3321 = vpop.f32.mrf.mxu0
      %v3322 = vadd.f32 0.0, %v3321
      %v3323 = vpop.f32.mrf.mxu0
      %v3324 = vadd.f32 0.0, %v3323
      %3325 = vmatmul.bf16.gmra.mxu0 %v3172
      %v3326 = vpop.f32.mrf.mxu0
      %v3327 = vadd.f32 0.0, %v3326
      %v3328 = vpop.f32.mrf.mxu0
      %v3329 = vadd.f32 0.0, %v3328
      %3330 = vmatmul.bf16.gmra.mxu0 %v3175
      %v3331 = vpop.f32.mrf.mxu0
      %v3332 = vadd.f32 0.0, %v3331
      %v3333 = vpop.f32.mrf.mxu0
      %v3334 = vadd.f32 0.0, %v3333
      %3335 = vmatmul.bf16.gmra.mxu0 %v3178
      %v3336 = vpop.f32.mrf.mxu0
      %v3337 = vadd.f32 0.0, %v3336
      %v3338 = vpop.f32.mrf.mxu0
      %v3339 = vadd.f32 0.0, %v3338
      %3340 = vmatmul.bf16.gmra.mxu0 %v3181
      %v3341 = vpop.f32.mrf.mxu0
      %v3342 = vadd.f32 0.0, %v3341
      %v3343 = vpop.f32.mrf.mxu0
      %v3344 = vadd.f32 0.0, %v3343
      %3345 = vmatmul.bf16.gmra.mxu0 %v3184
      %v3346 = vpop.f32.mrf.mxu0
      %v3347 = vadd.f32 0.0, %v3346
      %v3348 = vpop.f32.mrf.mxu0
      %v3349 = vadd.f32 0.0, %v3348
      %3350 = vmatmul.bf16.gmra.mxu0 %v3187
      %v3351 = vpop.f32.mrf.mxu0
      %v3352 = vadd.f32 0.0, %v3351
      %v3353 = vpop.f32.mrf.mxu0
      %v3354 = vadd.f32 0.0, %v3353
      %3355 = vmatmul.bf16.gmra.mxu0 %v3190
      %v3356 = vpop.f32.mrf.mxu0
      %v3357 = vadd.f32 0.0, %v3356
      %v3358 = vpop.f32.mrf.mxu0
      %v3359 = vadd.f32 0.0, %v3358
      %3360 = vdwg.mxu0
      %v3361 = vadd.f32 %v2894, %v3202
      %v3362 = vadd.f32 %v2895, %v3204
      %v3363 = vadd.f32 %v2896, %v3207
      %v3364 = vadd.f32 %v2897, %v3209
      %v3365 = vadd.f32 %v2898, %v3212
      %v3366 = vadd.f32 %v2899, %v3214
      %v3367 = vadd.f32 %v2900, %v3217
      %v3368 = vadd.f32 %v2901, %v3219
      %v3369 = vadd.f32 %v2902, %v3222
      %v3370 = vadd.f32 %v2903, %v3224
      %v3371 = vadd.f32 %v2904, %v3227
      %v3372 = vadd.f32 %v2905, %v3229
      %v3373 = vadd.f32 %v2906, %v3232
      %v3374 = vadd.f32 %v2907, %v3234
      %v3375 = vadd.f32 %v2908, %v3237
      %v3376 = vadd.f32 %v2909, %v3239
      %v3377 = vadd.f32 %v2910, %v3242
      %v3378 = vadd.f32 %v2911, %v3244
      %v3379 = vadd.f32 %v2912, %v3247
      %v3380 = vadd.f32 %v2913, %v3249
      %v3381 = vadd.f32 %v2914, %v3252
      %v3382 = vadd.f32 %v2915, %v3254
      %v3383 = vadd.f32 %v2916, %v3257
      %v3384 = vadd.f32 %v2917, %v3259
      %v3385 = vadd.f32 %v2918, %v3262
      %v3386 = vadd.f32 %v2919, %v3264
      %v3387 = vadd.f32 %v2920, %v3267
      %v3388 = vadd.f32 %v2921, %v3269
      %v3389 = vadd.f32 %v2922, %v3272
      %v3390 = vadd.f32 %v2923, %v3274
      %v3391 = vadd.f32 %v2924, %v3277
      %v3392 = vadd.f32 %v2925, %v3279
      %v3393 = vadd.f32 %v2926, %v3282
      %v3394 = vadd.f32 %v2927, %v3284
      %v3395 = vadd.f32 %v2928, %v3287
      %v3396 = vadd.f32 %v2929, %v3289
      %v3397 = vadd.f32 %v2930, %v3292
      %v3398 = vadd.f32 %v2931, %v3294
      %v3399 = vadd.f32 %v2932, %v3297
      %v3400 = vadd.f32 %v2933, %v3299
      %v3401 = vadd.f32 %v2934, %v3302
      %v3402 = vadd.f32 %v2935, %v3304
      %v3403 = vadd.f32 %v2936, %v3307
      %v3404 = vadd.f32 %v2937, %v3309
      %v3405 = vadd.f32 %v2938, %v3312
      %v3406 = vadd.f32 %v2939, %v3314
      %v3407 = vadd.f32 %v2940, %v3317
      %v3408 = vadd.f32 %v2941, %v3319
      %v3409 = vadd.f32 %v2942, %v3322
      %v3410 = vadd.f32 %v2943, %v3324
      %v3411 = vadd.f32 %v2944, %v3327
      %v3412 = vadd.f32 %v2945, %v3329
      %v3413 = vadd.f32 %v2946, %v3332
      %v3414 = vadd.f32 %v2947, %v3334
      %v3415 = vadd.f32 %v2948, %v3337
      %v3416 = vadd.f32 %v2949, %v3339
      %v3417 = vadd.f32 %v2950, %v3342
      %v3418 = vadd.f32 %v2951, %v3344
      %v3419 = vadd.f32 %v2952, %v3347
      %v3420 = vadd.f32 %v2953, %v3349
      %v3421 = vadd.f32 %v2954, %v3352
      %v3422 = vadd.f32 %v2955, %v3354
      %v3423 = vadd.f32 %v2956, %v3357
      %v3424 = vadd.f32 %v2957, %v3359
      %vm3425 = vsmask.f32 5376
      %v3426 = vrot.slane %v1102, 2
      %v3427 = vrot.slane %v1098, 3
      %v3428 = vor.u32 %v3426, %v3427
      %v3429 = vrot.slane %v1110, 2
      %v3430 = vrot.slane %v1106, 3
      %v3431 = vor.u32 %v3429, %v3430
      %v3432 = vsel %vm3425, %v3428, %v3431
      %v3433 = vrot.slane %v1118, 2
      %v3434 = vrot.slane %v1114, 3
      %v3435 = vor.u32 %v3433, %v3434
      %v3436 = vsel %vm3425, %v3431, %v3435
      %v3437 = vrot.slane %v1126, 2
      %v3438 = vrot.slane %v1122, 3
      %v3439 = vor.u32 %v3437, %v3438
      %v3440 = vsel %vm3425, %v3435, %v3439
      %v3441 = vrot.slane %v1134, 2
      %v3442 = vrot.slane %v1130, 3
      %v3443 = vor.u32 %v3441, %v3442
      %v3444 = vsel %vm3425, %v3439, %v3443
      %v3445 = vrot.slane %v1142, 2
      %v3446 = vrot.slane %v1138, 3
      %v3447 = vor.u32 %v3445, %v3446
      %v3448 = vsel %vm3425, %v3443, %v3447
      %v3449 = vrot.slane %v1150, 2
      %v3450 = vrot.slane %v1146, 3
      %v3451 = vor.u32 %v3449, %v3450
      %v3452 = vsel %vm3425, %v3447, %v3451
      %v3453 = vrot.slane %v1158, 2
      %v3454 = vrot.slane %v1154, 3
      %v3455 = vor.u32 %v3453, %v3454
      %v3456 = vsel %vm3425, %v3451, %v3455
      %v3457 = vrot.slane %v1166, 2
      %v3458 = vrot.slane %v1162, 3
      %v3459 = vor.u32 %v3457, %v3458
      %v3460 = vsel %vm3425, %v3455, %v3459
      %v3461 = vrot.slane %v1174, 2
      %v3462 = vrot.slane %v1170, 3
      %v3463 = vor.u32 %v3461, %v3462
      %v3464 = vsel %vm3425, %v3459, %v3463
      %v3465 = vrot.slane %v1182, 2
      %v3466 = vrot.slane %v1178, 3
      %v3467 = vor.u32 %v3465, %v3466
      %v3468 = vsel %vm3425, %v3463, %v3467
      %v3469 = vrot.slane %v1190, 2
      %v3470 = vrot.slane %v1186, 3
      %v3471 = vor.u32 %v3469, %v3470
      %v3472 = vsel %vm3425, %v3467, %v3471
      %v3473 = vrot.slane %v1198, 2
      %v3474 = vrot.slane %v1194, 3
      %v3475 = vor.u32 %v3473, %v3474
      %v3476 = vsel %vm3425, %v3471, %v3475
      %v3477 = vrot.slane %v1206, 2
      %v3478 = vrot.slane %v1202, 3
      %v3479 = vor.u32 %v3477, %v3478
      %v3480 = vsel %vm3425, %v3475, %v3479
      %v3481 = vrot.slane %v1214, 2
      %v3482 = vrot.slane %v1210, 3
      %v3483 = vor.u32 %v3481, %v3482
      %v3484 = vsel %vm3425, %v3479, %v3483
      %v3485 = vrot.slane %v1222, 2
      %v3486 = vrot.slane %v1218, 3
      %v3487 = vor.u32 %v3485, %v3486
      %v3488 = vsel %vm3425, %v3483, %v3487
      %v3489 = vrot.slane %v1230, 2
      %v3490 = vrot.slane %v1226, 3
      %v3491 = vor.u32 %v3489, %v3490
      %v3492 = vsel %vm3425, %v3487, %v3491
      %v3493 = vrot.slane %v1238, 2
      %v3494 = vrot.slane %v1234, 3
      %v3495 = vor.u32 %v3493, %v3494
      %v3496 = vsel %vm3425, %v3491, %v3495
      %v3497 = vrot.slane %v1246, 2
      %v3498 = vrot.slane %v1242, 3
      %v3499 = vor.u32 %v3497, %v3498
      %v3500 = vsel %vm3425, %v3495, %v3499
      %v3501 = vrot.slane %v1254, 2
      %v3502 = vrot.slane %v1250, 3
      %v3503 = vor.u32 %v3501, %v3502
      %v3504 = vsel %vm3425, %v3499, %v3503
      %v3505 = vrot.slane %v1262, 2
      %v3506 = vrot.slane %v1258, 3
      %v3507 = vor.u32 %v3505, %v3506
      %v3508 = vsel %vm3425, %v3503, %v3507
      %v3509 = vrot.slane %v1270, 2
      %v3510 = vrot.slane %v1266, 3
      %v3511 = vor.u32 %v3509, %v3510
      %v3512 = vsel %vm3425, %v3507, %v3511
      %v3513 = vrot.slane %v1278, 2
      %v3514 = vrot.slane %v1274, 3
      %v3515 = vor.u32 %v3513, %v3514
      %v3516 = vsel %vm3425, %v3511, %v3515
      %v3517 = vrot.slane %v1286, 2
      %v3518 = vrot.slane %v1282, 3
      %v3519 = vor.u32 %v3517, %v3518
      %v3520 = vsel %vm3425, %v3515, %v3519
      %v3521 = vrot.slane %v1294, 2
      %v3522 = vrot.slane %v1290, 3
      %v3523 = vor.u32 %v3521, %v3522
      %v3524 = vsel %vm3425, %v3519, %v3523
      %v3525 = vrot.slane %v1302, 2
      %v3526 = vrot.slane %v1298, 3
      %v3527 = vor.u32 %v3525, %v3526
      %v3528 = vsel %vm3425, %v3523, %v3527
      %v3529 = vrot.slane %v1310, 2
      %v3530 = vrot.slane %v1306, 3
      %v3531 = vor.u32 %v3529, %v3530
      %v3532 = vsel %vm3425, %v3527, %v3531
      %v3533 = vrot.slane %v1318, 2
      %v3534 = vrot.slane %v1314, 3
      %v3535 = vor.u32 %v3533, %v3534
      %v3536 = vsel %vm3425, %v3531, %v3535
      %v3537 = vrot.slane %v1326, 2
      %v3538 = vrot.slane %v1322, 3
      %v3539 = vor.u32 %v3537, %v3538
      %v3540 = vsel %vm3425, %v3535, %v3539
      %v3541 = vrot.slane %v1334, 2
      %v3542 = vrot.slane %v1330, 3
      %v3543 = vor.u32 %v3541, %v3542
      %v3544 = vsel %vm3425, %v3539, %v3543
      %v3545 = vrot.slane %v1342, 2
      %v3546 = vrot.slane %v1338, 3
      %v3547 = vor.u32 %v3545, %v3546
      %v3548 = vsel %vm3425, %v3543, %v3547
      %v3549 = vrot.slane %v1749, 2
      %v3550 = vrot.slane %v1346, 3
      %v3551 = vor.u32 %v3549, %v3550
      %v3552 = vsel %vm3425, %v3547, %v3551
      %v3554 = vshrl.u32 %v656, 16
      %v3556 = vrot.slane %v3554, 2
      %v3557 = vshll.u32 %v656, 16
      %v3559 = vrot.slane %v3557, 3
      %v3560 = vor.u32 %v3556, %v3559
      %v3561 = vsel %vm3425, %v3551, %v3560
      %v3564 = vunpack.c.l.b16 %v709
      %v3565 = vunpack.c.l.b16 %v710
      %v3566 = vpack.c.b16 %v3565, %v3564
      %v3569 = vsel %vm823, %v3432, 0
      %v3572 = vsel %vm823, %v3436, 0
      %v3575 = vsel %vm823, %v3440, 0
      %v3578 = vsel %vm823, %v3444, 0
      %v3581 = vsel %vm823, %v3448, 0
      %v3584 = vsel %vm823, %v3452, 0
      %v3587 = vsel %vm823, %v3456, 0
      %v3590 = vsel %vm823, %v3460, 0
      %v3593 = vsel %vm823, %v3464, 0
      %v3596 = vsel %vm823, %v3468, 0
      %v3599 = vsel %vm823, %v3472, 0
      %v3602 = vsel %vm823, %v3476, 0
      %v3605 = vsel %vm823, %v3480, 0
      %v3608 = vsel %vm823, %v3484, 0
      %v3611 = vsel %vm823, %v3488, 0
      %v3614 = vsel %vm823, %v3492, 0
      %v3617 = vsel %vm823, %v3496, 0
      %v3620 = vsel %vm823, %v3500, 0
      %v3623 = vsel %vm823, %v3504, 0
      %v3626 = vsel %vm823, %v3508, 0
      %v3629 = vsel %vm823, %v3512, 0
      %v3632 = vsel %vm823, %v3516, 0
      %v3635 = vsel %vm823, %v3520, 0
      %v3638 = vsel %vm823, %v3524, 0
      %v3641 = vsel %vm823, %v3528, 0
      %v3644 = vsel %vm823, %v3532, 0
      %v3647 = vsel %vm823, %v3536, 0
      %v3650 = vsel %vm823, %v3540, 0
      %v3653 = vsel %vm823, %v3544, 0
      %v3656 = vsel %vm823, %v3548, 0
      %v3659 = vsel %vm823, %v3552, 0
      %v3662 = vsel %vm823, %v3561, 0
      %3664 = vmatpush.bf16.msra.mxu0 0
      %3665 = vmatpush.bf16.msra.mxu0 0
      %3666 = vmatpush.bf16.msra.mxu0 0
      %3667 = vmatpush.bf16.msra.mxu0 0
      %3668 = vmatpush.bf16.msra.mxu0 0
      %3669 = vmatpush.bf16.msra.mxu0 0
      %3670 = vmatpush.bf16.msra.mxu0 0
      %3671 = vmatpush.bf16.msra.mxu0 %v3566
      %3672 = vmatmul.bf16.gmra.mxu0 %v3569
      %v3673 = vpop.f32.mrf.mxu0
      %v3674 = vadd.f32 0.0, %v3673
      %v3675 = vpop.f32.mrf.mxu0
      %v3676 = vadd.f32 0.0, %v3675
      %3677 = vmatmul.bf16.gmra.mxu0 %v3572
      %v3678 = vpop.f32.mrf.mxu0
      %v3679 = vadd.f32 0.0, %v3678
      %v3680 = vpop.f32.mrf.mxu0
      %v3681 = vadd.f32 0.0, %v3680
      %3682 = vmatmul.bf16.gmra.mxu0 %v3575
      %v3683 = vpop.f32.mrf.mxu0
      %v3684 = vadd.f32 0.0, %v3683
      %v3685 = vpop.f32.mrf.mxu0
      %v3686 = vadd.f32 0.0, %v3685
      %3687 = vmatmul.bf16.gmra.mxu0 %v3578
      %v3688 = vpop.f32.mrf.mxu0
      %v3689 = vadd.f32 0.0, %v3688
      %v3690 = vpop.f32.mrf.mxu0
      %v3691 = vadd.f32 0.0, %v3690
      %3692 = vmatmul.bf16.gmra.mxu0 %v3581
      %v3693 = vpop.f32.mrf.mxu0
      %v3694 = vadd.f32 0.0, %v3693
      %v3695 = vpop.f32.mrf.mxu0
      %v3696 = vadd.f32 0.0, %v3695
      %3697 = vmatmul.bf16.gmra.mxu0 %v3584
      %v3698 = vpop.f32.mrf.mxu0
      %v3699 = vadd.f32 0.0, %v3698
      %v3700 = vpop.f32.mrf.mxu0
      %v3701 = vadd.f32 0.0, %v3700
      %3702 = vmatmul.bf16.gmra.mxu0 %v3587
      %v3703 = vpop.f32.mrf.mxu0
      %v3704 = vadd.f32 0.0, %v3703
      %v3705 = vpop.f32.mrf.mxu0
      %v3706 = vadd.f32 0.0, %v3705
      %3707 = vmatmul.bf16.gmra.mxu0 %v3590
      %v3708 = vpop.f32.mrf.mxu0
      %v3709 = vadd.f32 0.0, %v3708
      %v3710 = vpop.f32.mrf.mxu0
      %v3711 = vadd.f32 0.0, %v3710
      %3712 = vmatmul.bf16.gmra.mxu0 %v3593
      %v3713 = vpop.f32.mrf.mxu0
      %v3714 = vadd.f32 0.0, %v3713
      %v3715 = vpop.f32.mrf.mxu0
      %v3716 = vadd.f32 0.0, %v3715
      %3717 = vmatmul.bf16.gmra.mxu0 %v3596
      %v3718 = vpop.f32.mrf.mxu0
      %v3719 = vadd.f32 0.0, %v3718
      %v3720 = vpop.f32.mrf.mxu0
      %v3721 = vadd.f32 0.0, %v3720
      %3722 = vmatmul.bf16.gmra.mxu0 %v3599
      %v3723 = vpop.f32.mrf.mxu0
      %v3724 = vadd.f32 0.0, %v3723
      %v3725 = vpop.f32.mrf.mxu0
      %v3726 = vadd.f32 0.0, %v3725
      %3727 = vmatmul.bf16.gmra.mxu0 %v3602
      %v3728 = vpop.f32.mrf.mxu0
      %v3729 = vadd.f32 0.0, %v3728
      %v3730 = vpop.f32.mrf.mxu0
      %v3731 = vadd.f32 0.0, %v3730
      %3732 = vmatmul.bf16.gmra.mxu0 %v3605
      %v3733 = vpop.f32.mrf.mxu0
      %v3734 = vadd.f32 0.0, %v3733
      %v3735 = vpop.f32.mrf.mxu0
      %v3736 = vadd.f32 0.0, %v3735
      %3737 = vmatmul.bf16.gmra.mxu0 %v3608
      %v3738 = vpop.f32.mrf.mxu0
      %v3739 = vadd.f32 0.0, %v3738
      %v3740 = vpop.f32.mrf.mxu0
      %v3741 = vadd.f32 0.0, %v3740
      %3742 = vmatmul.bf16.gmra.mxu0 %v3611
      %v3743 = vpop.f32.mrf.mxu0
      %v3744 = vadd.f32 0.0, %v3743
      %v3745 = vpop.f32.mrf.mxu0
      %v3746 = vadd.f32 0.0, %v3745
      %3747 = vmatmul.bf16.gmra.mxu0 %v3614
      %v3748 = vpop.f32.mrf.mxu0
      %v3749 = vadd.f32 0.0, %v3748
      %v3750 = vpop.f32.mrf.mxu0
      %v3751 = vadd.f32 0.0, %v3750
      %3752 = vmatmul.bf16.gmra.mxu0 %v3617
      %v3753 = vpop.f32.mrf.mxu0
      %v3754 = vadd.f32 0.0, %v3753
      %v3755 = vpop.f32.mrf.mxu0
      %v3756 = vadd.f32 0.0, %v3755
      %3757 = vmatmul.bf16.gmra.mxu0 %v3620
      %v3758 = vpop.f32.mrf.mxu0
      %v3759 = vadd.f32 0.0, %v3758
      %v3760 = vpop.f32.mrf.mxu0
      %v3761 = vadd.f32 0.0, %v3760
      %3762 = vmatmul.bf16.gmra.mxu0 %v3623
      %v3763 = vpop.f32.mrf.mxu0
      %v3764 = vadd.f32 0.0, %v3763
      %v3765 = vpop.f32.mrf.mxu0
      %v3766 = vadd.f32 0.0, %v3765
      %3767 = vmatmul.bf16.gmra.mxu0 %v3626
      %v3768 = vpop.f32.mrf.mxu0
      %v3769 = vadd.f32 0.0, %v3768
      %v3770 = vpop.f32.mrf.mxu0
      %v3771 = vadd.f32 0.0, %v3770
      %3772 = vmatmul.bf16.gmra.mxu0 %v3629
      %v3773 = vpop.f32.mrf.mxu0
      %v3774 = vadd.f32 0.0, %v3773
      %v3775 = vpop.f32.mrf.mxu0
      %v3776 = vadd.f32 0.0, %v3775
      %3777 = vmatmul.bf16.gmra.mxu0 %v3632
      %v3778 = vpop.f32.mrf.mxu0
      %v3779 = vadd.f32 0.0, %v3778
      %v3780 = vpop.f32.mrf.mxu0
      %v3781 = vadd.f32 0.0, %v3780
      %3782 = vmatmul.bf16.gmra.mxu0 %v3635
      %v3783 = vpop.f32.mrf.mxu0
      %v3784 = vadd.f32 0.0, %v3783
      %v3785 = vpop.f32.mrf.mxu0
      %v3786 = vadd.f32 0.0, %v3785
      %3787 = vmatmul.bf16.gmra.mxu0 %v3638
      %v3788 = vpop.f32.mrf.mxu0
      %v3789 = vadd.f32 0.0, %v3788
      %v3790 = vpop.f32.mrf.mxu0
      %v3791 = vadd.f32 0.0, %v3790
      %3792 = vmatmul.bf16.gmra.mxu0 %v3641
      %v3793 = vpop.f32.mrf.mxu0
      %v3794 = vadd.f32 0.0, %v3793
      %v3795 = vpop.f32.mrf.mxu0
      %v3796 = vadd.f32 0.0, %v3795
      %3797 = vmatmul.bf16.gmra.mxu0 %v3644
      %v3798 = vpop.f32.mrf.mxu0
      %v3799 = vadd.f32 0.0, %v3798
      %v3800 = vpop.f32.mrf.mxu0
      %v3801 = vadd.f32 0.0, %v3800
      %3802 = vmatmul.bf16.gmra.mxu0 %v3647
      %v3803 = vpop.f32.mrf.mxu0
      %v3804 = vadd.f32 0.0, %v3803
      %v3805 = vpop.f32.mrf.mxu0
      %v3806 = vadd.f32 0.0, %v3805
      %3807 = vmatmul.bf16.gmra.mxu0 %v3650
      %v3808 = vpop.f32.mrf.mxu0
      %v3809 = vadd.f32 0.0, %v3808
      %v3810 = vpop.f32.mrf.mxu0
      %v3811 = vadd.f32 0.0, %v3810
      %3812 = vmatmul.bf16.gmra.mxu0 %v3653
      %v3813 = vpop.f32.mrf.mxu0
      %v3814 = vadd.f32 0.0, %v3813
      %v3815 = vpop.f32.mrf.mxu0
      %v3816 = vadd.f32 0.0, %v3815
      %3817 = vmatmul.bf16.gmra.mxu0 %v3656
      %v3818 = vpop.f32.mrf.mxu0
      %v3819 = vadd.f32 0.0, %v3818
      %v3820 = vpop.f32.mrf.mxu0
      %v3821 = vadd.f32 0.0, %v3820
      %3822 = vmatmul.bf16.gmra.mxu0 %v3659
      %v3823 = vpop.f32.mrf.mxu0
      %v3824 = vadd.f32 0.0, %v3823
      %v3825 = vpop.f32.mrf.mxu0
      %v3826 = vadd.f32 0.0, %v3825
      %3827 = vmatmul.bf16.gmra.mxu0 %v3662
      %v3828 = vpop.f32.mrf.mxu0
      %v3829 = vadd.f32 0.0, %v3828
      %v3830 = vpop.f32.mrf.mxu0
      %v3831 = vadd.f32 0.0, %v3830
      %3832 = vdwg.mxu0
      %v3833 = vadd.f32 %v3361, %v3674
      %v3834 = vadd.f32 %v3362, %v3676
      %v3835 = vadd.f32 %v3363, %v3679
      %v3836 = vadd.f32 %v3364, %v3681
      %v3837 = vadd.f32 %v3365, %v3684
      %v3838 = vadd.f32 %v3366, %v3686
      %v3839 = vadd.f32 %v3367, %v3689
      %v3840 = vadd.f32 %v3368, %v3691
      %v3841 = vadd.f32 %v3369, %v3694
      %v3842 = vadd.f32 %v3370, %v3696
      %v3843 = vadd.f32 %v3371, %v3699
      %v3844 = vadd.f32 %v3372, %v3701
      %v3845 = vadd.f32 %v3373, %v3704
      %v3846 = vadd.f32 %v3374, %v3706
      %v3847 = vadd.f32 %v3375, %v3709
      %v3848 = vadd.f32 %v3376, %v3711
      %v3849 = vadd.f32 %v3377, %v3714
      %v3850 = vadd.f32 %v3378, %v3716
      %v3851 = vadd.f32 %v3379, %v3719
      %v3852 = vadd.f32 %v3380, %v3721
      %v3853 = vadd.f32 %v3381, %v3724
      %v3854 = vadd.f32 %v3382, %v3726
      %v3855 = vadd.f32 %v3383, %v3729
      %v3856 = vadd.f32 %v3384, %v3731
      %v3857 = vadd.f32 %v3385, %v3734
      %v3858 = vadd.f32 %v3386, %v3736
      %v3859 = vadd.f32 %v3387, %v3739
      %v3860 = vadd.f32 %v3388, %v3741
      %v3861 = vadd.f32 %v3389, %v3744
      %v3862 = vadd.f32 %v3390, %v3746
      %v3863 = vadd.f32 %v3391, %v3749
      %v3864 = vadd.f32 %v3392, %v3751
      %v3865 = vadd.f32 %v3393, %v3754
      %v3866 = vadd.f32 %v3394, %v3756
      %v3867 = vadd.f32 %v3395, %v3759
      %v3868 = vadd.f32 %v3396, %v3761
      %v3869 = vadd.f32 %v3397, %v3764
      %v3870 = vadd.f32 %v3398, %v3766
      %v3871 = vadd.f32 %v3399, %v3769
      %v3872 = vadd.f32 %v3400, %v3771
      %v3873 = vadd.f32 %v3401, %v3774
      %v3874 = vadd.f32 %v3402, %v3776
      %v3875 = vadd.f32 %v3403, %v3779
      %v3876 = vadd.f32 %v3404, %v3781
      %v3877 = vadd.f32 %v3405, %v3784
      %v3878 = vadd.f32 %v3406, %v3786
      %v3879 = vadd.f32 %v3407, %v3789
      %v3880 = vadd.f32 %v3408, %v3791
      %v3881 = vadd.f32 %v3409, %v3794
      %v3882 = vadd.f32 %v3410, %v3796
      %v3883 = vadd.f32 %v3411, %v3799
      %v3884 = vadd.f32 %v3412, %v3801
      %v3885 = vadd.f32 %v3413, %v3804
      %v3886 = vadd.f32 %v3414, %v3806
      %v3887 = vadd.f32 %v3415, %v3809
      %v3888 = vadd.f32 %v3416, %v3811
      %v3889 = vadd.f32 %v3417, %v3814
      %v3890 = vadd.f32 %v3418, %v3816
      %v3891 = vadd.f32 %v3419, %v3819
      %v3892 = vadd.f32 %v3420, %v3821
      %v3893 = vadd.f32 %v3421, %v3824
      %v3894 = vadd.f32 %v3422, %v3826
      %v3895 = vadd.f32 %v3423, %v3829
      %v3896 = vadd.f32 %v3424, %v3831
      %vm3897 = vcmask 1044480
      %v3898 = vrot.slane %v496, 3
      %v3899 = vrot.slane %v497, 3
      %v3900 = vsel %vm3897, %v3898, %v3899
      %v3901 = vrot.slane %v498, 3
      %v3902 = vsel %vm3897, %v3899, %v3901
      %v3903 = vrot.slane %v499, 3
      %v3904 = vsel %vm3897, %v3901, %v3903
      %v3905 = vrot.slane %v500, 3
      %v3906 = vsel %vm3897, %v3903, %v3905
      %v3907 = vrot.slane %v501, 3
      %v3908 = vsel %vm3897, %v3905, %v3907
      %v3909 = vrot.slane %v630, 3
      %v3910 = vsel %vm3897, %v3907, %v3909
      %v3911 = vrot.slane %v631, 3
      %v3912 = vsel %vm3897, %v3909, %v3911
      %v3913 = vrot.slane %v632, 3
      %v3914 = vsel %vm3897, %v3911, %v3913
      %v3915 = vrot.slane %v633, 3
      %v3916 = vsel %vm3897, %v3913, %v3915
      %v3917 = vrot.slane %v634, 3
      %v3918 = vsel %vm3897, %v3915, %v3917
      %v3919 = vrot.slane %v635, 3
      %v3920 = vsel %vm3897, %v3917, %v3919
      %v3921 = vrot.slane %v636, 3
      %v3922 = vsel %vm3897, %v3919, %v3921
      %v3923 = vrot.slane %v637, 3
      %v3924 = vsel %vm3897, %v3921, %v3923
      %v3925 = vrot.slane %v638, 3
      %v3926 = vsel %vm3897, %v3923, %v3925
      %v3927 = vrot.slane %v639, 3
      %v3928 = vsel %vm3897, %v3925, %v3927
      %v3929 = vrot.slane %v640, 3
      %v3930 = vsel %vm3897, %v3927, %v3929
      %v3931 = vrot.slane %v641, 3
      %v3932 = vsel %vm3897, %v3929, %v3931
      %v3933 = vrot.slane %v642, 3
      %v3934 = vsel %vm3897, %v3931, %v3933
      %v3935 = vrot.slane %v643, 3
      %v3936 = vsel %vm3897, %v3933, %v3935
      %v3937 = vrot.slane %v644, 3
      %v3938 = vsel %vm3897, %v3935, %v3937
      %v3939 = vrot.slane %v645, 3
      %v3940 = vsel %vm3897, %v3937, %v3939
      %v3941 = vrot.slane %v646, 3
      %v3942 = vsel %vm3897, %v3939, %v3941
      %v3943 = vrot.slane %v647, 3
      %v3944 = vsel %vm3897, %v3941, %v3943
      %v3945 = vrot.slane %v648, 3
      %v3946 = vsel %vm3897, %v3943, %v3945
      %v3947 = vrot.slane %v649, 3
      %v3948 = vsel %vm3897, %v3945, %v3947
      %v3949 = vrot.slane %v650, 3
      %v3950 = vsel %vm3897, %v3947, %v3949
      %v3951 = vrot.slane %v651, 3
      %v3952 = vsel %vm3897, %v3949, %v3951
      %v3953 = vrot.slane %v652, 3
      %v3954 = vsel %vm3897, %v3951, %v3953
      %v3955 = vrot.slane %v653, 3
      %v3956 = vsel %vm3897, %v3953, %v3955
      %v3957 = vrot.slane %v654, 3
      %v3958 = vsel %vm3897, %v3955, %v3957
      %v3959 = vrot.slane %v655, 3
      %v3960 = vsel %vm3897, %v3957, %v3959
      %v3961 = vrot.slane %v656, 3
      %v3962 = vsel %vm3897, %v3959, %v3961
      %v3965 = vunpack.c.l.b16 %v711
      %v3966 = vunpack.c.l.b16 %v712
      %v3967 = vpack.c.b16 %v3966, %v3965
      %v3970 = vsel %vm823, %v3900, 0
      %v3973 = vsel %vm823, %v3902, 0
      %v3976 = vsel %vm823, %v3904, 0
      %v3979 = vsel %vm823, %v3906, 0
      %v3982 = vsel %vm823, %v3908, 0
      %v3985 = vsel %vm823, %v3910, 0
      %v3988 = vsel %vm823, %v3912, 0
      %v3991 = vsel %vm823, %v3914, 0
      %v3994 = vsel %vm823, %v3916, 0
      %v3997 = vsel %vm823, %v3918, 0
      %v4000 = vsel %vm823, %v3920, 0
      %v4003 = vsel %vm823, %v3922, 0
      %v4006 = vsel %vm823, %v3924, 0
      %v4009 = vsel %vm823, %v3926, 0
      %v4012 = vsel %vm823, %v3928, 0
      %v4015 = vsel %vm823, %v3930, 0
      %v4018 = vsel %vm823, %v3932, 0
      %v4021 = vsel %vm823, %v3934, 0
      %v4024 = vsel %vm823, %v3936, 0
      %v4027 = vsel %vm823, %v3938, 0
      %v4030 = vsel %vm823, %v3940, 0
      %v4033 = vsel %vm823, %v3942, 0
      %v4036 = vsel %vm823, %v3944, 0
      %v4039 = vsel %vm823, %v3946, 0
      %v4042 = vsel %vm823, %v3948, 0
      %v4045 = vsel %vm823, %v3950, 0
      %v4048 = vsel %vm823, %v3952, 0
      %v4051 = vsel %vm823, %v3954, 0
      %v4054 = vsel %vm823, %v3956, 0
      %v4057 = vsel %vm823, %v3958, 0
      %v4060 = vsel %vm823, %v3960, 0
      %v4063 = vsel %vm823, %v3962, 0
      %4065 = vmatpush.bf16.msra.mxu0 0
      %4066 = vmatpush.bf16.msra.mxu0 0
      %4067 = vmatpush.bf16.msra.mxu0 0
      %4068 = vmatpush.bf16.msra.mxu0 0
      %4069 = vmatpush.bf16.msra.mxu0 0
      %4070 = vmatpush.bf16.msra.mxu0 0
      %4071 = vmatpush.bf16.msra.mxu0 0
      %4072 = vmatpush.bf16.msra.mxu0 %v3967
      %4073 = vmatmul.bf16.gmra.mxu0 %v3970
      %v4074 = vpop.f32.mrf.mxu0
      %v4075 = vadd.f32 0.0, %v4074
      %v4076 = vpop.f32.mrf.mxu0
      %v4077 = vadd.f32 0.0, %v4076
      %4078 = vmatmul.bf16.gmra.mxu0 %v3973
      %v4079 = vpop.f32.mrf.mxu0
      %v4080 = vadd.f32 0.0, %v4079
      %v4081 = vpop.f32.mrf.mxu0
      %v4082 = vadd.f32 0.0, %v4081
      %4083 = vmatmul.bf16.gmra.mxu0 %v3976
      %v4084 = vpop.f32.mrf.mxu0
      %v4085 = vadd.f32 0.0, %v4084
      %v4086 = vpop.f32.mrf.mxu0
      %v4087 = vadd.f32 0.0, %v4086
      %4088 = vmatmul.bf16.gmra.mxu0 %v3979
      %v4089 = vpop.f32.mrf.mxu0
      %v4090 = vadd.f32 0.0, %v4089
      %v4091 = vpop.f32.mrf.mxu0
      %v4092 = vadd.f32 0.0, %v4091
      %4093 = vmatmul.bf16.gmra.mxu0 %v3982
      %v4094 = vpop.f32.mrf.mxu0
      %v4095 = vadd.f32 0.0, %v4094
      %v4096 = vpop.f32.mrf.mxu0
      %v4097 = vadd.f32 0.0, %v4096
      %4098 = vmatmul.bf16.gmra.mxu0 %v3985
      %v4099 = vpop.f32.mrf.mxu0
      %v4100 = vadd.f32 0.0, %v4099
      %v4101 = vpop.f32.mrf.mxu0
      %v4102 = vadd.f32 0.0, %v4101
      %4103 = vmatmul.bf16.gmra.mxu0 %v3988
      %v4104 = vpop.f32.mrf.mxu0
      %v4105 = vadd.f32 0.0, %v4104
      %v4106 = vpop.f32.mrf.mxu0
      %v4107 = vadd.f32 0.0, %v4106
      %4108 = vmatmul.bf16.gmra.mxu0 %v3991
      %v4109 = vpop.f32.mrf.mxu0
      %v4110 = vadd.f32 0.0, %v4109
      %v4111 = vpop.f32.mrf.mxu0
      %v4112 = vadd.f32 0.0, %v4111
      %4113 = vmatmul.bf16.gmra.mxu0 %v3994
      %v4114 = vpop.f32.mrf.mxu0
      %v4115 = vadd.f32 0.0, %v4114
      %v4116 = vpop.f32.mrf.mxu0
      %v4117 = vadd.f32 0.0, %v4116
      %4118 = vmatmul.bf16.gmra.mxu0 %v3997
      %v4119 = vpop.f32.mrf.mxu0
      %v4120 = vadd.f32 0.0, %v4119
      %v4121 = vpop.f32.mrf.mxu0
      %v4122 = vadd.f32 0.0, %v4121
      %4123 = vmatmul.bf16.gmra.mxu0 %v4000
      %v4124 = vpop.f32.mrf.mxu0
      %v4125 = vadd.f32 0.0, %v4124
      %v4126 = vpop.f32.mrf.mxu0
      %v4127 = vadd.f32 0.0, %v4126
      %4128 = vmatmul.bf16.gmra.mxu0 %v4003
      %v4129 = vpop.f32.mrf.mxu0
      %v4130 = vadd.f32 0.0, %v4129
      %v4131 = vpop.f32.mrf.mxu0
      %v4132 = vadd.f32 0.0, %v4131
      %4133 = vmatmul.bf16.gmra.mxu0 %v4006
      %v4134 = vpop.f32.mrf.mxu0
      %v4135 = vadd.f32 0.0, %v4134
      %v4136 = vpop.f32.mrf.mxu0
      %v4137 = vadd.f32 0.0, %v4136
      %4138 = vmatmul.bf16.gmra.mxu0 %v4009
      %v4139 = vpop.f32.mrf.mxu0
      %v4140 = vadd.f32 0.0, %v4139
      %v4141 = vpop.f32.mrf.mxu0
      %v4142 = vadd.f32 0.0, %v4141
      %4143 = vmatmul.bf16.gmra.mxu0 %v4012
      %v4144 = vpop.f32.mrf.mxu0
      %v4145 = vadd.f32 0.0, %v4144
      %v4146 = vpop.f32.mrf.mxu0
      %v4147 = vadd.f32 0.0, %v4146
      %4148 = vmatmul.bf16.gmra.mxu0 %v4015
      %v4149 = vpop.f32.mrf.mxu0
      %v4150 = vadd.f32 0.0, %v4149
      %v4151 = vpop.f32.mrf.mxu0
      %v4152 = vadd.f32 0.0, %v4151
      %4153 = vmatmul.bf16.gmra.mxu0 %v4018
      %v4154 = vpop.f32.mrf.mxu0
      %v4155 = vadd.f32 0.0, %v4154
      %v4156 = vpop.f32.mrf.mxu0
      %v4157 = vadd.f32 0.0, %v4156
      %4158 = vmatmul.bf16.gmra.mxu0 %v4021
      %v4159 = vpop.f32.mrf.mxu0
      %v4160 = vadd.f32 0.0, %v4159
      %v4161 = vpop.f32.mrf.mxu0
      %v4162 = vadd.f32 0.0, %v4161
      %4163 = vmatmul.bf16.gmra.mxu0 %v4024
      %v4164 = vpop.f32.mrf.mxu0
      %v4165 = vadd.f32 0.0, %v4164
      %v4166 = vpop.f32.mrf.mxu0
      %v4167 = vadd.f32 0.0, %v4166
      %4168 = vmatmul.bf16.gmra.mxu0 %v4027
      %v4169 = vpop.f32.mrf.mxu0
      %v4170 = vadd.f32 0.0, %v4169
      %v4171 = vpop.f32.mrf.mxu0
      %v4172 = vadd.f32 0.0, %v4171
      %4173 = vmatmul.bf16.gmra.mxu0 %v4030
      %v4174 = vpop.f32.mrf.mxu0
      %v4175 = vadd.f32 0.0, %v4174
      %v4176 = vpop.f32.mrf.mxu0
      %v4177 = vadd.f32 0.0, %v4176
      %4178 = vmatmul.bf16.gmra.mxu0 %v4033
      %v4179 = vpop.f32.mrf.mxu0
      %v4180 = vadd.f32 0.0, %v4179
      %v4181 = vpop.f32.mrf.mxu0
      %v4182 = vadd.f32 0.0, %v4181
      %4183 = vmatmul.bf16.gmra.mxu0 %v4036
      %v4184 = vpop.f32.mrf.mxu0
      %v4185 = vadd.f32 0.0, %v4184
      %v4186 = vpop.f32.mrf.mxu0
      %v4187 = vadd.f32 0.0, %v4186
      %4188 = vmatmul.bf16.gmra.mxu0 %v4039
      %v4189 = vpop.f32.mrf.mxu0
      %v4190 = vadd.f32 0.0, %v4189
      %v4191 = vpop.f32.mrf.mxu0
      %v4192 = vadd.f32 0.0, %v4191
      %4193 = vmatmul.bf16.gmra.mxu0 %v4042
      %v4194 = vpop.f32.mrf.mxu0
      %v4195 = vadd.f32 0.0, %v4194
      %v4196 = vpop.f32.mrf.mxu0
      %v4197 = vadd.f32 0.0, %v4196
      %4198 = vmatmul.bf16.gmra.mxu0 %v4045
      %v4199 = vpop.f32.mrf.mxu0
      %v4200 = vadd.f32 0.0, %v4199
      %v4201 = vpop.f32.mrf.mxu0
      %v4202 = vadd.f32 0.0, %v4201
      %4203 = vmatmul.bf16.gmra.mxu0 %v4048
      %v4204 = vpop.f32.mrf.mxu0
      %v4205 = vadd.f32 0.0, %v4204
      %v4206 = vpop.f32.mrf.mxu0
      %v4207 = vadd.f32 0.0, %v4206
      %4208 = vmatmul.bf16.gmra.mxu0 %v4051
      %v4209 = vpop.f32.mrf.mxu0
      %v4210 = vadd.f32 0.0, %v4209
      %v4211 = vpop.f32.mrf.mxu0
      %v4212 = vadd.f32 0.0, %v4211
      %4213 = vmatmul.bf16.gmra.mxu0 %v4054
      %v4214 = vpop.f32.mrf.mxu0
      %v4215 = vadd.f32 0.0, %v4214
      %v4216 = vpop.f32.mrf.mxu0
      %v4217 = vadd.f32 0.0, %v4216
      %4218 = vmatmul.bf16.gmra.mxu0 %v4057
      %v4219 = vpop.f32.mrf.mxu0
      %v4220 = vadd.f32 0.0, %v4219
      %v4221 = vpop.f32.mrf.mxu0
      %v4222 = vadd.f32 0.0, %v4221
      %4223 = vmatmul.bf16.gmra.mxu0 %v4060
      %v4224 = vpop.f32.mrf.mxu0
      %v4225 = vadd.f32 0.0, %v4224
      %v4226 = vpop.f32.mrf.mxu0
      %v4227 = vadd.f32 0.0, %v4226
      %4228 = vmatmul.bf16.gmra.mxu0 %v4063
      %v4229 = vpop.f32.mrf.mxu0
      %v4230 = vadd.f32 0.0, %v4229
      %v4231 = vpop.f32.mrf.mxu0
      %v4232 = vadd.f32 0.0, %v4231
      %4233 = vdwg.mxu0
      %v4234 = vadd.f32 %v3833, %v4075
      %v4235 = vadd.f32 %v3834, %v4077
      %v4236 = vadd.f32 %v3835, %v4080
      %v4237 = vadd.f32 %v3836, %v4082
      %v4238 = vadd.f32 %v3837, %v4085
      %v4239 = vadd.f32 %v3838, %v4087
      %v4240 = vadd.f32 %v3839, %v4090
      %v4241 = vadd.f32 %v3840, %v4092
      %v4242 = vadd.f32 %v3841, %v4095
      %v4243 = vadd.f32 %v3842, %v4097
      %v4244 = vadd.f32 %v3843, %v4100
      %v4245 = vadd.f32 %v3844, %v4102
      %v4246 = vadd.f32 %v3845, %v4105
      %v4247 = vadd.f32 %v3846, %v4107
      %v4248 = vadd.f32 %v3847, %v4110
      %v4249 = vadd.f32 %v3848, %v4112
      %v4250 = vadd.f32 %v3849, %v4115
      %v4251 = vadd.f32 %v3850, %v4117
      %v4252 = vadd.f32 %v3851, %v4120
      %v4253 = vadd.f32 %v3852, %v4122
      %v4254 = vadd.f32 %v3853, %v4125
      %v4255 = vadd.f32 %v3854, %v4127
      %v4256 = vadd.f32 %v3855, %v4130
      %v4257 = vadd.f32 %v3856, %v4132
      %v4258 = vadd.f32 %v3857, %v4135
      %v4259 = vadd.f32 %v3858, %v4137
      %v4260 = vadd.f32 %v3859, %v4140
      %v4261 = vadd.f32 %v3860, %v4142
      %v4262 = vadd.f32 %v3861, %v4145
      %v4263 = vadd.f32 %v3862, %v4147
      %v4264 = vadd.f32 %v3863, %v4150
      %v4265 = vadd.f32 %v3864, %v4152
      %v4266 = vadd.f32 %v3865, %v4155
      %v4267 = vadd.f32 %v3866, %v4157
      %v4268 = vadd.f32 %v3867, %v4160
      %v4269 = vadd.f32 %v3868, %v4162
      %v4270 = vadd.f32 %v3869, %v4165
      %v4271 = vadd.f32 %v3870, %v4167
      %v4272 = vadd.f32 %v3871, %v4170
      %v4273 = vadd.f32 %v3872, %v4172
      %v4274 = vadd.f32 %v3873, %v4175
      %v4275 = vadd.f32 %v3874, %v4177
      %v4276 = vadd.f32 %v3875, %v4180
      %v4277 = vadd.f32 %v3876, %v4182
      %v4278 = vadd.f32 %v3877, %v4185
      %v4279 = vadd.f32 %v3878, %v4187
      %v4280 = vadd.f32 %v3879, %v4190
      %v4281 = vadd.f32 %v3880, %v4192
      %v4282 = vadd.f32 %v3881, %v4195
      %v4283 = vadd.f32 %v3882, %v4197
      %v4284 = vadd.f32 %v3883, %v4200
      %v4285 = vadd.f32 %v3884, %v4202
      %v4286 = vadd.f32 %v3885, %v4205
      %v4287 = vadd.f32 %v3886, %v4207
      %v4288 = vadd.f32 %v3887, %v4210
      %v4289 = vadd.f32 %v3888, %v4212
      %v4290 = vadd.f32 %v3889, %v4215
      %v4291 = vadd.f32 %v3890, %v4217
      %v4292 = vadd.f32 %v3891, %v4220
      %v4293 = vadd.f32 %v3892, %v4222
      %v4294 = vadd.f32 %v3893, %v4225
      %v4295 = vadd.f32 %v3894, %v4227
      %v4296 = vadd.f32 %v3895, %v4230
      %v4297 = vadd.f32 %v3896, %v4232
      %vm4298 = vsmask.f32 4352
      %v4299 = vrot.slane %v1102, 3
      %v4300 = vrot.slane %v1098, 4
      %v4301 = vor.u32 %v4299, %v4300
      %v4302 = vrot.slane %v1110, 3
      %v4303 = vrot.slane %v1106, 4
      %v4304 = vor.u32 %v4302, %v4303
      %v4305 = vsel %vm4298, %v4301, %v4304
      %v4306 = vrot.slane %v1118, 3
      %v4307 = vrot.slane %v1114, 4
      %v4308 = vor.u32 %v4306, %v4307
      %v4309 = vsel %vm4298, %v4304, %v4308
      %v4310 = vrot.slane %v1126, 3
      %v4311 = vrot.slane %v1122, 4
      %v4312 = vor.u32 %v4310, %v4311
      %v4313 = vsel %vm4298, %v4308, %v4312
      %v4314 = vrot.slane %v1134, 3
      %v4315 = vrot.slane %v1130, 4
      %v4316 = vor.u32 %v4314, %v4315
      %v4317 = vsel %vm4298, %v4312, %v4316
      %v4318 = vrot.slane %v1142, 3
      %v4319 = vrot.slane %v1138, 4
      %v4320 = vor.u32 %v4318, %v4319
      %v4321 = vsel %vm4298, %v4316, %v4320
      %v4322 = vrot.slane %v1150, 3
      %v4323 = vrot.slane %v1146, 4
      %v4324 = vor.u32 %v4322, %v4323
      %v4325 = vsel %vm4298, %v4320, %v4324
      %v4326 = vrot.slane %v1158, 3
      %v4327 = vrot.slane %v1154, 4
      %v4328 = vor.u32 %v4326, %v4327
      %v4329 = vsel %vm4298, %v4324, %v4328
      %v4330 = vrot.slane %v1166, 3
      %v4331 = vrot.slane %v1162, 4
      %v4332 = vor.u32 %v4330, %v4331
      %v4333 = vsel %vm4298, %v4328, %v4332
      %v4334 = vrot.slane %v1174, 3
      %v4335 = vrot.slane %v1170, 4
      %v4336 = vor.u32 %v4334, %v4335
      %v4337 = vsel %vm4298, %v4332, %v4336
      %v4338 = vrot.slane %v1182, 3
      %v4339 = vrot.slane %v1178, 4
      %v4340 = vor.u32 %v4338, %v4339
      %v4341 = vsel %vm4298, %v4336, %v4340
      %v4342 = vrot.slane %v1190, 3
      %v4343 = vrot.slane %v1186, 4
      %v4344 = vor.u32 %v4342, %v4343
      %v4345 = vsel %vm4298, %v4340, %v4344
      %v4346 = vrot.slane %v1198, 3
      %v4347 = vrot.slane %v1194, 4
      %v4348 = vor.u32 %v4346, %v4347
      %v4349 = vsel %vm4298, %v4344, %v4348
      %v4350 = vrot.slane %v1206, 3
      %v4351 = vrot.slane %v1202, 4
      %v4352 = vor.u32 %v4350, %v4351
      %v4353 = vsel %vm4298, %v4348, %v4352
      %v4354 = vrot.slane %v1214, 3
      %v4355 = vrot.slane %v1210, 4
      %v4356 = vor.u32 %v4354, %v4355
      %v4357 = vsel %vm4298, %v4352, %v4356
      %v4358 = vrot.slane %v1222, 3
      %v4359 = vrot.slane %v1218, 4
      %v4360 = vor.u32 %v4358, %v4359
      %v4361 = vsel %vm4298, %v4356, %v4360
      %v4362 = vrot.slane %v1230, 3
      %v4363 = vrot.slane %v1226, 4
      %v4364 = vor.u32 %v4362, %v4363
      %v4365 = vsel %vm4298, %v4360, %v4364
      %v4366 = vrot.slane %v1238, 3
      %v4367 = vrot.slane %v1234, 4
      %v4368 = vor.u32 %v4366, %v4367
      %v4369 = vsel %vm4298, %v4364, %v4368
      %v4370 = vrot.slane %v1246, 3
      %v4371 = vrot.slane %v1242, 4
      %v4372 = vor.u32 %v4370, %v4371
      %v4373 = vsel %vm4298, %v4368, %v4372
      %v4374 = vrot.slane %v1254, 3
      %v4375 = vrot.slane %v1250, 4
      %v4376 = vor.u32 %v4374, %v4375
      %v4377 = vsel %vm4298, %v4372, %v4376
      %v4378 = vrot.slane %v1262, 3
      %v4379 = vrot.slane %v1258, 4
      %v4380 = vor.u32 %v4378, %v4379
      %v4381 = vsel %vm4298, %v4376, %v4380
      %v4382 = vrot.slane %v1270, 3
      %v4383 = vrot.slane %v1266, 4
      %v4384 = vor.u32 %v4382, %v4383
      %v4385 = vsel %vm4298, %v4380, %v4384
      %v4386 = vrot.slane %v1278, 3
      %v4387 = vrot.slane %v1274, 4
      %v4388 = vor.u32 %v4386, %v4387
      %v4389 = vsel %vm4298, %v4384, %v4388
      %v4390 = vrot.slane %v1286, 3
      %v4391 = vrot.slane %v1282, 4
      %v4392 = vor.u32 %v4390, %v4391
      %v4393 = vsel %vm4298, %v4388, %v4392
      %v4394 = vrot.slane %v1294, 3
      %v4395 = vrot.slane %v1290, 4
      %v4396 = vor.u32 %v4394, %v4395
      %v4397 = vsel %vm4298, %v4392, %v4396
      %v4398 = vrot.slane %v1302, 3
      %v4399 = vrot.slane %v1298, 4
      %v4400 = vor.u32 %v4398, %v4399
      %v4401 = vsel %vm4298, %v4396, %v4400
      %v4402 = vrot.slane %v1310, 3
      %v4403 = vrot.slane %v1306, 4
      %v4404 = vor.u32 %v4402, %v4403
      %v4405 = vsel %vm4298, %v4400, %v4404
      %v4406 = vrot.slane %v1318, 3
      %v4407 = vrot.slane %v1314, 4
      %v4408 = vor.u32 %v4406, %v4407
      %v4409 = vsel %vm4298, %v4404, %v4408
      %v4410 = vrot.slane %v1326, 3
      %v4411 = vrot.slane %v1322, 4
      %v4412 = vor.u32 %v4410, %v4411
      %v4413 = vsel %vm4298, %v4408, %v4412
      %v4414 = vrot.slane %v1334, 3
      %v4415 = vrot.slane %v1330, 4
      %v4416 = vor.u32 %v4414, %v4415
      %v4417 = vsel %vm4298, %v4412, %v4416
      %v4418 = vrot.slane %v1342, 3
      %v4419 = vrot.slane %v1338, 4
      %v4420 = vor.u32 %v4418, %v4419
      %v4421 = vsel %vm4298, %v4416, %v4420
      %v4422 = vrot.slane %v1749, 3
      %v4423 = vrot.slane %v1346, 4
      %v4424 = vor.u32 %v4422, %v4423
      %v4425 = vsel %vm4298, %v4420, %v4424
      %v4426 = vrot.slane %v3554, 3
      %v4427 = vrot.slane %v3557, 4
      %v4428 = vor.u32 %v4426, %v4427
      %v4429 = vsel %vm4298, %v4424, %v4428
      %v4432 = vunpack.c.l.b16 %v713
      %v4433 = vunpack.c.l.b16 %v714
      %v4434 = vpack.c.b16 %v4433, %v4432
      %v4437 = vsel %vm823, %v4305, 0
      %v4440 = vsel %vm823, %v4309, 0
      %v4443 = vsel %vm823, %v4313, 0
      %v4446 = vsel %vm823, %v4317, 0
      %v4449 = vsel %vm823, %v4321, 0
      %v4452 = vsel %vm823, %v4325, 0
      %v4455 = vsel %vm823, %v4329, 0
      %v4458 = vsel %vm823, %v4333, 0
      %v4461 = vsel %vm823, %v4337, 0
      %v4464 = vsel %vm823, %v4341, 0
      %v4467 = vsel %vm823, %v4345, 0
      %v4470 = vsel %vm823, %v4349, 0
      %v4473 = vsel %vm823, %v4353, 0
      %v4476 = vsel %vm823, %v4357, 0
      %v4479 = vsel %vm823, %v4361, 0
      %v4482 = vsel %vm823, %v4365, 0
      %v4485 = vsel %vm823, %v4369, 0
      %v4488 = vsel %vm823, %v4373, 0
      %v4491 = vsel %vm823, %v4377, 0
      %v4494 = vsel %vm823, %v4381, 0
      %v4497 = vsel %vm823, %v4385, 0
      %v4500 = vsel %vm823, %v4389, 0
      %v4503 = vsel %vm823, %v4393, 0
      %v4506 = vsel %vm823, %v4397, 0
      %v4509 = vsel %vm823, %v4401, 0
      %v4512 = vsel %vm823, %v4405, 0
      %v4515 = vsel %vm823, %v4409, 0
      %v4518 = vsel %vm823, %v4413, 0
      %v4521 = vsel %vm823, %v4417, 0
      %v4524 = vsel %vm823, %v4421, 0
      %v4527 = vsel %vm823, %v4425, 0
      %v4530 = vsel %vm823, %v4429, 0
      %4532 = vmatpush.bf16.msra.mxu0 0
      %4533 = vmatpush.bf16.msra.mxu0 0
      %4534 = vmatpush.bf16.msra.mxu0 0
      %4535 = vmatpush.bf16.msra.mxu0 0
      %4536 = vmatpush.bf16.msra.mxu0 0
      %4537 = vmatpush.bf16.msra.mxu0 0
      %4538 = vmatpush.bf16.msra.mxu0 0
      %4539 = vmatpush.bf16.msra.mxu0 %v4434
      %4540 = vmatmul.bf16.gmra.mxu0 %v4437
      %v4541 = vpop.f32.mrf.mxu0
      %v4542 = vadd.f32 0.0, %v4541
      %v4543 = vpop.f32.mrf.mxu0
      %v4544 = vadd.f32 0.0, %v4543
      %4545 = vmatmul.bf16.gmra.mxu0 %v4440
      %v4546 = vpop.f32.mrf.mxu0
      %v4547 = vadd.f32 0.0, %v4546
      %v4548 = vpop.f32.mrf.mxu0
      %v4549 = vadd.f32 0.0, %v4548
      %4550 = vmatmul.bf16.gmra.mxu0 %v4443
      %v4551 = vpop.f32.mrf.mxu0
      %v4552 = vadd.f32 0.0, %v4551
      %v4553 = vpop.f32.mrf.mxu0
      %v4554 = vadd.f32 0.0, %v4553
      %4555 = vmatmul.bf16.gmra.mxu0 %v4446
      %v4556 = vpop.f32.mrf.mxu0
      %v4557 = vadd.f32 0.0, %v4556
      %v4558 = vpop.f32.mrf.mxu0
      %v4559 = vadd.f32 0.0, %v4558
      %4560 = vmatmul.bf16.gmra.mxu0 %v4449
      %v4561 = vpop.f32.mrf.mxu0
      %v4562 = vadd.f32 0.0, %v4561
      %v4563 = vpop.f32.mrf.mxu0
      %v4564 = vadd.f32 0.0, %v4563
      %4565 = vmatmul.bf16.gmra.mxu0 %v4452
      %v4566 = vpop.f32.mrf.mxu0
      %v4567 = vadd.f32 0.0, %v4566
      %v4568 = vpop.f32.mrf.mxu0
      %v4569 = vadd.f32 0.0, %v4568
      %4570 = vmatmul.bf16.gmra.mxu0 %v4455
      %v4571 = vpop.f32.mrf.mxu0
      %v4572 = vadd.f32 0.0, %v4571
      %v4573 = vpop.f32.mrf.mxu0
      %v4574 = vadd.f32 0.0, %v4573
      %4575 = vmatmul.bf16.gmra.mxu0 %v4458
      %v4576 = vpop.f32.mrf.mxu0
      %v4577 = vadd.f32 0.0, %v4576
      %v4578 = vpop.f32.mrf.mxu0
      %v4579 = vadd.f32 0.0, %v4578
      %4580 = vmatmul.bf16.gmra.mxu0 %v4461
      %v4581 = vpop.f32.mrf.mxu0
      %v4582 = vadd.f32 0.0, %v4581
      %v4583 = vpop.f32.mrf.mxu0
      %v4584 = vadd.f32 0.0, %v4583
      %4585 = vmatmul.bf16.gmra.mxu0 %v4464
      %v4586 = vpop.f32.mrf.mxu0
      %v4587 = vadd.f32 0.0, %v4586
      %v4588 = vpop.f32.mrf.mxu0
      %v4589 = vadd.f32 0.0, %v4588
      %4590 = vmatmul.bf16.gmra.mxu0 %v4467
      %v4591 = vpop.f32.mrf.mxu0
      %v4592 = vadd.f32 0.0, %v4591
      %v4593 = vpop.f32.mrf.mxu0
      %v4594 = vadd.f32 0.0, %v4593
      %4595 = vmatmul.bf16.gmra.mxu0 %v4470
      %v4596 = vpop.f32.mrf.mxu0
      %v4597 = vadd.f32 0.0, %v4596
      %v4598 = vpop.f32.mrf.mxu0
      %v4599 = vadd.f32 0.0, %v4598
      %4600 = vmatmul.bf16.gmra.mxu0 %v4473
      %v4601 = vpop.f32.mrf.mxu0
      %v4602 = vadd.f32 0.0, %v4601
      %v4603 = vpop.f32.mrf.mxu0
      %v4604 = vadd.f32 0.0, %v4603
      %4605 = vmatmul.bf16.gmra.mxu0 %v4476
      %v4606 = vpop.f32.mrf.mxu0
      %v4607 = vadd.f32 0.0, %v4606
      %v4608 = vpop.f32.mrf.mxu0
      %v4609 = vadd.f32 0.0, %v4608
      %4610 = vmatmul.bf16.gmra.mxu0 %v4479
      %v4611 = vpop.f32.mrf.mxu0
      %v4612 = vadd.f32 0.0, %v4611
      %v4613 = vpop.f32.mrf.mxu0
      %v4614 = vadd.f32 0.0, %v4613
      %4615 = vmatmul.bf16.gmra.mxu0 %v4482
      %v4616 = vpop.f32.mrf.mxu0
      %v4617 = vadd.f32 0.0, %v4616
      %v4618 = vpop.f32.mrf.mxu0
      %v4619 = vadd.f32 0.0, %v4618
      %4620 = vmatmul.bf16.gmra.mxu0 %v4485
      %v4621 = vpop.f32.mrf.mxu0
      %v4622 = vadd.f32 0.0, %v4621
      %v4623 = vpop.f32.mrf.mxu0
      %v4624 = vadd.f32 0.0, %v4623
      %4625 = vmatmul.bf16.gmra.mxu0 %v4488
      %v4626 = vpop.f32.mrf.mxu0
      %v4627 = vadd.f32 0.0, %v4626
      %v4628 = vpop.f32.mrf.mxu0
      %v4629 = vadd.f32 0.0, %v4628
      %4630 = vmatmul.bf16.gmra.mxu0 %v4491
      %v4631 = vpop.f32.mrf.mxu0
      %v4632 = vadd.f32 0.0, %v4631
      %v4633 = vpop.f32.mrf.mxu0
      %v4634 = vadd.f32 0.0, %v4633
      %4635 = vmatmul.bf16.gmra.mxu0 %v4494
      %v4636 = vpop.f32.mrf.mxu0
      %v4637 = vadd.f32 0.0, %v4636
      %v4638 = vpop.f32.mrf.mxu0
      %v4639 = vadd.f32 0.0, %v4638
      %4640 = vmatmul.bf16.gmra.mxu0 %v4497
      %v4641 = vpop.f32.mrf.mxu0
      %v4642 = vadd.f32 0.0, %v4641
      %v4643 = vpop.f32.mrf.mxu0
      %v4644 = vadd.f32 0.0, %v4643
      %4645 = vmatmul.bf16.gmra.mxu0 %v4500
      %v4646 = vpop.f32.mrf.mxu0
      %v4647 = vadd.f32 0.0, %v4646
      %v4648 = vpop.f32.mrf.mxu0
      %v4649 = vadd.f32 0.0, %v4648
      %4650 = vmatmul.bf16.gmra.mxu0 %v4503
      %v4651 = vpop.f32.mrf.mxu0
      %v4652 = vadd.f32 0.0, %v4651
      %v4653 = vpop.f32.mrf.mxu0
      %v4654 = vadd.f32 0.0, %v4653
      %4655 = vmatmul.bf16.gmra.mxu0 %v4506
      %v4656 = vpop.f32.mrf.mxu0
      %v4657 = vadd.f32 0.0, %v4656
      %v4658 = vpop.f32.mrf.mxu0
      %v4659 = vadd.f32 0.0, %v4658
      %4660 = vmatmul.bf16.gmra.mxu0 %v4509
      %v4661 = vpop.f32.mrf.mxu0
      %v4662 = vadd.f32 0.0, %v4661
      %v4663 = vpop.f32.mrf.mxu0
      %v4664 = vadd.f32 0.0, %v4663
      %4665 = vmatmul.bf16.gmra.mxu0 %v4512
      %v4666 = vpop.f32.mrf.mxu0
      %v4667 = vadd.f32 0.0, %v4666
      %v4668 = vpop.f32.mrf.mxu0
      %v4669 = vadd.f32 0.0, %v4668
      %4670 = vmatmul.bf16.gmra.mxu0 %v4515
      %v4671 = vpop.f32.mrf.mxu0
      %v4672 = vadd.f32 0.0, %v4671
      %v4673 = vpop.f32.mrf.mxu0
      %v4674 = vadd.f32 0.0, %v4673
      %4675 = vmatmul.bf16.gmra.mxu0 %v4518
      %v4676 = vpop.f32.mrf.mxu0
      %v4677 = vadd.f32 0.0, %v4676
      %v4678 = vpop.f32.mrf.mxu0
      %v4679 = vadd.f32 0.0, %v4678
      %4680 = vmatmul.bf16.gmra.mxu0 %v4521
      %v4681 = vpop.f32.mrf.mxu0
      %v4682 = vadd.f32 0.0, %v4681
      %v4683 = vpop.f32.mrf.mxu0
      %v4684 = vadd.f32 0.0, %v4683
      %4685 = vmatmul.bf16.gmra.mxu0 %v4524
      %v4686 = vpop.f32.mrf.mxu0
      %v4687 = vadd.f32 0.0, %v4686
      %v4688 = vpop.f32.mrf.mxu0
      %v4689 = vadd.f32 0.0, %v4688
      %4690 = vmatmul.bf16.gmra.mxu0 %v4527
      %v4691 = vpop.f32.mrf.mxu0
      %v4692 = vadd.f32 0.0, %v4691
      %v4693 = vpop.f32.mrf.mxu0
      %v4694 = vadd.f32 0.0, %v4693
      %4695 = vmatmul.bf16.gmra.mxu0 %v4530
      %v4696 = vpop.f32.mrf.mxu0
      %v4697 = vadd.f32 0.0, %v4696
      %v4698 = vpop.f32.mrf.mxu0
      %v4699 = vadd.f32 0.0, %v4698
      %4700 = vdwg.mxu0
      %v4701 = vadd.f32 %v4234, %v4542
      %v4702 = vadd.f32 %v4235, %v4544
      %v4703 = vadd.f32 %v4236, %v4547
      %v4704 = vadd.f32 %v4237, %v4549
      %v4705 = vadd.f32 %v4238, %v4552
      %v4706 = vadd.f32 %v4239, %v4554
      %v4707 = vadd.f32 %v4240, %v4557
      %v4708 = vadd.f32 %v4241, %v4559
      %v4709 = vadd.f32 %v4242, %v4562
      %v4710 = vadd.f32 %v4243, %v4564
      %v4711 = vadd.f32 %v4244, %v4567
      %v4712 = vadd.f32 %v4245, %v4569
      %v4713 = vadd.f32 %v4246, %v4572
      %v4714 = vadd.f32 %v4247, %v4574
      %v4715 = vadd.f32 %v4248, %v4577
      %v4716 = vadd.f32 %v4249, %v4579
      %v4717 = vadd.f32 %v4250, %v4582
      %v4718 = vadd.f32 %v4251, %v4584
      %v4719 = vadd.f32 %v4252, %v4587
      %v4720 = vadd.f32 %v4253, %v4589
      %v4721 = vadd.f32 %v4254, %v4592
      %v4722 = vadd.f32 %v4255, %v4594
      %v4723 = vadd.f32 %v4256, %v4597
      %v4724 = vadd.f32 %v4257, %v4599
      %v4725 = vadd.f32 %v4258, %v4602
      %v4726 = vadd.f32 %v4259, %v4604
      %v4727 = vadd.f32 %v4260, %v4607
      %v4728 = vadd.f32 %v4261, %v4609
      %v4729 = vadd.f32 %v4262, %v4612
      %v4730 = vadd.f32 %v4263, %v4614
      %v4731 = vadd.f32 %v4264, %v4617
      %v4732 = vadd.f32 %v4265, %v4619
      %v4733 = vadd.f32 %v4266, %v4622
      %v4734 = vadd.f32 %v4267, %v4624
      %v4735 = vadd.f32 %v4268, %v4627
      %v4736 = vadd.f32 %v4269, %v4629
      %v4737 = vadd.f32 %v4270, %v4632
      %v4738 = vadd.f32 %v4271, %v4634
      %v4739 = vadd.f32 %v4272, %v4637
      %v4740 = vadd.f32 %v4273, %v4639
      %v4741 = vadd.f32 %v4274, %v4642
      %v4742 = vadd.f32 %v4275, %v4644
      %v4743 = vadd.f32 %v4276, %v4647
      %v4744 = vadd.f32 %v4277, %v4649
      %v4745 = vadd.f32 %v4278, %v4652
      %v4746 = vadd.f32 %v4279, %v4654
      %v4747 = vadd.f32 %v4280, %v4657
      %v4748 = vadd.f32 %v4281, %v4659
      %v4749 = vadd.f32 %v4282, %v4662
      %v4750 = vadd.f32 %v4283, %v4664
      %v4751 = vadd.f32 %v4284, %v4667
      %v4752 = vadd.f32 %v4285, %v4669
      %v4753 = vadd.f32 %v4286, %v4672
      %v4754 = vadd.f32 %v4287, %v4674
      %v4755 = vadd.f32 %v4288, %v4677
      %v4756 = vadd.f32 %v4289, %v4679
      %v4757 = vadd.f32 %v4290, %v4682
      %v4758 = vadd.f32 %v4291, %v4684
      %v4759 = vadd.f32 %v4292, %v4687
      %v4760 = vadd.f32 %v4293, %v4689
      %v4761 = vadd.f32 %v4294, %v4692
      %v4762 = vadd.f32 %v4295, %v4694
      %v4763 = vadd.f32 %v4296, %v4697
      %v4764 = vadd.f32 %v4297, %v4699
      %v4766 = vshrl.u32 %v657, 16
      %v4768 = vrot.slane %v4766, 2
      %v4769 = vshll.u32 %v657, 16
      %v4771 = vrot.slane %v4769, 3
      %v4772 = vor.u32 %v4768, %v4771
      %v4773 = vsel %vm3425, %v3560, %v4772
      %v4775 = vshrl.u32 %v658, 16
      %v4777 = vrot.slane %v4775, 2
      %v4778 = vshll.u32 %v658, 16
      %v4780 = vrot.slane %v4778, 3
      %v4781 = vor.u32 %v4777, %v4780
      %v4782 = vsel %vm3425, %v4772, %v4781
      %v4784 = vshrl.u32 %v659, 16
      %v4786 = vrot.slane %v4784, 2
      %v4787 = vshll.u32 %v659, 16
      %v4789 = vrot.slane %v4787, 3
      %v4790 = vor.u32 %v4786, %v4789
      %v4791 = vsel %vm3425, %v4781, %v4790
      %v4793 = vshrl.u32 %v660, 16
      %v4795 = vrot.slane %v4793, 2
      %v4796 = vshll.u32 %v660, 16
      %v4798 = vrot.slane %v4796, 3
      %v4799 = vor.u32 %v4795, %v4798
      %v4800 = vsel %vm3425, %v4790, %v4799
      %v4802 = vshrl.u32 %v661, 16
      %v4804 = vrot.slane %v4802, 2
      %v4805 = vshll.u32 %v661, 16
      %v4807 = vrot.slane %v4805, 3
      %v4808 = vor.u32 %v4804, %v4807
      %v4809 = vsel %vm3425, %v4799, %v4808
      %v4812 = vunpack.c.l.b16 %v715
      %v4813 = vunpack.c.l.b16 %v716
      %v4814 = vpack.c.b16 %v4813, %v4812
      %v4817 = vsel %vm823, %v4773, 0
      %v4820 = vsel %vm823, %v4782, 0
      %v4823 = vsel %vm823, %v4791, 0
      %v4826 = vsel %vm823, %v4800, 0
      %v4829 = vsel %vm823, %v4809, 0
      %4831 = vmatpush.bf16.msra.mxu0 0
      %4832 = vmatpush.bf16.msra.mxu0 0
      %4833 = vmatpush.bf16.msra.mxu0 0
      %4834 = vmatpush.bf16.msra.mxu0 0
      %4835 = vmatpush.bf16.msra.mxu0 0
      %4836 = vmatpush.bf16.msra.mxu0 0
      %4837 = vmatpush.bf16.msra.mxu0 0
      %4838 = vmatpush.bf16.msra.mxu0 %v4814
      %4839 = vmatmul.bf16.gmra.mxu0 %v3584
      %v4840 = vpop.f32.mrf.mxu0
      %v4841 = vadd.f32 0.0, %v4840
      %v4842 = vpop.f32.mrf.mxu0
      %v4843 = vadd.f32 0.0, %v4842
      %4844 = vmatmul.bf16.gmra.mxu0 %v3587
      %v4845 = vpop.f32.mrf.mxu0
      %v4846 = vadd.f32 0.0, %v4845
      %v4847 = vpop.f32.mrf.mxu0
      %v4848 = vadd.f32 0.0, %v4847
      %4849 = vmatmul.bf16.gmra.mxu0 %v3590
      %v4850 = vpop.f32.mrf.mxu0
      %v4851 = vadd.f32 0.0, %v4850
      %v4852 = vpop.f32.mrf.mxu0
      %v4853 = vadd.f32 0.0, %v4852
      %4854 = vmatmul.bf16.gmra.mxu0 %v3593
      %v4855 = vpop.f32.mrf.mxu0
      %v4856 = vadd.f32 0.0, %v4855
      %v4857 = vpop.f32.mrf.mxu0
      %v4858 = vadd.f32 0.0, %v4857
      %4859 = vmatmul.bf16.gmra.mxu0 %v3596
      %v4860 = vpop.f32.mrf.mxu0
      %v4861 = vadd.f32 0.0, %v4860
      %v4862 = vpop.f32.mrf.mxu0
      %v4863 = vadd.f32 0.0, %v4862
      %4864 = vmatmul.bf16.gmra.mxu0 %v3599
      %v4865 = vpop.f32.mrf.mxu0
      %v4866 = vadd.f32 0.0, %v4865
      %v4867 = vpop.f32.mrf.mxu0
      %v4868 = vadd.f32 0.0, %v4867
      %4869 = vmatmul.bf16.gmra.mxu0 %v3602
      %v4870 = vpop.f32.mrf.mxu0
      %v4871 = vadd.f32 0.0, %v4870
      %v4872 = vpop.f32.mrf.mxu0
      %v4873 = vadd.f32 0.0, %v4872
      %4874 = vmatmul.bf16.gmra.mxu0 %v3605
      %v4875 = vpop.f32.mrf.mxu0
      %v4876 = vadd.f32 0.0, %v4875
      %v4877 = vpop.f32.mrf.mxu0
      %v4878 = vadd.f32 0.0, %v4877
      %4879 = vmatmul.bf16.gmra.mxu0 %v3608
      %v4880 = vpop.f32.mrf.mxu0
      %v4881 = vadd.f32 0.0, %v4880
      %v4882 = vpop.f32.mrf.mxu0
      %v4883 = vadd.f32 0.0, %v4882
      %4884 = vmatmul.bf16.gmra.mxu0 %v3611
      %v4885 = vpop.f32.mrf.mxu0
      %v4886 = vadd.f32 0.0, %v4885
      %v4887 = vpop.f32.mrf.mxu0
      %v4888 = vadd.f32 0.0, %v4887
      %4889 = vmatmul.bf16.gmra.mxu0 %v3614
      %v4890 = vpop.f32.mrf.mxu0
      %v4891 = vadd.f32 0.0, %v4890
      %v4892 = vpop.f32.mrf.mxu0
      %v4893 = vadd.f32 0.0, %v4892
      %4894 = vmatmul.bf16.gmra.mxu0 %v3617
      %v4895 = vpop.f32.mrf.mxu0
      %v4896 = vadd.f32 0.0, %v4895
      %v4897 = vpop.f32.mrf.mxu0
      %v4898 = vadd.f32 0.0, %v4897
      %4899 = vmatmul.bf16.gmra.mxu0 %v3620
      %v4900 = vpop.f32.mrf.mxu0
      %v4901 = vadd.f32 0.0, %v4900
      %v4902 = vpop.f32.mrf.mxu0
      %v4903 = vadd.f32 0.0, %v4902
      %4904 = vmatmul.bf16.gmra.mxu0 %v3623
      %v4905 = vpop.f32.mrf.mxu0
      %v4906 = vadd.f32 0.0, %v4905
      %v4907 = vpop.f32.mrf.mxu0
      %v4908 = vadd.f32 0.0, %v4907
      %4909 = vmatmul.bf16.gmra.mxu0 %v3626
      %v4910 = vpop.f32.mrf.mxu0
      %v4911 = vadd.f32 0.0, %v4910
      %v4912 = vpop.f32.mrf.mxu0
      %v4913 = vadd.f32 0.0, %v4912
      %4914 = vmatmul.bf16.gmra.mxu0 %v3629
      %v4915 = vpop.f32.mrf.mxu0
      %v4916 = vadd.f32 0.0, %v4915
      %v4917 = vpop.f32.mrf.mxu0
      %v4918 = vadd.f32 0.0, %v4917
      %4919 = vmatmul.bf16.gmra.mxu0 %v3632
      %v4920 = vpop.f32.mrf.mxu0
      %v4921 = vadd.f32 0.0, %v4920
      %v4922 = vpop.f32.mrf.mxu0
      %v4923 = vadd.f32 0.0, %v4922
      %4924 = vmatmul.bf16.gmra.mxu0 %v3635
      %v4925 = vpop.f32.mrf.mxu0
      %v4926 = vadd.f32 0.0, %v4925
      %v4927 = vpop.f32.mrf.mxu0
      %v4928 = vadd.f32 0.0, %v4927
      %4929 = vmatmul.bf16.gmra.mxu0 %v3638
      %v4930 = vpop.f32.mrf.mxu0
      %v4931 = vadd.f32 0.0, %v4930
      %v4932 = vpop.f32.mrf.mxu0
      %v4933 = vadd.f32 0.0, %v4932
      %4934 = vmatmul.bf16.gmra.mxu0 %v3641
      %v4935 = vpop.f32.mrf.mxu0
      %v4936 = vadd.f32 0.0, %v4935
      %v4937 = vpop.f32.mrf.mxu0
      %v4938 = vadd.f32 0.0, %v4937
      %4939 = vmatmul.bf16.gmra.mxu0 %v3644
      %v4940 = vpop.f32.mrf.mxu0
      %v4941 = vadd.f32 0.0, %v4940
      %v4942 = vpop.f32.mrf.mxu0
      %v4943 = vadd.f32 0.0, %v4942
      %4944 = vmatmul.bf16.gmra.mxu0 %v3647
      %v4945 = vpop.f32.mrf.mxu0
      %v4946 = vadd.f32 0.0, %v4945
      %v4947 = vpop.f32.mrf.mxu0
      %v4948 = vadd.f32 0.0, %v4947
      %4949 = vmatmul.bf16.gmra.mxu0 %v3650
      %v4950 = vpop.f32.mrf.mxu0
      %v4951 = vadd.f32 0.0, %v4950
      %v4952 = vpop.f32.mrf.mxu0
      %v4953 = vadd.f32 0.0, %v4952
      %4954 = vmatmul.bf16.gmra.mxu0 %v3653
      %v4955 = vpop.f32.mrf.mxu0
      %v4956 = vadd.f32 0.0, %v4955
      %v4957 = vpop.f32.mrf.mxu0
      %v4958 = vadd.f32 0.0, %v4957
      %4959 = vmatmul.bf16.gmra.mxu0 %v3656
      %v4960 = vpop.f32.mrf.mxu0
      %v4961 = vadd.f32 0.0, %v4960
      %v4962 = vpop.f32.mrf.mxu0
      %v4963 = vadd.f32 0.0, %v4962
      %4964 = vmatmul.bf16.gmra.mxu0 %v3659
      %v4965 = vpop.f32.mrf.mxu0
      %v4966 = vadd.f32 0.0, %v4965
      %v4967 = vpop.f32.mrf.mxu0
      %v4968 = vadd.f32 0.0, %v4967
      %4969 = vmatmul.bf16.gmra.mxu0 %v3662
      %v4970 = vpop.f32.mrf.mxu0
      %v4971 = vadd.f32 0.0, %v4970
      %v4972 = vpop.f32.mrf.mxu0
      %v4973 = vadd.f32 0.0, %v4972
      %4974 = vmatmul.bf16.gmra.mxu0 %v4817
      %v4975 = vpop.f32.mrf.mxu0
      %v4976 = vadd.f32 0.0, %v4975
      %v4977 = vpop.f32.mrf.mxu0
      %v4978 = vadd.f32 0.0, %v4977
      %4979 = vmatmul.bf16.gmra.mxu0 %v4820
      %v4980 = vpop.f32.mrf.mxu0
      %v4981 = vadd.f32 0.0, %v4980
      %v4982 = vpop.f32.mrf.mxu0
      %v4983 = vadd.f32 0.0, %v4982
      %4984 = vmatmul.bf16.gmra.mxu0 %v4823
      %v4985 = vpop.f32.mrf.mxu0
      %v4986 = vadd.f32 0.0, %v4985
      %v4987 = vpop.f32.mrf.mxu0
      %v4988 = vadd.f32 0.0, %v4987
      %4989 = vmatmul.bf16.gmra.mxu0 %v4826
      %v4990 = vpop.f32.mrf.mxu0
      %v4991 = vadd.f32 0.0, %v4990
      %v4992 = vpop.f32.mrf.mxu0
      %v4993 = vadd.f32 0.0, %v4992
      %4994 = vmatmul.bf16.gmra.mxu0 %v4829
      %v4995 = vpop.f32.mrf.mxu0
      %v4996 = vadd.f32 0.0, %v4995
      %v4997 = vpop.f32.mrf.mxu0
      %v4998 = vadd.f32 0.0, %v4997
      %4999 = vdwg.mxu0
      %v5000 = vadd.f32 %v4701, %v4841
      %v5001 = vadd.f32 %v4702, %v4843
      %v5002 = vadd.f32 %v4703, %v4846
      %v5003 = vadd.f32 %v4704, %v4848
      %v5004 = vadd.f32 %v4705, %v4851
      %v5005 = vadd.f32 %v4706, %v4853
      %v5006 = vadd.f32 %v4707, %v4856
      %v5007 = vadd.f32 %v4708, %v4858
      %v5008 = vadd.f32 %v4709, %v4861
      %v5009 = vadd.f32 %v4710, %v4863
      %v5010 = vadd.f32 %v4711, %v4866
      %v5011 = vadd.f32 %v4712, %v4868
      %v5012 = vadd.f32 %v4713, %v4871
      %v5013 = vadd.f32 %v4714, %v4873
      %v5014 = vadd.f32 %v4715, %v4876
      %v5015 = vadd.f32 %v4716, %v4878
      %v5016 = vadd.f32 %v4717, %v4881
      %v5017 = vadd.f32 %v4718, %v4883
      %v5018 = vadd.f32 %v4719, %v4886
      %v5019 = vadd.f32 %v4720, %v4888
      %v5020 = vadd.f32 %v4721, %v4891
      %v5021 = vadd.f32 %v4722, %v4893
      %v5022 = vadd.f32 %v4723, %v4896
      %v5023 = vadd.f32 %v4724, %v4898
      %v5024 = vadd.f32 %v4725, %v4901
      %v5025 = vadd.f32 %v4726, %v4903
      %v5026 = vadd.f32 %v4727, %v4906
      %v5027 = vadd.f32 %v4728, %v4908
      %v5028 = vadd.f32 %v4729, %v4911
      %v5029 = vadd.f32 %v4730, %v4913
      %v5030 = vadd.f32 %v4731, %v4916
      %v5031 = vadd.f32 %v4732, %v4918
      %v5032 = vadd.f32 %v4733, %v4921
      %v5033 = vadd.f32 %v4734, %v4923
      %v5034 = vadd.f32 %v4735, %v4926
      %v5035 = vadd.f32 %v4736, %v4928
      %v5036 = vadd.f32 %v4737, %v4931
      %v5037 = vadd.f32 %v4738, %v4933
      %v5038 = vadd.f32 %v4739, %v4936
      %v5039 = vadd.f32 %v4740, %v4938
      %v5040 = vadd.f32 %v4741, %v4941
      %v5041 = vadd.f32 %v4742, %v4943
      %v5042 = vadd.f32 %v4743, %v4946
      %v5043 = vadd.f32 %v4744, %v4948
      %v5044 = vadd.f32 %v4745, %v4951
      %v5045 = vadd.f32 %v4746, %v4953
      %v5046 = vadd.f32 %v4747, %v4956
      %v5047 = vadd.f32 %v4748, %v4958
      %v5048 = vadd.f32 %v4749, %v4961
      %v5049 = vadd.f32 %v4750, %v4963
      %v5050 = vadd.f32 %v4751, %v4966
      %v5051 = vadd.f32 %v4752, %v4968
      %v5052 = vadd.f32 %v4753, %v4971
      %v5053 = vadd.f32 %v4754, %v4973
      %v5054 = vadd.f32 %v4755, %v4976
      %v5055 = vadd.f32 %v4756, %v4978
      %v5056 = vadd.f32 %v4757, %v4981
      %v5057 = vadd.f32 %v4758, %v4983
      %v5058 = vadd.f32 %v4759, %v4986
      %v5059 = vadd.f32 %v4760, %v4988
      %v5060 = vadd.f32 %v4761, %v4991
      %v5061 = vadd.f32 %v4762, %v4993
      %v5062 = vadd.f32 %v4763, %v4996
      %v5063 = vadd.f32 %v4764, %v4998
      %v5064 = vrot.slane %v657, 3
      %v5065 = vsel %vm3897, %v3961, %v5064
      %v5066 = vrot.slane %v658, 3
      %v5067 = vsel %vm3897, %v5064, %v5066
      %v5068 = vrot.slane %v659, 3
      %v5069 = vsel %vm3897, %v5066, %v5068
      %v5070 = vrot.slane %v660, 3
      %v5071 = vsel %vm3897, %v5068, %v5070
      %v5072 = vrot.slane %v661, 3
      %v5073 = vsel %vm3897, %v5070, %v5072
      %v5076 = vunpack.c.l.b16 %v717
      %v5077 = vunpack.c.l.b16 %v718
      %v5078 = vpack.c.b16 %v5077, %v5076
      %v5081 = vsel %vm823, %v5065, 0
      %v5084 = vsel %vm823, %v5067, 0
      %v5087 = vsel %vm823, %v5069, 0
      %v5090 = vsel %vm823, %v5071, 0
      %v5093 = vsel %vm823, %v5073, 0
      %5095 = vmatpush.bf16.msra.mxu0 0
      %5096 = vmatpush.bf16.msra.mxu0 0
      %5097 = vmatpush.bf16.msra.mxu0 0
      %5098 = vmatpush.bf16.msra.mxu0 0
      %5099 = vmatpush.bf16.msra.mxu0 0
      %5100 = vmatpush.bf16.msra.mxu0 0
      %5101 = vmatpush.bf16.msra.mxu0 0
      %5102 = vmatpush.bf16.msra.mxu0 %v5078
      %5103 = vmatmul.bf16.gmra.mxu0 %v3985
      %v5104 = vpop.f32.mrf.mxu0
      %v5105 = vadd.f32 0.0, %v5104
      %v5106 = vpop.f32.mrf.mxu0
      %v5107 = vadd.f32 0.0, %v5106
      %5108 = vmatmul.bf16.gmra.mxu0 %v3988
      %v5109 = vpop.f32.mrf.mxu0
      %v5110 = vadd.f32 0.0, %v5109
      %v5111 = vpop.f32.mrf.mxu0
      %v5112 = vadd.f32 0.0, %v5111
      %5113 = vmatmul.bf16.gmra.mxu0 %v3991
      %v5114 = vpop.f32.mrf.mxu0
      %v5115 = vadd.f32 0.0, %v5114
      %v5116 = vpop.f32.mrf.mxu0
      %v5117 = vadd.f32 0.0, %v5116
      %5118 = vmatmul.bf16.gmra.mxu0 %v3994
      %v5119 = vpop.f32.mrf.mxu0
      %v5120 = vadd.f32 0.0, %v5119
      %v5121 = vpop.f32.mrf.mxu0
      %v5122 = vadd.f32 0.0, %v5121
      %5123 = vmatmul.bf16.gmra.mxu0 %v3997
      %v5124 = vpop.f32.mrf.mxu0
      %v5125 = vadd.f32 0.0, %v5124
      %v5126 = vpop.f32.mrf.mxu0
      %v5127 = vadd.f32 0.0, %v5126
      %5128 = vmatmul.bf16.gmra.mxu0 %v4000
      %v5129 = vpop.f32.mrf.mxu0
      %v5130 = vadd.f32 0.0, %v5129
      %v5131 = vpop.f32.mrf.mxu0
      %v5132 = vadd.f32 0.0, %v5131
      %5133 = vmatmul.bf16.gmra.mxu0 %v4003
      %v5134 = vpop.f32.mrf.mxu0
      %v5135 = vadd.f32 0.0, %v5134
      %v5136 = vpop.f32.mrf.mxu0
      %v5137 = vadd.f32 0.0, %v5136
      %5138 = vmatmul.bf16.gmra.mxu0 %v4006
      %v5139 = vpop.f32.mrf.mxu0
      %v5140 = vadd.f32 0.0, %v5139
      %v5141 = vpop.f32.mrf.mxu0
      %v5142 = vadd.f32 0.0, %v5141
      %5143 = vmatmul.bf16.gmra.mxu0 %v4009
      %v5144 = vpop.f32.mrf.mxu0
      %v5145 = vadd.f32 0.0, %v5144
      %v5146 = vpop.f32.mrf.mxu0
      %v5147 = vadd.f32 0.0, %v5146
      %5148 = vmatmul.bf16.gmra.mxu0 %v4012
      %v5149 = vpop.f32.mrf.mxu0
      %v5150 = vadd.f32 0.0, %v5149
      %v5151 = vpop.f32.mrf.mxu0
      %v5152 = vadd.f32 0.0, %v5151
      %5153 = vmatmul.bf16.gmra.mxu0 %v4015
      %v5154 = vpop.f32.mrf.mxu0
      %v5155 = vadd.f32 0.0, %v5154
      %v5156 = vpop.f32.mrf.mxu0
      %v5157 = vadd.f32 0.0, %v5156
      %5158 = vmatmul.bf16.gmra.mxu0 %v4018
      %v5159 = vpop.f32.mrf.mxu0
      %v5160 = vadd.f32 0.0, %v5159
      %v5161 = vpop.f32.mrf.mxu0
      %v5162 = vadd.f32 0.0, %v5161
      %5163 = vmatmul.bf16.gmra.mxu0 %v4021
      %v5164 = vpop.f32.mrf.mxu0
      %v5165 = vadd.f32 0.0, %v5164
      %v5166 = vpop.f32.mrf.mxu0
      %v5167 = vadd.f32 0.0, %v5166
      %5168 = vmatmul.bf16.gmra.mxu0 %v4024
      %v5169 = vpop.f32.mrf.mxu0
      %v5170 = vadd.f32 0.0, %v5169
      %v5171 = vpop.f32.mrf.mxu0
      %v5172 = vadd.f32 0.0, %v5171
      %5173 = vmatmul.bf16.gmra.mxu0 %v4027
      %v5174 = vpop.f32.mrf.mxu0
      %v5175 = vadd.f32 0.0, %v5174
      %v5176 = vpop.f32.mrf.mxu0
      %v5177 = vadd.f32 0.0, %v5176
      %5178 = vmatmul.bf16.gmra.mxu0 %v4030
      %v5179 = vpop.f32.mrf.mxu0
      %v5180 = vadd.f32 0.0, %v5179
      %v5181 = vpop.f32.mrf.mxu0
      %v5182 = vadd.f32 0.0, %v5181
      %5183 = vmatmul.bf16.gmra.mxu0 %v4033
      %v5184 = vpop.f32.mrf.mxu0
      %v5185 = vadd.f32 0.0, %v5184
      %v5186 = vpop.f32.mrf.mxu0
      %v5187 = vadd.f32 0.0, %v5186
      %5188 = vmatmul.bf16.gmra.mxu0 %v4036
      %v5189 = vpop.f32.mrf.mxu0
      %v5190 = vadd.f32 0.0, %v5189
      %v5191 = vpop.f32.mrf.mxu0
      %v5192 = vadd.f32 0.0, %v5191
      %5193 = vmatmul.bf16.gmra.mxu0 %v4039
      %v5194 = vpop.f32.mrf.mxu0
      %v5195 = vadd.f32 0.0, %v5194
      %v5196 = vpop.f32.mrf.mxu0
      %v5197 = vadd.f32 0.0, %v5196
      %5198 = vmatmul.bf16.gmra.mxu0 %v4042
      %v5199 = vpop.f32.mrf.mxu0
      %v5200 = vadd.f32 0.0, %v5199
      %v5201 = vpop.f32.mrf.mxu0
      %v5202 = vadd.f32 0.0, %v5201
      %5203 = vmatmul.bf16.gmra.mxu0 %v4045
      %v5204 = vpop.f32.mrf.mxu0
      %v5205 = vadd.f32 0.0, %v5204
      %v5206 = vpop.f32.mrf.mxu0
      %v5207 = vadd.f32 0.0, %v5206
      %5208 = vmatmul.bf16.gmra.mxu0 %v4048
      %v5209 = vpop.f32.mrf.mxu0
      %v5210 = vadd.f32 0.0, %v5209
      %v5211 = vpop.f32.mrf.mxu0
      %v5212 = vadd.f32 0.0, %v5211
      %5213 = vmatmul.bf16.gmra.mxu0 %v4051
      %v5214 = vpop.f32.mrf.mxu0
      %v5215 = vadd.f32 0.0, %v5214
      %v5216 = vpop.f32.mrf.mxu0
      %v5217 = vadd.f32 0.0, %v5216
      %5218 = vmatmul.bf16.gmra.mxu0 %v4054
      %v5219 = vpop.f32.mrf.mxu0
      %v5220 = vadd.f32 0.0, %v5219
      %v5221 = vpop.f32.mrf.mxu0
      %v5222 = vadd.f32 0.0, %v5221
      %5223 = vmatmul.bf16.gmra.mxu0 %v4057
      %v5224 = vpop.f32.mrf.mxu0
      %v5225 = vadd.f32 0.0, %v5224
      %v5226 = vpop.f32.mrf.mxu0
      %v5227 = vadd.f32 0.0, %v5226
      %5228 = vmatmul.bf16.gmra.mxu0 %v4060
      %v5229 = vpop.f32.mrf.mxu0
      %v5230 = vadd.f32 0.0, %v5229
      %v5231 = vpop.f32.mrf.mxu0
      %v5232 = vadd.f32 0.0, %v5231
      %5233 = vmatmul.bf16.gmra.mxu0 %v4063
      %v5234 = vpop.f32.mrf.mxu0
      %v5235 = vadd.f32 0.0, %v5234
      %v5236 = vpop.f32.mrf.mxu0
      %v5237 = vadd.f32 0.0, %v5236
      %5238 = vmatmul.bf16.gmra.mxu0 %v5081
      %v5239 = vpop.f32.mrf.mxu0
      %v5240 = vadd.f32 0.0, %v5239
      %v5241 = vpop.f32.mrf.mxu0
      %v5242 = vadd.f32 0.0, %v5241
      %5243 = vmatmul.bf16.gmra.mxu0 %v5084
      %v5244 = vpop.f32.mrf.mxu0
      %v5245 = vadd.f32 0.0, %v5244
      %v5246 = vpop.f32.mrf.mxu0
      %v5247 = vadd.f32 0.0, %v5246
      %5248 = vmatmul.bf16.gmra.mxu0 %v5087
      %v5249 = vpop.f32.mrf.mxu0
      %v5250 = vadd.f32 0.0, %v5249
      %v5251 = vpop.f32.mrf.mxu0
      %v5252 = vadd.f32 0.0, %v5251
      %5253 = vmatmul.bf16.gmra.mxu0 %v5090
      %v5254 = vpop.f32.mrf.mxu0
      %v5255 = vadd.f32 0.0, %v5254
      %v5256 = vpop.f32.mrf.mxu0
      %v5257 = vadd.f32 0.0, %v5256
      %5258 = vmatmul.bf16.gmra.mxu0 %v5093
      %v5259 = vpop.f32.mrf.mxu0
      %v5260 = vadd.f32 0.0, %v5259
      %v5261 = vpop.f32.mrf.mxu0
      %v5262 = vadd.f32 0.0, %v5261
      %5263 = vdwg.mxu0
      %v5264 = vadd.f32 %v5000, %v5105
      %v5265 = vadd.f32 %v5001, %v5107
      %v5266 = vadd.f32 %v5002, %v5110
      %v5267 = vadd.f32 %v5003, %v5112
      %v5268 = vadd.f32 %v5004, %v5115
      %v5269 = vadd.f32 %v5005, %v5117
      %v5270 = vadd.f32 %v5006, %v5120
      %v5271 = vadd.f32 %v5007, %v5122
      %v5272 = vadd.f32 %v5008, %v5125
      %v5273 = vadd.f32 %v5009, %v5127
      %v5274 = vadd.f32 %v5010, %v5130
      %v5275 = vadd.f32 %v5011, %v5132
      %v5276 = vadd.f32 %v5012, %v5135
      %v5277 = vadd.f32 %v5013, %v5137
      %v5278 = vadd.f32 %v5014, %v5140
      %v5279 = vadd.f32 %v5015, %v5142
      %v5280 = vadd.f32 %v5016, %v5145
      %v5281 = vadd.f32 %v5017, %v5147
      %v5282 = vadd.f32 %v5018, %v5150
      %v5283 = vadd.f32 %v5019, %v5152
      %v5284 = vadd.f32 %v5020, %v5155
      %v5285 = vadd.f32 %v5021, %v5157
      %v5286 = vadd.f32 %v5022, %v5160
      %v5287 = vadd.f32 %v5023, %v5162
      %v5288 = vadd.f32 %v5024, %v5165
      %v5289 = vadd.f32 %v5025, %v5167
      %v5290 = vadd.f32 %v5026, %v5170
      %v5291 = vadd.f32 %v5027, %v5172
      %v5292 = vadd.f32 %v5028, %v5175
      %v5293 = vadd.f32 %v5029, %v5177
      %v5294 = vadd.f32 %v5030, %v5180
      %v5295 = vadd.f32 %v5031, %v5182
      %v5296 = vadd.f32 %v5032, %v5185
      %v5297 = vadd.f32 %v5033, %v5187
      %v5298 = vadd.f32 %v5034, %v5190
      %v5299 = vadd.f32 %v5035, %v5192
      %v5300 = vadd.f32 %v5036, %v5195
      %v5301 = vadd.f32 %v5037, %v5197
      %v5302 = vadd.f32 %v5038, %v5200
      %v5303 = vadd.f32 %v5039, %v5202
      %v5304 = vadd.f32 %v5040, %v5205
      %v5305 = vadd.f32 %v5041, %v5207
      %v5306 = vadd.f32 %v5042, %v5210
      %v5307 = vadd.f32 %v5043, %v5212
      %v5308 = vadd.f32 %v5044, %v5215
      %v5309 = vadd.f32 %v5045, %v5217
      %v5310 = vadd.f32 %v5046, %v5220
      %v5311 = vadd.f32 %v5047, %v5222
      %v5312 = vadd.f32 %v5048, %v5225
      %v5313 = vadd.f32 %v5049, %v5227
      %v5314 = vadd.f32 %v5050, %v5230
      %v5315 = vadd.f32 %v5051, %v5232
      %v5316 = vadd.f32 %v5052, %v5235
      %v5317 = vadd.f32 %v5053, %v5237
      %v5318 = vadd.f32 %v5054, %v5240
      %v5319 = vadd.f32 %v5055, %v5242
      %v5320 = vadd.f32 %v5056, %v5245
      %v5321 = vadd.f32 %v5057, %v5247
      %v5322 = vadd.f32 %v5058, %v5250
      %v5323 = vadd.f32 %v5059, %v5252
      %v5324 = vadd.f32 %v5060, %v5255
      %v5325 = vadd.f32 %v5061, %v5257
      %v5326 = vadd.f32 %v5062, %v5260
      %v5327 = vadd.f32 %v5063, %v5262
      %v5328 = vrot.slane %v4766, 3
      %v5329 = vrot.slane %v4769, 4
      %v5330 = vor.u32 %v5328, %v5329
      %v5331 = vsel %vm4298, %v4428, %v5330
      %v5332 = vrot.slane %v4775, 3
      %v5333 = vrot.slane %v4778, 4
      %v5334 = vor.u32 %v5332, %v5333
      %v5335 = vsel %vm4298, %v5330, %v5334
      %v5336 = vrot.slane %v4784, 3
      %v5337 = vrot.slane %v4787, 4
      %v5338 = vor.u32 %v5336, %v5337
      %v5339 = vsel %vm4298, %v5334, %v5338
      %v5340 = vrot.slane %v4793, 3
      %v5341 = vrot.slane %v4796, 4
      %v5342 = vor.u32 %v5340, %v5341
      %v5343 = vsel %vm4298, %v5338, %v5342
      %v5344 = vrot.slane %v4802, 3
      %v5345 = vrot.slane %v4805, 4
      %v5346 = vor.u32 %v5344, %v5345
      %v5347 = vsel %vm4298, %v5342, %v5346
      %v5350 = vunpack.c.l.b16 %v719
      %v5351 = vunpack.c.l.b16 %v720
      %v5352 = vpack.c.b16 %v5351, %v5350
      %v5355 = vsel %vm823, %v5331, 0
      %v5358 = vsel %vm823, %v5335, 0
      %v5361 = vsel %vm823, %v5339, 0
      %v5364 = vsel %vm823, %v5343, 0
      %v5367 = vsel %vm823, %v5347, 0
      %5369 = vmatpush.bf16.msra.mxu0 0
      %5370 = vmatpush.bf16.msra.mxu0 0
      %5371 = vmatpush.bf16.msra.mxu0 0
      %5372 = vmatpush.bf16.msra.mxu0 0
      %5373 = vmatpush.bf16.msra.mxu0 0
      %5374 = vmatpush.bf16.msra.mxu0 0
      %5375 = vmatpush.bf16.msra.mxu0 0
      %5376 = vmatpush.bf16.msra.mxu0 %v5352
      %5377 = vmatmul.bf16.gmra.mxu0 %v4452
      %v5378 = vpop.f32.mrf.mxu0
      %v5379 = vadd.f32 0.0, %v5378
      %v5380 = vpop.f32.mrf.mxu0
      %v5381 = vadd.f32 0.0, %v5380
      %5382 = vmatmul.bf16.gmra.mxu0 %v4455
      %v5383 = vpop.f32.mrf.mxu0
      %v5384 = vadd.f32 0.0, %v5383
      %v5385 = vpop.f32.mrf.mxu0
      %v5386 = vadd.f32 0.0, %v5385
      %5387 = vmatmul.bf16.gmra.mxu0 %v4458
      %v5388 = vpop.f32.mrf.mxu0
      %v5389 = vadd.f32 0.0, %v5388
      %v5390 = vpop.f32.mrf.mxu0
      %v5391 = vadd.f32 0.0, %v5390
      %5392 = vmatmul.bf16.gmra.mxu0 %v4461
      %v5393 = vpop.f32.mrf.mxu0
      %v5394 = vadd.f32 0.0, %v5393
      %v5395 = vpop.f32.mrf.mxu0
      %v5396 = vadd.f32 0.0, %v5395
      %5397 = vmatmul.bf16.gmra.mxu0 %v4464
      %v5398 = vpop.f32.mrf.mxu0
      %v5399 = vadd.f32 0.0, %v5398
      %v5400 = vpop.f32.mrf.mxu0
      %v5401 = vadd.f32 0.0, %v5400
      %5402 = vmatmul.bf16.gmra.mxu0 %v4467
      %v5403 = vpop.f32.mrf.mxu0
      %v5404 = vadd.f32 0.0, %v5403
      %v5405 = vpop.f32.mrf.mxu0
      %v5406 = vadd.f32 0.0, %v5405
      %5407 = vmatmul.bf16.gmra.mxu0 %v4470
      %v5408 = vpop.f32.mrf.mxu0
      %v5409 = vadd.f32 0.0, %v5408
      %v5410 = vpop.f32.mrf.mxu0
      %v5411 = vadd.f32 0.0, %v5410
      %5412 = vmatmul.bf16.gmra.mxu0 %v4473
      %v5413 = vpop.f32.mrf.mxu0
      %v5414 = vadd.f32 0.0, %v5413
      %v5415 = vpop.f32.mrf.mxu0
      %v5416 = vadd.f32 0.0, %v5415
      %5417 = vmatmul.bf16.gmra.mxu0 %v4476
      %v5418 = vpop.f32.mrf.mxu0
      %v5419 = vadd.f32 0.0, %v5418
      %v5420 = vpop.f32.mrf.mxu0
      %v5421 = vadd.f32 0.0, %v5420
      %5422 = vmatmul.bf16.gmra.mxu0 %v4479
      %v5423 = vpop.f32.mrf.mxu0
      %v5424 = vadd.f32 0.0, %v5423
      %v5425 = vpop.f32.mrf.mxu0
      %v5426 = vadd.f32 0.0, %v5425
      %5427 = vmatmul.bf16.gmra.mxu0 %v4482
      %v5428 = vpop.f32.mrf.mxu0
      %v5429 = vadd.f32 0.0, %v5428
      %v5430 = vpop.f32.mrf.mxu0
      %v5431 = vadd.f32 0.0, %v5430
      %5432 = vmatmul.bf16.gmra.mxu0 %v4485
      %v5433 = vpop.f32.mrf.mxu0
      %v5434 = vadd.f32 0.0, %v5433
      %v5435 = vpop.f32.mrf.mxu0
      %v5436 = vadd.f32 0.0, %v5435
      %5437 = vmatmul.bf16.gmra.mxu0 %v4488
      %v5438 = vpop.f32.mrf.mxu0
      %v5439 = vadd.f32 0.0, %v5438
      %v5440 = vpop.f32.mrf.mxu0
      %v5441 = vadd.f32 0.0, %v5440
      %5442 = vmatmul.bf16.gmra.mxu0 %v4491
      %v5443 = vpop.f32.mrf.mxu0
      %v5444 = vadd.f32 0.0, %v5443
      %v5445 = vpop.f32.mrf.mxu0
      %v5446 = vadd.f32 0.0, %v5445
      %5447 = vmatmul.bf16.gmra.mxu0 %v4494
      %v5448 = vpop.f32.mrf.mxu0
      %v5449 = vadd.f32 0.0, %v5448
      %v5450 = vpop.f32.mrf.mxu0
      %v5451 = vadd.f32 0.0, %v5450
      %5452 = vmatmul.bf16.gmra.mxu0 %v4497
      %v5453 = vpop.f32.mrf.mxu0
      %v5454 = vadd.f32 0.0, %v5453
      %v5455 = vpop.f32.mrf.mxu0
      %v5456 = vadd.f32 0.0, %v5455
      %5457 = vmatmul.bf16.gmra.mxu0 %v4500
      %v5458 = vpop.f32.mrf.mxu0
      %v5459 = vadd.f32 0.0, %v5458
      %v5460 = vpop.f32.mrf.mxu0
      %v5461 = vadd.f32 0.0, %v5460
      %5462 = vmatmul.bf16.gmra.mxu0 %v4503
      %v5463 = vpop.f32.mrf.mxu0
      %v5464 = vadd.f32 0.0, %v5463
      %v5465 = vpop.f32.mrf.mxu0
      %v5466 = vadd.f32 0.0, %v5465
      %5467 = vmatmul.bf16.gmra.mxu0 %v4506
      %v5468 = vpop.f32.mrf.mxu0
      %v5469 = vadd.f32 0.0, %v5468
      %v5470 = vpop.f32.mrf.mxu0
      %v5471 = vadd.f32 0.0, %v5470
      %5472 = vmatmul.bf16.gmra.mxu0 %v4509
      %v5473 = vpop.f32.mrf.mxu0
      %v5474 = vadd.f32 0.0, %v5473
      %v5475 = vpop.f32.mrf.mxu0
      %v5476 = vadd.f32 0.0, %v5475
      %5477 = vmatmul.bf16.gmra.mxu0 %v4512
      %v5478 = vpop.f32.mrf.mxu0
      %v5479 = vadd.f32 0.0, %v5478
      %v5480 = vpop.f32.mrf.mxu0
      %v5481 = vadd.f32 0.0, %v5480
      %5482 = vmatmul.bf16.gmra.mxu0 %v4515
      %v5483 = vpop.f32.mrf.mxu0
      %v5484 = vadd.f32 0.0, %v5483
      %v5485 = vpop.f32.mrf.mxu0
      %v5486 = vadd.f32 0.0, %v5485
      %5487 = vmatmul.bf16.gmra.mxu0 %v4518
      %v5488 = vpop.f32.mrf.mxu0
      %v5489 = vadd.f32 0.0, %v5488
      %v5490 = vpop.f32.mrf.mxu0
      %v5491 = vadd.f32 0.0, %v5490
      %5492 = vmatmul.bf16.gmra.mxu0 %v4521
      %v5493 = vpop.f32.mrf.mxu0
      %v5494 = vadd.f32 0.0, %v5493
      %v5495 = vpop.f32.mrf.mxu0
      %v5496 = vadd.f32 0.0, %v5495
      %5497 = vmatmul.bf16.gmra.mxu0 %v4524
      %v5498 = vpop.f32.mrf.mxu0
      %v5499 = vadd.f32 0.0, %v5498
      %v5500 = vpop.f32.mrf.mxu0
      %v5501 = vadd.f32 0.0, %v5500
      %5502 = vmatmul.bf16.gmra.mxu0 %v4527
      %v5503 = vpop.f32.mrf.mxu0
      %v5504 = vadd.f32 0.0, %v5503
      %v5505 = vpop.f32.mrf.mxu0
      %v5506 = vadd.f32 0.0, %v5505
      %5507 = vmatmul.bf16.gmra.mxu0 %v4530
      %v5508 = vpop.f32.mrf.mxu0
      %v5509 = vadd.f32 0.0, %v5508
      %v5510 = vpop.f32.mrf.mxu0
      %v5511 = vadd.f32 0.0, %v5510
      %5512 = vmatmul.bf16.gmra.mxu0 %v5355
      %v5513 = vpop.f32.mrf.mxu0
      %v5514 = vadd.f32 0.0, %v5513
      %v5515 = vpop.f32.mrf.mxu0
      %v5516 = vadd.f32 0.0, %v5515
      %5517 = vmatmul.bf16.gmra.mxu0 %v5358
      %v5518 = vpop.f32.mrf.mxu0
      %v5519 = vadd.f32 0.0, %v5518
      %v5520 = vpop.f32.mrf.mxu0
      %v5521 = vadd.f32 0.0, %v5520
      %5522 = vmatmul.bf16.gmra.mxu0 %v5361
      %v5523 = vpop.f32.mrf.mxu0
      %v5524 = vadd.f32 0.0, %v5523
      %v5525 = vpop.f32.mrf.mxu0
      %v5526 = vadd.f32 0.0, %v5525
      %5527 = vmatmul.bf16.gmra.mxu0 %v5364
      %v5528 = vpop.f32.mrf.mxu0
      %v5529 = vadd.f32 0.0, %v5528
      %v5530 = vpop.f32.mrf.mxu0
      %v5531 = vadd.f32 0.0, %v5530
      %5532 = vmatmul.bf16.gmra.mxu0 %v5367
      %v5533 = vpop.f32.mrf.mxu0
      %v5534 = vadd.f32 0.0, %v5533
      %v5535 = vpop.f32.mrf.mxu0
      %v5536 = vadd.f32 0.0, %v5535
      %5537 = vdwg.mxu0
      %v5538 = vadd.f32 %v5264, %v5379
      %v5539 = vadd.f32 %v5265, %v5381
      %v5540 = vadd.f32 %v5266, %v5384
      %v5541 = vadd.f32 %v5267, %v5386
      %v5542 = vadd.f32 %v5268, %v5389
      %v5543 = vadd.f32 %v5269, %v5391
      %v5544 = vadd.f32 %v5270, %v5394
      %v5545 = vadd.f32 %v5271, %v5396
      %v5546 = vadd.f32 %v5272, %v5399
      %v5547 = vadd.f32 %v5273, %v5401
      %v5548 = vadd.f32 %v5274, %v5404
      %v5549 = vadd.f32 %v5275, %v5406
      %v5550 = vadd.f32 %v5276, %v5409
      %v5551 = vadd.f32 %v5277, %v5411
      %v5552 = vadd.f32 %v5278, %v5414
      %v5553 = vadd.f32 %v5279, %v5416
      %v5554 = vadd.f32 %v5280, %v5419
      %v5555 = vadd.f32 %v5281, %v5421
      %v5556 = vadd.f32 %v5282, %v5424
      %v5557 = vadd.f32 %v5283, %v5426
      %v5558 = vadd.f32 %v5284, %v5429
      %v5559 = vadd.f32 %v5285, %v5431
      %v5560 = vadd.f32 %v5286, %v5434
      %v5561 = vadd.f32 %v5287, %v5436
      %v5562 = vadd.f32 %v5288, %v5439
      %v5563 = vadd.f32 %v5289, %v5441
      %v5564 = vadd.f32 %v5290, %v5444
      %v5565 = vadd.f32 %v5291, %v5446
      %v5566 = vadd.f32 %v5292, %v5449
      %v5567 = vadd.f32 %v5293, %v5451
      %v5568 = vadd.f32 %v5294, %v5454
      %v5569 = vadd.f32 %v5295, %v5456
      %v5570 = vadd.f32 %v5296, %v5459
      %v5571 = vadd.f32 %v5297, %v5461
      %v5572 = vadd.f32 %v5298, %v5464
      %v5573 = vadd.f32 %v5299, %v5466
      %v5574 = vadd.f32 %v5300, %v5469
      %v5575 = vadd.f32 %v5301, %v5471
      %v5576 = vadd.f32 %v5302, %v5474
      %v5577 = vadd.f32 %v5303, %v5476
      %v5578 = vadd.f32 %v5304, %v5479
      %v5579 = vadd.f32 %v5305, %v5481
      %v5580 = vadd.f32 %v5306, %v5484
      %v5581 = vadd.f32 %v5307, %v5486
      %v5582 = vadd.f32 %v5308, %v5489
      %v5583 = vadd.f32 %v5309, %v5491
      %v5584 = vadd.f32 %v5310, %v5494
      %v5585 = vadd.f32 %v5311, %v5496
      %v5586 = vadd.f32 %v5312, %v5499
      %v5587 = vadd.f32 %v5313, %v5501
      %v5588 = vadd.f32 %v5314, %v5504
      %v5589 = vadd.f32 %v5315, %v5506
      %v5590 = vadd.f32 %v5316, %v5509
      %v5591 = vadd.f32 %v5317, %v5511
      %v5592 = vadd.f32 %v5318, %v5514
      %v5593 = vadd.f32 %v5319, %v5516
      %v5594 = vadd.f32 %v5320, %v5519
      %v5595 = vadd.f32 %v5321, %v5521
      %v5596 = vadd.f32 %v5322, %v5524
      %v5597 = vadd.f32 %v5323, %v5526
      %v5598 = vadd.f32 %v5324, %v5529
      %v5599 = vadd.f32 %v5325, %v5531
      %v5600 = vadd.f32 %v5326, %v5534
      %v5601 = vadd.f32 %v5327, %v5536
      %vm5602 = vsmask.f32 256
      %v5603 = vrot.slane %v1142, 7
      %v5604 = vrot.slane %v1150, 7
      %v5605 = vor.u32 %v5604, %v1146
      %v5606 = vsel %vm5602, %v5603, %v5605
      %v5607 = vrot.slane %v1158, 7
      %v5608 = vor.u32 %v5607, %v1154
      %v5609 = vsel %vm5602, %v5604, %v5608
      %v5610 = vrot.slane %v1166, 7
      %v5611 = vor.u32 %v5610, %v1162
      %v5612 = vsel %vm5602, %v5607, %v5611
      %v5613 = vrot.slane %v1174, 7
      %v5614 = vor.u32 %v5613, %v1170
      %v5615 = vsel %vm5602, %v5610, %v5614
      %v5616 = vrot.slane %v1182, 7
      %v5617 = vor.u32 %v5616, %v1178
      %v5618 = vsel %vm5602, %v5613, %v5617
      %v5619 = vrot.slane %v1190, 7
      %v5620 = vor.u32 %v5619, %v1186
      %v5621 = vsel %vm5602, %v5616, %v5620
      %v5622 = vrot.slane %v1198, 7
      %v5623 = vor.u32 %v5622, %v1194
      %v5624 = vsel %vm5602, %v5619, %v5623
      %v5625 = vrot.slane %v1206, 7
      %v5626 = vor.u32 %v5625, %v1202
      %v5627 = vsel %vm5602, %v5622, %v5626
      %v5628 = vrot.slane %v1214, 7
      %v5629 = vor.u32 %v5628, %v1210
      %v5630 = vsel %vm5602, %v5625, %v5629
      %v5631 = vrot.slane %v1222, 7
      %v5632 = vor.u32 %v5631, %v1218
      %v5633 = vsel %vm5602, %v5628, %v5632
      %v5634 = vrot.slane %v1230, 7
      %v5635 = vor.u32 %v5634, %v1226
      %v5636 = vsel %vm5602, %v5631, %v5635
      %v5637 = vrot.slane %v1238, 7
      %v5638 = vor.u32 %v5637, %v1234
      %v5639 = vsel %vm5602, %v5634, %v5638
      %v5640 = vrot.slane %v1246, 7
      %v5641 = vor.u32 %v5640, %v1242
      %v5642 = vsel %vm5602, %v5637, %v5641
      %v5643 = vrot.slane %v1254, 7
      %v5644 = vor.u32 %v5643, %v1250
      %v5645 = vsel %vm5602, %v5640, %v5644
      %v5646 = vrot.slane %v1262, 7
      %v5647 = vor.u32 %v5646, %v1258
      %v5648 = vsel %vm5602, %v5643, %v5647
      %v5649 = vrot.slane %v1270, 7
      %v5650 = vor.u32 %v5649, %v1266
      %v5651 = vsel %vm5602, %v5646, %v5650
      %v5652 = vrot.slane %v1278, 7
      %v5653 = vor.u32 %v5652, %v1274
      %v5654 = vsel %vm5602, %v5649, %v5653
      %v5655 = vrot.slane %v1286, 7
      %v5656 = vor.u32 %v5655, %v1282
      %v5657 = vsel %vm5602, %v5652, %v5656
      %v5658 = vrot.slane %v1294, 7
      %v5659 = vor.u32 %v5658, %v1290
      %v5660 = vsel %vm5602, %v5655, %v5659
      %v5661 = vrot.slane %v1302, 7
      %v5662 = vor.u32 %v5661, %v1298
      %v5663 = vsel %vm5602, %v5658, %v5662
      %v5664 = vrot.slane %v1310, 7
      %v5665 = vor.u32 %v5664, %v1306
      %v5666 = vsel %vm5602, %v5661, %v5665
      %v5667 = vrot.slane %v1318, 7
      %v5668 = vor.u32 %v5667, %v1314
      %v5669 = vsel %vm5602, %v5664, %v5668
      %v5670 = vrot.slane %v1326, 7
      %v5671 = vor.u32 %v5670, %v1322
      %v5672 = vsel %vm5602, %v5667, %v5671
      %v5673 = vrot.slane %v1334, 7
      %v5674 = vor.u32 %v5673, %v1330
      %v5675 = vsel %vm5602, %v5670, %v5674
      %v5676 = vrot.slane %v1342, 7
      %v5677 = vor.u32 %v5676, %v1338
      %v5678 = vsel %vm5602, %v5673, %v5677
      %v5679 = vrot.slane %v1749, 7
      %v5680 = vor.u32 %v5679, %v1346
      %v5681 = vsel %vm5602, %v5676, %v5680
      %v5682 = vrot.slane %v3554, 7
      %v5683 = vor.u32 %v5682, %v3557
      %v5684 = vsel %vm5602, %v5679, %v5683
      %v5685 = vrot.slane %v4766, 7
      %v5686 = vor.u32 %v5685, %v4769
      %v5687 = vsel %vm5602, %v5682, %v5686
      %v5688 = vrot.slane %v4775, 7
      %v5689 = vor.u32 %v5688, %v4778
      %v5690 = vsel %vm5602, %v5685, %v5689
      %v5691 = vrot.slane %v4784, 7
      %v5692 = vor.u32 %v5691, %v4787
      %v5693 = vsel %vm5602, %v5688, %v5692
      %v5694 = vrot.slane %v4793, 7
      %v5695 = vor.u32 %v5694, %v4796
      %v5696 = vsel %vm5602, %v5691, %v5695
      %v5697 = vrot.slane %v4802, 7
      %v5698 = vor.u32 %v5697, %v4805
      %v5699 = vsel %vm5602, %v5694, %v5698
      %v5702 = vunpack.c.l.b16 %v721
      %v5703 = vunpack.c.l.b16 %v722
      %v5704 = vpack.c.b16 %v5703, %v5702
      %v5707 = vsel %vm823, %v5606, 0
      %v5710 = vsel %vm823, %v5609, 0
      %v5713 = vsel %vm823, %v5612, 0
      %v5716 = vsel %vm823, %v5615, 0
      %v5719 = vsel %vm823, %v5618, 0
      %v5722 = vsel %vm823, %v5621, 0
      %v5725 = vsel %vm823, %v5624, 0
      %v5728 = vsel %vm823, %v5627, 0
      %v5731 = vsel %vm823, %v5630, 0
      %v5734 = vsel %vm823, %v5633, 0
      %v5737 = vsel %vm823, %v5636, 0
      %v5740 = vsel %vm823, %v5639, 0
      %v5743 = vsel %vm823, %v5642, 0
      %v5746 = vsel %vm823, %v5645, 0
      %v5749 = vsel %vm823, %v5648, 0
      %v5752 = vsel %vm823, %v5651, 0
      %v5755 = vsel %vm823, %v5654, 0
      %v5758 = vsel %vm823, %v5657, 0
      %v5761 = vsel %vm823, %v5660, 0
      %v5764 = vsel %vm823, %v5663, 0
      %v5767 = vsel %vm823, %v5666, 0
      %v5770 = vsel %vm823, %v5669, 0
      %v5773 = vsel %vm823, %v5672, 0
      %v5776 = vsel %vm823, %v5675, 0
      %v5779 = vsel %vm823, %v5678, 0
      %v5782 = vsel %vm823, %v5681, 0
      %v5785 = vsel %vm823, %v5684, 0
      %v5788 = vsel %vm823, %v5687, 0
      %v5791 = vsel %vm823, %v5690, 0
      %v5794 = vsel %vm823, %v5693, 0
      %v5797 = vsel %vm823, %v5696, 0
      %v5800 = vsel %vm823, %v5699, 0
      %5802 = vmatpush.bf16.msra.mxu0 0
      %5803 = vmatpush.bf16.msra.mxu0 0
      %5804 = vmatpush.bf16.msra.mxu0 0
      %5805 = vmatpush.bf16.msra.mxu0 0
      %5806 = vmatpush.bf16.msra.mxu0 0
      %5807 = vmatpush.bf16.msra.mxu0 0
      %5808 = vmatpush.bf16.msra.mxu0 0
      %5809 = vmatpush.bf16.msra.mxu0 %v5704
      %5810 = vmatmul.bf16.gmra.mxu0 %v5707
      %v5811 = vpop.f32.mrf.mxu0
      %v5812 = vadd.f32 0.0, %v5811
      %v5813 = vpop.f32.mrf.mxu0
      %v5814 = vadd.f32 0.0, %v5813
      %5815 = vmatmul.bf16.gmra.mxu0 %v5710
      %v5816 = vpop.f32.mrf.mxu0
      %v5817 = vadd.f32 0.0, %v5816
      %v5818 = vpop.f32.mrf.mxu0
      %v5819 = vadd.f32 0.0, %v5818
      %5820 = vmatmul.bf16.gmra.mxu0 %v5713
      %v5821 = vpop.f32.mrf.mxu0
      %v5822 = vadd.f32 0.0, %v5821
      %v5823 = vpop.f32.mrf.mxu0
      %v5824 = vadd.f32 0.0, %v5823
      %5825 = vmatmul.bf16.gmra.mxu0 %v5716
      %v5826 = vpop.f32.mrf.mxu0
      %v5827 = vadd.f32 0.0, %v5826
      %v5828 = vpop.f32.mrf.mxu0
      %v5829 = vadd.f32 0.0, %v5828
      %5830 = vmatmul.bf16.gmra.mxu0 %v5719
      %v5831 = vpop.f32.mrf.mxu0
      %v5832 = vadd.f32 0.0, %v5831
      %v5833 = vpop.f32.mrf.mxu0
      %v5834 = vadd.f32 0.0, %v5833
      %5835 = vmatmul.bf16.gmra.mxu0 %v5722
      %v5836 = vpop.f32.mrf.mxu0
      %v5837 = vadd.f32 0.0, %v5836
      %v5838 = vpop.f32.mrf.mxu0
      %v5839 = vadd.f32 0.0, %v5838
      %5840 = vmatmul.bf16.gmra.mxu0 %v5725
      %v5841 = vpop.f32.mrf.mxu0
      %v5842 = vadd.f32 0.0, %v5841
      %v5843 = vpop.f32.mrf.mxu0
      %v5844 = vadd.f32 0.0, %v5843
      %5845 = vmatmul.bf16.gmra.mxu0 %v5728
      %v5846 = vpop.f32.mrf.mxu0
      %v5847 = vadd.f32 0.0, %v5846
      %v5848 = vpop.f32.mrf.mxu0
      %v5849 = vadd.f32 0.0, %v5848
      %5850 = vmatmul.bf16.gmra.mxu0 %v5731
      %v5851 = vpop.f32.mrf.mxu0
      %v5852 = vadd.f32 0.0, %v5851
      %v5853 = vpop.f32.mrf.mxu0
      %v5854 = vadd.f32 0.0, %v5853
      %5855 = vmatmul.bf16.gmra.mxu0 %v5734
      %v5856 = vpop.f32.mrf.mxu0
      %v5857 = vadd.f32 0.0, %v5856
      %v5858 = vpop.f32.mrf.mxu0
      %v5859 = vadd.f32 0.0, %v5858
      %5860 = vmatmul.bf16.gmra.mxu0 %v5737
      %v5861 = vpop.f32.mrf.mxu0
      %v5862 = vadd.f32 0.0, %v5861
      %v5863 = vpop.f32.mrf.mxu0
      %v5864 = vadd.f32 0.0, %v5863
      %5865 = vmatmul.bf16.gmra.mxu0 %v5740
      %v5866 = vpop.f32.mrf.mxu0
      %v5867 = vadd.f32 0.0, %v5866
      %v5868 = vpop.f32.mrf.mxu0
      %v5869 = vadd.f32 0.0, %v5868
      %5870 = vmatmul.bf16.gmra.mxu0 %v5743
      %v5871 = vpop.f32.mrf.mxu0
      %v5872 = vadd.f32 0.0, %v5871
      %v5873 = vpop.f32.mrf.mxu0
      %v5874 = vadd.f32 0.0, %v5873
      %5875 = vmatmul.bf16.gmra.mxu0 %v5746
      %v5876 = vpop.f32.mrf.mxu0
      %v5877 = vadd.f32 0.0, %v5876
      %v5878 = vpop.f32.mrf.mxu0
      %v5879 = vadd.f32 0.0, %v5878
      %5880 = vmatmul.bf16.gmra.mxu0 %v5749
      %v5881 = vpop.f32.mrf.mxu0
      %v5882 = vadd.f32 0.0, %v5881
      %v5883 = vpop.f32.mrf.mxu0
      %v5884 = vadd.f32 0.0, %v5883
      %5885 = vmatmul.bf16.gmra.mxu0 %v5752
      %v5886 = vpop.f32.mrf.mxu0
      %v5887 = vadd.f32 0.0, %v5886
      %v5888 = vpop.f32.mrf.mxu0
      %v5889 = vadd.f32 0.0, %v5888
      %5890 = vmatmul.bf16.gmra.mxu0 %v5755
      %v5891 = vpop.f32.mrf.mxu0
      %v5892 = vadd.f32 0.0, %v5891
      %v5893 = vpop.f32.mrf.mxu0
      %v5894 = vadd.f32 0.0, %v5893
      %5895 = vmatmul.bf16.gmra.mxu0 %v5758
      %v5896 = vpop.f32.mrf.mxu0
      %v5897 = vadd.f32 0.0, %v5896
      %v5898 = vpop.f32.mrf.mxu0
      %v5899 = vadd.f32 0.0, %v5898
      %5900 = vmatmul.bf16.gmra.mxu0 %v5761
      %v5901 = vpop.f32.mrf.mxu0
      %v5902 = vadd.f32 0.0, %v5901
      %v5903 = vpop.f32.mrf.mxu0
      %v5904 = vadd.f32 0.0, %v5903
      %5905 = vmatmul.bf16.gmra.mxu0 %v5764
      %v5906 = vpop.f32.mrf.mxu0
      %v5907 = vadd.f32 0.0, %v5906
      %v5908 = vpop.f32.mrf.mxu0
      %v5909 = vadd.f32 0.0, %v5908
      %5910 = vmatmul.bf16.gmra.mxu0 %v5767
      %v5911 = vpop.f32.mrf.mxu0
      %v5912 = vadd.f32 0.0, %v5911
      %v5913 = vpop.f32.mrf.mxu0
      %v5914 = vadd.f32 0.0, %v5913
      %5915 = vmatmul.bf16.gmra.mxu0 %v5770
      %v5916 = vpop.f32.mrf.mxu0
      %v5917 = vadd.f32 0.0, %v5916
      %v5918 = vpop.f32.mrf.mxu0
      %v5919 = vadd.f32 0.0, %v5918
      %5920 = vmatmul.bf16.gmra.mxu0 %v5773
      %v5921 = vpop.f32.mrf.mxu0
      %v5922 = vadd.f32 0.0, %v5921
      %v5923 = vpop.f32.mrf.mxu0
      %v5924 = vadd.f32 0.0, %v5923
      %5925 = vmatmul.bf16.gmra.mxu0 %v5776
      %v5926 = vpop.f32.mrf.mxu0
      %v5927 = vadd.f32 0.0, %v5926
      %v5928 = vpop.f32.mrf.mxu0
      %v5929 = vadd.f32 0.0, %v5928
      %5930 = vmatmul.bf16.gmra.mxu0 %v5779
      %v5931 = vpop.f32.mrf.mxu0
      %v5932 = vadd.f32 0.0, %v5931
      %v5933 = vpop.f32.mrf.mxu0
      %v5934 = vadd.f32 0.0, %v5933
      %5935 = vmatmul.bf16.gmra.mxu0 %v5782
      %v5936 = vpop.f32.mrf.mxu0
      %v5937 = vadd.f32 0.0, %v5936
      %v5938 = vpop.f32.mrf.mxu0
      %v5939 = vadd.f32 0.0, %v5938
      %5940 = vmatmul.bf16.gmra.mxu0 %v5785
      %v5941 = vpop.f32.mrf.mxu0
      %v5942 = vadd.f32 0.0, %v5941
      %v5943 = vpop.f32.mrf.mxu0
      %v5944 = vadd.f32 0.0, %v5943
      %5945 = vmatmul.bf16.gmra.mxu0 %v5788
      %v5946 = vpop.f32.mrf.mxu0
      %v5947 = vadd.f32 0.0, %v5946
      %v5948 = vpop.f32.mrf.mxu0
      %v5949 = vadd.f32 0.0, %v5948
      %5950 = vmatmul.bf16.gmra.mxu0 %v5791
      %v5951 = vpop.f32.mrf.mxu0
      %v5952 = vadd.f32 0.0, %v5951
      %v5953 = vpop.f32.mrf.mxu0
      %v5954 = vadd.f32 0.0, %v5953
      %5955 = vmatmul.bf16.gmra.mxu0 %v5794
      %v5956 = vpop.f32.mrf.mxu0
      %v5957 = vadd.f32 0.0, %v5956
      %v5958 = vpop.f32.mrf.mxu0
      %v5959 = vadd.f32 0.0, %v5958
      %5960 = vmatmul.bf16.gmra.mxu0 %v5797
      %v5961 = vpop.f32.mrf.mxu0
      %v5962 = vadd.f32 0.0, %v5961
      %v5963 = vpop.f32.mrf.mxu0
      %v5964 = vadd.f32 0.0, %v5963
      %5965 = vmatmul.bf16.gmra.mxu0 %v5800
      %v5966 = vpop.f32.mrf.mxu0
      %v5967 = vadd.f32 0.0, %v5966
      %v5968 = vpop.f32.mrf.mxu0
      %v5969 = vadd.f32 0.0, %v5968
      %5970 = vdwg.mxu0
      %v5971 = vadd.f32 %v5538, %v5812
      %v5972 = vadd.f32 %v5539, %v5814
      %v5973 = vadd.f32 %v5540, %v5817
      %v5974 = vadd.f32 %v5541, %v5819
      %v5975 = vadd.f32 %v5542, %v5822
      %v5976 = vadd.f32 %v5543, %v5824
      %v5977 = vadd.f32 %v5544, %v5827
      %v5978 = vadd.f32 %v5545, %v5829
      %v5979 = vadd.f32 %v5546, %v5832
      %v5980 = vadd.f32 %v5547, %v5834
      %v5981 = vadd.f32 %v5548, %v5837
      %v5982 = vadd.f32 %v5549, %v5839
      %v5983 = vadd.f32 %v5550, %v5842
      %v5984 = vadd.f32 %v5551, %v5844
      %v5985 = vadd.f32 %v5552, %v5847
      %v5986 = vadd.f32 %v5553, %v5849
      %v5987 = vadd.f32 %v5554, %v5852
      %v5988 = vadd.f32 %v5555, %v5854
      %v5989 = vadd.f32 %v5556, %v5857
      %v5990 = vadd.f32 %v5557, %v5859
      %v5991 = vadd.f32 %v5558, %v5862
      %v5992 = vadd.f32 %v5559, %v5864
      %v5993 = vadd.f32 %v5560, %v5867
      %v5994 = vadd.f32 %v5561, %v5869
      %v5995 = vadd.f32 %v5562, %v5872
      %v5996 = vadd.f32 %v5563, %v5874
      %v5997 = vadd.f32 %v5564, %v5877
      %v5998 = vadd.f32 %v5565, %v5879
      %v5999 = vadd.f32 %v5566, %v5882
      %v6000 = vadd.f32 %v5567, %v5884
      %v6001 = vadd.f32 %v5568, %v5887
      %v6002 = vadd.f32 %v5569, %v5889
      %v6003 = vadd.f32 %v5570, %v5892
      %v6004 = vadd.f32 %v5571, %v5894
      %v6005 = vadd.f32 %v5572, %v5897
      %v6006 = vadd.f32 %v5573, %v5899
      %v6007 = vadd.f32 %v5574, %v5902
      %v6008 = vadd.f32 %v5575, %v5904
      %v6009 = vadd.f32 %v5576, %v5907
      %v6010 = vadd.f32 %v5577, %v5909
      %v6011 = vadd.f32 %v5578, %v5912
      %v6012 = vadd.f32 %v5579, %v5914
      %v6013 = vadd.f32 %v5580, %v5917
      %v6014 = vadd.f32 %v5581, %v5919
      %v6015 = vadd.f32 %v5582, %v5922
      %v6016 = vadd.f32 %v5583, %v5924
      %v6017 = vadd.f32 %v5584, %v5927
      %v6018 = vadd.f32 %v5585, %v5929
      %v6019 = vadd.f32 %v5586, %v5932
      %v6020 = vadd.f32 %v5587, %v5934
      %v6021 = vadd.f32 %v5588, %v5937
      %v6022 = vadd.f32 %v5589, %v5939
      %v6023 = vadd.f32 %v5590, %v5942
      %v6024 = vadd.f32 %v5591, %v5944
      %v6025 = vadd.f32 %v5592, %v5947
      %v6026 = vadd.f32 %v5593, %v5949
      %v6027 = vadd.f32 %v5594, %v5952
      %v6028 = vadd.f32 %v5595, %v5954
      %v6029 = vadd.f32 %v5596, %v5957
      %v6030 = vadd.f32 %v5597, %v5959
      %v6031 = vadd.f32 %v5598, %v5962
      %v6032 = vadd.f32 %v5599, %v5964
      %v6033 = vadd.f32 %v5600, %v5967
      %v6034 = vadd.f32 %v5601, %v5969
      %v6037 = vunpack.c.l.b16 %v723
      %v6038 = vunpack.c.l.b16 %v724
      %v6039 = vpack.c.b16 %v6038, %v6037
      %v6041 = vsel %vm823, %v630, 0
      %v6043 = vsel %vm823, %v631, 0
      %v6045 = vsel %vm823, %v632, 0
      %v6047 = vsel %vm823, %v633, 0
      %v6049 = vsel %vm823, %v634, 0
      %v6051 = vsel %vm823, %v635, 0
      %v6053 = vsel %vm823, %v636, 0
      %v6055 = vsel %vm823, %v637, 0
      %v6057 = vsel %vm823, %v638, 0
      %v6059 = vsel %vm823, %v639, 0
      %v6061 = vsel %vm823, %v640, 0
      %v6063 = vsel %vm823, %v641, 0
      %v6065 = vsel %vm823, %v642, 0
      %v6067 = vsel %vm823, %v643, 0
      %v6069 = vsel %vm823, %v644, 0
      %v6071 = vsel %vm823, %v645, 0
      %v6073 = vsel %vm823, %v646, 0
      %v6075 = vsel %vm823, %v647, 0
      %v6077 = vsel %vm823, %v648, 0
      %v6079 = vsel %vm823, %v649, 0
      %v6081 = vsel %vm823, %v650, 0
      %v6083 = vsel %vm823, %v651, 0
      %v6085 = vsel %vm823, %v652, 0
      %v6087 = vsel %vm823, %v653, 0
      %v6089 = vsel %vm823, %v654, 0
      %v6091 = vsel %vm823, %v655, 0
      %v6093 = vsel %vm823, %v656, 0
      %v6095 = vsel %vm823, %v657, 0
      %v6097 = vsel %vm823, %v658, 0
      %v6099 = vsel %vm823, %v659, 0
      %v6101 = vsel %vm823, %v660, 0
      %v6103 = vsel %vm823, %v661, 0
      %6105 = vmatpush.bf16.msra.mxu0 0
      %6106 = vmatpush.bf16.msra.mxu0 0
      %6107 = vmatpush.bf16.msra.mxu0 0
      %6108 = vmatpush.bf16.msra.mxu0 0
      %6109 = vmatpush.bf16.msra.mxu0 0
      %6110 = vmatpush.bf16.msra.mxu0 0
      %6111 = vmatpush.bf16.msra.mxu0 0
      %6112 = vmatpush.bf16.msra.mxu0 %v6039
      %6113 = vmatmul.bf16.gmra.mxu0 %v6041
      %v6114 = vpop.f32.mrf.mxu0
      %v6115 = vadd.f32 0.0, %v6114
      %v6116 = vpop.f32.mrf.mxu0
      %v6117 = vadd.f32 0.0, %v6116
      %6118 = vmatmul.bf16.gmra.mxu0 %v6043
      %v6119 = vpop.f32.mrf.mxu0
      %v6120 = vadd.f32 0.0, %v6119
      %v6121 = vpop.f32.mrf.mxu0
      %v6122 = vadd.f32 0.0, %v6121
      %6123 = vmatmul.bf16.gmra.mxu0 %v6045
      %v6124 = vpop.f32.mrf.mxu0
      %v6125 = vadd.f32 0.0, %v6124
      %v6126 = vpop.f32.mrf.mxu0
      %v6127 = vadd.f32 0.0, %v6126
      %6128 = vmatmul.bf16.gmra.mxu0 %v6047
      %v6129 = vpop.f32.mrf.mxu0
      %v6130 = vadd.f32 0.0, %v6129
      %v6131 = vpop.f32.mrf.mxu0
      %v6132 = vadd.f32 0.0, %v6131
      %6133 = vmatmul.bf16.gmra.mxu0 %v6049
      %v6134 = vpop.f32.mrf.mxu0
      %v6135 = vadd.f32 0.0, %v6134
      %v6136 = vpop.f32.mrf.mxu0
      %v6137 = vadd.f32 0.0, %v6136
      %6138 = vmatmul.bf16.gmra.mxu0 %v6051
      %v6139 = vpop.f32.mrf.mxu0
      %v6140 = vadd.f32 0.0, %v6139
      %v6141 = vpop.f32.mrf.mxu0
      %v6142 = vadd.f32 0.0, %v6141
      %6143 = vmatmul.bf16.gmra.mxu0 %v6053
      %v6144 = vpop.f32.mrf.mxu0
      %v6145 = vadd.f32 0.0, %v6144
      %v6146 = vpop.f32.mrf.mxu0
      %v6147 = vadd.f32 0.0, %v6146
      %6148 = vmatmul.bf16.gmra.mxu0 %v6055
      %v6149 = vpop.f32.mrf.mxu0
      %v6150 = vadd.f32 0.0, %v6149
      %v6151 = vpop.f32.mrf.mxu0
      %v6152 = vadd.f32 0.0, %v6151
      %6153 = vmatmul.bf16.gmra.mxu0 %v6057
      %v6154 = vpop.f32.mrf.mxu0
      %v6155 = vadd.f32 0.0, %v6154
      %v6156 = vpop.f32.mrf.mxu0
      %v6157 = vadd.f32 0.0, %v6156
      %6158 = vmatmul.bf16.gmra.mxu0 %v6059
      %v6159 = vpop.f32.mrf.mxu0
      %v6160 = vadd.f32 0.0, %v6159
      %v6161 = vpop.f32.mrf.mxu0
      %v6162 = vadd.f32 0.0, %v6161
      %6163 = vmatmul.bf16.gmra.mxu0 %v6061
      %v6164 = vpop.f32.mrf.mxu0
      %v6165 = vadd.f32 0.0, %v6164
      %v6166 = vpop.f32.mrf.mxu0
      %v6167 = vadd.f32 0.0, %v6166
      %6168 = vmatmul.bf16.gmra.mxu0 %v6063
      %v6169 = vpop.f32.mrf.mxu0
      %v6170 = vadd.f32 0.0, %v6169
      %v6171 = vpop.f32.mrf.mxu0
      %v6172 = vadd.f32 0.0, %v6171
      %6173 = vmatmul.bf16.gmra.mxu0 %v6065
      %v6174 = vpop.f32.mrf.mxu0
      %v6175 = vadd.f32 0.0, %v6174
      %v6176 = vpop.f32.mrf.mxu0
      %v6177 = vadd.f32 0.0, %v6176
      %6178 = vmatmul.bf16.gmra.mxu0 %v6067
      %v6179 = vpop.f32.mrf.mxu0
      %v6180 = vadd.f32 0.0, %v6179
      %v6181 = vpop.f32.mrf.mxu0
      %v6182 = vadd.f32 0.0, %v6181
      %6183 = vmatmul.bf16.gmra.mxu0 %v6069
      %v6184 = vpop.f32.mrf.mxu0
      %v6185 = vadd.f32 0.0, %v6184
      %v6186 = vpop.f32.mrf.mxu0
      %v6187 = vadd.f32 0.0, %v6186
      %6188 = vmatmul.bf16.gmra.mxu0 %v6071
      %v6189 = vpop.f32.mrf.mxu0
      %v6190 = vadd.f32 0.0, %v6189
      %v6191 = vpop.f32.mrf.mxu0
      %v6192 = vadd.f32 0.0, %v6191
      %6193 = vmatmul.bf16.gmra.mxu0 %v6073
      %v6194 = vpop.f32.mrf.mxu0
      %v6195 = vadd.f32 0.0, %v6194
      %v6196 = vpop.f32.mrf.mxu0
      %v6197 = vadd.f32 0.0, %v6196
      %6198 = vmatmul.bf16.gmra.mxu0 %v6075
      %v6199 = vpop.f32.mrf.mxu0
      %v6200 = vadd.f32 0.0, %v6199
      %v6201 = vpop.f32.mrf.mxu0
      %v6202 = vadd.f32 0.0, %v6201
      %6203 = vmatmul.bf16.gmra.mxu0 %v6077
      %v6204 = vpop.f32.mrf.mxu0
      %v6205 = vadd.f32 0.0, %v6204
      %v6206 = vpop.f32.mrf.mxu0
      %v6207 = vadd.f32 0.0, %v6206
      %6208 = vmatmul.bf16.gmra.mxu0 %v6079
      %v6209 = vpop.f32.mrf.mxu0
      %v6210 = vadd.f32 0.0, %v6209
      %v6211 = vpop.f32.mrf.mxu0
      %v6212 = vadd.f32 0.0, %v6211
      %6213 = vmatmul.bf16.gmra.mxu0 %v6081
      %v6214 = vpop.f32.mrf.mxu0
      %v6215 = vadd.f32 0.0, %v6214
      %v6216 = vpop.f32.mrf.mxu0
      %v6217 = vadd.f32 0.0, %v6216
      %6218 = vmatmul.bf16.gmra.mxu0 %v6083
      %v6219 = vpop.f32.mrf.mxu0
      %v6220 = vadd.f32 0.0, %v6219
      %v6221 = vpop.f32.mrf.mxu0
      %v6222 = vadd.f32 0.0, %v6221
      %6223 = vmatmul.bf16.gmra.mxu0 %v6085
      %v6224 = vpop.f32.mrf.mxu0
      %v6225 = vadd.f32 0.0, %v6224
      %v6226 = vpop.f32.mrf.mxu0
      %v6227 = vadd.f32 0.0, %v6226
      %6228 = vmatmul.bf16.gmra.mxu0 %v6087
      %v6229 = vpop.f32.mrf.mxu0
      %v6230 = vadd.f32 0.0, %v6229
      %v6231 = vpop.f32.mrf.mxu0
      %v6232 = vadd.f32 0.0, %v6231
      %6233 = vmatmul.bf16.gmra.mxu0 %v6089
      %v6234 = vpop.f32.mrf.mxu0
      %v6235 = vadd.f32 0.0, %v6234
      %v6236 = vpop.f32.mrf.mxu0
      %v6237 = vadd.f32 0.0, %v6236
      %6238 = vmatmul.bf16.gmra.mxu0 %v6091
      %v6239 = vpop.f32.mrf.mxu0
      %v6240 = vadd.f32 0.0, %v6239
      %v6241 = vpop.f32.mrf.mxu0
      %v6242 = vadd.f32 0.0, %v6241
      %6243 = vmatmul.bf16.gmra.mxu0 %v6093
      %v6244 = vpop.f32.mrf.mxu0
      %v6245 = vadd.f32 0.0, %v6244
      %v6246 = vpop.f32.mrf.mxu0
      %v6247 = vadd.f32 0.0, %v6246
      %6248 = vmatmul.bf16.gmra.mxu0 %v6095
      %v6249 = vpop.f32.mrf.mxu0
      %v6250 = vadd.f32 0.0, %v6249
      %v6251 = vpop.f32.mrf.mxu0
      %v6252 = vadd.f32 0.0, %v6251
      %6253 = vmatmul.bf16.gmra.mxu0 %v6097
      %v6254 = vpop.f32.mrf.mxu0
      %v6255 = vadd.f32 0.0, %v6254
      %v6256 = vpop.f32.mrf.mxu0
      %v6257 = vadd.f32 0.0, %v6256
      %6258 = vmatmul.bf16.gmra.mxu0 %v6099
      %v6259 = vpop.f32.mrf.mxu0
      %v6260 = vadd.f32 0.0, %v6259
      %v6261 = vpop.f32.mrf.mxu0
      %v6262 = vadd.f32 0.0, %v6261
      %6263 = vmatmul.bf16.gmra.mxu0 %v6101
      %v6264 = vpop.f32.mrf.mxu0
      %v6265 = vadd.f32 0.0, %v6264
      %v6266 = vpop.f32.mrf.mxu0
      %v6267 = vadd.f32 0.0, %v6266
      %6268 = vmatmul.bf16.gmra.mxu0 %v6103
      %v6269 = vpop.f32.mrf.mxu0
      %v6270 = vadd.f32 0.0, %v6269
      %v6271 = vpop.f32.mrf.mxu0
      %v6272 = vadd.f32 0.0, %v6271
      %6273 = vdwg.mxu0
      %v6274 = vadd.f32 %v5971, %v6115
      %v6275 = vadd.f32 %v5972, %v6117
      %v6276 = vadd.f32 %v5973, %v6120
      %v6277 = vadd.f32 %v5974, %v6122
      %v6278 = vadd.f32 %v5975, %v6125
      %v6279 = vadd.f32 %v5976, %v6127
      %v6280 = vadd.f32 %v5977, %v6130
      %v6281 = vadd.f32 %v5978, %v6132
      %v6282 = vadd.f32 %v5979, %v6135
      %v6283 = vadd.f32 %v5980, %v6137
      %v6284 = vadd.f32 %v5981, %v6140
      %v6285 = vadd.f32 %v5982, %v6142
      %v6286 = vadd.f32 %v5983, %v6145
      %v6287 = vadd.f32 %v5984, %v6147
      %v6288 = vadd.f32 %v5985, %v6150
      %v6289 = vadd.f32 %v5986, %v6152
      %v6290 = vadd.f32 %v5987, %v6155
      %v6291 = vadd.f32 %v5988, %v6157
      %v6292 = vadd.f32 %v5989, %v6160
      %v6293 = vadd.f32 %v5990, %v6162
      %v6294 = vadd.f32 %v5991, %v6165
      %v6295 = vadd.f32 %v5992, %v6167
      %v6296 = vadd.f32 %v5993, %v6170
      %v6297 = vadd.f32 %v5994, %v6172
      %v6298 = vadd.f32 %v5995, %v6175
      %v6299 = vadd.f32 %v5996, %v6177
      %v6300 = vadd.f32 %v5997, %v6180
      %v6301 = vadd.f32 %v5998, %v6182
      %v6302 = vadd.f32 %v5999, %v6185
      %v6303 = vadd.f32 %v6000, %v6187
      %v6304 = vadd.f32 %v6001, %v6190
      %v6305 = vadd.f32 %v6002, %v6192
      %v6306 = vadd.f32 %v6003, %v6195
      %v6307 = vadd.f32 %v6004, %v6197
      %v6308 = vadd.f32 %v6005, %v6200
      %v6309 = vadd.f32 %v6006, %v6202
      %v6310 = vadd.f32 %v6007, %v6205
      %v6311 = vadd.f32 %v6008, %v6207
      %v6312 = vadd.f32 %v6009, %v6210
      %v6313 = vadd.f32 %v6010, %v6212
      %v6314 = vadd.f32 %v6011, %v6215
      %v6315 = vadd.f32 %v6012, %v6217
      %v6316 = vadd.f32 %v6013, %v6220
      %v6317 = vadd.f32 %v6014, %v6222
      %v6318 = vadd.f32 %v6015, %v6225
      %v6319 = vadd.f32 %v6016, %v6227
      %v6320 = vadd.f32 %v6017, %v6230
      %v6321 = vadd.f32 %v6018, %v6232
      %v6322 = vadd.f32 %v6019, %v6235
      %v6323 = vadd.f32 %v6020, %v6237
      %v6324 = vadd.f32 %v6021, %v6240
      %v6325 = vadd.f32 %v6022, %v6242
      %v6326 = vadd.f32 %v6023, %v6245
      %v6327 = vadd.f32 %v6024, %v6247
      %v6328 = vadd.f32 %v6025, %v6250
      %v6329 = vadd.f32 %v6026, %v6252
      %v6330 = vadd.f32 %v6027, %v6255
      %v6331 = vadd.f32 %v6028, %v6257
      %v6332 = vadd.f32 %v6029, %v6260
      %v6333 = vadd.f32 %v6030, %v6262
      %v6334 = vadd.f32 %v6031, %v6265
      %v6335 = vadd.f32 %v6032, %v6267
      %v6336 = vadd.f32 %v6033, %v6270
      %v6337 = vadd.f32 %v6034, %v6272
      %v6338 = vor.u32 %v1749, %v1348
      %v6339 = vrot.slane %v3557, 1
      %v6340 = vsel %vm1089, %v6338, %v6339
      %v6341 = vor.u32 %v3554, %v6339
      %v6342 = vrot.slane %v4769, 1
      %v6343 = vsel %vm1089, %v6341, %v6342
      %v6344 = vor.u32 %v4766, %v6342
      %v6345 = vrot.slane %v4778, 1
      %v6346 = vsel %vm1089, %v6344, %v6345
      %v6347 = vor.u32 %v4775, %v6345
      %v6348 = vrot.slane %v4787, 1
      %v6349 = vsel %vm1089, %v6347, %v6348
      %v6350 = vor.u32 %v4784, %v6348
      %v6351 = vrot.slane %v4796, 1
      %v6352 = vsel %vm1089, %v6350, %v6351
      %v6353 = vor.u32 %v4793, %v6351
      %v6354 = vrot.slane %v4805, 1
      %v6355 = vsel %vm1089, %v6353, %v6354
      %v6356 = vor.u32 %v4802, %v6354
      %v6358 = vshll.u32 %v690, 16
      %v6360 = vrot.slane %v6358, 1
      %v6361 = vsel %vm1089, %v6356, %v6360
      %v6364 = vunpack.c.l.b16 %v725
      %v6365 = vunpack.c.l.b16 %v726
      %v6366 = vpack.c.b16 %v6365, %v6364
      %v6369 = vsel %vm823, %v6340, 0
      %v6372 = vsel %vm823, %v6343, 0
      %v6375 = vsel %vm823, %v6346, 0
      %v6378 = vsel %vm823, %v6349, 0
      %v6381 = vsel %vm823, %v6352, 0
      %v6384 = vsel %vm823, %v6355, 0
      %v6387 = vsel %vm823, %v6361, 0
      %6389 = vmatpush.bf16.msra.mxu0 0
      %6390 = vmatpush.bf16.msra.mxu0 0
      %6391 = vmatpush.bf16.msra.mxu0 0
      %6392 = vmatpush.bf16.msra.mxu0 0
      %6393 = vmatpush.bf16.msra.mxu0 0
      %6394 = vmatpush.bf16.msra.mxu0 0
      %6395 = vmatpush.bf16.msra.mxu0 0
      %6396 = vmatpush.bf16.msra.mxu0 %v6366
      %6397 = vmatmul.bf16.gmra.mxu0 %v1378
      %v6398 = vpop.f32.mrf.mxu0
      %v6399 = vadd.f32 0.0, %v6398
      %v6400 = vpop.f32.mrf.mxu0
      %v6401 = vadd.f32 0.0, %v6400
      %6402 = vmatmul.bf16.gmra.mxu0 %v1381
      %v6403 = vpop.f32.mrf.mxu0
      %v6404 = vadd.f32 0.0, %v6403
      %v6405 = vpop.f32.mrf.mxu0
      %v6406 = vadd.f32 0.0, %v6405
      %6407 = vmatmul.bf16.gmra.mxu0 %v1384
      %v6408 = vpop.f32.mrf.mxu0
      %v6409 = vadd.f32 0.0, %v6408
      %v6410 = vpop.f32.mrf.mxu0
      %v6411 = vadd.f32 0.0, %v6410
      %6412 = vmatmul.bf16.gmra.mxu0 %v1387
      %v6413 = vpop.f32.mrf.mxu0
      %v6414 = vadd.f32 0.0, %v6413
      %v6415 = vpop.f32.mrf.mxu0
      %v6416 = vadd.f32 0.0, %v6415
      %6417 = vmatmul.bf16.gmra.mxu0 %v1390
      %v6418 = vpop.f32.mrf.mxu0
      %v6419 = vadd.f32 0.0, %v6418
      %v6420 = vpop.f32.mrf.mxu0
      %v6421 = vadd.f32 0.0, %v6420
      %6422 = vmatmul.bf16.gmra.mxu0 %v1393
      %v6423 = vpop.f32.mrf.mxu0
      %v6424 = vadd.f32 0.0, %v6423
      %v6425 = vpop.f32.mrf.mxu0
      %v6426 = vadd.f32 0.0, %v6425
      %6427 = vmatmul.bf16.gmra.mxu0 %v1396
      %v6428 = vpop.f32.mrf.mxu0
      %v6429 = vadd.f32 0.0, %v6428
      %v6430 = vpop.f32.mrf.mxu0
      %v6431 = vadd.f32 0.0, %v6430
      %6432 = vmatmul.bf16.gmra.mxu0 %v1399
      %v6433 = vpop.f32.mrf.mxu0
      %v6434 = vadd.f32 0.0, %v6433
      %v6435 = vpop.f32.mrf.mxu0
      %v6436 = vadd.f32 0.0, %v6435
      %6437 = vmatmul.bf16.gmra.mxu0 %v1402
      %v6438 = vpop.f32.mrf.mxu0
      %v6439 = vadd.f32 0.0, %v6438
      %v6440 = vpop.f32.mrf.mxu0
      %v6441 = vadd.f32 0.0, %v6440
      %6442 = vmatmul.bf16.gmra.mxu0 %v1405
      %v6443 = vpop.f32.mrf.mxu0
      %v6444 = vadd.f32 0.0, %v6443
      %v6445 = vpop.f32.mrf.mxu0
      %v6446 = vadd.f32 0.0, %v6445
      %6447 = vmatmul.bf16.gmra.mxu0 %v1408
      %v6448 = vpop.f32.mrf.mxu0
      %v6449 = vadd.f32 0.0, %v6448
      %v6450 = vpop.f32.mrf.mxu0
      %v6451 = vadd.f32 0.0, %v6450
      %6452 = vmatmul.bf16.gmra.mxu0 %v1411
      %v6453 = vpop.f32.mrf.mxu0
      %v6454 = vadd.f32 0.0, %v6453
      %v6455 = vpop.f32.mrf.mxu0
      %v6456 = vadd.f32 0.0, %v6455
      %6457 = vmatmul.bf16.gmra.mxu0 %v1414
      %v6458 = vpop.f32.mrf.mxu0
      %v6459 = vadd.f32 0.0, %v6458
      %v6460 = vpop.f32.mrf.mxu0
      %v6461 = vadd.f32 0.0, %v6460
      %6462 = vmatmul.bf16.gmra.mxu0 %v1417
      %v6463 = vpop.f32.mrf.mxu0
      %v6464 = vadd.f32 0.0, %v6463
      %v6465 = vpop.f32.mrf.mxu0
      %v6466 = vadd.f32 0.0, %v6465
      %6467 = vmatmul.bf16.gmra.mxu0 %v1420
      %v6468 = vpop.f32.mrf.mxu0
      %v6469 = vadd.f32 0.0, %v6468
      %v6470 = vpop.f32.mrf.mxu0
      %v6471 = vadd.f32 0.0, %v6470
      %6472 = vmatmul.bf16.gmra.mxu0 %v1423
      %v6473 = vpop.f32.mrf.mxu0
      %v6474 = vadd.f32 0.0, %v6473
      %v6475 = vpop.f32.mrf.mxu0
      %v6476 = vadd.f32 0.0, %v6475
      %6477 = vmatmul.bf16.gmra.mxu0 %v1426
      %v6478 = vpop.f32.mrf.mxu0
      %v6479 = vadd.f32 0.0, %v6478
      %v6480 = vpop.f32.mrf.mxu0
      %v6481 = vadd.f32 0.0, %v6480
      %6482 = vmatmul.bf16.gmra.mxu0 %v1429
      %v6483 = vpop.f32.mrf.mxu0
      %v6484 = vadd.f32 0.0, %v6483
      %v6485 = vpop.f32.mrf.mxu0
      %v6486 = vadd.f32 0.0, %v6485
      %6487 = vmatmul.bf16.gmra.mxu0 %v1432
      %v6488 = vpop.f32.mrf.mxu0
      %v6489 = vadd.f32 0.0, %v6488
      %v6490 = vpop.f32.mrf.mxu0
      %v6491 = vadd.f32 0.0, %v6490
      %6492 = vmatmul.bf16.gmra.mxu0 %v1435
      %v6493 = vpop.f32.mrf.mxu0
      %v6494 = vadd.f32 0.0, %v6493
      %v6495 = vpop.f32.mrf.mxu0
      %v6496 = vadd.f32 0.0, %v6495
      %6497 = vmatmul.bf16.gmra.mxu0 %v1438
      %v6498 = vpop.f32.mrf.mxu0
      %v6499 = vadd.f32 0.0, %v6498
      %v6500 = vpop.f32.mrf.mxu0
      %v6501 = vadd.f32 0.0, %v6500
      %6502 = vmatmul.bf16.gmra.mxu0 %v1441
      %v6503 = vpop.f32.mrf.mxu0
      %v6504 = vadd.f32 0.0, %v6503
      %v6505 = vpop.f32.mrf.mxu0
      %v6506 = vadd.f32 0.0, %v6505
      %6507 = vmatmul.bf16.gmra.mxu0 %v1444
      %v6508 = vpop.f32.mrf.mxu0
      %v6509 = vadd.f32 0.0, %v6508
      %v6510 = vpop.f32.mrf.mxu0
      %v6511 = vadd.f32 0.0, %v6510
      %6512 = vmatmul.bf16.gmra.mxu0 %v1447
      %v6513 = vpop.f32.mrf.mxu0
      %v6514 = vadd.f32 0.0, %v6513
      %v6515 = vpop.f32.mrf.mxu0
      %v6516 = vadd.f32 0.0, %v6515
      %6517 = vmatmul.bf16.gmra.mxu0 %v1450
      %v6518 = vpop.f32.mrf.mxu0
      %v6519 = vadd.f32 0.0, %v6518
      %v6520 = vpop.f32.mrf.mxu0
      %v6521 = vadd.f32 0.0, %v6520
      %6522 = vmatmul.bf16.gmra.mxu0 %v6369
      %v6523 = vpop.f32.mrf.mxu0
      %v6524 = vadd.f32 0.0, %v6523
      %v6525 = vpop.f32.mrf.mxu0
      %v6526 = vadd.f32 0.0, %v6525
      %6527 = vmatmul.bf16.gmra.mxu0 %v6372
      %v6528 = vpop.f32.mrf.mxu0
      %v6529 = vadd.f32 0.0, %v6528
      %v6530 = vpop.f32.mrf.mxu0
      %v6531 = vadd.f32 0.0, %v6530
      %6532 = vmatmul.bf16.gmra.mxu0 %v6375
      %v6533 = vpop.f32.mrf.mxu0
      %v6534 = vadd.f32 0.0, %v6533
      %v6535 = vpop.f32.mrf.mxu0
      %v6536 = vadd.f32 0.0, %v6535
      %6537 = vmatmul.bf16.gmra.mxu0 %v6378
      %v6538 = vpop.f32.mrf.mxu0
      %v6539 = vadd.f32 0.0, %v6538
      %v6540 = vpop.f32.mrf.mxu0
      %v6541 = vadd.f32 0.0, %v6540
      %6542 = vmatmul.bf16.gmra.mxu0 %v6381
      %v6543 = vpop.f32.mrf.mxu0
      %v6544 = vadd.f32 0.0, %v6543
      %v6545 = vpop.f32.mrf.mxu0
      %v6546 = vadd.f32 0.0, %v6545
      %6547 = vmatmul.bf16.gmra.mxu0 %v6384
      %v6548 = vpop.f32.mrf.mxu0
      %v6549 = vadd.f32 0.0, %v6548
      %v6550 = vpop.f32.mrf.mxu0
      %v6551 = vadd.f32 0.0, %v6550
      %6552 = vmatmul.bf16.gmra.mxu0 %v6387
      %v6553 = vpop.f32.mrf.mxu0
      %v6554 = vadd.f32 0.0, %v6553
      %v6555 = vpop.f32.mrf.mxu0
      %v6556 = vadd.f32 0.0, %v6555
      %6557 = vdwg.mxu0
      %v6558 = vadd.f32 %v6274, %v6399
      %v6559 = vadd.f32 %v6275, %v6401
      %v6560 = vadd.f32 %v6276, %v6404
      %v6561 = vadd.f32 %v6277, %v6406
      %v6562 = vadd.f32 %v6278, %v6409
      %v6563 = vadd.f32 %v6279, %v6411
      %v6564 = vadd.f32 %v6280, %v6414
      %v6565 = vadd.f32 %v6281, %v6416
      %v6566 = vadd.f32 %v6282, %v6419
      %v6567 = vadd.f32 %v6283, %v6421
      %v6568 = vadd.f32 %v6284, %v6424
      %v6569 = vadd.f32 %v6285, %v6426
      %v6570 = vadd.f32 %v6286, %v6429
      %v6571 = vadd.f32 %v6287, %v6431
      %v6572 = vadd.f32 %v6288, %v6434
      %v6573 = vadd.f32 %v6289, %v6436
      %v6574 = vadd.f32 %v6290, %v6439
      %v6575 = vadd.f32 %v6291, %v6441
      %v6576 = vadd.f32 %v6292, %v6444
      %v6577 = vadd.f32 %v6293, %v6446
      %v6578 = vadd.f32 %v6294, %v6449
      %v6579 = vadd.f32 %v6295, %v6451
      %v6580 = vadd.f32 %v6296, %v6454
      %v6581 = vadd.f32 %v6297, %v6456
      %v6582 = vadd.f32 %v6298, %v6459
      %v6583 = vadd.f32 %v6299, %v6461
      %v6584 = vadd.f32 %v6300, %v6464
      %v6585 = vadd.f32 %v6301, %v6466
      %v6586 = vadd.f32 %v6302, %v6469
      %v6587 = vadd.f32 %v6303, %v6471
      %v6588 = vadd.f32 %v6304, %v6474
      %v6589 = vadd.f32 %v6305, %v6476
      %v6590 = vadd.f32 %v6306, %v6479
      %v6591 = vadd.f32 %v6307, %v6481
      %v6592 = vadd.f32 %v6308, %v6484
      %v6593 = vadd.f32 %v6309, %v6486
      %v6594 = vadd.f32 %v6310, %v6489
      %v6595 = vadd.f32 %v6311, %v6491
      %v6596 = vadd.f32 %v6312, %v6494
      %v6597 = vadd.f32 %v6313, %v6496
      %v6598 = vadd.f32 %v6314, %v6499
      %v6599 = vadd.f32 %v6315, %v6501
      %v6600 = vadd.f32 %v6316, %v6504
      %v6601 = vadd.f32 %v6317, %v6506
      %v6602 = vadd.f32 %v6318, %v6509
      %v6603 = vadd.f32 %v6319, %v6511
      %v6604 = vadd.f32 %v6320, %v6514
      %v6605 = vadd.f32 %v6321, %v6516
      %v6606 = vadd.f32 %v6322, %v6519
      %v6607 = vadd.f32 %v6323, %v6521
      %v6608 = vadd.f32 %v6324, %v6524
      %v6609 = vadd.f32 %v6325, %v6526
      %v6610 = vadd.f32 %v6326, %v6529
      %v6611 = vadd.f32 %v6327, %v6531
      %v6612 = vadd.f32 %v6328, %v6534
      %v6613 = vadd.f32 %v6329, %v6536
      %v6614 = vadd.f32 %v6330, %v6539
      %v6615 = vadd.f32 %v6331, %v6541
      %v6616 = vadd.f32 %v6332, %v6544
      %v6617 = vadd.f32 %v6333, %v6546
      %v6618 = vadd.f32 %v6334, %v6549
      %v6619 = vadd.f32 %v6335, %v6551
      %v6620 = vadd.f32 %v6336, %v6554
      %v6621 = vadd.f32 %v6337, %v6556
      %vm6622 = vsmask.f32 3328
      %v6623 = vrot.slane %v1150, 4
      %v6624 = vrot.slane %v1146, 5
      %v6625 = vor.u32 %v6623, %v6624
      %v6626 = vrot.slane %v1158, 4
      %v6627 = vrot.slane %v1154, 5
      %v6628 = vor.u32 %v6626, %v6627
      %v6629 = vsel %vm6622, %v6625, %v6628
      %v6630 = vrot.slane %v1166, 4
      %v6631 = vrot.slane %v1162, 5
      %v6632 = vor.u32 %v6630, %v6631
      %v6633 = vsel %vm6622, %v6628, %v6632
      %v6634 = vrot.slane %v1174, 4
      %v6635 = vrot.slane %v1170, 5
      %v6636 = vor.u32 %v6634, %v6635
      %v6637 = vsel %vm6622, %v6632, %v6636
      %v6638 = vrot.slane %v1182, 4
      %v6639 = vrot.slane %v1178, 5
      %v6640 = vor.u32 %v6638, %v6639
      %v6641 = vsel %vm6622, %v6636, %v6640
      %v6642 = vrot.slane %v1190, 4
      %v6643 = vrot.slane %v1186, 5
      %v6644 = vor.u32 %v6642, %v6643
      %v6645 = vsel %vm6622, %v6640, %v6644
      %v6646 = vrot.slane %v1198, 4
      %v6647 = vrot.slane %v1194, 5
      %v6648 = vor.u32 %v6646, %v6647
      %v6649 = vsel %vm6622, %v6644, %v6648
      %v6650 = vrot.slane %v1206, 4
      %v6651 = vrot.slane %v1202, 5
      %v6652 = vor.u32 %v6650, %v6651
      %v6653 = vsel %vm6622, %v6648, %v6652
      %v6654 = vrot.slane %v1214, 4
      %v6655 = vrot.slane %v1210, 5
      %v6656 = vor.u32 %v6654, %v6655
      %v6657 = vsel %vm6622, %v6652, %v6656
      %v6658 = vrot.slane %v1222, 4
      %v6659 = vrot.slane %v1218, 5
      %v6660 = vor.u32 %v6658, %v6659
      %v6661 = vsel %vm6622, %v6656, %v6660
      %v6662 = vrot.slane %v1230, 4
      %v6663 = vrot.slane %v1226, 5
      %v6664 = vor.u32 %v6662, %v6663
      %v6665 = vsel %vm6622, %v6660, %v6664
      %v6666 = vrot.slane %v1238, 4
      %v6667 = vrot.slane %v1234, 5
      %v6668 = vor.u32 %v6666, %v6667
      %v6669 = vsel %vm6622, %v6664, %v6668
      %v6670 = vrot.slane %v1246, 4
      %v6671 = vrot.slane %v1242, 5
      %v6672 = vor.u32 %v6670, %v6671
      %v6673 = vsel %vm6622, %v6668, %v6672
      %v6674 = vrot.slane %v1254, 4
      %v6675 = vrot.slane %v1250, 5
      %v6676 = vor.u32 %v6674, %v6675
      %v6677 = vsel %vm6622, %v6672, %v6676
      %v6678 = vrot.slane %v1262, 4
      %v6679 = vrot.slane %v1258, 5
      %v6680 = vor.u32 %v6678, %v6679
      %v6681 = vsel %vm6622, %v6676, %v6680
      %v6682 = vrot.slane %v1270, 4
      %v6683 = vrot.slane %v1266, 5
      %v6684 = vor.u32 %v6682, %v6683
      %v6685 = vsel %vm6622, %v6680, %v6684
      %v6686 = vrot.slane %v1278, 4
      %v6687 = vrot.slane %v1274, 5
      %v6688 = vor.u32 %v6686, %v6687
      %v6689 = vsel %vm6622, %v6684, %v6688
      %v6690 = vrot.slane %v1286, 4
      %v6691 = vrot.slane %v1282, 5
      %v6692 = vor.u32 %v6690, %v6691
      %v6693 = vsel %vm6622, %v6688, %v6692
      %v6694 = vrot.slane %v1294, 4
      %v6695 = vrot.slane %v1290, 5
      %v6696 = vor.u32 %v6694, %v6695
      %v6697 = vsel %vm6622, %v6692, %v6696
      %v6698 = vrot.slane %v1302, 4
      %v6699 = vrot.slane %v1298, 5
      %v6700 = vor.u32 %v6698, %v6699
      %v6701 = vsel %vm6622, %v6696, %v6700
      %v6702 = vrot.slane %v1310, 4
      %v6703 = vrot.slane %v1306, 5
      %v6704 = vor.u32 %v6702, %v6703
      %v6705 = vsel %vm6622, %v6700, %v6704
      %v6706 = vrot.slane %v1318, 4
      %v6707 = vrot.slane %v1314, 5
      %v6708 = vor.u32 %v6706, %v6707
      %v6709 = vsel %vm6622, %v6704, %v6708
      %v6710 = vrot.slane %v1326, 4
      %v6711 = vrot.slane %v1322, 5
      %v6712 = vor.u32 %v6710, %v6711
      %v6713 = vsel %vm6622, %v6708, %v6712
      %v6714 = vrot.slane %v1334, 4
      %v6715 = vrot.slane %v1330, 5
      %v6716 = vor.u32 %v6714, %v6715
      %v6717 = vsel %vm6622, %v6712, %v6716
      %v6718 = vrot.slane %v1342, 4
      %v6719 = vrot.slane %v1338, 5
      %v6720 = vor.u32 %v6718, %v6719
      %v6721 = vsel %vm6622, %v6716, %v6720
      %v6722 = vrot.slane %v1749, 4
      %v6723 = vrot.slane %v1346, 5
      %v6724 = vor.u32 %v6722, %v6723
      %v6725 = vsel %vm6622, %v6720, %v6724
      %v6726 = vrot.slane %v3554, 4
      %v6727 = vrot.slane %v3557, 5
      %v6728 = vor.u32 %v6726, %v6727
      %v6729 = vsel %vm6622, %v6724, %v6728
      %v6730 = vrot.slane %v4766, 4
      %v6731 = vrot.slane %v4769, 5
      %v6732 = vor.u32 %v6730, %v6731
      %v6733 = vsel %vm6622, %v6728, %v6732
      %v6734 = vrot.slane %v4775, 4
      %v6735 = vrot.slane %v4778, 5
      %v6736 = vor.u32 %v6734, %v6735
      %v6737 = vsel %vm6622, %v6732, %v6736
      %v6738 = vrot.slane %v4784, 4
      %v6739 = vrot.slane %v4787, 5
      %v6740 = vor.u32 %v6738, %v6739
      %v6741 = vsel %vm6622, %v6736, %v6740
      %v6742 = vrot.slane %v4793, 4
      %v6743 = vrot.slane %v4796, 5
      %v6744 = vor.u32 %v6742, %v6743
      %v6745 = vsel %vm6622, %v6740, %v6744
      %v6746 = vrot.slane %v4802, 4
      %v6747 = vrot.slane %v4805, 5
      %v6748 = vor.u32 %v6746, %v6747
      %v6749 = vsel %vm6622, %v6744, %v6748
      %v6750 = vshrl.u32 %v690, 16
      %v6752 = vrot.slane %v6750, 4
      %v6753 = vrot.slane %v6358, 5
      %v6754 = vor.u32 %v6752, %v6753
      %v6755 = vsel %vm6622, %v6748, %v6754
      %v6758 = vunpack.c.l.b16 %v727
      %v6759 = vunpack.c.l.b16 %v728
      %v6760 = vpack.c.b16 %v6759, %v6758
      %v6763 = vsel %vm823, %v6629, 0
      %v6766 = vsel %vm823, %v6633, 0
      %v6769 = vsel %vm823, %v6637, 0
      %v6772 = vsel %vm823, %v6641, 0
      %v6775 = vsel %vm823, %v6645, 0
      %v6778 = vsel %vm823, %v6649, 0
      %v6781 = vsel %vm823, %v6653, 0
      %v6784 = vsel %vm823, %v6657, 0
      %v6787 = vsel %vm823, %v6661, 0
      %v6790 = vsel %vm823, %v6665, 0
      %v6793 = vsel %vm823, %v6669, 0
      %v6796 = vsel %vm823, %v6673, 0
      %v6799 = vsel %vm823, %v6677, 0
      %v6802 = vsel %vm823, %v6681, 0
      %v6805 = vsel %vm823, %v6685, 0
      %v6808 = vsel %vm823, %v6689, 0
      %v6811 = vsel %vm823, %v6693, 0
      %v6814 = vsel %vm823, %v6697, 0
      %v6817 = vsel %vm823, %v6701, 0
      %v6820 = vsel %vm823, %v6705, 0
      %v6823 = vsel %vm823, %v6709, 0
      %v6826 = vsel %vm823, %v6713, 0
      %v6829 = vsel %vm823, %v6717, 0
      %v6832 = vsel %vm823, %v6721, 0
      %v6835 = vsel %vm823, %v6725, 0
      %v6838 = vsel %vm823, %v6729, 0
      %v6841 = vsel %vm823, %v6733, 0
      %v6844 = vsel %vm823, %v6737, 0
      %v6847 = vsel %vm823, %v6741, 0
      %v6850 = vsel %vm823, %v6745, 0
      %v6853 = vsel %vm823, %v6749, 0
      %v6856 = vsel %vm823, %v6755, 0
      %6858 = vmatpush.bf16.msra.mxu0 0
      %6859 = vmatpush.bf16.msra.mxu0 0
      %6860 = vmatpush.bf16.msra.mxu0 0
      %6861 = vmatpush.bf16.msra.mxu0 0
      %6862 = vmatpush.bf16.msra.mxu0 0
      %6863 = vmatpush.bf16.msra.mxu0 0
      %6864 = vmatpush.bf16.msra.mxu0 0
      %6865 = vmatpush.bf16.msra.mxu0 %v6760
      %6866 = vmatmul.bf16.gmra.mxu0 %v6763
      %v6867 = vpop.f32.mrf.mxu0
      %v6868 = vadd.f32 0.0, %v6867
      %v6869 = vpop.f32.mrf.mxu0
      %v6870 = vadd.f32 0.0, %v6869
      %6871 = vmatmul.bf16.gmra.mxu0 %v6766
      %v6872 = vpop.f32.mrf.mxu0
      %v6873 = vadd.f32 0.0, %v6872
      %v6874 = vpop.f32.mrf.mxu0
      %v6875 = vadd.f32 0.0, %v6874
      %6876 = vmatmul.bf16.gmra.mxu0 %v6769
      %v6877 = vpop.f32.mrf.mxu0
      %v6878 = vadd.f32 0.0, %v6877
      %v6879 = vpop.f32.mrf.mxu0
      %v6880 = vadd.f32 0.0, %v6879
      %6881 = vmatmul.bf16.gmra.mxu0 %v6772
      %v6882 = vpop.f32.mrf.mxu0
      %v6883 = vadd.f32 0.0, %v6882
      %v6884 = vpop.f32.mrf.mxu0
      %v6885 = vadd.f32 0.0, %v6884
      %6886 = vmatmul.bf16.gmra.mxu0 %v6775
      %v6887 = vpop.f32.mrf.mxu0
      %v6888 = vadd.f32 0.0, %v6887
      %v6889 = vpop.f32.mrf.mxu0
      %v6890 = vadd.f32 0.0, %v6889
      %6891 = vmatmul.bf16.gmra.mxu0 %v6778
      %v6892 = vpop.f32.mrf.mxu0
      %v6893 = vadd.f32 0.0, %v6892
      %v6894 = vpop.f32.mrf.mxu0
      %v6895 = vadd.f32 0.0, %v6894
      %6896 = vmatmul.bf16.gmra.mxu0 %v6781
      %v6897 = vpop.f32.mrf.mxu0
      %v6898 = vadd.f32 0.0, %v6897
      %v6899 = vpop.f32.mrf.mxu0
      %v6900 = vadd.f32 0.0, %v6899
      %6901 = vmatmul.bf16.gmra.mxu0 %v6784
      %v6902 = vpop.f32.mrf.mxu0
      %v6903 = vadd.f32 0.0, %v6902
      %v6904 = vpop.f32.mrf.mxu0
      %v6905 = vadd.f32 0.0, %v6904
      %6906 = vmatmul.bf16.gmra.mxu0 %v6787
      %v6907 = vpop.f32.mrf.mxu0
      %v6908 = vadd.f32 0.0, %v6907
      %v6909 = vpop.f32.mrf.mxu0
      %v6910 = vadd.f32 0.0, %v6909
      %6911 = vmatmul.bf16.gmra.mxu0 %v6790
      %v6912 = vpop.f32.mrf.mxu0
      %v6913 = vadd.f32 0.0, %v6912
      %v6914 = vpop.f32.mrf.mxu0
      %v6915 = vadd.f32 0.0, %v6914
      %6916 = vmatmul.bf16.gmra.mxu0 %v6793
      %v6917 = vpop.f32.mrf.mxu0
      %v6918 = vadd.f32 0.0, %v6917
      %v6919 = vpop.f32.mrf.mxu0
      %v6920 = vadd.f32 0.0, %v6919
      %6921 = vmatmul.bf16.gmra.mxu0 %v6796
      %v6922 = vpop.f32.mrf.mxu0
      %v6923 = vadd.f32 0.0, %v6922
      %v6924 = vpop.f32.mrf.mxu0
      %v6925 = vadd.f32 0.0, %v6924
      %6926 = vmatmul.bf16.gmra.mxu0 %v6799
      %v6927 = vpop.f32.mrf.mxu0
      %v6928 = vadd.f32 0.0, %v6927
      %v6929 = vpop.f32.mrf.mxu0
      %v6930 = vadd.f32 0.0, %v6929
      %6931 = vmatmul.bf16.gmra.mxu0 %v6802
      %v6932 = vpop.f32.mrf.mxu0
      %v6933 = vadd.f32 0.0, %v6932
      %v6934 = vpop.f32.mrf.mxu0
      %v6935 = vadd.f32 0.0, %v6934
      %6936 = vmatmul.bf16.gmra.mxu0 %v6805
      %v6937 = vpop.f32.mrf.mxu0
      %v6938 = vadd.f32 0.0, %v6937
      %v6939 = vpop.f32.mrf.mxu0
      %v6940 = vadd.f32 0.0, %v6939
      %6941 = vmatmul.bf16.gmra.mxu0 %v6808
      %v6942 = vpop.f32.mrf.mxu0
      %v6943 = vadd.f32 0.0, %v6942
      %v6944 = vpop.f32.mrf.mxu0
      %v6945 = vadd.f32 0.0, %v6944
      %6946 = vmatmul.bf16.gmra.mxu0 %v6811
      %v6947 = vpop.f32.mrf.mxu0
      %v6948 = vadd.f32 0.0, %v6947
      %v6949 = vpop.f32.mrf.mxu0
      %v6950 = vadd.f32 0.0, %v6949
      %6951 = vmatmul.bf16.gmra.mxu0 %v6814
      %v6952 = vpop.f32.mrf.mxu0
      %v6953 = vadd.f32 0.0, %v6952
      %v6954 = vpop.f32.mrf.mxu0
      %v6955 = vadd.f32 0.0, %v6954
      %6956 = vmatmul.bf16.gmra.mxu0 %v6817
      %v6957 = vpop.f32.mrf.mxu0
      %v6958 = vadd.f32 0.0, %v6957
      %v6959 = vpop.f32.mrf.mxu0
      %v6960 = vadd.f32 0.0, %v6959
      %6961 = vmatmul.bf16.gmra.mxu0 %v6820
      %v6962 = vpop.f32.mrf.mxu0
      %v6963 = vadd.f32 0.0, %v6962
      %v6964 = vpop.f32.mrf.mxu0
      %v6965 = vadd.f32 0.0, %v6964
      %6966 = vmatmul.bf16.gmra.mxu0 %v6823
      %v6967 = vpop.f32.mrf.mxu0
      %v6968 = vadd.f32 0.0, %v6967
      %v6969 = vpop.f32.mrf.mxu0
      %v6970 = vadd.f32 0.0, %v6969
      %6971 = vmatmul.bf16.gmra.mxu0 %v6826
      %v6972 = vpop.f32.mrf.mxu0
      %v6973 = vadd.f32 0.0, %v6972
      %v6974 = vpop.f32.mrf.mxu0
      %v6975 = vadd.f32 0.0, %v6974
      %6976 = vmatmul.bf16.gmra.mxu0 %v6829
      %v6977 = vpop.f32.mrf.mxu0
      %v6978 = vadd.f32 0.0, %v6977
      %v6979 = vpop.f32.mrf.mxu0
      %v6980 = vadd.f32 0.0, %v6979
      %6981 = vmatmul.bf16.gmra.mxu0 %v6832
      %v6982 = vpop.f32.mrf.mxu0
      %v6983 = vadd.f32 0.0, %v6982
      %v6984 = vpop.f32.mrf.mxu0
      %v6985 = vadd.f32 0.0, %v6984
      %6986 = vmatmul.bf16.gmra.mxu0 %v6835
      %v6987 = vpop.f32.mrf.mxu0
      %v6988 = vadd.f32 0.0, %v6987
      %v6989 = vpop.f32.mrf.mxu0
      %v6990 = vadd.f32 0.0, %v6989
      %6991 = vmatmul.bf16.gmra.mxu0 %v6838
      %v6992 = vpop.f32.mrf.mxu0
      %v6993 = vadd.f32 0.0, %v6992
      %v6994 = vpop.f32.mrf.mxu0
      %v6995 = vadd.f32 0.0, %v6994
      %6996 = vmatmul.bf16.gmra.mxu0 %v6841
      %v6997 = vpop.f32.mrf.mxu0
      %v6998 = vadd.f32 0.0, %v6997
      %v6999 = vpop.f32.mrf.mxu0
      %v7000 = vadd.f32 0.0, %v6999
      %7001 = vmatmul.bf16.gmra.mxu0 %v6844
      %v7002 = vpop.f32.mrf.mxu0
      %v7003 = vadd.f32 0.0, %v7002
      %v7004 = vpop.f32.mrf.mxu0
      %v7005 = vadd.f32 0.0, %v7004
      %7006 = vmatmul.bf16.gmra.mxu0 %v6847
      %v7007 = vpop.f32.mrf.mxu0
      %v7008 = vadd.f32 0.0, %v7007
      %v7009 = vpop.f32.mrf.mxu0
      %v7010 = vadd.f32 0.0, %v7009
      %7011 = vmatmul.bf16.gmra.mxu0 %v6850
      %v7012 = vpop.f32.mrf.mxu0
      %v7013 = vadd.f32 0.0, %v7012
      %v7014 = vpop.f32.mrf.mxu0
      %v7015 = vadd.f32 0.0, %v7014
      %7016 = vmatmul.bf16.gmra.mxu0 %v6853
      %v7017 = vpop.f32.mrf.mxu0
      %v7018 = vadd.f32 0.0, %v7017
      %v7019 = vpop.f32.mrf.mxu0
      %v7020 = vadd.f32 0.0, %v7019
      %7021 = vmatmul.bf16.gmra.mxu0 %v6856
      %v7022 = vpop.f32.mrf.mxu0
      %v7023 = vadd.f32 0.0, %v7022
      %v7024 = vpop.f32.mrf.mxu0
      %v7025 = vadd.f32 0.0, %v7024
      %7026 = vdwg.mxu0
      %v7027 = vadd.f32 %v6558, %v6868
      %v7028 = vadd.f32 %v6559, %v6870
      %v7029 = vadd.f32 %v6560, %v6873
      %v7030 = vadd.f32 %v6561, %v6875
      %v7031 = vadd.f32 %v6562, %v6878
      %v7032 = vadd.f32 %v6563, %v6880
      %v7033 = vadd.f32 %v6564, %v6883
      %v7034 = vadd.f32 %v6565, %v6885
      %v7035 = vadd.f32 %v6566, %v6888
      %v7036 = vadd.f32 %v6567, %v6890
      %v7037 = vadd.f32 %v6568, %v6893
      %v7038 = vadd.f32 %v6569, %v6895
      %v7039 = vadd.f32 %v6570, %v6898
      %v7040 = vadd.f32 %v6571, %v6900
      %v7041 = vadd.f32 %v6572, %v6903
      %v7042 = vadd.f32 %v6573, %v6905
      %v7043 = vadd.f32 %v6574, %v6908
      %v7044 = vadd.f32 %v6575, %v6910
      %v7045 = vadd.f32 %v6576, %v6913
      %v7046 = vadd.f32 %v6577, %v6915
      %v7047 = vadd.f32 %v6578, %v6918
      %v7048 = vadd.f32 %v6579, %v6920
      %v7049 = vadd.f32 %v6580, %v6923
      %v7050 = vadd.f32 %v6581, %v6925
      %v7051 = vadd.f32 %v6582, %v6928
      %v7052 = vadd.f32 %v6583, %v6930
      %v7053 = vadd.f32 %v6584, %v6933
      %v7054 = vadd.f32 %v6585, %v6935
      %v7055 = vadd.f32 %v6586, %v6938
      %v7056 = vadd.f32 %v6587, %v6940
      %v7057 = vadd.f32 %v6588, %v6943
      %v7058 = vadd.f32 %v6589, %v6945
      %v7059 = vadd.f32 %v6590, %v6948
      %v7060 = vadd.f32 %v6591, %v6950
      %v7061 = vadd.f32 %v6592, %v6953
      %v7062 = vadd.f32 %v6593, %v6955
      %v7063 = vadd.f32 %v6594, %v6958
      %v7064 = vadd.f32 %v6595, %v6960
      %v7065 = vadd.f32 %v6596, %v6963
      %v7066 = vadd.f32 %v6597, %v6965
      %v7067 = vadd.f32 %v6598, %v6968
      %v7068 = vadd.f32 %v6599, %v6970
      %v7069 = vadd.f32 %v6600, %v6973
      %v7070 = vadd.f32 %v6601, %v6975
      %v7071 = vadd.f32 %v6602, %v6978
      %v7072 = vadd.f32 %v6603, %v6980
      %v7073 = vadd.f32 %v6604, %v6983
      %v7074 = vadd.f32 %v6605, %v6985
      %v7075 = vadd.f32 %v6606, %v6988
      %v7076 = vadd.f32 %v6607, %v6990
      %v7077 = vadd.f32 %v6608, %v6993
      %v7078 = vadd.f32 %v6609, %v6995
      %v7079 = vadd.f32 %v6610, %v6998
      %v7080 = vadd.f32 %v6611, %v7000
      %v7081 = vadd.f32 %v6612, %v7003
      %v7082 = vadd.f32 %v6613, %v7005
      %v7083 = vadd.f32 %v6614, %v7008
      %v7084 = vadd.f32 %v6615, %v7010
      %v7085 = vadd.f32 %v6616, %v7013
      %v7086 = vadd.f32 %v6617, %v7015
      %v7087 = vadd.f32 %v6618, %v7018
      %v7088 = vadd.f32 %v6619, %v7020
      %v7089 = vadd.f32 %v6620, %v7023
      %v7090 = vadd.f32 %v6621, %v7025
      %vm7091 = vcmask 1042432
      %v7092 = vrot.slane %v630, 5
      %v7093 = vrot.slane %v631, 5
      %v7094 = vsel %vm7091, %v7092, %v7093
      %v7095 = vrot.slane %v632, 5
      %v7096 = vsel %vm7091, %v7093, %v7095
      %v7097 = vrot.slane %v633, 5
      %v7098 = vsel %vm7091, %v7095, %v7097
      %v7099 = vrot.slane %v634, 5
      %v7100 = vsel %vm7091, %v7097, %v7099
      %v7101 = vrot.slane %v635, 5
      %v7102 = vsel %vm7091, %v7099, %v7101
      %v7103 = vrot.slane %v636, 5
      %v7104 = vsel %vm7091, %v7101, %v7103
      %v7105 = vrot.slane %v637, 5
      %v7106 = vsel %vm7091, %v7103, %v7105
      %v7107 = vrot.slane %v638, 5
      %v7108 = vsel %vm7091, %v7105, %v7107
      %v7109 = vrot.slane %v639, 5
      %v7110 = vsel %vm7091, %v7107, %v7109
      %v7111 = vrot.slane %v640, 5
      %v7112 = vsel %vm7091, %v7109, %v7111
      %v7113 = vrot.slane %v641, 5
      %v7114 = vsel %vm7091, %v7111, %v7113
      %v7115 = vrot.slane %v642, 5
      %v7116 = vsel %vm7091, %v7113, %v7115
      %v7117 = vrot.slane %v643, 5
      %v7118 = vsel %vm7091, %v7115, %v7117
      %v7119 = vrot.slane %v644, 5
      %v7120 = vsel %vm7091, %v7117, %v7119
      %v7121 = vrot.slane %v645, 5
      %v7122 = vsel %vm7091, %v7119, %v7121
      %v7123 = vrot.slane %v646, 5
      %v7124 = vsel %vm7091, %v7121, %v7123
      %v7125 = vrot.slane %v647, 5
      %v7126 = vsel %vm7091, %v7123, %v7125
      %v7127 = vrot.slane %v648, 5
      %v7128 = vsel %vm7091, %v7125, %v7127
      %v7129 = vrot.slane %v649, 5
      %v7130 = vsel %vm7091, %v7127, %v7129
      %v7131 = vrot.slane %v650, 5
      %v7132 = vsel %vm7091, %v7129, %v7131
      %v7133 = vrot.slane %v651, 5
      %v7134 = vsel %vm7091, %v7131, %v7133
      %v7135 = vrot.slane %v652, 5
      %v7136 = vsel %vm7091, %v7133, %v7135
      %v7137 = vrot.slane %v653, 5
      %v7138 = vsel %vm7091, %v7135, %v7137
      %v7139 = vrot.slane %v654, 5
      %v7140 = vsel %vm7091, %v7137, %v7139
      %v7141 = vrot.slane %v655, 5
      %v7142 = vsel %vm7091, %v7139, %v7141
      %v7143 = vrot.slane %v656, 5
      %v7144 = vsel %vm7091, %v7141, %v7143
      %v7145 = vrot.slane %v657, 5
      %v7146 = vsel %vm7091, %v7143, %v7145
      %v7147 = vrot.slane %v658, 5
      %v7148 = vsel %vm7091, %v7145, %v7147
      %v7149 = vrot.slane %v659, 5
      %v7150 = vsel %vm7091, %v7147, %v7149
      %v7151 = vrot.slane %v660, 5
      %v7152 = vsel %vm7091, %v7149, %v7151
      %v7153 = vrot.slane %v661, 5
      %v7154 = vsel %vm7091, %v7151, %v7153
      %v7155 = vrot.slane %v690, 5
      %v7156 = vsel %vm7091, %v7153, %v7155
      %v7159 = vunpack.c.l.b16 %v729
      %v7160 = vunpack.c.l.b16 %v730
      %v7161 = vpack.c.b16 %v7160, %v7159
      %v7164 = vsel %vm823, %v7094, 0
      %v7167 = vsel %vm823, %v7096, 0
      %v7170 = vsel %vm823, %v7098, 0
      %v7173 = vsel %vm823, %v7100, 0
      %v7176 = vsel %vm823, %v7102, 0
      %v7179 = vsel %vm823, %v7104, 0
      %v7182 = vsel %vm823, %v7106, 0
      %v7185 = vsel %vm823, %v7108, 0
      %v7188 = vsel %vm823, %v7110, 0
      %v7191 = vsel %vm823, %v7112, 0
      %v7194 = vsel %vm823, %v7114, 0
      %v7197 = vsel %vm823, %v7116, 0
      %v7200 = vsel %vm823, %v7118, 0
      %v7203 = vsel %vm823, %v7120, 0
      %v7206 = vsel %vm823, %v7122, 0
      %v7209 = vsel %vm823, %v7124, 0
      %v7212 = vsel %vm823, %v7126, 0
      %v7215 = vsel %vm823, %v7128, 0
      %v7218 = vsel %vm823, %v7130, 0
      %v7221 = vsel %vm823, %v7132, 0
      %v7224 = vsel %vm823, %v7134, 0
      %v7227 = vsel %vm823, %v7136, 0
      %v7230 = vsel %vm823, %v7138, 0
      %v7233 = vsel %vm823, %v7140, 0
      %v7236 = vsel %vm823, %v7142, 0
      %v7239 = vsel %vm823, %v7144, 0
      %v7242 = vsel %vm823, %v7146, 0
      %v7245 = vsel %vm823, %v7148, 0
      %v7248 = vsel %vm823, %v7150, 0
      %v7251 = vsel %vm823, %v7152, 0
      %v7254 = vsel %vm823, %v7154, 0
      %v7257 = vsel %vm823, %v7156, 0
      %7259 = vmatpush.bf16.msra.mxu0 0
      %7260 = vmatpush.bf16.msra.mxu0 0
      %7261 = vmatpush.bf16.msra.mxu0 0
      %7262 = vmatpush.bf16.msra.mxu0 0
      %7263 = vmatpush.bf16.msra.mxu0 0
      %7264 = vmatpush.bf16.msra.mxu0 0
      %7265 = vmatpush.bf16.msra.mxu0 0
      %7266 = vmatpush.bf16.msra.mxu0 %v7161
      %7267 = vmatmul.bf16.gmra.mxu0 %v7164
      %v7268 = vpop.f32.mrf.mxu0
      %v7269 = vadd.f32 0.0, %v7268
      %v7270 = vpop.f32.mrf.mxu0
      %v7271 = vadd.f32 0.0, %v7270
      %7272 = vmatmul.bf16.gmra.mxu0 %v7167
      %v7273 = vpop.f32.mrf.mxu0
      %v7274 = vadd.f32 0.0, %v7273
      %v7275 = vpop.f32.mrf.mxu0
      %v7276 = vadd.f32 0.0, %v7275
      %7277 = vmatmul.bf16.gmra.mxu0 %v7170
      %v7278 = vpop.f32.mrf.mxu0
      %v7279 = vadd.f32 0.0, %v7278
      %v7280 = vpop.f32.mrf.mxu0
      %v7281 = vadd.f32 0.0, %v7280
      %7282 = vmatmul.bf16.gmra.mxu0 %v7173
      %v7283 = vpop.f32.mrf.mxu0
      %v7284 = vadd.f32 0.0, %v7283
      %v7285 = vpop.f32.mrf.mxu0
      %v7286 = vadd.f32 0.0, %v7285
      %7287 = vmatmul.bf16.gmra.mxu0 %v7176
      %v7288 = vpop.f32.mrf.mxu0
      %v7289 = vadd.f32 0.0, %v7288
      %v7290 = vpop.f32.mrf.mxu0
      %v7291 = vadd.f32 0.0, %v7290
      %7292 = vmatmul.bf16.gmra.mxu0 %v7179
      %v7293 = vpop.f32.mrf.mxu0
      %v7294 = vadd.f32 0.0, %v7293
      %v7295 = vpop.f32.mrf.mxu0
      %v7296 = vadd.f32 0.0, %v7295
      %7297 = vmatmul.bf16.gmra.mxu0 %v7182
      %v7298 = vpop.f32.mrf.mxu0
      %v7299 = vadd.f32 0.0, %v7298
      %v7300 = vpop.f32.mrf.mxu0
      %v7301 = vadd.f32 0.0, %v7300
      %7302 = vmatmul.bf16.gmra.mxu0 %v7185
      %v7303 = vpop.f32.mrf.mxu0
      %v7304 = vadd.f32 0.0, %v7303
      %v7305 = vpop.f32.mrf.mxu0
      %v7306 = vadd.f32 0.0, %v7305
      %7307 = vmatmul.bf16.gmra.mxu0 %v7188
      %v7308 = vpop.f32.mrf.mxu0
      %v7309 = vadd.f32 0.0, %v7308
      %v7310 = vpop.f32.mrf.mxu0
      %v7311 = vadd.f32 0.0, %v7310
      %7312 = vmatmul.bf16.gmra.mxu0 %v7191
      %v7313 = vpop.f32.mrf.mxu0
      %v7314 = vadd.f32 0.0, %v7313
      %v7315 = vpop.f32.mrf.mxu0
      %v7316 = vadd.f32 0.0, %v7315
      %7317 = vmatmul.bf16.gmra.mxu0 %v7194
      %v7318 = vpop.f32.mrf.mxu0
      %v7319 = vadd.f32 0.0, %v7318
      %v7320 = vpop.f32.mrf.mxu0
      %v7321 = vadd.f32 0.0, %v7320
      %7322 = vmatmul.bf16.gmra.mxu0 %v7197
      %v7323 = vpop.f32.mrf.mxu0
      %v7324 = vadd.f32 0.0, %v7323
      %v7325 = vpop.f32.mrf.mxu0
      %v7326 = vadd.f32 0.0, %v7325
      %7327 = vmatmul.bf16.gmra.mxu0 %v7200
      %v7328 = vpop.f32.mrf.mxu0
      %v7329 = vadd.f32 0.0, %v7328
      %v7330 = vpop.f32.mrf.mxu0
      %v7331 = vadd.f32 0.0, %v7330
      %7332 = vmatmul.bf16.gmra.mxu0 %v7203
      %v7333 = vpop.f32.mrf.mxu0
      %v7334 = vadd.f32 0.0, %v7333
      %v7335 = vpop.f32.mrf.mxu0
      %v7336 = vadd.f32 0.0, %v7335
      %7337 = vmatmul.bf16.gmra.mxu0 %v7206
      %v7338 = vpop.f32.mrf.mxu0
      %v7339 = vadd.f32 0.0, %v7338
      %v7340 = vpop.f32.mrf.mxu0
      %v7341 = vadd.f32 0.0, %v7340
      %7342 = vmatmul.bf16.gmra.mxu0 %v7209
      %v7343 = vpop.f32.mrf.mxu0
      %v7344 = vadd.f32 0.0, %v7343
      %v7345 = vpop.f32.mrf.mxu0
      %v7346 = vadd.f32 0.0, %v7345
      %7347 = vmatmul.bf16.gmra.mxu0 %v7212
      %v7348 = vpop.f32.mrf.mxu0
      %v7349 = vadd.f32 0.0, %v7348
      %v7350 = vpop.f32.mrf.mxu0
      %v7351 = vadd.f32 0.0, %v7350
      %7352 = vmatmul.bf16.gmra.mxu0 %v7215
      %v7353 = vpop.f32.mrf.mxu0
      %v7354 = vadd.f32 0.0, %v7353
      %v7355 = vpop.f32.mrf.mxu0
      %v7356 = vadd.f32 0.0, %v7355
      %7357 = vmatmul.bf16.gmra.mxu0 %v7218
      %v7358 = vpop.f32.mrf.mxu0
      %v7359 = vadd.f32 0.0, %v7358
      %v7360 = vpop.f32.mrf.mxu0
      %v7361 = vadd.f32 0.0, %v7360
      %7362 = vmatmul.bf16.gmra.mxu0 %v7221
      %v7363 = vpop.f32.mrf.mxu0
      %v7364 = vadd.f32 0.0, %v7363
      %v7365 = vpop.f32.mrf.mxu0
      %v7366 = vadd.f32 0.0, %v7365
      %7367 = vmatmul.bf16.gmra.mxu0 %v7224
      %v7368 = vpop.f32.mrf.mxu0
      %v7369 = vadd.f32 0.0, %v7368
      %v7370 = vpop.f32.mrf.mxu0
      %v7371 = vadd.f32 0.0, %v7370
      %7372 = vmatmul.bf16.gmra.mxu0 %v7227
      %v7373 = vpop.f32.mrf.mxu0
      %v7374 = vadd.f32 0.0, %v7373
      %v7375 = vpop.f32.mrf.mxu0
      %v7376 = vadd.f32 0.0, %v7375
      %7377 = vmatmul.bf16.gmra.mxu0 %v7230
      %v7378 = vpop.f32.mrf.mxu0
      %v7379 = vadd.f32 0.0, %v7378
      %v7380 = vpop.f32.mrf.mxu0
      %v7381 = vadd.f32 0.0, %v7380
      %7382 = vmatmul.bf16.gmra.mxu0 %v7233
      %v7383 = vpop.f32.mrf.mxu0
      %v7384 = vadd.f32 0.0, %v7383
      %v7385 = vpop.f32.mrf.mxu0
      %v7386 = vadd.f32 0.0, %v7385
      %7387 = vmatmul.bf16.gmra.mxu0 %v7236
      %v7388 = vpop.f32.mrf.mxu0
      %v7389 = vadd.f32 0.0, %v7388
      %v7390 = vpop.f32.mrf.mxu0
      %v7391 = vadd.f32 0.0, %v7390
      %7392 = vmatmul.bf16.gmra.mxu0 %v7239
      %v7393 = vpop.f32.mrf.mxu0
      %v7394 = vadd.f32 0.0, %v7393
      %v7395 = vpop.f32.mrf.mxu0
      %v7396 = vadd.f32 0.0, %v7395
      %7397 = vmatmul.bf16.gmra.mxu0 %v7242
      %v7398 = vpop.f32.mrf.mxu0
      %v7399 = vadd.f32 0.0, %v7398
      %v7400 = vpop.f32.mrf.mxu0
      %v7401 = vadd.f32 0.0, %v7400
      %7402 = vmatmul.bf16.gmra.mxu0 %v7245
      %v7403 = vpop.f32.mrf.mxu0
      %v7404 = vadd.f32 0.0, %v7403
      %v7405 = vpop.f32.mrf.mxu0
      %v7406 = vadd.f32 0.0, %v7405
      %7407 = vmatmul.bf16.gmra.mxu0 %v7248
      %v7408 = vpop.f32.mrf.mxu0
      %v7409 = vadd.f32 0.0, %v7408
      %v7410 = vpop.f32.mrf.mxu0
      %v7411 = vadd.f32 0.0, %v7410
      %7412 = vmatmul.bf16.gmra.mxu0 %v7251
      %v7413 = vpop.f32.mrf.mxu0
      %v7414 = vadd.f32 0.0, %v7413
      %v7415 = vpop.f32.mrf.mxu0
      %v7416 = vadd.f32 0.0, %v7415
      %7417 = vmatmul.bf16.gmra.mxu0 %v7254
      %v7418 = vpop.f32.mrf.mxu0
      %v7419 = vadd.f32 0.0, %v7418
      %v7420 = vpop.f32.mrf.mxu0
      %v7421 = vadd.f32 0.0, %v7420
      %7422 = vmatmul.bf16.gmra.mxu0 %v7257
      %v7423 = vpop.f32.mrf.mxu0
      %v7424 = vadd.f32 0.0, %v7423
      %v7425 = vpop.f32.mrf.mxu0
      %v7426 = vadd.f32 0.0, %v7425
      %7427 = vdwg.mxu0
      %v7428 = vadd.f32 %v7027, %v7269
      %v7429 = vadd.f32 %v7028, %v7271
      %v7430 = vadd.f32 %v7029, %v7274
      %v7431 = vadd.f32 %v7030, %v7276
      %v7432 = vadd.f32 %v7031, %v7279
      %v7433 = vadd.f32 %v7032, %v7281
      %v7434 = vadd.f32 %v7033, %v7284
      %v7435 = vadd.f32 %v7034, %v7286
      %v7436 = vadd.f32 %v7035, %v7289
      %v7437 = vadd.f32 %v7036, %v7291
      %v7438 = vadd.f32 %v7037, %v7294
      %v7439 = vadd.f32 %v7038, %v7296
      %v7440 = vadd.f32 %v7039, %v7299
      %v7441 = vadd.f32 %v7040, %v7301
      %v7442 = vadd.f32 %v7041, %v7304
      %v7443 = vadd.f32 %v7042, %v7306
      %v7444 = vadd.f32 %v7043, %v7309
      %v7445 = vadd.f32 %v7044, %v7311
      %v7446 = vadd.f32 %v7045, %v7314
      %v7447 = vadd.f32 %v7046, %v7316
      %v7448 = vadd.f32 %v7047, %v7319
      %v7449 = vadd.f32 %v7048, %v7321
      %v7450 = vadd.f32 %v7049, %v7324
      %v7451 = vadd.f32 %v7050, %v7326
      %v7452 = vadd.f32 %v7051, %v7329
      %v7453 = vadd.f32 %v7052, %v7331
      %v7454 = vadd.f32 %v7053, %v7334
      %v7455 = vadd.f32 %v7054, %v7336
      %v7456 = vadd.f32 %v7055, %v7339
      %v7457 = vadd.f32 %v7056, %v7341
      %v7458 = vadd.f32 %v7057, %v7344
      %v7459 = vadd.f32 %v7058, %v7346
      %v7460 = vadd.f32 %v7059, %v7349
      %v7461 = vadd.f32 %v7060, %v7351
      %v7462 = vadd.f32 %v7061, %v7354
      %v7463 = vadd.f32 %v7062, %v7356
      %v7464 = vadd.f32 %v7063, %v7359
      %v7465 = vadd.f32 %v7064, %v7361
      %v7466 = vadd.f32 %v7065, %v7364
      %v7467 = vadd.f32 %v7066, %v7366
      %v7468 = vadd.f32 %v7067, %v7369
      %v7469 = vadd.f32 %v7068, %v7371
      %v7470 = vadd.f32 %v7069, %v7374
      %v7471 = vadd.f32 %v7070, %v7376
      %v7472 = vadd.f32 %v7071, %v7379
      %v7473 = vadd.f32 %v7072, %v7381
      %v7474 = vadd.f32 %v7073, %v7384
      %v7475 = vadd.f32 %v7074, %v7386
      %v7476 = vadd.f32 %v7075, %v7389
      %v7477 = vadd.f32 %v7076, %v7391
      %v7478 = vadd.f32 %v7077, %v7394
      %v7479 = vadd.f32 %v7078, %v7396
      %v7480 = vadd.f32 %v7079, %v7399
      %v7481 = vadd.f32 %v7080, %v7401
      %v7482 = vadd.f32 %v7081, %v7404
      %v7483 = vadd.f32 %v7082, %v7406
      %v7484 = vadd.f32 %v7083, %v7409
      %v7485 = vadd.f32 %v7084, %v7411
      %v7486 = vadd.f32 %v7085, %v7414
      %v7487 = vadd.f32 %v7086, %v7416
      %v7488 = vadd.f32 %v7087, %v7419
      %v7489 = vadd.f32 %v7088, %v7421
      %v7490 = vadd.f32 %v7089, %v7424
      %v7491 = vadd.f32 %v7090, %v7426
      %v7492 = vrot.slane %v3554, 5
      %v7493 = vrot.slane %v3557, 6
      %v7494 = vor.u32 %v7492, %v7493
      %v7495 = vsel %vm2090, %v2220, %v7494
      %v7496 = vrot.slane %v4766, 5
      %v7497 = vrot.slane %v4769, 6
      %v7498 = vor.u32 %v7496, %v7497
      %v7499 = vsel %vm2090, %v7494, %v7498
      %v7500 = vrot.slane %v4775, 5
      %v7501 = vrot.slane %v4778, 6
      %v7502 = vor.u32 %v7500, %v7501
      %v7503 = vsel %vm2090, %v7498, %v7502
      %v7504 = vrot.slane %v4784, 5
      %v7505 = vrot.slane %v4787, 6
      %v7506 = vor.u32 %v7504, %v7505
      %v7507 = vsel %vm2090, %v7502, %v7506
      %v7508 = vrot.slane %v4793, 5
      %v7509 = vrot.slane %v4796, 6
      %v7510 = vor.u32 %v7508, %v7509
      %v7511 = vsel %vm2090, %v7506, %v7510
      %v7512 = vrot.slane %v4802, 5
      %v7513 = vrot.slane %v4805, 6
      %v7514 = vor.u32 %v7512, %v7513
      %v7515 = vsel %vm2090, %v7510, %v7514
      %v7516 = vrot.slane %v6750, 5
      %v7517 = vrot.slane %v6358, 6
      %v7518 = vor.u32 %v7516, %v7517
      %v7519 = vsel %vm2090, %v7514, %v7518
      %v7522 = vunpack.c.l.b16 %v731
      %v7523 = vunpack.c.l.b16 %v732
      %v7524 = vpack.c.b16 %v7523, %v7522
      %v7527 = vsel %vm823, %v7495, 0
      %v7530 = vsel %vm823, %v7499, 0
      %v7533 = vsel %vm823, %v7503, 0
      %v7536 = vsel %vm823, %v7507, 0
      %v7539 = vsel %vm823, %v7511, 0
      %v7542 = vsel %vm823, %v7515, 0
      %v7545 = vsel %vm823, %v7519, 0
      %7547 = vmatpush.bf16.msra.mxu0 0
      %7548 = vmatpush.bf16.msra.mxu0 0
      %7549 = vmatpush.bf16.msra.mxu0 0
      %7550 = vmatpush.bf16.msra.mxu0 0
      %7551 = vmatpush.bf16.msra.mxu0 0
      %7552 = vmatpush.bf16.msra.mxu0 0
      %7553 = vmatpush.bf16.msra.mxu0 0
      %7554 = vmatpush.bf16.msra.mxu0 %v7524
      %7555 = vmatmul.bf16.gmra.mxu0 %v2250
      %v7556 = vpop.f32.mrf.mxu0
      %v7557 = vadd.f32 0.0, %v7556
      %v7558 = vpop.f32.mrf.mxu0
      %v7559 = vadd.f32 0.0, %v7558
      %7560 = vmatmul.bf16.gmra.mxu0 %v2253
      %v7561 = vpop.f32.mrf.mxu0
      %v7562 = vadd.f32 0.0, %v7561
      %v7563 = vpop.f32.mrf.mxu0
      %v7564 = vadd.f32 0.0, %v7563
      %7565 = vmatmul.bf16.gmra.mxu0 %v2256
      %v7566 = vpop.f32.mrf.mxu0
      %v7567 = vadd.f32 0.0, %v7566
      %v7568 = vpop.f32.mrf.mxu0
      %v7569 = vadd.f32 0.0, %v7568
      %7570 = vmatmul.bf16.gmra.mxu0 %v2259
      %v7571 = vpop.f32.mrf.mxu0
      %v7572 = vadd.f32 0.0, %v7571
      %v7573 = vpop.f32.mrf.mxu0
      %v7574 = vadd.f32 0.0, %v7573
      %7575 = vmatmul.bf16.gmra.mxu0 %v2262
      %v7576 = vpop.f32.mrf.mxu0
      %v7577 = vadd.f32 0.0, %v7576
      %v7578 = vpop.f32.mrf.mxu0
      %v7579 = vadd.f32 0.0, %v7578
      %7580 = vmatmul.bf16.gmra.mxu0 %v2265
      %v7581 = vpop.f32.mrf.mxu0
      %v7582 = vadd.f32 0.0, %v7581
      %v7583 = vpop.f32.mrf.mxu0
      %v7584 = vadd.f32 0.0, %v7583
      %7585 = vmatmul.bf16.gmra.mxu0 %v2268
      %v7586 = vpop.f32.mrf.mxu0
      %v7587 = vadd.f32 0.0, %v7586
      %v7588 = vpop.f32.mrf.mxu0
      %v7589 = vadd.f32 0.0, %v7588
      %7590 = vmatmul.bf16.gmra.mxu0 %v2271
      %v7591 = vpop.f32.mrf.mxu0
      %v7592 = vadd.f32 0.0, %v7591
      %v7593 = vpop.f32.mrf.mxu0
      %v7594 = vadd.f32 0.0, %v7593
      %7595 = vmatmul.bf16.gmra.mxu0 %v2274
      %v7596 = vpop.f32.mrf.mxu0
      %v7597 = vadd.f32 0.0, %v7596
      %v7598 = vpop.f32.mrf.mxu0
      %v7599 = vadd.f32 0.0, %v7598
      %7600 = vmatmul.bf16.gmra.mxu0 %v2277
      %v7601 = vpop.f32.mrf.mxu0
      %v7602 = vadd.f32 0.0, %v7601
      %v7603 = vpop.f32.mrf.mxu0
      %v7604 = vadd.f32 0.0, %v7603
      %7605 = vmatmul.bf16.gmra.mxu0 %v2280
      %v7606 = vpop.f32.mrf.mxu0
      %v7607 = vadd.f32 0.0, %v7606
      %v7608 = vpop.f32.mrf.mxu0
      %v7609 = vadd.f32 0.0, %v7608
      %7610 = vmatmul.bf16.gmra.mxu0 %v2283
      %v7611 = vpop.f32.mrf.mxu0
      %v7612 = vadd.f32 0.0, %v7611
      %v7613 = vpop.f32.mrf.mxu0
      %v7614 = vadd.f32 0.0, %v7613
      %7615 = vmatmul.bf16.gmra.mxu0 %v2286
      %v7616 = vpop.f32.mrf.mxu0
      %v7617 = vadd.f32 0.0, %v7616
      %v7618 = vpop.f32.mrf.mxu0
      %v7619 = vadd.f32 0.0, %v7618
      %7620 = vmatmul.bf16.gmra.mxu0 %v2289
      %v7621 = vpop.f32.mrf.mxu0
      %v7622 = vadd.f32 0.0, %v7621
      %v7623 = vpop.f32.mrf.mxu0
      %v7624 = vadd.f32 0.0, %v7623
      %7625 = vmatmul.bf16.gmra.mxu0 %v2292
      %v7626 = vpop.f32.mrf.mxu0
      %v7627 = vadd.f32 0.0, %v7626
      %v7628 = vpop.f32.mrf.mxu0
      %v7629 = vadd.f32 0.0, %v7628
      %7630 = vmatmul.bf16.gmra.mxu0 %v2295
      %v7631 = vpop.f32.mrf.mxu0
      %v7632 = vadd.f32 0.0, %v7631
      %v7633 = vpop.f32.mrf.mxu0
      %v7634 = vadd.f32 0.0, %v7633
      %7635 = vmatmul.bf16.gmra.mxu0 %v2298
      %v7636 = vpop.f32.mrf.mxu0
      %v7637 = vadd.f32 0.0, %v7636
      %v7638 = vpop.f32.mrf.mxu0
      %v7639 = vadd.f32 0.0, %v7638
      %7640 = vmatmul.bf16.gmra.mxu0 %v2301
      %v7641 = vpop.f32.mrf.mxu0
      %v7642 = vadd.f32 0.0, %v7641
      %v7643 = vpop.f32.mrf.mxu0
      %v7644 = vadd.f32 0.0, %v7643
      %7645 = vmatmul.bf16.gmra.mxu0 %v2304
      %v7646 = vpop.f32.mrf.mxu0
      %v7647 = vadd.f32 0.0, %v7646
      %v7648 = vpop.f32.mrf.mxu0
      %v7649 = vadd.f32 0.0, %v7648
      %7650 = vmatmul.bf16.gmra.mxu0 %v2307
      %v7651 = vpop.f32.mrf.mxu0
      %v7652 = vadd.f32 0.0, %v7651
      %v7653 = vpop.f32.mrf.mxu0
      %v7654 = vadd.f32 0.0, %v7653
      %7655 = vmatmul.bf16.gmra.mxu0 %v2310
      %v7656 = vpop.f32.mrf.mxu0
      %v7657 = vadd.f32 0.0, %v7656
      %v7658 = vpop.f32.mrf.mxu0
      %v7659 = vadd.f32 0.0, %v7658
      %7660 = vmatmul.bf16.gmra.mxu0 %v2313
      %v7661 = vpop.f32.mrf.mxu0
      %v7662 = vadd.f32 0.0, %v7661
      %v7663 = vpop.f32.mrf.mxu0
      %v7664 = vadd.f32 0.0, %v7663
      %7665 = vmatmul.bf16.gmra.mxu0 %v2316
      %v7666 = vpop.f32.mrf.mxu0
      %v7667 = vadd.f32 0.0, %v7666
      %v7668 = vpop.f32.mrf.mxu0
      %v7669 = vadd.f32 0.0, %v7668
      %7670 = vmatmul.bf16.gmra.mxu0 %v2319
      %v7671 = vpop.f32.mrf.mxu0
      %v7672 = vadd.f32 0.0, %v7671
      %v7673 = vpop.f32.mrf.mxu0
      %v7674 = vadd.f32 0.0, %v7673
      %7675 = vmatmul.bf16.gmra.mxu0 %v2322
      %v7676 = vpop.f32.mrf.mxu0
      %v7677 = vadd.f32 0.0, %v7676
      %v7678 = vpop.f32.mrf.mxu0
      %v7679 = vadd.f32 0.0, %v7678
      %7680 = vmatmul.bf16.gmra.mxu0 %v7527
      %v7681 = vpop.f32.mrf.mxu0
      %v7682 = vadd.f32 0.0, %v7681
      %v7683 = vpop.f32.mrf.mxu0
      %v7684 = vadd.f32 0.0, %v7683
      %7685 = vmatmul.bf16.gmra.mxu0 %v7530
      %v7686 = vpop.f32.mrf.mxu0
      %v7687 = vadd.f32 0.0, %v7686
      %v7688 = vpop.f32.mrf.mxu0
      %v7689 = vadd.f32 0.0, %v7688
      %7690 = vmatmul.bf16.gmra.mxu0 %v7533
      %v7691 = vpop.f32.mrf.mxu0
      %v7692 = vadd.f32 0.0, %v7691
      %v7693 = vpop.f32.mrf.mxu0
      %v7694 = vadd.f32 0.0, %v7693
      %7695 = vmatmul.bf16.gmra.mxu0 %v7536
      %v7696 = vpop.f32.mrf.mxu0
      %v7697 = vadd.f32 0.0, %v7696
      %v7698 = vpop.f32.mrf.mxu0
      %v7699 = vadd.f32 0.0, %v7698
      %7700 = vmatmul.bf16.gmra.mxu0 %v7539
      %v7701 = vpop.f32.mrf.mxu0
      %v7702 = vadd.f32 0.0, %v7701
      %v7703 = vpop.f32.mrf.mxu0
      %v7704 = vadd.f32 0.0, %v7703
      %7705 = vmatmul.bf16.gmra.mxu0 %v7542
      %v7706 = vpop.f32.mrf.mxu0
      %v7707 = vadd.f32 0.0, %v7706
      %v7708 = vpop.f32.mrf.mxu0
      %v7709 = vadd.f32 0.0, %v7708
      %7710 = vmatmul.bf16.gmra.mxu0 %v7545
      %v7711 = vpop.f32.mrf.mxu0
      %v7712 = vadd.f32 0.0, %v7711
      %v7713 = vpop.f32.mrf.mxu0
      %v7714 = vadd.f32 0.0, %v7713
      %7715 = vdwg.mxu0
      %v7716 = vadd.f32 %v7428, %v7557
      %v7717 = vadd.f32 %v7429, %v7559
      %v7718 = vadd.f32 %v7430, %v7562
      %v7719 = vadd.f32 %v7431, %v7564
      %v7720 = vadd.f32 %v7432, %v7567
      %v7721 = vadd.f32 %v7433, %v7569
      %v7722 = vadd.f32 %v7434, %v7572
      %v7723 = vadd.f32 %v7435, %v7574
      %v7724 = vadd.f32 %v7436, %v7577
      %v7725 = vadd.f32 %v7437, %v7579
      %v7726 = vadd.f32 %v7438, %v7582
      %v7727 = vadd.f32 %v7439, %v7584
      %v7728 = vadd.f32 %v7440, %v7587
      %v7729 = vadd.f32 %v7441, %v7589
      %v7730 = vadd.f32 %v7442, %v7592
      %v7731 = vadd.f32 %v7443, %v7594
      %v7732 = vadd.f32 %v7444, %v7597
      %v7733 = vadd.f32 %v7445, %v7599
      %v7734 = vadd.f32 %v7446, %v7602
      %v7735 = vadd.f32 %v7447, %v7604
      %v7736 = vadd.f32 %v7448, %v7607
      %v7737 = vadd.f32 %v7449, %v7609
      %v7738 = vadd.f32 %v7450, %v7612
      %v7739 = vadd.f32 %v7451, %v7614
      %v7740 = vadd.f32 %v7452, %v7617
      %v7741 = vadd.f32 %v7453, %v7619
      %v7742 = vadd.f32 %v7454, %v7622
      %v7743 = vadd.f32 %v7455, %v7624
      %v7744 = vadd.f32 %v7456, %v7627
      %v7745 = vadd.f32 %v7457, %v7629
      %v7746 = vadd.f32 %v7458, %v7632
      %v7747 = vadd.f32 %v7459, %v7634
      %v7748 = vadd.f32 %v7460, %v7637
      %v7749 = vadd.f32 %v7461, %v7639
      %v7750 = vadd.f32 %v7462, %v7642
      %v7751 = vadd.f32 %v7463, %v7644
      %v7752 = vadd.f32 %v7464, %v7647
      %v7753 = vadd.f32 %v7465, %v7649
      %v7754 = vadd.f32 %v7466, %v7652
      %v7755 = vadd.f32 %v7467, %v7654
      %v7756 = vadd.f32 %v7468, %v7657
      %v7757 = vadd.f32 %v7469, %v7659
      %v7758 = vadd.f32 %v7470, %v7662
      %v7759 = vadd.f32 %v7471, %v7664
      %v7760 = vadd.f32 %v7472, %v7667
      %v7761 = vadd.f32 %v7473, %v7669
      %v7762 = vadd.f32 %v7474, %v7672
      %v7763 = vadd.f32 %v7475, %v7674
      %v7764 = vadd.f32 %v7476, %v7677
      %v7765 = vadd.f32 %v7477, %v7679
      %v7766 = vadd.f32 %v7478, %v7682
      %v7767 = vadd.f32 %v7479, %v7684
      %v7768 = vadd.f32 %v7480, %v7687
      %v7769 = vadd.f32 %v7481, %v7689
      %v7770 = vadd.f32 %v7482, %v7692
      %v7771 = vadd.f32 %v7483, %v7694
      %v7772 = vadd.f32 %v7484, %v7697
      %v7773 = vadd.f32 %v7485, %v7699
      %v7774 = vadd.f32 %v7486, %v7702
      %v7775 = vadd.f32 %v7487, %v7704
      %v7776 = vadd.f32 %v7488, %v7707
      %v7777 = vadd.f32 %v7489, %v7709
      %v7778 = vadd.f32 %v7490, %v7712
      %v7779 = vadd.f32 %v7491, %v7714
      %v7781 = vshrl.u32 %v691, 16
      %v7783 = vrot.slane %v7781, 4
      %v7784 = vshll.u32 %v691, 16
      %v7786 = vrot.slane %v7784, 5
      %v7787 = vor.u32 %v7783, %v7786
      %v7788 = vsel %vm6622, %v6754, %v7787
      %v7790 = vshrl.u32 %v692, 16
      %v7792 = vrot.slane %v7790, 4
      %v7793 = vshll.u32 %v692, 16
      %v7795 = vrot.slane %v7793, 5
      %v7796 = vor.u32 %v7792, %v7795
      %v7797 = vsel %vm6622, %v7787, %v7796
      %v7799 = vshrl.u32 %v693, 16
      %v7801 = vrot.slane %v7799, 4
      %v7802 = vshll.u32 %v693, 16
      %v7804 = vrot.slane %v7802, 5
      %v7805 = vor.u32 %v7801, %v7804
      %v7806 = vsel %vm6622, %v7796, %v7805
      %v7808 = vshrl.u32 %v694, 16
      %v7810 = vrot.slane %v7808, 4
      %v7811 = vshll.u32 %v694, 16
      %v7813 = vrot.slane %v7811, 5
      %v7814 = vor.u32 %v7810, %v7813
      %v7815 = vsel %vm6622, %v7805, %v7814
      %v7817 = vshrl.u32 %v695, 16
      %v7819 = vrot.slane %v7817, 4
      %v7820 = vshll.u32 %v695, 16
      %v7822 = vrot.slane %v7820, 5
      %v7823 = vor.u32 %v7819, %v7822
      %v7824 = vsel %vm6622, %v7814, %v7823
      %v7827 = vunpack.c.l.b16 %v733
      %v7828 = vunpack.c.l.b16 %v734
      %v7829 = vpack.c.b16 %v7828, %v7827
      %v7832 = vsel %vm823, %v7788, 0
      %v7835 = vsel %vm823, %v7797, 0
      %v7838 = vsel %vm823, %v7806, 0
      %v7841 = vsel %vm823, %v7815, 0
      %v7844 = vsel %vm823, %v7824, 0
      %7846 = vmatpush.bf16.msra.mxu0 0
      %7847 = vmatpush.bf16.msra.mxu0 0
      %7848 = vmatpush.bf16.msra.mxu0 0
      %7849 = vmatpush.bf16.msra.mxu0 0
      %7850 = vmatpush.bf16.msra.mxu0 0
      %7851 = vmatpush.bf16.msra.mxu0 0
      %7852 = vmatpush.bf16.msra.mxu0 0
      %7853 = vmatpush.bf16.msra.mxu0 %v7829
      %7854 = vmatmul.bf16.gmra.mxu0 %v6778
      %v7855 = vpop.f32.mrf.mxu0
      %v7856 = vadd.f32 0.0, %v7855
      %v7857 = vpop.f32.mrf.mxu0
      %v7858 = vadd.f32 0.0, %v7857
      %7859 = vmatmul.bf16.gmra.mxu0 %v6781
      %v7860 = vpop.f32.mrf.mxu0
      %v7861 = vadd.f32 0.0, %v7860
      %v7862 = vpop.f32.mrf.mxu0
      %v7863 = vadd.f32 0.0, %v7862
      %7864 = vmatmul.bf16.gmra.mxu0 %v6784
      %v7865 = vpop.f32.mrf.mxu0
      %v7866 = vadd.f32 0.0, %v7865
      %v7867 = vpop.f32.mrf.mxu0
      %v7868 = vadd.f32 0.0, %v7867
      %7869 = vmatmul.bf16.gmra.mxu0 %v6787
      %v7870 = vpop.f32.mrf.mxu0
      %v7871 = vadd.f32 0.0, %v7870
      %v7872 = vpop.f32.mrf.mxu0
      %v7873 = vadd.f32 0.0, %v7872
      %7874 = vmatmul.bf16.gmra.mxu0 %v6790
      %v7875 = vpop.f32.mrf.mxu0
      %v7876 = vadd.f32 0.0, %v7875
      %v7877 = vpop.f32.mrf.mxu0
      %v7878 = vadd.f32 0.0, %v7877
      %7879 = vmatmul.bf16.gmra.mxu0 %v6793
      %v7880 = vpop.f32.mrf.mxu0
      %v7881 = vadd.f32 0.0, %v7880
      %v7882 = vpop.f32.mrf.mxu0
      %v7883 = vadd.f32 0.0, %v7882
      %7884 = vmatmul.bf16.gmra.mxu0 %v6796
      %v7885 = vpop.f32.mrf.mxu0
      %v7886 = vadd.f32 0.0, %v7885
      %v7887 = vpop.f32.mrf.mxu0
      %v7888 = vadd.f32 0.0, %v7887
      %7889 = vmatmul.bf16.gmra.mxu0 %v6799
      %v7890 = vpop.f32.mrf.mxu0
      %v7891 = vadd.f32 0.0, %v7890
      %v7892 = vpop.f32.mrf.mxu0
      %v7893 = vadd.f32 0.0, %v7892
      %7894 = vmatmul.bf16.gmra.mxu0 %v6802
      %v7895 = vpop.f32.mrf.mxu0
      %v7896 = vadd.f32 0.0, %v7895
      %v7897 = vpop.f32.mrf.mxu0
      %v7898 = vadd.f32 0.0, %v7897
      %7899 = vmatmul.bf16.gmra.mxu0 %v6805
      %v7900 = vpop.f32.mrf.mxu0
      %v7901 = vadd.f32 0.0, %v7900
      %v7902 = vpop.f32.mrf.mxu0
      %v7903 = vadd.f32 0.0, %v7902
      %7904 = vmatmul.bf16.gmra.mxu0 %v6808
      %v7905 = vpop.f32.mrf.mxu0
      %v7906 = vadd.f32 0.0, %v7905
      %v7907 = vpop.f32.mrf.mxu0
      %v7908 = vadd.f32 0.0, %v7907
      %7909 = vmatmul.bf16.gmra.mxu0 %v6811
      %v7910 = vpop.f32.mrf.mxu0
      %v7911 = vadd.f32 0.0, %v7910
      %v7912 = vpop.f32.mrf.mxu0
      %v7913 = vadd.f32 0.0, %v7912
      %7914 = vmatmul.bf16.gmra.mxu0 %v6814
      %v7915 = vpop.f32.mrf.mxu0
      %v7916 = vadd.f32 0.0, %v7915
      %v7917 = vpop.f32.mrf.mxu0
      %v7918 = vadd.f32 0.0, %v7917
      %7919 = vmatmul.bf16.gmra.mxu0 %v6817
      %v7920 = vpop.f32.mrf.mxu0
      %v7921 = vadd.f32 0.0, %v7920
      %v7922 = vpop.f32.mrf.mxu0
      %v7923 = vadd.f32 0.0, %v7922
      %7924 = vmatmul.bf16.gmra.mxu0 %v6820
      %v7925 = vpop.f32.mrf.mxu0
      %v7926 = vadd.f32 0.0, %v7925
      %v7927 = vpop.f32.mrf.mxu0
      %v7928 = vadd.f32 0.0, %v7927
      %7929 = vmatmul.bf16.gmra.mxu0 %v6823
      %v7930 = vpop.f32.mrf.mxu0
      %v7931 = vadd.f32 0.0, %v7930
      %v7932 = vpop.f32.mrf.mxu0
      %v7933 = vadd.f32 0.0, %v7932
      %7934 = vmatmul.bf16.gmra.mxu0 %v6826
      %v7935 = vpop.f32.mrf.mxu0
      %v7936 = vadd.f32 0.0, %v7935
      %v7937 = vpop.f32.mrf.mxu0
      %v7938 = vadd.f32 0.0, %v7937
      %7939 = vmatmul.bf16.gmra.mxu0 %v6829
      %v7940 = vpop.f32.mrf.mxu0
      %v7941 = vadd.f32 0.0, %v7940
      %v7942 = vpop.f32.mrf.mxu0
      %v7943 = vadd.f32 0.0, %v7942
      %7944 = vmatmul.bf16.gmra.mxu0 %v6832
      %v7945 = vpop.f32.mrf.mxu0
      %v7946 = vadd.f32 0.0, %v7945
      %v7947 = vpop.f32.mrf.mxu0
      %v7948 = vadd.f32 0.0, %v7947
      %7949 = vmatmul.bf16.gmra.mxu0 %v6835
      %v7950 = vpop.f32.mrf.mxu0
      %v7951 = vadd.f32 0.0, %v7950
      %v7952 = vpop.f32.mrf.mxu0
      %v7953 = vadd.f32 0.0, %v7952
      %7954 = vmatmul.bf16.gmra.mxu0 %v6838
      %v7955 = vpop.f32.mrf.mxu0
      %v7956 = vadd.f32 0.0, %v7955
      %v7957 = vpop.f32.mrf.mxu0
      %v7958 = vadd.f32 0.0, %v7957
      %7959 = vmatmul.bf16.gmra.mxu0 %v6841
      %v7960 = vpop.f32.mrf.mxu0
      %v7961 = vadd.f32 0.0, %v7960
      %v7962 = vpop.f32.mrf.mxu0
      %v7963 = vadd.f32 0.0, %v7962
      %7964 = vmatmul.bf16.gmra.mxu0 %v6844
      %v7965 = vpop.f32.mrf.mxu0
      %v7966 = vadd.f32 0.0, %v7965
      %v7967 = vpop.f32.mrf.mxu0
      %v7968 = vadd.f32 0.0, %v7967
      %7969 = vmatmul.bf16.gmra.mxu0 %v6847
      %v7970 = vpop.f32.mrf.mxu0
      %v7971 = vadd.f32 0.0, %v7970
      %v7972 = vpop.f32.mrf.mxu0
      %v7973 = vadd.f32 0.0, %v7972
      %7974 = vmatmul.bf16.gmra.mxu0 %v6850
      %v7975 = vpop.f32.mrf.mxu0
      %v7976 = vadd.f32 0.0, %v7975
      %v7977 = vpop.f32.mrf.mxu0
      %v7978 = vadd.f32 0.0, %v7977
      %7979 = vmatmul.bf16.gmra.mxu0 %v6853
      %v7980 = vpop.f32.mrf.mxu0
      %v7981 = vadd.f32 0.0, %v7980
      %v7982 = vpop.f32.mrf.mxu0
      %v7983 = vadd.f32 0.0, %v7982
      %7984 = vmatmul.bf16.gmra.mxu0 %v6856
      %v7985 = vpop.f32.mrf.mxu0
      %v7986 = vadd.f32 0.0, %v7985
      %v7987 = vpop.f32.mrf.mxu0
      %v7988 = vadd.f32 0.0, %v7987
      %7989 = vmatmul.bf16.gmra.mxu0 %v7832
      %v7990 = vpop.f32.mrf.mxu0
      %v7991 = vadd.f32 0.0, %v7990
      %v7992 = vpop.f32.mrf.mxu0
      %v7993 = vadd.f32 0.0, %v7992
      %7994 = vmatmul.bf16.gmra.mxu0 %v7835
      %v7995 = vpop.f32.mrf.mxu0
      %v7996 = vadd.f32 0.0, %v7995
      %v7997 = vpop.f32.mrf.mxu0
      %v7998 = vadd.f32 0.0, %v7997
      %7999 = vmatmul.bf16.gmra.mxu0 %v7838
      %v8000 = vpop.f32.mrf.mxu0
      %v8001 = vadd.f32 0.0, %v8000
      %v8002 = vpop.f32.mrf.mxu0
      %v8003 = vadd.f32 0.0, %v8002
      %8004 = vmatmul.bf16.gmra.mxu0 %v7841
      %v8005 = vpop.f32.mrf.mxu0
      %v8006 = vadd.f32 0.0, %v8005
      %v8007 = vpop.f32.mrf.mxu0
      %v8008 = vadd.f32 0.0, %v8007
      %8009 = vmatmul.bf16.gmra.mxu0 %v7844
      %v8010 = vpop.f32.mrf.mxu0
      %v8011 = vadd.f32 0.0, %v8010
      %v8012 = vpop.f32.mrf.mxu0
      %v8013 = vadd.f32 0.0, %v8012
      %8014 = vdwg.mxu0
      %v8015 = vadd.f32 %v7716, %v7856
      %v8016 = vadd.f32 %v7717, %v7858
      %v8017 = vadd.f32 %v7718, %v7861
      %v8018 = vadd.f32 %v7719, %v7863
      %v8019 = vadd.f32 %v7720, %v7866
      %v8020 = vadd.f32 %v7721, %v7868
      %v8021 = vadd.f32 %v7722, %v7871
      %v8022 = vadd.f32 %v7723, %v7873
      %v8023 = vadd.f32 %v7724, %v7876
      %v8024 = vadd.f32 %v7725, %v7878
      %v8025 = vadd.f32 %v7726, %v7881
      %v8026 = vadd.f32 %v7727, %v7883
      %v8027 = vadd.f32 %v7728, %v7886
      %v8028 = vadd.f32 %v7729, %v7888
      %v8029 = vadd.f32 %v7730, %v7891
      %v8030 = vadd.f32 %v7731, %v7893
      %v8031 = vadd.f32 %v7732, %v7896
      %v8032 = vadd.f32 %v7733, %v7898
      %v8033 = vadd.f32 %v7734, %v7901
      %v8034 = vadd.f32 %v7735, %v7903
      %v8035 = vadd.f32 %v7736, %v7906
      %v8036 = vadd.f32 %v7737, %v7908
      %v8037 = vadd.f32 %v7738, %v7911
      %v8038 = vadd.f32 %v7739, %v7913
      %v8039 = vadd.f32 %v7740, %v7916
      %v8040 = vadd.f32 %v7741, %v7918
      %v8041 = vadd.f32 %v7742, %v7921
      %v8042 = vadd.f32 %v7743, %v7923
      %v8043 = vadd.f32 %v7744, %v7926
      %v8044 = vadd.f32 %v7745, %v7928
      %v8045 = vadd.f32 %v7746, %v7931
      %v8046 = vadd.f32 %v7747, %v7933
      %v8047 = vadd.f32 %v7748, %v7936
      %v8048 = vadd.f32 %v7749, %v7938
      %v8049 = vadd.f32 %v7750, %v7941
      %v8050 = vadd.f32 %v7751, %v7943
      %v8051 = vadd.f32 %v7752, %v7946
      %v8052 = vadd.f32 %v7753, %v7948
      %v8053 = vadd.f32 %v7754, %v7951
      %v8054 = vadd.f32 %v7755, %v7953
      %v8055 = vadd.f32 %v7756, %v7956
      %v8056 = vadd.f32 %v7757, %v7958
      %v8057 = vadd.f32 %v7758, %v7961
      %v8058 = vadd.f32 %v7759, %v7963
      %v8059 = vadd.f32 %v7760, %v7966
      %v8060 = vadd.f32 %v7761, %v7968
      %v8061 = vadd.f32 %v7762, %v7971
      %v8062 = vadd.f32 %v7763, %v7973
      %v8063 = vadd.f32 %v7764, %v7976
      %v8064 = vadd.f32 %v7765, %v7978
      %v8065 = vadd.f32 %v7766, %v7981
      %v8066 = vadd.f32 %v7767, %v7983
      %v8067 = vadd.f32 %v7768, %v7986
      %v8068 = vadd.f32 %v7769, %v7988
      %v8069 = vadd.f32 %v7770, %v7991
      %v8070 = vadd.f32 %v7771, %v7993
      %v8071 = vadd.f32 %v7772, %v7996
      %v8072 = vadd.f32 %v7773, %v7998
      %v8073 = vadd.f32 %v7774, %v8001
      %v8074 = vadd.f32 %v7775, %v8003
      %v8075 = vadd.f32 %v7776, %v8006
      %v8076 = vadd.f32 %v7777, %v8008
      %v8077 = vadd.f32 %v7778, %v8011
      %v8078 = vadd.f32 %v7779, %v8013
      %v8079 = vrot.slane %v691, 5
      %v8080 = vsel %vm7091, %v7155, %v8079
      %v8081 = vrot.slane %v692, 5
      %v8082 = vsel %vm7091, %v8079, %v8081
      %v8083 = vrot.slane %v693, 5
      %v8084 = vsel %vm7091, %v8081, %v8083
      %v8085 = vrot.slane %v694, 5
      %v8086 = vsel %vm7091, %v8083, %v8085
      %v8087 = vrot.slane %v695, 5
      %v8088 = vsel %vm7091, %v8085, %v8087
      %v8091 = vunpack.c.l.b16 %v735
      %v8092 = vunpack.c.l.b16 %v736
      %v8093 = vpack.c.b16 %v8092, %v8091
      %v8096 = vsel %vm823, %v8080, 0
      %v8099 = vsel %vm823, %v8082, 0
      %v8102 = vsel %vm823, %v8084, 0
      %v8105 = vsel %vm823, %v8086, 0
      %v8108 = vsel %vm823, %v8088, 0
      %8110 = vmatpush.bf16.msra.mxu0 0
      %8111 = vmatpush.bf16.msra.mxu0 0
      %8112 = vmatpush.bf16.msra.mxu0 0
      %8113 = vmatpush.bf16.msra.mxu0 0
      %8114 = vmatpush.bf16.msra.mxu0 0
      %8115 = vmatpush.bf16.msra.mxu0 0
      %8116 = vmatpush.bf16.msra.mxu0 0
      %8117 = vmatpush.bf16.msra.mxu0 %v8093
      %8118 = vmatmul.bf16.gmra.mxu0 %v7179
      %v8119 = vpop.f32.mrf.mxu0
      %v8120 = vadd.f32 0.0, %v8119
      %v8121 = vpop.f32.mrf.mxu0
      %v8122 = vadd.f32 0.0, %v8121
      %8123 = vmatmul.bf16.gmra.mxu0 %v7182
      %v8124 = vpop.f32.mrf.mxu0
      %v8125 = vadd.f32 0.0, %v8124
      %v8126 = vpop.f32.mrf.mxu0
      %v8127 = vadd.f32 0.0, %v8126
      %8128 = vmatmul.bf16.gmra.mxu0 %v7185
      %v8129 = vpop.f32.mrf.mxu0
      %v8130 = vadd.f32 0.0, %v8129
      %v8131 = vpop.f32.mrf.mxu0
      %v8132 = vadd.f32 0.0, %v8131
      %8133 = vmatmul.bf16.gmra.mxu0 %v7188
      %v8134 = vpop.f32.mrf.mxu0
      %v8135 = vadd.f32 0.0, %v8134
      %v8136 = vpop.f32.mrf.mxu0
      %v8137 = vadd.f32 0.0, %v8136
      %8138 = vmatmul.bf16.gmra.mxu0 %v7191
      %v8139 = vpop.f32.mrf.mxu0
      %v8140 = vadd.f32 0.0, %v8139
      %v8141 = vpop.f32.mrf.mxu0
      %v8142 = vadd.f32 0.0, %v8141
      %8143 = vmatmul.bf16.gmra.mxu0 %v7194
      %v8144 = vpop.f32.mrf.mxu0
      %v8145 = vadd.f32 0.0, %v8144
      %v8146 = vpop.f32.mrf.mxu0
      %v8147 = vadd.f32 0.0, %v8146
      %8148 = vmatmul.bf16.gmra.mxu0 %v7197
      %v8149 = vpop.f32.mrf.mxu0
      %v8150 = vadd.f32 0.0, %v8149
      %v8151 = vpop.f32.mrf.mxu0
      %v8152 = vadd.f32 0.0, %v8151
      %8153 = vmatmul.bf16.gmra.mxu0 %v7200
      %v8154 = vpop.f32.mrf.mxu0
      %v8155 = vadd.f32 0.0, %v8154
      %v8156 = vpop.f32.mrf.mxu0
      %v8157 = vadd.f32 0.0, %v8156
      %8158 = vmatmul.bf16.gmra.mxu0 %v7203
      %v8159 = vpop.f32.mrf.mxu0
      %v8160 = vadd.f32 0.0, %v8159
      %v8161 = vpop.f32.mrf.mxu0
      %v8162 = vadd.f32 0.0, %v8161
      %8163 = vmatmul.bf16.gmra.mxu0 %v7206
      %v8164 = vpop.f32.mrf.mxu0
      %v8165 = vadd.f32 0.0, %v8164
      %v8166 = vpop.f32.mrf.mxu0
      %v8167 = vadd.f32 0.0, %v8166
      %8168 = vmatmul.bf16.gmra.mxu0 %v7209
      %v8169 = vpop.f32.mrf.mxu0
      %v8170 = vadd.f32 0.0, %v8169
      %v8171 = vpop.f32.mrf.mxu0
      %v8172 = vadd.f32 0.0, %v8171
      %8173 = vmatmul.bf16.gmra.mxu0 %v7212
      %v8174 = vpop.f32.mrf.mxu0
      %v8175 = vadd.f32 0.0, %v8174
      %v8176 = vpop.f32.mrf.mxu0
      %v8177 = vadd.f32 0.0, %v8176
      %8178 = vmatmul.bf16.gmra.mxu0 %v7215
      %v8179 = vpop.f32.mrf.mxu0
      %v8180 = vadd.f32 0.0, %v8179
      %v8181 = vpop.f32.mrf.mxu0
      %v8182 = vadd.f32 0.0, %v8181
      %8183 = vmatmul.bf16.gmra.mxu0 %v7218
      %v8184 = vpop.f32.mrf.mxu0
      %v8185 = vadd.f32 0.0, %v8184
      %v8186 = vpop.f32.mrf.mxu0
      %v8187 = vadd.f32 0.0, %v8186
      %8188 = vmatmul.bf16.gmra.mxu0 %v7221
      %v8189 = vpop.f32.mrf.mxu0
      %v8190 = vadd.f32 0.0, %v8189
      %v8191 = vpop.f32.mrf.mxu0
      %v8192 = vadd.f32 0.0, %v8191
      %8193 = vmatmul.bf16.gmra.mxu0 %v7224
      %v8194 = vpop.f32.mrf.mxu0
      %v8195 = vadd.f32 0.0, %v8194
      %v8196 = vpop.f32.mrf.mxu0
      %v8197 = vadd.f32 0.0, %v8196
      %8198 = vmatmul.bf16.gmra.mxu0 %v7227
      %v8199 = vpop.f32.mrf.mxu0
      %v8200 = vadd.f32 0.0, %v8199
      %v8201 = vpop.f32.mrf.mxu0
      %v8202 = vadd.f32 0.0, %v8201
      %8203 = vmatmul.bf16.gmra.mxu0 %v7230
      %v8204 = vpop.f32.mrf.mxu0
      %v8205 = vadd.f32 0.0, %v8204
      %v8206 = vpop.f32.mrf.mxu0
      %v8207 = vadd.f32 0.0, %v8206
      %8208 = vmatmul.bf16.gmra.mxu0 %v7233
      %v8209 = vpop.f32.mrf.mxu0
      %v8210 = vadd.f32 0.0, %v8209
      %v8211 = vpop.f32.mrf.mxu0
      %v8212 = vadd.f32 0.0, %v8211
      %8213 = vmatmul.bf16.gmra.mxu0 %v7236
      %v8214 = vpop.f32.mrf.mxu0
      %v8215 = vadd.f32 0.0, %v8214
      %v8216 = vpop.f32.mrf.mxu0
      %v8217 = vadd.f32 0.0, %v8216
      %8218 = vmatmul.bf16.gmra.mxu0 %v7239
      %v8219 = vpop.f32.mrf.mxu0
      %v8220 = vadd.f32 0.0, %v8219
      %v8221 = vpop.f32.mrf.mxu0
      %v8222 = vadd.f32 0.0, %v8221
      %8223 = vmatmul.bf16.gmra.mxu0 %v7242
      %v8224 = vpop.f32.mrf.mxu0
      %v8225 = vadd.f32 0.0, %v8224
      %v8226 = vpop.f32.mrf.mxu0
      %v8227 = vadd.f32 0.0, %v8226
      %8228 = vmatmul.bf16.gmra.mxu0 %v7245
      %v8229 = vpop.f32.mrf.mxu0
      %v8230 = vadd.f32 0.0, %v8229
      %v8231 = vpop.f32.mrf.mxu0
      %v8232 = vadd.f32 0.0, %v8231
      %8233 = vmatmul.bf16.gmra.mxu0 %v7248
      %v8234 = vpop.f32.mrf.mxu0
      %v8235 = vadd.f32 0.0, %v8234
      %v8236 = vpop.f32.mrf.mxu0
      %v8237 = vadd.f32 0.0, %v8236
      %8238 = vmatmul.bf16.gmra.mxu0 %v7251
      %v8239 = vpop.f32.mrf.mxu0
      %v8240 = vadd.f32 0.0, %v8239
      %v8241 = vpop.f32.mrf.mxu0
      %v8242 = vadd.f32 0.0, %v8241
      %8243 = vmatmul.bf16.gmra.mxu0 %v7254
      %v8244 = vpop.f32.mrf.mxu0
      %v8245 = vadd.f32 0.0, %v8244
      %v8246 = vpop.f32.mrf.mxu0
      %v8247 = vadd.f32 0.0, %v8246
      %8248 = vmatmul.bf16.gmra.mxu0 %v7257
      %v8249 = vpop.f32.mrf.mxu0
      %v8250 = vadd.f32 0.0, %v8249
      %v8251 = vpop.f32.mrf.mxu0
      %v8252 = vadd.f32 0.0, %v8251
      %8253 = vmatmul.bf16.gmra.mxu0 %v8096
      %v8254 = vpop.f32.mrf.mxu0
      %v8255 = vadd.f32 0.0, %v8254
      %v8256 = vpop.f32.mrf.mxu0
      %v8257 = vadd.f32 0.0, %v8256
      %8258 = vmatmul.bf16.gmra.mxu0 %v8099
      %v8259 = vpop.f32.mrf.mxu0
      %v8260 = vadd.f32 0.0, %v8259
      %v8261 = vpop.f32.mrf.mxu0
      %v8262 = vadd.f32 0.0, %v8261
      %8263 = vmatmul.bf16.gmra.mxu0 %v8102
      %v8264 = vpop.f32.mrf.mxu0
      %v8265 = vadd.f32 0.0, %v8264
      %v8266 = vpop.f32.mrf.mxu0
      %v8267 = vadd.f32 0.0, %v8266
      %8268 = vmatmul.bf16.gmra.mxu0 %v8105
      %v8269 = vpop.f32.mrf.mxu0
      %v8270 = vadd.f32 0.0, %v8269
      %v8271 = vpop.f32.mrf.mxu0
      %v8272 = vadd.f32 0.0, %v8271
      %8273 = vmatmul.bf16.gmra.mxu0 %v8108
      %v8274 = vpop.f32.mrf.mxu0
      %v8275 = vadd.f32 0.0, %v8274
      %v8276 = vpop.f32.mrf.mxu0
      %v8277 = vadd.f32 0.0, %v8276
      %8278 = vdwg.mxu0
      %v8279 = vadd.f32 %v8015, %v8120
      %v8280 = vadd.f32 %v8016, %v8122
      %v8281 = vadd.f32 %v8017, %v8125
      %v8282 = vadd.f32 %v8018, %v8127
      %v8283 = vadd.f32 %v8019, %v8130
      %v8284 = vadd.f32 %v8020, %v8132
      %v8285 = vadd.f32 %v8021, %v8135
      %v8286 = vadd.f32 %v8022, %v8137
      %v8287 = vadd.f32 %v8023, %v8140
      %v8288 = vadd.f32 %v8024, %v8142
      %v8289 = vadd.f32 %v8025, %v8145
      %v8290 = vadd.f32 %v8026, %v8147
      %v8291 = vadd.f32 %v8027, %v8150
      %v8292 = vadd.f32 %v8028, %v8152
      %v8293 = vadd.f32 %v8029, %v8155
      %v8294 = vadd.f32 %v8030, %v8157
      %v8295 = vadd.f32 %v8031, %v8160
      %v8296 = vadd.f32 %v8032, %v8162
      %v8297 = vadd.f32 %v8033, %v8165
      %v8298 = vadd.f32 %v8034, %v8167
      %v8299 = vadd.f32 %v8035, %v8170
      %v8300 = vadd.f32 %v8036, %v8172
      %v8301 = vadd.f32 %v8037, %v8175
      %v8302 = vadd.f32 %v8038, %v8177
      %v8303 = vadd.f32 %v8039, %v8180
      %v8304 = vadd.f32 %v8040, %v8182
      %v8305 = vadd.f32 %v8041, %v8185
      %v8306 = vadd.f32 %v8042, %v8187
      %v8307 = vadd.f32 %v8043, %v8190
      %v8308 = vadd.f32 %v8044, %v8192
      %v8309 = vadd.f32 %v8045, %v8195
      %v8310 = vadd.f32 %v8046, %v8197
      %v8311 = vadd.f32 %v8047, %v8200
      %v8312 = vadd.f32 %v8048, %v8202
      %v8313 = vadd.f32 %v8049, %v8205
      %v8314 = vadd.f32 %v8050, %v8207
      %v8315 = vadd.f32 %v8051, %v8210
      %v8316 = vadd.f32 %v8052, %v8212
      %v8317 = vadd.f32 %v8053, %v8215
      %v8318 = vadd.f32 %v8054, %v8217
      %v8319 = vadd.f32 %v8055, %v8220
      %v8320 = vadd.f32 %v8056, %v8222
      %v8321 = vadd.f32 %v8057, %v8225
      %v8322 = vadd.f32 %v8058, %v8227
      %v8323 = vadd.f32 %v8059, %v8230
      %v8324 = vadd.f32 %v8060, %v8232
      %v8325 = vadd.f32 %v8061, %v8235
      %v8326 = vadd.f32 %v8062, %v8237
      %v8327 = vadd.f32 %v8063, %v8240
      %v8328 = vadd.f32 %v8064, %v8242
      %v8329 = vadd.f32 %v8065, %v8245
      %v8330 = vadd.f32 %v8066, %v8247
      %v8331 = vadd.f32 %v8067, %v8250
      %v8332 = vadd.f32 %v8068, %v8252
      %v8333 = vadd.f32 %v8069, %v8255
      %v8334 = vadd.f32 %v8070, %v8257
      %v8335 = vadd.f32 %v8071, %v8260
      %v8336 = vadd.f32 %v8072, %v8262
      %v8337 = vadd.f32 %v8073, %v8265
      %v8338 = vadd.f32 %v8074, %v8267
      %v8339 = vadd.f32 %v8075, %v8270
      %v8340 = vadd.f32 %v8076, %v8272
      %v8341 = vadd.f32 %v8077, %v8275
      %v8342 = vadd.f32 %v8078, %v8277
      %v8343 = vrot.slane %v7781, 5
      %v8344 = vrot.slane %v7784, 6
      %v8345 = vor.u32 %v8343, %v8344
      %v8346 = vsel %vm2090, %v7518, %v8345
      %v8347 = vrot.slane %v7790, 5
      %v8348 = vrot.slane %v7793, 6
      %v8349 = vor.u32 %v8347, %v8348
      %v8350 = vsel %vm2090, %v8345, %v8349
      %v8351 = vrot.slane %v7799, 5
      %v8352 = vrot.slane %v7802, 6
      %v8353 = vor.u32 %v8351, %v8352
      %v8354 = vsel %vm2090, %v8349, %v8353
      %v8355 = vrot.slane %v7808, 5
      %v8356 = vrot.slane %v7811, 6
      %v8357 = vor.u32 %v8355, %v8356
      %v8358 = vsel %vm2090, %v8353, %v8357
      %v8359 = vrot.slane %v7817, 5
      %v8360 = vrot.slane %v7820, 6
      %v8361 = vor.u32 %v8359, %v8360
      %v8362 = vsel %vm2090, %v8357, %v8361
      %v8365 = vunpack.c.l.b16 %v737
      %v8366 = vunpack.c.l.b16 %v738
      %v8367 = vpack.c.b16 %v8366, %v8365
      %v8370 = vsel %vm823, %v8346, 0
      %v8373 = vsel %vm823, %v8350, 0
      %v8376 = vsel %vm823, %v8354, 0
      %v8379 = vsel %vm823, %v8358, 0
      %v8382 = vsel %vm823, %v8362, 0
      %8384 = vmatpush.bf16.msra.mxu0 0
      %8385 = vmatpush.bf16.msra.mxu0 0
      %8386 = vmatpush.bf16.msra.mxu0 0
      %8387 = vmatpush.bf16.msra.mxu0 0
      %8388 = vmatpush.bf16.msra.mxu0 0
      %8389 = vmatpush.bf16.msra.mxu0 0
      %8390 = vmatpush.bf16.msra.mxu0 0
      %8391 = vmatpush.bf16.msra.mxu0 %v8367
      %8392 = vmatmul.bf16.gmra.mxu0 %v2265
      %v8393 = vpop.f32.mrf.mxu0
      %v8394 = vadd.f32 0.0, %v8393
      %v8395 = vpop.f32.mrf.mxu0
      %v8396 = vadd.f32 0.0, %v8395
      %8397 = vmatmul.bf16.gmra.mxu0 %v2268
      %v8398 = vpop.f32.mrf.mxu0
      %v8399 = vadd.f32 0.0, %v8398
      %v8400 = vpop.f32.mrf.mxu0
      %v8401 = vadd.f32 0.0, %v8400
      %8402 = vmatmul.bf16.gmra.mxu0 %v2271
      %v8403 = vpop.f32.mrf.mxu0
      %v8404 = vadd.f32 0.0, %v8403
      %v8405 = vpop.f32.mrf.mxu0
      %v8406 = vadd.f32 0.0, %v8405
      %8407 = vmatmul.bf16.gmra.mxu0 %v2274
      %v8408 = vpop.f32.mrf.mxu0
      %v8409 = vadd.f32 0.0, %v8408
      %v8410 = vpop.f32.mrf.mxu0
      %v8411 = vadd.f32 0.0, %v8410
      %8412 = vmatmul.bf16.gmra.mxu0 %v2277
      %v8413 = vpop.f32.mrf.mxu0
      %v8414 = vadd.f32 0.0, %v8413
      %v8415 = vpop.f32.mrf.mxu0
      %v8416 = vadd.f32 0.0, %v8415
      %8417 = vmatmul.bf16.gmra.mxu0 %v2280
      %v8418 = vpop.f32.mrf.mxu0
      %v8419 = vadd.f32 0.0, %v8418
      %v8420 = vpop.f32.mrf.mxu0
      %v8421 = vadd.f32 0.0, %v8420
      %8422 = vmatmul.bf16.gmra.mxu0 %v2283
      %v8423 = vpop.f32.mrf.mxu0
      %v8424 = vadd.f32 0.0, %v8423
      %v8425 = vpop.f32.mrf.mxu0
      %v8426 = vadd.f32 0.0, %v8425
      %8427 = vmatmul.bf16.gmra.mxu0 %v2286
      %v8428 = vpop.f32.mrf.mxu0
      %v8429 = vadd.f32 0.0, %v8428
      %v8430 = vpop.f32.mrf.mxu0
      %v8431 = vadd.f32 0.0, %v8430
      %8432 = vmatmul.bf16.gmra.mxu0 %v2289
      %v8433 = vpop.f32.mrf.mxu0
      %v8434 = vadd.f32 0.0, %v8433
      %v8435 = vpop.f32.mrf.mxu0
      %v8436 = vadd.f32 0.0, %v8435
      %8437 = vmatmul.bf16.gmra.mxu0 %v2292
      %v8438 = vpop.f32.mrf.mxu0
      %v8439 = vadd.f32 0.0, %v8438
      %v8440 = vpop.f32.mrf.mxu0
      %v8441 = vadd.f32 0.0, %v8440
      %8442 = vmatmul.bf16.gmra.mxu0 %v2295
      %v8443 = vpop.f32.mrf.mxu0
      %v8444 = vadd.f32 0.0, %v8443
      %v8445 = vpop.f32.mrf.mxu0
      %v8446 = vadd.f32 0.0, %v8445
      %8447 = vmatmul.bf16.gmra.mxu0 %v2298
      %v8448 = vpop.f32.mrf.mxu0
      %v8449 = vadd.f32 0.0, %v8448
      %v8450 = vpop.f32.mrf.mxu0
      %v8451 = vadd.f32 0.0, %v8450
      %8452 = vmatmul.bf16.gmra.mxu0 %v2301
      %v8453 = vpop.f32.mrf.mxu0
      %v8454 = vadd.f32 0.0, %v8453
      %v8455 = vpop.f32.mrf.mxu0
      %v8456 = vadd.f32 0.0, %v8455
      %8457 = vmatmul.bf16.gmra.mxu0 %v2304
      %v8458 = vpop.f32.mrf.mxu0
      %v8459 = vadd.f32 0.0, %v8458
      %v8460 = vpop.f32.mrf.mxu0
      %v8461 = vadd.f32 0.0, %v8460
      %8462 = vmatmul.bf16.gmra.mxu0 %v2307
      %v8463 = vpop.f32.mrf.mxu0
      %v8464 = vadd.f32 0.0, %v8463
      %v8465 = vpop.f32.mrf.mxu0
      %v8466 = vadd.f32 0.0, %v8465
      %8467 = vmatmul.bf16.gmra.mxu0 %v2310
      %v8468 = vpop.f32.mrf.mxu0
      %v8469 = vadd.f32 0.0, %v8468
      %v8470 = vpop.f32.mrf.mxu0
      %v8471 = vadd.f32 0.0, %v8470
      %8472 = vmatmul.bf16.gmra.mxu0 %v2313
      %v8473 = vpop.f32.mrf.mxu0
      %v8474 = vadd.f32 0.0, %v8473
      %v8475 = vpop.f32.mrf.mxu0
      %v8476 = vadd.f32 0.0, %v8475
      %8477 = vmatmul.bf16.gmra.mxu0 %v2316
      %v8478 = vpop.f32.mrf.mxu0
      %v8479 = vadd.f32 0.0, %v8478
      %v8480 = vpop.f32.mrf.mxu0
      %v8481 = vadd.f32 0.0, %v8480
      %8482 = vmatmul.bf16.gmra.mxu0 %v2319
      %v8483 = vpop.f32.mrf.mxu0
      %v8484 = vadd.f32 0.0, %v8483
      %v8485 = vpop.f32.mrf.mxu0
      %v8486 = vadd.f32 0.0, %v8485
      %8487 = vmatmul.bf16.gmra.mxu0 %v2322
      %v8488 = vpop.f32.mrf.mxu0
      %v8489 = vadd.f32 0.0, %v8488
      %v8490 = vpop.f32.mrf.mxu0
      %v8491 = vadd.f32 0.0, %v8490
      %8492 = vmatmul.bf16.gmra.mxu0 %v7527
      %v8493 = vpop.f32.mrf.mxu0
      %v8494 = vadd.f32 0.0, %v8493
      %v8495 = vpop.f32.mrf.mxu0
      %v8496 = vadd.f32 0.0, %v8495
      %8497 = vmatmul.bf16.gmra.mxu0 %v7530
      %v8498 = vpop.f32.mrf.mxu0
      %v8499 = vadd.f32 0.0, %v8498
      %v8500 = vpop.f32.mrf.mxu0
      %v8501 = vadd.f32 0.0, %v8500
      %8502 = vmatmul.bf16.gmra.mxu0 %v7533
      %v8503 = vpop.f32.mrf.mxu0
      %v8504 = vadd.f32 0.0, %v8503
      %v8505 = vpop.f32.mrf.mxu0
      %v8506 = vadd.f32 0.0, %v8505
      %8507 = vmatmul.bf16.gmra.mxu0 %v7536
      %v8508 = vpop.f32.mrf.mxu0
      %v8509 = vadd.f32 0.0, %v8508
      %v8510 = vpop.f32.mrf.mxu0
      %v8511 = vadd.f32 0.0, %v8510
      %8512 = vmatmul.bf16.gmra.mxu0 %v7539
      %v8513 = vpop.f32.mrf.mxu0
      %v8514 = vadd.f32 0.0, %v8513
      %v8515 = vpop.f32.mrf.mxu0
      %v8516 = vadd.f32 0.0, %v8515
      %8517 = vmatmul.bf16.gmra.mxu0 %v7542
      %v8518 = vpop.f32.mrf.mxu0
      %v8519 = vadd.f32 0.0, %v8518
      %v8520 = vpop.f32.mrf.mxu0
      %v8521 = vadd.f32 0.0, %v8520
      %8522 = vmatmul.bf16.gmra.mxu0 %v7545
      %v8523 = vpop.f32.mrf.mxu0
      %v8524 = vadd.f32 0.0, %v8523
      %v8525 = vpop.f32.mrf.mxu0
      %v8526 = vadd.f32 0.0, %v8525
      %8527 = vmatmul.bf16.gmra.mxu0 %v8370
      %v8528 = vpop.f32.mrf.mxu0
      %v8529 = vadd.f32 0.0, %v8528
      %v8530 = vpop.f32.mrf.mxu0
      %v8531 = vadd.f32 0.0, %v8530
      %8532 = vmatmul.bf16.gmra.mxu0 %v8373
      %v8533 = vpop.f32.mrf.mxu0
      %v8534 = vadd.f32 0.0, %v8533
      %v8535 = vpop.f32.mrf.mxu0
      %v8536 = vadd.f32 0.0, %v8535
      %8537 = vmatmul.bf16.gmra.mxu0 %v8376
      %v8538 = vpop.f32.mrf.mxu0
      %v8539 = vadd.f32 0.0, %v8538
      %v8540 = vpop.f32.mrf.mxu0
      %v8541 = vadd.f32 0.0, %v8540
      %8542 = vmatmul.bf16.gmra.mxu0 %v8379
      %v8543 = vpop.f32.mrf.mxu0
      %v8544 = vadd.f32 0.0, %v8543
      %v8545 = vpop.f32.mrf.mxu0
      %v8546 = vadd.f32 0.0, %v8545
      %8547 = vmatmul.bf16.gmra.mxu0 %v8382
      %v8548 = vpop.f32.mrf.mxu0
      %v8549 = vadd.f32 0.0, %v8548
      %v8550 = vpop.f32.mrf.mxu0
      %v8551 = vadd.f32 0.0, %v8550
      %8552 = vdwg.mxu0
      %v8553 = vadd.f32 %v8279, %v8394
      %v8554 = vadd.f32 %v8280, %v8396
      %v8555 = vadd.f32 %v8281, %v8399
      %v8556 = vadd.f32 %v8282, %v8401
      %v8557 = vadd.f32 %v8283, %v8404
      %v8558 = vadd.f32 %v8284, %v8406
      %v8559 = vadd.f32 %v8285, %v8409
      %v8560 = vadd.f32 %v8286, %v8411
      %v8561 = vadd.f32 %v8287, %v8414
      %v8562 = vadd.f32 %v8288, %v8416
      %v8563 = vadd.f32 %v8289, %v8419
      %v8564 = vadd.f32 %v8290, %v8421
      %v8565 = vadd.f32 %v8291, %v8424
      %v8566 = vadd.f32 %v8292, %v8426
      %v8567 = vadd.f32 %v8293, %v8429
      %v8568 = vadd.f32 %v8294, %v8431
      %v8569 = vadd.f32 %v8295, %v8434
      %v8570 = vadd.f32 %v8296, %v8436
      %v8571 = vadd.f32 %v8297, %v8439
      %v8572 = vadd.f32 %v8298, %v8441
      %v8573 = vadd.f32 %v8299, %v8444
      %v8574 = vadd.f32 %v8300, %v8446
      %v8575 = vadd.f32 %v8301, %v8449
      %v8576 = vadd.f32 %v8302, %v8451
      %v8577 = vadd.f32 %v8303, %v8454
      %v8578 = vadd.f32 %v8304, %v8456
      %v8579 = vadd.f32 %v8305, %v8459
      %v8580 = vadd.f32 %v8306, %v8461
      %v8581 = vadd.f32 %v8307, %v8464
      %v8582 = vadd.f32 %v8308, %v8466
      %v8583 = vadd.f32 %v8309, %v8469
      %v8584 = vadd.f32 %v8310, %v8471
      %v8585 = vadd.f32 %v8311, %v8474
      %v8586 = vadd.f32 %v8312, %v8476
      %v8587 = vadd.f32 %v8313, %v8479
      %v8588 = vadd.f32 %v8314, %v8481
      %v8589 = vadd.f32 %v8315, %v8484
      %v8590 = vadd.f32 %v8316, %v8486
      %v8591 = vadd.f32 %v8317, %v8489
      %v8592 = vadd.f32 %v8318, %v8491
      %v8593 = vadd.f32 %v8319, %v8494
      %v8594 = vadd.f32 %v8320, %v8496
      %v8595 = vadd.f32 %v8321, %v8499
      %v8596 = vadd.f32 %v8322, %v8501
      %v8597 = vadd.f32 %v8323, %v8504
      %v8598 = vadd.f32 %v8324, %v8506
      %v8599 = vadd.f32 %v8325, %v8509
      %v8600 = vadd.f32 %v8326, %v8511
      %v8601 = vadd.f32 %v8327, %v8514
      %v8602 = vadd.f32 %v8328, %v8516
      %v8603 = vadd.f32 %v8329, %v8519
      %v8604 = vadd.f32 %v8330, %v8521
      %v8605 = vadd.f32 %v8331, %v8524
      %v8606 = vadd.f32 %v8332, %v8526
      %v8607 = vadd.f32 %v8333, %v8529
      %v8608 = vadd.f32 %v8334, %v8531
      %v8609 = vadd.f32 %v8335, %v8534
      %v8610 = vadd.f32 %v8336, %v8536
      %v8611 = vadd.f32 %v8337, %v8539
      %v8612 = vadd.f32 %v8338, %v8541
      %v8613 = vadd.f32 %v8339, %v8544
      %v8614 = vadd.f32 %v8340, %v8546
      %v8615 = vadd.f32 %v8341, %v8549
      %v8616 = vadd.f32 %v8342, %v8551
      %v8617 = vrot.slane %v3554, 1
      %v8618 = vrot.slane %v3557, 2
      %v8619 = vor.u32 %v8617, %v8618
      %v8620 = vsel %vm1621, %v1753, %v8619
      %v8621 = vrot.slane %v4766, 1
      %v8622 = vrot.slane %v4769, 2
      %v8623 = vor.u32 %v8621, %v8622
      %v8624 = vsel %vm1621, %v8619, %v8623
      %v8625 = vrot.slane %v4775, 1
      %v8626 = vrot.slane %v4778, 2
      %v8627 = vor.u32 %v8625, %v8626
      %v8628 = vsel %vm1621, %v8623, %v8627
      %v8629 = vrot.slane %v4784, 1
      %v8630 = vrot.slane %v4787, 2
      %v8631 = vor.u32 %v8629, %v8630
      %v8632 = vsel %vm1621, %v8627, %v8631
      %v8633 = vrot.slane %v4793, 1
      %v8634 = vrot.slane %v4796, 2
      %v8635 = vor.u32 %v8633, %v8634
      %v8636 = vsel %vm1621, %v8631, %v8635
      %v8637 = vrot.slane %v4802, 1
      %v8638 = vrot.slane %v4805, 2
      %v8639 = vor.u32 %v8637, %v8638
      %v8640 = vsel %vm1621, %v8635, %v8639
      %v8641 = vrot.slane %v6750, 1
      %v8642 = vrot.slane %v6358, 2
      %v8643 = vor.u32 %v8641, %v8642
      %v8644 = vsel %vm1621, %v8639, %v8643
      %v8645 = vrot.slane %v7781, 1
      %v8646 = vrot.slane %v7784, 2
      %v8647 = vor.u32 %v8645, %v8646
      %v8648 = vsel %vm1621, %v8643, %v8647
      %v8649 = vrot.slane %v7790, 1
      %v8650 = vrot.slane %v7793, 2
      %v8651 = vor.u32 %v8649, %v8650
      %v8652 = vsel %vm1621, %v8647, %v8651
      %v8653 = vrot.slane %v7799, 1
      %v8654 = vrot.slane %v7802, 2
      %v8655 = vor.u32 %v8653, %v8654
      %v8656 = vsel %vm1621, %v8651, %v8655
      %v8657 = vrot.slane %v7808, 1
      %v8658 = vrot.slane %v7811, 2
      %v8659 = vor.u32 %v8657, %v8658
      %v8660 = vsel %vm1621, %v8655, %v8659
      %v8661 = vrot.slane %v7817, 1
      %v8662 = vrot.slane %v7820, 2
      %v8663 = vor.u32 %v8661, %v8662
      %v8664 = vsel %vm1621, %v8659, %v8663
      %v8666 = vshrl.u32 %v696, 16
      %v8668 = vrot.slane %v8666, 1
      %v8669 = vshll.u32 %v696, 16
      %v8671 = vrot.slane %v8669, 2
      %v8672 = vor.u32 %v8668, %v8671
      %v8673 = vsel %vm1621, %v8663, %v8672
      %v8676 = vunpack.c.l.b16 %v739
      %v8677 = vunpack.c.l.b16 %v740
      %v8678 = vpack.c.b16 %v8677, %v8676
      %v8681 = vsel %vm823, %v8620, 0
      %v8684 = vsel %vm823, %v8624, 0
      %v8687 = vsel %vm823, %v8628, 0
      %v8690 = vsel %vm823, %v8632, 0
      %v8693 = vsel %vm823, %v8636, 0
      %v8696 = vsel %vm823, %v8640, 0
      %v8699 = vsel %vm823, %v8644, 0
      %v8702 = vsel %vm823, %v8648, 0
      %v8705 = vsel %vm823, %v8652, 0
      %v8708 = vsel %vm823, %v8656, 0
      %v8711 = vsel %vm823, %v8660, 0
      %v8714 = vsel %vm823, %v8664, 0
      %v8717 = vsel %vm823, %v8673, 0
      %8719 = vmatpush.bf16.msra.mxu0 0
      %8720 = vmatpush.bf16.msra.mxu0 0
      %8721 = vmatpush.bf16.msra.mxu0 0
      %8722 = vmatpush.bf16.msra.mxu0 0
      %8723 = vmatpush.bf16.msra.mxu0 0
      %8724 = vmatpush.bf16.msra.mxu0 0
      %8725 = vmatpush.bf16.msra.mxu0 0
      %8726 = vmatpush.bf16.msra.mxu0 %v8678
      %8727 = vmatmul.bf16.gmra.mxu0 %v1801
      %v8728 = vpop.f32.mrf.mxu0
      %v8729 = vadd.f32 0.0, %v8728
      %v8730 = vpop.f32.mrf.mxu0
      %v8731 = vadd.f32 0.0, %v8730
      %8732 = vmatmul.bf16.gmra.mxu0 %v1804
      %v8733 = vpop.f32.mrf.mxu0
      %v8734 = vadd.f32 0.0, %v8733
      %v8735 = vpop.f32.mrf.mxu0
      %v8736 = vadd.f32 0.0, %v8735
      %8737 = vmatmul.bf16.gmra.mxu0 %v1807
      %v8738 = vpop.f32.mrf.mxu0
      %v8739 = vadd.f32 0.0, %v8738
      %v8740 = vpop.f32.mrf.mxu0
      %v8741 = vadd.f32 0.0, %v8740
      %8742 = vmatmul.bf16.gmra.mxu0 %v1810
      %v8743 = vpop.f32.mrf.mxu0
      %v8744 = vadd.f32 0.0, %v8743
      %v8745 = vpop.f32.mrf.mxu0
      %v8746 = vadd.f32 0.0, %v8745
      %8747 = vmatmul.bf16.gmra.mxu0 %v1813
      %v8748 = vpop.f32.mrf.mxu0
      %v8749 = vadd.f32 0.0, %v8748
      %v8750 = vpop.f32.mrf.mxu0
      %v8751 = vadd.f32 0.0, %v8750
      %8752 = vmatmul.bf16.gmra.mxu0 %v1816
      %v8753 = vpop.f32.mrf.mxu0
      %v8754 = vadd.f32 0.0, %v8753
      %v8755 = vpop.f32.mrf.mxu0
      %v8756 = vadd.f32 0.0, %v8755
      %8757 = vmatmul.bf16.gmra.mxu0 %v1819
      %v8758 = vpop.f32.mrf.mxu0
      %v8759 = vadd.f32 0.0, %v8758
      %v8760 = vpop.f32.mrf.mxu0
      %v8761 = vadd.f32 0.0, %v8760
      %8762 = vmatmul.bf16.gmra.mxu0 %v1822
      %v8763 = vpop.f32.mrf.mxu0
      %v8764 = vadd.f32 0.0, %v8763
      %v8765 = vpop.f32.mrf.mxu0
      %v8766 = vadd.f32 0.0, %v8765
      %8767 = vmatmul.bf16.gmra.mxu0 %v1825
      %v8768 = vpop.f32.mrf.mxu0
      %v8769 = vadd.f32 0.0, %v8768
      %v8770 = vpop.f32.mrf.mxu0
      %v8771 = vadd.f32 0.0, %v8770
      %8772 = vmatmul.bf16.gmra.mxu0 %v1828
      %v8773 = vpop.f32.mrf.mxu0
      %v8774 = vadd.f32 0.0, %v8773
      %v8775 = vpop.f32.mrf.mxu0
      %v8776 = vadd.f32 0.0, %v8775
      %8777 = vmatmul.bf16.gmra.mxu0 %v1831
      %v8778 = vpop.f32.mrf.mxu0
      %v8779 = vadd.f32 0.0, %v8778
      %v8780 = vpop.f32.mrf.mxu0
      %v8781 = vadd.f32 0.0, %v8780
      %8782 = vmatmul.bf16.gmra.mxu0 %v1834
      %v8783 = vpop.f32.mrf.mxu0
      %v8784 = vadd.f32 0.0, %v8783
      %v8785 = vpop.f32.mrf.mxu0
      %v8786 = vadd.f32 0.0, %v8785
      %8787 = vmatmul.bf16.gmra.mxu0 %v1837
      %v8788 = vpop.f32.mrf.mxu0
      %v8789 = vadd.f32 0.0, %v8788
      %v8790 = vpop.f32.mrf.mxu0
      %v8791 = vadd.f32 0.0, %v8790
      %8792 = vmatmul.bf16.gmra.mxu0 %v1840
      %v8793 = vpop.f32.mrf.mxu0
      %v8794 = vadd.f32 0.0, %v8793
      %v8795 = vpop.f32.mrf.mxu0
      %v8796 = vadd.f32 0.0, %v8795
      %8797 = vmatmul.bf16.gmra.mxu0 %v1843
      %v8798 = vpop.f32.mrf.mxu0
      %v8799 = vadd.f32 0.0, %v8798
      %v8800 = vpop.f32.mrf.mxu0
      %v8801 = vadd.f32 0.0, %v8800
      %8802 = vmatmul.bf16.gmra.mxu0 %v1846
      %v8803 = vpop.f32.mrf.mxu0
      %v8804 = vadd.f32 0.0, %v8803
      %v8805 = vpop.f32.mrf.mxu0
      %v8806 = vadd.f32 0.0, %v8805
      %8807 = vmatmul.bf16.gmra.mxu0 %v1849
      %v8808 = vpop.f32.mrf.mxu0
      %v8809 = vadd.f32 0.0, %v8808
      %v8810 = vpop.f32.mrf.mxu0
      %v8811 = vadd.f32 0.0, %v8810
      %8812 = vmatmul.bf16.gmra.mxu0 %v1852
      %v8813 = vpop.f32.mrf.mxu0
      %v8814 = vadd.f32 0.0, %v8813
      %v8815 = vpop.f32.mrf.mxu0
      %v8816 = vadd.f32 0.0, %v8815
      %8817 = vmatmul.bf16.gmra.mxu0 %v1855
      %v8818 = vpop.f32.mrf.mxu0
      %v8819 = vadd.f32 0.0, %v8818
      %v8820 = vpop.f32.mrf.mxu0
      %v8821 = vadd.f32 0.0, %v8820
      %8822 = vmatmul.bf16.gmra.mxu0 %v8681
      %v8823 = vpop.f32.mrf.mxu0
      %v8824 = vadd.f32 0.0, %v8823
      %v8825 = vpop.f32.mrf.mxu0
      %v8826 = vadd.f32 0.0, %v8825
      %8827 = vmatmul.bf16.gmra.mxu0 %v8684
      %v8828 = vpop.f32.mrf.mxu0
      %v8829 = vadd.f32 0.0, %v8828
      %v8830 = vpop.f32.mrf.mxu0
      %v8831 = vadd.f32 0.0, %v8830
      %8832 = vmatmul.bf16.gmra.mxu0 %v8687
      %v8833 = vpop.f32.mrf.mxu0
      %v8834 = vadd.f32 0.0, %v8833
      %v8835 = vpop.f32.mrf.mxu0
      %v8836 = vadd.f32 0.0, %v8835
      %8837 = vmatmul.bf16.gmra.mxu0 %v8690
      %v8838 = vpop.f32.mrf.mxu0
      %v8839 = vadd.f32 0.0, %v8838
      %v8840 = vpop.f32.mrf.mxu0
      %v8841 = vadd.f32 0.0, %v8840
      %8842 = vmatmul.bf16.gmra.mxu0 %v8693
      %v8843 = vpop.f32.mrf.mxu0
      %v8844 = vadd.f32 0.0, %v8843
      %v8845 = vpop.f32.mrf.mxu0
      %v8846 = vadd.f32 0.0, %v8845
      %8847 = vmatmul.bf16.gmra.mxu0 %v8696
      %v8848 = vpop.f32.mrf.mxu0
      %v8849 = vadd.f32 0.0, %v8848
      %v8850 = vpop.f32.mrf.mxu0
      %v8851 = vadd.f32 0.0, %v8850
      %8852 = vmatmul.bf16.gmra.mxu0 %v8699
      %v8853 = vpop.f32.mrf.mxu0
      %v8854 = vadd.f32 0.0, %v8853
      %v8855 = vpop.f32.mrf.mxu0
      %v8856 = vadd.f32 0.0, %v8855
      %8857 = vmatmul.bf16.gmra.mxu0 %v8702
      %v8858 = vpop.f32.mrf.mxu0
      %v8859 = vadd.f32 0.0, %v8858
      %v8860 = vpop.f32.mrf.mxu0
      %v8861 = vadd.f32 0.0, %v8860
      %8862 = vmatmul.bf16.gmra.mxu0 %v8705
      %v8863 = vpop.f32.mrf.mxu0
      %v8864 = vadd.f32 0.0, %v8863
      %v8865 = vpop.f32.mrf.mxu0
      %v8866 = vadd.f32 0.0, %v8865
      %8867 = vmatmul.bf16.gmra.mxu0 %v8708
      %v8868 = vpop.f32.mrf.mxu0
      %v8869 = vadd.f32 0.0, %v8868
      %v8870 = vpop.f32.mrf.mxu0
      %v8871 = vadd.f32 0.0, %v8870
      %8872 = vmatmul.bf16.gmra.mxu0 %v8711
      %v8873 = vpop.f32.mrf.mxu0
      %v8874 = vadd.f32 0.0, %v8873
      %v8875 = vpop.f32.mrf.mxu0
      %v8876 = vadd.f32 0.0, %v8875
      %8877 = vmatmul.bf16.gmra.mxu0 %v8714
      %v8878 = vpop.f32.mrf.mxu0
      %v8879 = vadd.f32 0.0, %v8878
      %v8880 = vpop.f32.mrf.mxu0
      %v8881 = vadd.f32 0.0, %v8880
      %8882 = vmatmul.bf16.gmra.mxu0 %v8717
      %v8883 = vpop.f32.mrf.mxu0
      %v8884 = vadd.f32 0.0, %v8883
      %v8885 = vpop.f32.mrf.mxu0
      %v8886 = vadd.f32 0.0, %v8885
      %8887 = vdwg.mxu0
      %v8888 = vadd.f32 %v8553, %v8729
      %v8889 = vadd.f32 %v8554, %v8731
      %v8890 = vadd.f32 %v8555, %v8734
      %v8891 = vadd.f32 %v8556, %v8736
      %v8892 = vadd.f32 %v8557, %v8739
      %v8893 = vadd.f32 %v8558, %v8741
      %v8894 = vadd.f32 %v8559, %v8744
      %v8895 = vadd.f32 %v8560, %v8746
      %v8896 = vadd.f32 %v8561, %v8749
      %v8897 = vadd.f32 %v8562, %v8751
      %v8898 = vadd.f32 %v8563, %v8754
      %v8899 = vadd.f32 %v8564, %v8756
      %v8900 = vadd.f32 %v8565, %v8759
      %v8901 = vadd.f32 %v8566, %v8761
      %v8902 = vadd.f32 %v8567, %v8764
      %v8903 = vadd.f32 %v8568, %v8766
      %v8904 = vadd.f32 %v8569, %v8769
      %v8905 = vadd.f32 %v8570, %v8771
      %v8906 = vadd.f32 %v8571, %v8774
      %v8907 = vadd.f32 %v8572, %v8776
      %v8908 = vadd.f32 %v8573, %v8779
      %v8909 = vadd.f32 %v8574, %v8781
      %v8910 = vadd.f32 %v8575, %v8784
      %v8911 = vadd.f32 %v8576, %v8786
      %v8912 = vadd.f32 %v8577, %v8789
      %v8913 = vadd.f32 %v8578, %v8791
      %v8914 = vadd.f32 %v8579, %v8794
      %v8915 = vadd.f32 %v8580, %v8796
      %v8916 = vadd.f32 %v8581, %v8799
      %v8917 = vadd.f32 %v8582, %v8801
      %v8918 = vadd.f32 %v8583, %v8804
      %v8919 = vadd.f32 %v8584, %v8806
      %v8920 = vadd.f32 %v8585, %v8809
      %v8921 = vadd.f32 %v8586, %v8811
      %v8922 = vadd.f32 %v8587, %v8814
      %v8923 = vadd.f32 %v8588, %v8816
      %v8924 = vadd.f32 %v8589, %v8819
      %v8925 = vadd.f32 %v8590, %v8821
      %v8926 = vadd.f32 %v8591, %v8824
      %v8927 = vadd.f32 %v8592, %v8826
      %v8928 = vadd.f32 %v8593, %v8829
      %v8929 = vadd.f32 %v8594, %v8831
      %v8930 = vadd.f32 %v8595, %v8834
      %v8931 = vadd.f32 %v8596, %v8836
      %v8932 = vadd.f32 %v8597, %v8839
      %v8933 = vadd.f32 %v8598, %v8841
      %v8934 = vadd.f32 %v8599, %v8844
      %v8935 = vadd.f32 %v8600, %v8846
      %v8936 = vadd.f32 %v8601, %v8849
      %v8937 = vadd.f32 %v8602, %v8851
      %v8938 = vadd.f32 %v8603, %v8854
      %v8939 = vadd.f32 %v8604, %v8856
      %v8940 = vadd.f32 %v8605, %v8859
      %v8941 = vadd.f32 %v8606, %v8861
      %v8942 = vadd.f32 %v8607, %v8864
      %v8943 = vadd.f32 %v8608, %v8866
      %v8944 = vadd.f32 %v8609, %v8869
      %v8945 = vadd.f32 %v8610, %v8871
      %v8946 = vadd.f32 %v8611, %v8874
      %v8947 = vadd.f32 %v8612, %v8876
      %v8948 = vadd.f32 %v8613, %v8879
      %v8949 = vadd.f32 %v8614, %v8881
      %v8950 = vadd.f32 %v8615, %v8884
      %v8951 = vadd.f32 %v8616, %v8886
      %vm8952 = vcmask 1045504
      %v8953 = vrot.slane %v636, 2
      %v8954 = vrot.slane %v637, 2
      %v8955 = vsel %vm8952, %v8953, %v8954
      %v8956 = vrot.slane %v638, 2
      %v8957 = vsel %vm8952, %v8954, %v8956
      %v8958 = vrot.slane %v639, 2
      %v8959 = vsel %vm8952, %v8956, %v8958
      %v8960 = vrot.slane %v640, 2
      %v8961 = vsel %vm8952, %v8958, %v8960
      %v8962 = vrot.slane %v641, 2
      %v8963 = vsel %vm8952, %v8960, %v8962
      %v8964 = vrot.slane %v642, 2
      %v8965 = vsel %vm8952, %v8962, %v8964
      %v8966 = vrot.slane %v643, 2
      %v8967 = vsel %vm8952, %v8964, %v8966
      %v8968 = vrot.slane %v644, 2
      %v8969 = vsel %vm8952, %v8966, %v8968
      %v8970 = vrot.slane %v645, 2
      %v8971 = vsel %vm8952, %v8968, %v8970
      %v8972 = vrot.slane %v646, 2
      %v8973 = vsel %vm8952, %v8970, %v8972
      %v8974 = vrot.slane %v647, 2
      %v8975 = vsel %vm8952, %v8972, %v8974
      %v8976 = vrot.slane %v648, 2
      %v8977 = vsel %vm8952, %v8974, %v8976
      %v8978 = vrot.slane %v649, 2
      %v8979 = vsel %vm8952, %v8976, %v8978
      %v8980 = vrot.slane %v650, 2
      %v8981 = vsel %vm8952, %v8978, %v8980
      %v8982 = vrot.slane %v651, 2
      %v8983 = vsel %vm8952, %v8980, %v8982
      %v8984 = vrot.slane %v652, 2
      %v8985 = vsel %vm8952, %v8982, %v8984
      %v8986 = vrot.slane %v653, 2
      %v8987 = vsel %vm8952, %v8984, %v8986
      %v8988 = vrot.slane %v654, 2
      %v8989 = vsel %vm8952, %v8986, %v8988
      %v8990 = vrot.slane %v655, 2
      %v8991 = vsel %vm8952, %v8988, %v8990
      %v8992 = vrot.slane %v656, 2
      %v8993 = vsel %vm8952, %v8990, %v8992
      %v8994 = vrot.slane %v657, 2
      %v8995 = vsel %vm8952, %v8992, %v8994
      %v8996 = vrot.slane %v658, 2
      %v8997 = vsel %vm8952, %v8994, %v8996
      %v8998 = vrot.slane %v659, 2
      %v8999 = vsel %vm8952, %v8996, %v8998
      %v9000 = vrot.slane %v660, 2
      %v9001 = vsel %vm8952, %v8998, %v9000
      %v9002 = vrot.slane %v661, 2
      %v9003 = vsel %vm8952, %v9000, %v9002
      %v9004 = vrot.slane %v690, 2
      %v9005 = vsel %vm8952, %v9002, %v9004
      %v9006 = vrot.slane %v691, 2
      %v9007 = vsel %vm8952, %v9004, %v9006
      %v9008 = vrot.slane %v692, 2
      %v9009 = vsel %vm8952, %v9006, %v9008
      %v9010 = vrot.slane %v693, 2
      %v9011 = vsel %vm8952, %v9008, %v9010
      %v9012 = vrot.slane %v694, 2
      %v9013 = vsel %vm8952, %v9010, %v9012
      %v9014 = vrot.slane %v695, 2
      %v9015 = vsel %vm8952, %v9012, %v9014
      %v9016 = vrot.slane %v696, 2
      %v9017 = vsel %vm8952, %v9014, %v9016
      %v9020 = vunpack.c.l.b16 %v741
      %v9021 = vunpack.c.l.b16 %v742
      %v9022 = vpack.c.b16 %v9021, %v9020
      %v9025 = vsel %vm823, %v8955, 0
      %v9028 = vsel %vm823, %v8957, 0
      %v9031 = vsel %vm823, %v8959, 0
      %v9034 = vsel %vm823, %v8961, 0
      %v9037 = vsel %vm823, %v8963, 0
      %v9040 = vsel %vm823, %v8965, 0
      %v9043 = vsel %vm823, %v8967, 0
      %v9046 = vsel %vm823, %v8969, 0
      %v9049 = vsel %vm823, %v8971, 0
      %v9052 = vsel %vm823, %v8973, 0
      %v9055 = vsel %vm823, %v8975, 0
      %v9058 = vsel %vm823, %v8977, 0
      %v9061 = vsel %vm823, %v8979, 0
      %v9064 = vsel %vm823, %v8981, 0
      %v9067 = vsel %vm823, %v8983, 0
      %v9070 = vsel %vm823, %v8985, 0
      %v9073 = vsel %vm823, %v8987, 0
      %v9076 = vsel %vm823, %v8989, 0
      %v9079 = vsel %vm823, %v8991, 0
      %v9082 = vsel %vm823, %v8993, 0
      %v9085 = vsel %vm823, %v8995, 0
      %v9088 = vsel %vm823, %v8997, 0
      %v9091 = vsel %vm823, %v8999, 0
      %v9094 = vsel %vm823, %v9001, 0
      %v9097 = vsel %vm823, %v9003, 0
      %v9100 = vsel %vm823, %v9005, 0
      %v9103 = vsel %vm823, %v9007, 0
      %v9106 = vsel %vm823, %v9009, 0
      %v9109 = vsel %vm823, %v9011, 0
      %v9112 = vsel %vm823, %v9013, 0
      %v9115 = vsel %vm823, %v9015, 0
      %v9118 = vsel %vm823, %v9017, 0
      %9120 = vmatpush.bf16.msra.mxu0 0
      %9121 = vmatpush.bf16.msra.mxu0 0
      %9122 = vmatpush.bf16.msra.mxu0 0
      %9123 = vmatpush.bf16.msra.mxu0 0
      %9124 = vmatpush.bf16.msra.mxu0 0
      %9125 = vmatpush.bf16.msra.mxu0 0
      %9126 = vmatpush.bf16.msra.mxu0 0
      %9127 = vmatpush.bf16.msra.mxu0 %v9022
      %9128 = vmatmul.bf16.gmra.mxu0 %v9025
      %v9129 = vpop.f32.mrf.mxu0
      %v9130 = vadd.f32 0.0, %v9129
      %v9131 = vpop.f32.mrf.mxu0
      %v9132 = vadd.f32 0.0, %v9131
      %9133 = vmatmul.bf16.gmra.mxu0 %v9028
      %v9134 = vpop.f32.mrf.mxu0
      %v9135 = vadd.f32 0.0, %v9134
      %v9136 = vpop.f32.mrf.mxu0
      %v9137 = vadd.f32 0.0, %v9136
      %9138 = vmatmul.bf16.gmra.mxu0 %v9031
      %v9139 = vpop.f32.mrf.mxu0
      %v9140 = vadd.f32 0.0, %v9139
      %v9141 = vpop.f32.mrf.mxu0
      %v9142 = vadd.f32 0.0, %v9141
      %9143 = vmatmul.bf16.gmra.mxu0 %v9034
      %v9144 = vpop.f32.mrf.mxu0
      %v9145 = vadd.f32 0.0, %v9144
      %v9146 = vpop.f32.mrf.mxu0
      %v9147 = vadd.f32 0.0, %v9146
      %9148 = vmatmul.bf16.gmra.mxu0 %v9037
      %v9149 = vpop.f32.mrf.mxu0
      %v9150 = vadd.f32 0.0, %v9149
      %v9151 = vpop.f32.mrf.mxu0
      %v9152 = vadd.f32 0.0, %v9151
      %9153 = vmatmul.bf16.gmra.mxu0 %v9040
      %v9154 = vpop.f32.mrf.mxu0
      %v9155 = vadd.f32 0.0, %v9154
      %v9156 = vpop.f32.mrf.mxu0
      %v9157 = vadd.f32 0.0, %v9156
      %9158 = vmatmul.bf16.gmra.mxu0 %v9043
      %v9159 = vpop.f32.mrf.mxu0
      %v9160 = vadd.f32 0.0, %v9159
      %v9161 = vpop.f32.mrf.mxu0
      %v9162 = vadd.f32 0.0, %v9161
      %9163 = vmatmul.bf16.gmra.mxu0 %v9046
      %v9164 = vpop.f32.mrf.mxu0
      %v9165 = vadd.f32 0.0, %v9164
      %v9166 = vpop.f32.mrf.mxu0
      %v9167 = vadd.f32 0.0, %v9166
      %9168 = vmatmul.bf16.gmra.mxu0 %v9049
      %v9169 = vpop.f32.mrf.mxu0
      %v9170 = vadd.f32 0.0, %v9169
      %v9171 = vpop.f32.mrf.mxu0
      %v9172 = vadd.f32 0.0, %v9171
      %9173 = vmatmul.bf16.gmra.mxu0 %v9052
      %v9174 = vpop.f32.mrf.mxu0
      %v9175 = vadd.f32 0.0, %v9174
      %v9176 = vpop.f32.mrf.mxu0
      %v9177 = vadd.f32 0.0, %v9176
      %9178 = vmatmul.bf16.gmra.mxu0 %v9055
      %v9179 = vpop.f32.mrf.mxu0
      %v9180 = vadd.f32 0.0, %v9179
      %v9181 = vpop.f32.mrf.mxu0
      %v9182 = vadd.f32 0.0, %v9181
      %9183 = vmatmul.bf16.gmra.mxu0 %v9058
      %v9184 = vpop.f32.mrf.mxu0
      %v9185 = vadd.f32 0.0, %v9184
      %v9186 = vpop.f32.mrf.mxu0
      %v9187 = vadd.f32 0.0, %v9186
      %9188 = vmatmul.bf16.gmra.mxu0 %v9061
      %v9189 = vpop.f32.mrf.mxu0
      %v9190 = vadd.f32 0.0, %v9189
      %v9191 = vpop.f32.mrf.mxu0
      %v9192 = vadd.f32 0.0, %v9191
      %9193 = vmatmul.bf16.gmra.mxu0 %v9064
      %v9194 = vpop.f32.mrf.mxu0
      %v9195 = vadd.f32 0.0, %v9194
      %v9196 = vpop.f32.mrf.mxu0
      %v9197 = vadd.f32 0.0, %v9196
      %9198 = vmatmul.bf16.gmra.mxu0 %v9067
      %v9199 = vpop.f32.mrf.mxu0
      %v9200 = vadd.f32 0.0, %v9199
      %v9201 = vpop.f32.mrf.mxu0
      %v9202 = vadd.f32 0.0, %v9201
      %9203 = vmatmul.bf16.gmra.mxu0 %v9070
      %v9204 = vpop.f32.mrf.mxu0
      %v9205 = vadd.f32 0.0, %v9204
      %v9206 = vpop.f32.mrf.mxu0
      %v9207 = vadd.f32 0.0, %v9206
      %9208 = vmatmul.bf16.gmra.mxu0 %v9073
      %v9209 = vpop.f32.mrf.mxu0
      %v9210 = vadd.f32 0.0, %v9209
      %v9211 = vpop.f32.mrf.mxu0
      %v9212 = vadd.f32 0.0, %v9211
      %9213 = vmatmul.bf16.gmra.mxu0 %v9076
      %v9214 = vpop.f32.mrf.mxu0
      %v9215 = vadd.f32 0.0, %v9214
      %v9216 = vpop.f32.mrf.mxu0
      %v9217 = vadd.f32 0.0, %v9216
      %9218 = vmatmul.bf16.gmra.mxu0 %v9079
      %v9219 = vpop.f32.mrf.mxu0
      %v9220 = vadd.f32 0.0, %v9219
      %v9221 = vpop.f32.mrf.mxu0
      %v9222 = vadd.f32 0.0, %v9221
      %9223 = vmatmul.bf16.gmra.mxu0 %v9082
      %v9224 = vpop.f32.mrf.mxu0
      %v9225 = vadd.f32 0.0, %v9224
      %v9226 = vpop.f32.mrf.mxu0
      %v9227 = vadd.f32 0.0, %v9226
      %9228 = vmatmul.bf16.gmra.mxu0 %v9085
      %v9229 = vpop.f32.mrf.mxu0
      %v9230 = vadd.f32 0.0, %v9229
      %v9231 = vpop.f32.mrf.mxu0
      %v9232 = vadd.f32 0.0, %v9231
      %9233 = vmatmul.bf16.gmra.mxu0 %v9088
      %v9234 = vpop.f32.mrf.mxu0
      %v9235 = vadd.f32 0.0, %v9234
      %v9236 = vpop.f32.mrf.mxu0
      %v9237 = vadd.f32 0.0, %v9236
      %9238 = vmatmul.bf16.gmra.mxu0 %v9091
      %v9239 = vpop.f32.mrf.mxu0
      %v9240 = vadd.f32 0.0, %v9239
      %v9241 = vpop.f32.mrf.mxu0
      %v9242 = vadd.f32 0.0, %v9241
      %9243 = vmatmul.bf16.gmra.mxu0 %v9094
      %v9244 = vpop.f32.mrf.mxu0
      %v9245 = vadd.f32 0.0, %v9244
      %v9246 = vpop.f32.mrf.mxu0
      %v9247 = vadd.f32 0.0, %v9246
      %9248 = vmatmul.bf16.gmra.mxu0 %v9097
      %v9249 = vpop.f32.mrf.mxu0
      %v9250 = vadd.f32 0.0, %v9249
      %v9251 = vpop.f32.mrf.mxu0
      %v9252 = vadd.f32 0.0, %v9251
      %9253 = vmatmul.bf16.gmra.mxu0 %v9100
      %v9254 = vpop.f32.mrf.mxu0
      %v9255 = vadd.f32 0.0, %v9254
      %v9256 = vpop.f32.mrf.mxu0
      %v9257 = vadd.f32 0.0, %v9256
      %9258 = vmatmul.bf16.gmra.mxu0 %v9103
      %v9259 = vpop.f32.mrf.mxu0
      %v9260 = vadd.f32 0.0, %v9259
      %v9261 = vpop.f32.mrf.mxu0
      %v9262 = vadd.f32 0.0, %v9261
      %9263 = vmatmul.bf16.gmra.mxu0 %v9106
      %v9264 = vpop.f32.mrf.mxu0
      %v9265 = vadd.f32 0.0, %v9264
      %v9266 = vpop.f32.mrf.mxu0
      %v9267 = vadd.f32 0.0, %v9266
      %9268 = vmatmul.bf16.gmra.mxu0 %v9109
      %v9269 = vpop.f32.mrf.mxu0
      %v9270 = vadd.f32 0.0, %v9269
      %v9271 = vpop.f32.mrf.mxu0
      %v9272 = vadd.f32 0.0, %v9271
      %9273 = vmatmul.bf16.gmra.mxu0 %v9112
      %v9274 = vpop.f32.mrf.mxu0
      %v9275 = vadd.f32 0.0, %v9274
      %v9276 = vpop.f32.mrf.mxu0
      %v9277 = vadd.f32 0.0, %v9276
      %9278 = vmatmul.bf16.gmra.mxu0 %v9115
      %v9279 = vpop.f32.mrf.mxu0
      %v9280 = vadd.f32 0.0, %v9279
      %v9281 = vpop.f32.mrf.mxu0
      %v9282 = vadd.f32 0.0, %v9281
      %9283 = vmatmul.bf16.gmra.mxu0 %v9118
      %v9284 = vpop.f32.mrf.mxu0
      %v9285 = vadd.f32 0.0, %v9284
      %v9286 = vpop.f32.mrf.mxu0
      %v9287 = vadd.f32 0.0, %v9286
      %9288 = vdwg.mxu0
      %v9289 = vadd.f32 %v8888, %v9130
      %v9290 = vadd.f32 %v8889, %v9132
      %v9291 = vadd.f32 %v8890, %v9135
      %v9292 = vadd.f32 %v8891, %v9137
      %v9293 = vadd.f32 %v8892, %v9140
      %v9294 = vadd.f32 %v8893, %v9142
      %v9295 = vadd.f32 %v8894, %v9145
      %v9296 = vadd.f32 %v8895, %v9147
      %v9297 = vadd.f32 %v8896, %v9150
      %v9298 = vadd.f32 %v8897, %v9152
      %v9299 = vadd.f32 %v8898, %v9155
      %v9300 = vadd.f32 %v8899, %v9157
      %v9301 = vadd.f32 %v8900, %v9160
      %v9302 = vadd.f32 %v8901, %v9162
      %v9303 = vadd.f32 %v8902, %v9165
      %v9304 = vadd.f32 %v8903, %v9167
      %v9305 = vadd.f32 %v8904, %v9170
      %v9306 = vadd.f32 %v8905, %v9172
      %v9307 = vadd.f32 %v8906, %v9175
      %v9308 = vadd.f32 %v8907, %v9177
      %v9309 = vadd.f32 %v8908, %v9180
      %v9310 = vadd.f32 %v8909, %v9182
      %v9311 = vadd.f32 %v8910, %v9185
      %v9312 = vadd.f32 %v8911, %v9187
      %v9313 = vadd.f32 %v8912, %v9190
      %v9314 = vadd.f32 %v8913, %v9192
      %v9315 = vadd.f32 %v8914, %v9195
      %v9316 = vadd.f32 %v8915, %v9197
      %v9317 = vadd.f32 %v8916, %v9200
      %v9318 = vadd.f32 %v8917, %v9202
      %v9319 = vadd.f32 %v8918, %v9205
      %v9320 = vadd.f32 %v8919, %v9207
      %v9321 = vadd.f32 %v8920, %v9210
      %v9322 = vadd.f32 %v8921, %v9212
      %v9323 = vadd.f32 %v8922, %v9215
      %v9324 = vadd.f32 %v8923, %v9217
      %v9325 = vadd.f32 %v8924, %v9220
      %v9326 = vadd.f32 %v8925, %v9222
      %v9327 = vadd.f32 %v8926, %v9225
      %v9328 = vadd.f32 %v8927, %v9227
      %v9329 = vadd.f32 %v8928, %v9230
      %v9330 = vadd.f32 %v8929, %v9232
      %v9331 = vadd.f32 %v8930, %v9235
      %v9332 = vadd.f32 %v8931, %v9237
      %v9333 = vadd.f32 %v8932, %v9240
      %v9334 = vadd.f32 %v8933, %v9242
      %v9335 = vadd.f32 %v8934, %v9245
      %v9336 = vadd.f32 %v8935, %v9247
      %v9337 = vadd.f32 %v8936, %v9250
      %v9338 = vadd.f32 %v8937, %v9252
      %v9339 = vadd.f32 %v8938, %v9255
      %v9340 = vadd.f32 %v8939, %v9257
      %v9341 = vadd.f32 %v8940, %v9260
      %v9342 = vadd.f32 %v8941, %v9262
      %v9343 = vadd.f32 %v8942, %v9265
      %v9344 = vadd.f32 %v8943, %v9267
      %v9345 = vadd.f32 %v8944, %v9270
      %v9346 = vadd.f32 %v8945, %v9272
      %v9347 = vadd.f32 %v8946, %v9275
      %v9348 = vadd.f32 %v8947, %v9277
      %v9349 = vadd.f32 %v8948, %v9280
      %v9350 = vadd.f32 %v8949, %v9282
      %v9351 = vadd.f32 %v8950, %v9285
      %v9352 = vadd.f32 %v8951, %v9287
      %v9353 = vrot.slane %v6750, 2
      %v9354 = vrot.slane %v6358, 3
      %v9355 = vor.u32 %v9353, %v9354
      %v9356 = vsel %vm3425, %v4808, %v9355
      %v9357 = vrot.slane %v7781, 2
      %v9358 = vrot.slane %v7784, 3
      %v9359 = vor.u32 %v9357, %v9358
      %v9360 = vsel %vm3425, %v9355, %v9359
      %v9361 = vrot.slane %v7790, 2
      %v9362 = vrot.slane %v7793, 3
      %v9363 = vor.u32 %v9361, %v9362
      %v9364 = vsel %vm3425, %v9359, %v9363
      %v9365 = vrot.slane %v7799, 2
      %v9366 = vrot.slane %v7802, 3
      %v9367 = vor.u32 %v9365, %v9366
      %v9368 = vsel %vm3425, %v9363, %v9367
      %v9369 = vrot.slane %v7808, 2
      %v9370 = vrot.slane %v7811, 3
      %v9371 = vor.u32 %v9369, %v9370
      %v9372 = vsel %vm3425, %v9367, %v9371
      %v9373 = vrot.slane %v7817, 2
      %v9374 = vrot.slane %v7820, 3
      %v9375 = vor.u32 %v9373, %v9374
      %v9376 = vsel %vm3425, %v9371, %v9375
      %v9377 = vrot.slane %v8666, 2
      %v9378 = vrot.slane %v8669, 3
      %v9379 = vor.u32 %v9377, %v9378
      %v9380 = vsel %vm3425, %v9375, %v9379
      %v9383 = vunpack.c.l.b16 %v743
      %v9384 = vunpack.c.l.b16 %v744
      %v9385 = vpack.c.b16 %v9384, %v9383
      %v9388 = vsel %vm823, %v9356, 0
      %v9391 = vsel %vm823, %v9360, 0
      %v9394 = vsel %vm823, %v9364, 0
      %v9397 = vsel %vm823, %v9368, 0
      %v9400 = vsel %vm823, %v9372, 0
      %v9403 = vsel %vm823, %v9376, 0
      %v9406 = vsel %vm823, %v9380, 0
      %9408 = vmatpush.bf16.msra.mxu0 0
      %9409 = vmatpush.bf16.msra.mxu0 0
      %9410 = vmatpush.bf16.msra.mxu0 0
      %9411 = vmatpush.bf16.msra.mxu0 0
      %9412 = vmatpush.bf16.msra.mxu0 0
      %9413 = vmatpush.bf16.msra.mxu0 0
      %9414 = vmatpush.bf16.msra.mxu0 0
      %9415 = vmatpush.bf16.msra.mxu0 %v9385
      %9416 = vmatmul.bf16.gmra.mxu0 %v3605
      %v9417 = vpop.f32.mrf.mxu0
      %v9418 = vadd.f32 0.0, %v9417
      %v9419 = vpop.f32.mrf.mxu0
      %v9420 = vadd.f32 0.0, %v9419
      %9421 = vmatmul.bf16.gmra.mxu0 %v3608
      %v9422 = vpop.f32.mrf.mxu0
      %v9423 = vadd.f32 0.0, %v9422
      %v9424 = vpop.f32.mrf.mxu0
      %v9425 = vadd.f32 0.0, %v9424
      %9426 = vmatmul.bf16.gmra.mxu0 %v3611
      %v9427 = vpop.f32.mrf.mxu0
      %v9428 = vadd.f32 0.0, %v9427
      %v9429 = vpop.f32.mrf.mxu0
      %v9430 = vadd.f32 0.0, %v9429
      %9431 = vmatmul.bf16.gmra.mxu0 %v3614
      %v9432 = vpop.f32.mrf.mxu0
      %v9433 = vadd.f32 0.0, %v9432
      %v9434 = vpop.f32.mrf.mxu0
      %v9435 = vadd.f32 0.0, %v9434
      %9436 = vmatmul.bf16.gmra.mxu0 %v3617
      %v9437 = vpop.f32.mrf.mxu0
      %v9438 = vadd.f32 0.0, %v9437
      %v9439 = vpop.f32.mrf.mxu0
      %v9440 = vadd.f32 0.0, %v9439
      %9441 = vmatmul.bf16.gmra.mxu0 %v3620
      %v9442 = vpop.f32.mrf.mxu0
      %v9443 = vadd.f32 0.0, %v9442
      %v9444 = vpop.f32.mrf.mxu0
      %v9445 = vadd.f32 0.0, %v9444
      %9446 = vmatmul.bf16.gmra.mxu0 %v3623
      %v9447 = vpop.f32.mrf.mxu0
      %v9448 = vadd.f32 0.0, %v9447
      %v9449 = vpop.f32.mrf.mxu0
      %v9450 = vadd.f32 0.0, %v9449
      %9451 = vmatmul.bf16.gmra.mxu0 %v3626
      %v9452 = vpop.f32.mrf.mxu0
      %v9453 = vadd.f32 0.0, %v9452
      %v9454 = vpop.f32.mrf.mxu0
      %v9455 = vadd.f32 0.0, %v9454
      %9456 = vmatmul.bf16.gmra.mxu0 %v3629
      %v9457 = vpop.f32.mrf.mxu0
      %v9458 = vadd.f32 0.0, %v9457
      %v9459 = vpop.f32.mrf.mxu0
      %v9460 = vadd.f32 0.0, %v9459
      %9461 = vmatmul.bf16.gmra.mxu0 %v3632
      %v9462 = vpop.f32.mrf.mxu0
      %v9463 = vadd.f32 0.0, %v9462
      %v9464 = vpop.f32.mrf.mxu0
      %v9465 = vadd.f32 0.0, %v9464
      %9466 = vmatmul.bf16.gmra.mxu0 %v3635
      %v9467 = vpop.f32.mrf.mxu0
      %v9468 = vadd.f32 0.0, %v9467
      %v9469 = vpop.f32.mrf.mxu0
      %v9470 = vadd.f32 0.0, %v9469
      %9471 = vmatmul.bf16.gmra.mxu0 %v3638
      %v9472 = vpop.f32.mrf.mxu0
      %v9473 = vadd.f32 0.0, %v9472
      %v9474 = vpop.f32.mrf.mxu0
      %v9475 = vadd.f32 0.0, %v9474
      %9476 = vmatmul.bf16.gmra.mxu0 %v3641
      %v9477 = vpop.f32.mrf.mxu0
      %v9478 = vadd.f32 0.0, %v9477
      %v9479 = vpop.f32.mrf.mxu0
      %v9480 = vadd.f32 0.0, %v9479
      %9481 = vmatmul.bf16.gmra.mxu0 %v3644
      %v9482 = vpop.f32.mrf.mxu0
      %v9483 = vadd.f32 0.0, %v9482
      %v9484 = vpop.f32.mrf.mxu0
      %v9485 = vadd.f32 0.0, %v9484
      %9486 = vmatmul.bf16.gmra.mxu0 %v3647
      %v9487 = vpop.f32.mrf.mxu0
      %v9488 = vadd.f32 0.0, %v9487
      %v9489 = vpop.f32.mrf.mxu0
      %v9490 = vadd.f32 0.0, %v9489
      %9491 = vmatmul.bf16.gmra.mxu0 %v3650
      %v9492 = vpop.f32.mrf.mxu0
      %v9493 = vadd.f32 0.0, %v9492
      %v9494 = vpop.f32.mrf.mxu0
      %v9495 = vadd.f32 0.0, %v9494
      %9496 = vmatmul.bf16.gmra.mxu0 %v3653
      %v9497 = vpop.f32.mrf.mxu0
      %v9498 = vadd.f32 0.0, %v9497
      %v9499 = vpop.f32.mrf.mxu0
      %v9500 = vadd.f32 0.0, %v9499
      %9501 = vmatmul.bf16.gmra.mxu0 %v3656
      %v9502 = vpop.f32.mrf.mxu0
      %v9503 = vadd.f32 0.0, %v9502
      %v9504 = vpop.f32.mrf.mxu0
      %v9505 = vadd.f32 0.0, %v9504
      %9506 = vmatmul.bf16.gmra.mxu0 %v3659
      %v9507 = vpop.f32.mrf.mxu0
      %v9508 = vadd.f32 0.0, %v9507
      %v9509 = vpop.f32.mrf.mxu0
      %v9510 = vadd.f32 0.0, %v9509
      %9511 = vmatmul.bf16.gmra.mxu0 %v3662
      %v9512 = vpop.f32.mrf.mxu0
      %v9513 = vadd.f32 0.0, %v9512
      %v9514 = vpop.f32.mrf.mxu0
      %v9515 = vadd.f32 0.0, %v9514
      %9516 = vmatmul.bf16.gmra.mxu0 %v4817
      %v9517 = vpop.f32.mrf.mxu0
      %v9518 = vadd.f32 0.0, %v9517
      %v9519 = vpop.f32.mrf.mxu0
      %v9520 = vadd.f32 0.0, %v9519
      %9521 = vmatmul.bf16.gmra.mxu0 %v4820
      %v9522 = vpop.f32.mrf.mxu0
      %v9523 = vadd.f32 0.0, %v9522
      %v9524 = vpop.f32.mrf.mxu0
      %v9525 = vadd.f32 0.0, %v9524
      %9526 = vmatmul.bf16.gmra.mxu0 %v4823
      %v9527 = vpop.f32.mrf.mxu0
      %v9528 = vadd.f32 0.0, %v9527
      %v9529 = vpop.f32.mrf.mxu0
      %v9530 = vadd.f32 0.0, %v9529
      %9531 = vmatmul.bf16.gmra.mxu0 %v4826
      %v9532 = vpop.f32.mrf.mxu0
      %v9533 = vadd.f32 0.0, %v9532
      %v9534 = vpop.f32.mrf.mxu0
      %v9535 = vadd.f32 0.0, %v9534
      %9536 = vmatmul.bf16.gmra.mxu0 %v4829
      %v9537 = vpop.f32.mrf.mxu0
      %v9538 = vadd.f32 0.0, %v9537
      %v9539 = vpop.f32.mrf.mxu0
      %v9540 = vadd.f32 0.0, %v9539
      %9541 = vmatmul.bf16.gmra.mxu0 %v9388
      %v9542 = vpop.f32.mrf.mxu0
      %v9543 = vadd.f32 0.0, %v9542
      %v9544 = vpop.f32.mrf.mxu0
      %v9545 = vadd.f32 0.0, %v9544
      %9546 = vmatmul.bf16.gmra.mxu0 %v9391
      %v9547 = vpop.f32.mrf.mxu0
      %v9548 = vadd.f32 0.0, %v9547
      %v9549 = vpop.f32.mrf.mxu0
      %v9550 = vadd.f32 0.0, %v9549
      %9551 = vmatmul.bf16.gmra.mxu0 %v9394
      %v9552 = vpop.f32.mrf.mxu0
      %v9553 = vadd.f32 0.0, %v9552
      %v9554 = vpop.f32.mrf.mxu0
      %v9555 = vadd.f32 0.0, %v9554
      %9556 = vmatmul.bf16.gmra.mxu0 %v9397
      %v9557 = vpop.f32.mrf.mxu0
      %v9558 = vadd.f32 0.0, %v9557
      %v9559 = vpop.f32.mrf.mxu0
      %v9560 = vadd.f32 0.0, %v9559
      %9561 = vmatmul.bf16.gmra.mxu0 %v9400
      %v9562 = vpop.f32.mrf.mxu0
      %v9563 = vadd.f32 0.0, %v9562
      %v9564 = vpop.f32.mrf.mxu0
      %v9565 = vadd.f32 0.0, %v9564
      %9566 = vmatmul.bf16.gmra.mxu0 %v9403
      %v9567 = vpop.f32.mrf.mxu0
      %v9568 = vadd.f32 0.0, %v9567
      %v9569 = vpop.f32.mrf.mxu0
      %v9570 = vadd.f32 0.0, %v9569
      %9571 = vmatmul.bf16.gmra.mxu0 %v9406
      %v9572 = vpop.f32.mrf.mxu0
      %v9573 = vadd.f32 0.0, %v9572
      %v9574 = vpop.f32.mrf.mxu0
      %v9575 = vadd.f32 0.0, %v9574
      %9576 = vdwg.mxu0
      %v9577 = vadd.f32 %v9289, %v9418
      %v9578 = vadd.f32 %v9290, %v9420
      %v9579 = vadd.f32 %v9291, %v9423
      %v9580 = vadd.f32 %v9292, %v9425
      %v9581 = vadd.f32 %v9293, %v9428
      %v9582 = vadd.f32 %v9294, %v9430
      %v9583 = vadd.f32 %v9295, %v9433
      %v9584 = vadd.f32 %v9296, %v9435
      %v9585 = vadd.f32 %v9297, %v9438
      %v9586 = vadd.f32 %v9298, %v9440
      %v9587 = vadd.f32 %v9299, %v9443
      %v9588 = vadd.f32 %v9300, %v9445
      %v9589 = vadd.f32 %v9301, %v9448
      %v9590 = vadd.f32 %v9302, %v9450
      %v9591 = vadd.f32 %v9303, %v9453
      %v9592 = vadd.f32 %v9304, %v9455
      %v9593 = vadd.f32 %v9305, %v9458
      %v9594 = vadd.f32 %v9306, %v9460
      %v9595 = vadd.f32 %v9307, %v9463
      %v9596 = vadd.f32 %v9308, %v9465
      %v9597 = vadd.f32 %v9309, %v9468
      %v9598 = vadd.f32 %v9310, %v9470
      %v9599 = vadd.f32 %v9311, %v9473
      %v9600 = vadd.f32 %v9312, %v9475
      %v9601 = vadd.f32 %v9313, %v9478
      %v9602 = vadd.f32 %v9314, %v9480
      %v9603 = vadd.f32 %v9315, %v9483
      %v9604 = vadd.f32 %v9316, %v9485
      %v9605 = vadd.f32 %v9317, %v9488
      %v9606 = vadd.f32 %v9318, %v9490
      %v9607 = vadd.f32 %v9319, %v9493
      %v9608 = vadd.f32 %v9320, %v9495
      %v9609 = vadd.f32 %v9321, %v9498
      %v9610 = vadd.f32 %v9322, %v9500
      %v9611 = vadd.f32 %v9323, %v9503
      %v9612 = vadd.f32 %v9324, %v9505
      %v9613 = vadd.f32 %v9325, %v9508
      %v9614 = vadd.f32 %v9326, %v9510
      %v9615 = vadd.f32 %v9327, %v9513
      %v9616 = vadd.f32 %v9328, %v9515
      %v9617 = vadd.f32 %v9329, %v9518
      %v9618 = vadd.f32 %v9330, %v9520
      %v9619 = vadd.f32 %v9331, %v9523
      %v9620 = vadd.f32 %v9332, %v9525
      %v9621 = vadd.f32 %v9333, %v9528
      %v9622 = vadd.f32 %v9334, %v9530
      %v9623 = vadd.f32 %v9335, %v9533
      %v9624 = vadd.f32 %v9336, %v9535
      %v9625 = vadd.f32 %v9337, %v9538
      %v9626 = vadd.f32 %v9338, %v9540
      %v9627 = vadd.f32 %v9339, %v9543
      %v9628 = vadd.f32 %v9340, %v9545
      %v9629 = vadd.f32 %v9341, %v9548
      %v9630 = vadd.f32 %v9342, %v9550
      %v9631 = vadd.f32 %v9343, %v9553
      %v9632 = vadd.f32 %v9344, %v9555
      %v9633 = vadd.f32 %v9345, %v9558
      %v9634 = vadd.f32 %v9346, %v9560
      %v9635 = vadd.f32 %v9347, %v9563
      %v9636 = vadd.f32 %v9348, %v9565
      %v9637 = vadd.f32 %v9349, %v9568
      %v9638 = vadd.f32 %v9350, %v9570
      %v9639 = vadd.f32 %v9351, %v9573
      %v9640 = vadd.f32 %v9352, %v9575
      %v9641 = vrot.slane %v3554, 6
      %v9642 = vrot.slane %v3557, 7
      %v9643 = vor.u32 %v9641, %v9642
      %v9644 = vsel %vm2958, %v3088, %v9643
      %v9645 = vrot.slane %v4766, 6
      %v9646 = vrot.slane %v4769, 7
      %v9647 = vor.u32 %v9645, %v9646
      %v9648 = vsel %vm2958, %v9643, %v9647
      %v9649 = vrot.slane %v4775, 6
      %v9650 = vrot.slane %v4778, 7
      %v9651 = vor.u32 %v9649, %v9650
      %v9652 = vsel %vm2958, %v9647, %v9651
      %v9653 = vrot.slane %v4784, 6
      %v9654 = vrot.slane %v4787, 7
      %v9655 = vor.u32 %v9653, %v9654
      %v9656 = vsel %vm2958, %v9651, %v9655
      %v9657 = vrot.slane %v4793, 6
      %v9658 = vrot.slane %v4796, 7
      %v9659 = vor.u32 %v9657, %v9658
      %v9660 = vsel %vm2958, %v9655, %v9659
      %v9661 = vrot.slane %v4802, 6
      %v9662 = vrot.slane %v4805, 7
      %v9663 = vor.u32 %v9661, %v9662
      %v9664 = vsel %vm2958, %v9659, %v9663
      %v9665 = vrot.slane %v6750, 6
      %v9666 = vrot.slane %v6358, 7
      %v9667 = vor.u32 %v9665, %v9666
      %v9668 = vsel %vm2958, %v9663, %v9667
      %v9669 = vrot.slane %v7781, 6
      %v9670 = vrot.slane %v7784, 7
      %v9671 = vor.u32 %v9669, %v9670
      %v9672 = vsel %vm2958, %v9667, %v9671
      %v9673 = vrot.slane %v7790, 6
      %v9674 = vrot.slane %v7793, 7
      %v9675 = vor.u32 %v9673, %v9674
      %v9676 = vsel %vm2958, %v9671, %v9675
      %v9677 = vrot.slane %v7799, 6
      %v9678 = vrot.slane %v7802, 7
      %v9679 = vor.u32 %v9677, %v9678
      %v9680 = vsel %vm2958, %v9675, %v9679
      %v9681 = vrot.slane %v7808, 6
      %v9682 = vrot.slane %v7811, 7
      %v9683 = vor.u32 %v9681, %v9682
      %v9684 = vsel %vm2958, %v9679, %v9683
      %v9685 = vrot.slane %v7817, 6
      %v9686 = vrot.slane %v7820, 7
      %v9687 = vor.u32 %v9685, %v9686
      %v9688 = vsel %vm2958, %v9683, %v9687
      %v9689 = vrot.slane %v8666, 6
      %v9690 = vrot.slane %v8669, 7
      %v9691 = vor.u32 %v9689, %v9690
      %v9692 = vsel %vm2958, %v9687, %v9691
      %v9695 = vunpack.c.l.b16 %v745
      %v9696 = vunpack.c.l.b16 %v746
      %v9697 = vpack.c.b16 %v9696, %v9695
      %v9700 = vsel %vm823, %v9644, 0
      %v9703 = vsel %vm823, %v9648, 0
      %v9706 = vsel %vm823, %v9652, 0
      %v9709 = vsel %vm823, %v9656, 0
      %v9712 = vsel %vm823, %v9660, 0
      %v9715 = vsel %vm823, %v9664, 0
      %v9718 = vsel %vm823, %v9668, 0
      %v9721 = vsel %vm823, %v9672, 0
      %v9724 = vsel %vm823, %v9676, 0
      %v9727 = vsel %vm823, %v9680, 0
      %v9730 = vsel %vm823, %v9684, 0
      %v9733 = vsel %vm823, %v9688, 0
      %v9736 = vsel %vm823, %v9692, 0
      %9738 = vmatpush.bf16.msra.mxu0 0
      %9739 = vmatpush.bf16.msra.mxu0 0
      %9740 = vmatpush.bf16.msra.mxu0 0
      %9741 = vmatpush.bf16.msra.mxu0 0
      %9742 = vmatpush.bf16.msra.mxu0 0
      %9743 = vmatpush.bf16.msra.mxu0 0
      %9744 = vmatpush.bf16.msra.mxu0 0
      %9745 = vmatpush.bf16.msra.mxu0 %v9697
      %9746 = vmatmul.bf16.gmra.mxu0 %v3136
      %v9747 = vpop.f32.mrf.mxu0
      %v9748 = vadd.f32 0.0, %v9747
      %v9749 = vpop.f32.mrf.mxu0
      %v9750 = vadd.f32 0.0, %v9749
      %9751 = vmatmul.bf16.gmra.mxu0 %v3139
      %v9752 = vpop.f32.mrf.mxu0
      %v9753 = vadd.f32 0.0, %v9752
      %v9754 = vpop.f32.mrf.mxu0
      %v9755 = vadd.f32 0.0, %v9754
      %9756 = vmatmul.bf16.gmra.mxu0 %v3142
      %v9757 = vpop.f32.mrf.mxu0
      %v9758 = vadd.f32 0.0, %v9757
      %v9759 = vpop.f32.mrf.mxu0
      %v9760 = vadd.f32 0.0, %v9759
      %9761 = vmatmul.bf16.gmra.mxu0 %v3145
      %v9762 = vpop.f32.mrf.mxu0
      %v9763 = vadd.f32 0.0, %v9762
      %v9764 = vpop.f32.mrf.mxu0
      %v9765 = vadd.f32 0.0, %v9764
      %9766 = vmatmul.bf16.gmra.mxu0 %v3148
      %v9767 = vpop.f32.mrf.mxu0
      %v9768 = vadd.f32 0.0, %v9767
      %v9769 = vpop.f32.mrf.mxu0
      %v9770 = vadd.f32 0.0, %v9769
      %9771 = vmatmul.bf16.gmra.mxu0 %v3151
      %v9772 = vpop.f32.mrf.mxu0
      %v9773 = vadd.f32 0.0, %v9772
      %v9774 = vpop.f32.mrf.mxu0
      %v9775 = vadd.f32 0.0, %v9774
      %9776 = vmatmul.bf16.gmra.mxu0 %v3154
      %v9777 = vpop.f32.mrf.mxu0
      %v9778 = vadd.f32 0.0, %v9777
      %v9779 = vpop.f32.mrf.mxu0
      %v9780 = vadd.f32 0.0, %v9779
      %9781 = vmatmul.bf16.gmra.mxu0 %v3157
      %v9782 = vpop.f32.mrf.mxu0
      %v9783 = vadd.f32 0.0, %v9782
      %v9784 = vpop.f32.mrf.mxu0
      %v9785 = vadd.f32 0.0, %v9784
      %9786 = vmatmul.bf16.gmra.mxu0 %v3160
      %v9787 = vpop.f32.mrf.mxu0
      %v9788 = vadd.f32 0.0, %v9787
      %v9789 = vpop.f32.mrf.mxu0
      %v9790 = vadd.f32 0.0, %v9789
      %9791 = vmatmul.bf16.gmra.mxu0 %v3163
      %v9792 = vpop.f32.mrf.mxu0
      %v9793 = vadd.f32 0.0, %v9792
      %v9794 = vpop.f32.mrf.mxu0
      %v9795 = vadd.f32 0.0, %v9794
      %9796 = vmatmul.bf16.gmra.mxu0 %v3166
      %v9797 = vpop.f32.mrf.mxu0
      %v9798 = vadd.f32 0.0, %v9797
      %v9799 = vpop.f32.mrf.mxu0
      %v9800 = vadd.f32 0.0, %v9799
      %9801 = vmatmul.bf16.gmra.mxu0 %v3169
      %v9802 = vpop.f32.mrf.mxu0
      %v9803 = vadd.f32 0.0, %v9802
      %v9804 = vpop.f32.mrf.mxu0
      %v9805 = vadd.f32 0.0, %v9804
      %9806 = vmatmul.bf16.gmra.mxu0 %v3172
      %v9807 = vpop.f32.mrf.mxu0
      %v9808 = vadd.f32 0.0, %v9807
      %v9809 = vpop.f32.mrf.mxu0
      %v9810 = vadd.f32 0.0, %v9809
      %9811 = vmatmul.bf16.gmra.mxu0 %v3175
      %v9812 = vpop.f32.mrf.mxu0
      %v9813 = vadd.f32 0.0, %v9812
      %v9814 = vpop.f32.mrf.mxu0
      %v9815 = vadd.f32 0.0, %v9814
      %9816 = vmatmul.bf16.gmra.mxu0 %v3178
      %v9817 = vpop.f32.mrf.mxu0
      %v9818 = vadd.f32 0.0, %v9817
      %v9819 = vpop.f32.mrf.mxu0
      %v9820 = vadd.f32 0.0, %v9819
      %9821 = vmatmul.bf16.gmra.mxu0 %v3181
      %v9822 = vpop.f32.mrf.mxu0
      %v9823 = vadd.f32 0.0, %v9822
      %v9824 = vpop.f32.mrf.mxu0
      %v9825 = vadd.f32 0.0, %v9824
      %9826 = vmatmul.bf16.gmra.mxu0 %v3184
      %v9827 = vpop.f32.mrf.mxu0
      %v9828 = vadd.f32 0.0, %v9827
      %v9829 = vpop.f32.mrf.mxu0
      %v9830 = vadd.f32 0.0, %v9829
      %9831 = vmatmul.bf16.gmra.mxu0 %v3187
      %v9832 = vpop.f32.mrf.mxu0
      %v9833 = vadd.f32 0.0, %v9832
      %v9834 = vpop.f32.mrf.mxu0
      %v9835 = vadd.f32 0.0, %v9834
      %9836 = vmatmul.bf16.gmra.mxu0 %v3190
      %v9837 = vpop.f32.mrf.mxu0
      %v9838 = vadd.f32 0.0, %v9837
      %v9839 = vpop.f32.mrf.mxu0
      %v9840 = vadd.f32 0.0, %v9839
      %9841 = vmatmul.bf16.gmra.mxu0 %v9700
      %v9842 = vpop.f32.mrf.mxu0
      %v9843 = vadd.f32 0.0, %v9842
      %v9844 = vpop.f32.mrf.mxu0
      %v9845 = vadd.f32 0.0, %v9844
      %9846 = vmatmul.bf16.gmra.mxu0 %v9703
      %v9847 = vpop.f32.mrf.mxu0
      %v9848 = vadd.f32 0.0, %v9847
      %v9849 = vpop.f32.mrf.mxu0
      %v9850 = vadd.f32 0.0, %v9849
      %9851 = vmatmul.bf16.gmra.mxu0 %v9706
      %v9852 = vpop.f32.mrf.mxu0
      %v9853 = vadd.f32 0.0, %v9852
      %v9854 = vpop.f32.mrf.mxu0
      %v9855 = vadd.f32 0.0, %v9854
      %9856 = vmatmul.bf16.gmra.mxu0 %v9709
      %v9857 = vpop.f32.mrf.mxu0
      %v9858 = vadd.f32 0.0, %v9857
      %v9859 = vpop.f32.mrf.mxu0
      %v9860 = vadd.f32 0.0, %v9859
      %9861 = vmatmul.bf16.gmra.mxu0 %v9712
      %v9862 = vpop.f32.mrf.mxu0
      %v9863 = vadd.f32 0.0, %v9862
      %v9864 = vpop.f32.mrf.mxu0
      %v9865 = vadd.f32 0.0, %v9864
      %9866 = vmatmul.bf16.gmra.mxu0 %v9715
      %v9867 = vpop.f32.mrf.mxu0
      %v9868 = vadd.f32 0.0, %v9867
      %v9869 = vpop.f32.mrf.mxu0
      %v9870 = vadd.f32 0.0, %v9869
      %9871 = vmatmul.bf16.gmra.mxu0 %v9718
      %v9872 = vpop.f32.mrf.mxu0
      %v9873 = vadd.f32 0.0, %v9872
      %v9874 = vpop.f32.mrf.mxu0
      %v9875 = vadd.f32 0.0, %v9874
      %9876 = vmatmul.bf16.gmra.mxu0 %v9721
      %v9877 = vpop.f32.mrf.mxu0
      %v9878 = vadd.f32 0.0, %v9877
      %v9879 = vpop.f32.mrf.mxu0
      %v9880 = vadd.f32 0.0, %v9879
      %9881 = vmatmul.bf16.gmra.mxu0 %v9724
      %v9882 = vpop.f32.mrf.mxu0
      %v9883 = vadd.f32 0.0, %v9882
      %v9884 = vpop.f32.mrf.mxu0
      %v9885 = vadd.f32 0.0, %v9884
      %9886 = vmatmul.bf16.gmra.mxu0 %v9727
      %v9887 = vpop.f32.mrf.mxu0
      %v9888 = vadd.f32 0.0, %v9887
      %v9889 = vpop.f32.mrf.mxu0
      %v9890 = vadd.f32 0.0, %v9889
      %9891 = vmatmul.bf16.gmra.mxu0 %v9730
      %v9892 = vpop.f32.mrf.mxu0
      %v9893 = vadd.f32 0.0, %v9892
      %v9894 = vpop.f32.mrf.mxu0
      %v9895 = vadd.f32 0.0, %v9894
      %9896 = vmatmul.bf16.gmra.mxu0 %v9733
      %v9897 = vpop.f32.mrf.mxu0
      %v9898 = vadd.f32 0.0, %v9897
      %v9899 = vpop.f32.mrf.mxu0
      %v9900 = vadd.f32 0.0, %v9899
      %9901 = vmatmul.bf16.gmra.mxu0 %v9736
      %v9902 = vpop.f32.mrf.mxu0
      %v9903 = vadd.f32 0.0, %v9902
      %v9904 = vpop.f32.mrf.mxu0
      %v9905 = vadd.f32 0.0, %v9904
      %9906 = vdwg.mxu0
      %v9907 = vadd.f32 %v9577, %v9748
      %v9908 = vadd.f32 %v9578, %v9750
      %v9909 = vadd.f32 %v9579, %v9753
      %v9910 = vadd.f32 %v9580, %v9755
      %v9911 = vadd.f32 %v9581, %v9758
      %v9912 = vadd.f32 %v9582, %v9760
      %v9913 = vadd.f32 %v9583, %v9763
      %v9914 = vadd.f32 %v9584, %v9765
      %v9915 = vadd.f32 %v9585, %v9768
      %v9916 = vadd.f32 %v9586, %v9770
      %v9917 = vadd.f32 %v9587, %v9773
      %v9918 = vadd.f32 %v9588, %v9775
      %v9919 = vadd.f32 %v9589, %v9778
      %v9920 = vadd.f32 %v9590, %v9780
      %v9921 = vadd.f32 %v9591, %v9783
      %v9922 = vadd.f32 %v9592, %v9785
      %v9923 = vadd.f32 %v9593, %v9788
      %v9924 = vadd.f32 %v9594, %v9790
      %v9925 = vadd.f32 %v9595, %v9793
      %v9926 = vadd.f32 %v9596, %v9795
      %v9927 = vadd.f32 %v9597, %v9798
      %v9928 = vadd.f32 %v9598, %v9800
      %v9929 = vadd.f32 %v9599, %v9803
      %v9930 = vadd.f32 %v9600, %v9805
      %v9931 = vadd.f32 %v9601, %v9808
      %v9932 = vadd.f32 %v9602, %v9810
      %v9933 = vadd.f32 %v9603, %v9813
      %v9934 = vadd.f32 %v9604, %v9815
      %v9935 = vadd.f32 %v9605, %v9818
      %v9936 = vadd.f32 %v9606, %v9820
      %v9937 = vadd.f32 %v9607, %v9823
      %v9938 = vadd.f32 %v9608, %v9825
      %v9939 = vadd.f32 %v9609, %v9828
      %v9940 = vadd.f32 %v9610, %v9830
      %v9941 = vadd.f32 %v9611, %v9833
      %v9942 = vadd.f32 %v9612, %v9835
      %v9943 = vadd.f32 %v9613, %v9838
      %v9944 = vadd.f32 %v9614, %v9840
      %v9945 = vadd.f32 %v9615, %v9843
      %v9946 = vadd.f32 %v9616, %v9845
      %v9947 = vadd.f32 %v9617, %v9848
      %v9948 = vadd.f32 %v9618, %v9850
      %v9949 = vadd.f32 %v9619, %v9853
      %v9950 = vadd.f32 %v9620, %v9855
      %v9951 = vadd.f32 %v9621, %v9858
      %v9952 = vadd.f32 %v9622, %v9860
      %v9953 = vadd.f32 %v9623, %v9863
      %v9954 = vadd.f32 %v9624, %v9865
      %v9955 = vadd.f32 %v9625, %v9868
      %v9956 = vadd.f32 %v9626, %v9870
      %v9957 = vadd.f32 %v9627, %v9873
      %v9958 = vadd.f32 %v9628, %v9875
      %v9959 = vadd.f32 %v9629, %v9878
      %v9960 = vadd.f32 %v9630, %v9880
      %v9961 = vadd.f32 %v9631, %v9883
      %v9962 = vadd.f32 %v9632, %v9885
      %v9963 = vadd.f32 %v9633, %v9888
      %v9964 = vadd.f32 %v9634, %v9890
      %v9965 = vadd.f32 %v9635, %v9893
      %v9966 = vadd.f32 %v9636, %v9895
      %v9967 = vadd.f32 %v9637, %v9898
      %v9968 = vadd.f32 %v9638, %v9900
      %v9969 = vadd.f32 %v9639, %v9903
      %v9970 = vadd.f32 %v9640, %v9905
      %vm9971 = vcmask 1040384
      %v9972 = vrot.slane %v636, 7
      %v9973 = vrot.slane %v637, 7
      %v9974 = vsel %vm9971, %v9972, %v9973
      %v9975 = vrot.slane %v638, 7
      %v9976 = vsel %vm9971, %v9973, %v9975
      %v9977 = vrot.slane %v639, 7
      %v9978 = vsel %vm9971, %v9975, %v9977
      %v9979 = vrot.slane %v640, 7
      %v9980 = vsel %vm9971, %v9977, %v9979
      %v9981 = vrot.slane %v641, 7
      %v9982 = vsel %vm9971, %v9979, %v9981
      %v9983 = vrot.slane %v642, 7
      %v9984 = vsel %vm9971, %v9981, %v9983
      %v9985 = vrot.slane %v643, 7
      %v9986 = vsel %vm9971, %v9983, %v9985
      %v9987 = vrot.slane %v644, 7
      %v9988 = vsel %vm9971, %v9985, %v9987
      %v9989 = vrot.slane %v645, 7
      %v9990 = vsel %vm9971, %v9987, %v9989
      %v9991 = vrot.slane %v646, 7
      %v9992 = vsel %vm9971, %v9989, %v9991
      %v9993 = vrot.slane %v647, 7
      %v9994 = vsel %vm9971, %v9991, %v9993
      %v9995 = vrot.slane %v648, 7
      %v9996 = vsel %vm9971, %v9993, %v9995
      %v9997 = vrot.slane %v649, 7
      %v9998 = vsel %vm9971, %v9995, %v9997
      %v9999 = vrot.slane %v650, 7
      %v10000 = vsel %vm9971, %v9997, %v9999
      %v10001 = vrot.slane %v651, 7
      %v10002 = vsel %vm9971, %v9999, %v10001
      %v10003 = vrot.slane %v652, 7
      %v10004 = vsel %vm9971, %v10001, %v10003
      %v10005 = vrot.slane %v653, 7
      %v10006 = vsel %vm9971, %v10003, %v10005
      %v10007 = vrot.slane %v654, 7
      %v10008 = vsel %vm9971, %v10005, %v10007
      %v10009 = vrot.slane %v655, 7
      %v10010 = vsel %vm9971, %v10007, %v10009
      %v10011 = vrot.slane %v656, 7
      %v10012 = vsel %vm9971, %v10009, %v10011
      %v10013 = vrot.slane %v657, 7
      %v10014 = vsel %vm9971, %v10011, %v10013
      %v10015 = vrot.slane %v658, 7
      %v10016 = vsel %vm9971, %v10013, %v10015
      %v10017 = vrot.slane %v659, 7
      %v10018 = vsel %vm9971, %v10015, %v10017
      %v10019 = vrot.slane %v660, 7
      %v10020 = vsel %vm9971, %v10017, %v10019
      %v10021 = vrot.slane %v661, 7
      %v10022 = vsel %vm9971, %v10019, %v10021
      %v10023 = vrot.slane %v690, 7
      %v10024 = vsel %vm9971, %v10021, %v10023
      %v10025 = vrot.slane %v691, 7
      %v10026 = vsel %vm9971, %v10023, %v10025
      %v10027 = vrot.slane %v692, 7
      %v10028 = vsel %vm9971, %v10025, %v10027
      %v10029 = vrot.slane %v693, 7
      %v10030 = vsel %vm9971, %v10027, %v10029
      %v10031 = vrot.slane %v694, 7
      %v10032 = vsel %vm9971, %v10029, %v10031
      %v10033 = vrot.slane %v695, 7
      %v10034 = vsel %vm9971, %v10031, %v10033
      %v10035 = vrot.slane %v696, 7
      %v10036 = vsel %vm9971, %v10033, %v10035
      %v10039 = vunpack.c.l.b16 %v747
      %v10040 = vunpack.c.l.b16 %v748
      %v10041 = vpack.c.b16 %v10040, %v10039
      %v10044 = vsel %vm823, %v9974, 0
      %v10047 = vsel %vm823, %v9976, 0
      %v10050 = vsel %vm823, %v9978, 0
      %v10053 = vsel %vm823, %v9980, 0
      %v10056 = vsel %vm823, %v9982, 0
      %v10059 = vsel %vm823, %v9984, 0
      %v10062 = vsel %vm823, %v9986, 0
      %v10065 = vsel %vm823, %v9988, 0
      %v10068 = vsel %vm823, %v9990, 0
      %v10071 = vsel %vm823, %v9992, 0
      %v10074 = vsel %vm823, %v9994, 0
      %v10077 = vsel %vm823, %v9996, 0
      %v10080 = vsel %vm823, %v9998, 0
      %v10083 = vsel %vm823, %v10000, 0
      %v10086 = vsel %vm823, %v10002, 0
      %v10089 = vsel %vm823, %v10004, 0
      %v10092 = vsel %vm823, %v10006, 0
      %v10095 = vsel %vm823, %v10008, 0
      %v10098 = vsel %vm823, %v10010, 0
      %v10101 = vsel %vm823, %v10012, 0
      %v10104 = vsel %vm823, %v10014, 0
      %v10107 = vsel %vm823, %v10016, 0
      %v10110 = vsel %vm823, %v10018, 0
      %v10113 = vsel %vm823, %v10020, 0
      %v10116 = vsel %vm823, %v10022, 0
      %v10119 = vsel %vm823, %v10024, 0
      %v10122 = vsel %vm823, %v10026, 0
      %v10125 = vsel %vm823, %v10028, 0
      %v10128 = vsel %vm823, %v10030, 0
      %v10131 = vsel %vm823, %v10032, 0
      %v10134 = vsel %vm823, %v10034, 0
      %v10137 = vsel %vm823, %v10036, 0
      %10139 = vmatpush.bf16.msra.mxu0 0
      %10140 = vmatpush.bf16.msra.mxu0 0
      %10141 = vmatpush.bf16.msra.mxu0 0
      %10142 = vmatpush.bf16.msra.mxu0 0
      %10143 = vmatpush.bf16.msra.mxu0 0
      %10144 = vmatpush.bf16.msra.mxu0 0
      %10145 = vmatpush.bf16.msra.mxu0 0
      %10146 = vmatpush.bf16.msra.mxu0 %v10041
      %10147 = vmatmul.bf16.gmra.mxu0 %v10044
      %v10148 = vpop.f32.mrf.mxu0
      %v10149 = vadd.f32 0.0, %v10148
      %v10150 = vpop.f32.mrf.mxu0
      %v10151 = vadd.f32 0.0, %v10150
      %10152 = vmatmul.bf16.gmra.mxu0 %v10047
      %v10153 = vpop.f32.mrf.mxu0
      %v10154 = vadd.f32 0.0, %v10153
      %v10155 = vpop.f32.mrf.mxu0
      %v10156 = vadd.f32 0.0, %v10155
      %10157 = vmatmul.bf16.gmra.mxu0 %v10050
      %v10158 = vpop.f32.mrf.mxu0
      %v10159 = vadd.f32 0.0, %v10158
      %v10160 = vpop.f32.mrf.mxu0
      %v10161 = vadd.f32 0.0, %v10160
      %10162 = vmatmul.bf16.gmra.mxu0 %v10053
      %v10163 = vpop.f32.mrf.mxu0
      %v10164 = vadd.f32 0.0, %v10163
      %v10165 = vpop.f32.mrf.mxu0
      %v10166 = vadd.f32 0.0, %v10165
      %10167 = vmatmul.bf16.gmra.mxu0 %v10056
      %v10168 = vpop.f32.mrf.mxu0
      %v10169 = vadd.f32 0.0, %v10168
      %v10170 = vpop.f32.mrf.mxu0
      %v10171 = vadd.f32 0.0, %v10170
      %10172 = vmatmul.bf16.gmra.mxu0 %v10059
      %v10173 = vpop.f32.mrf.mxu0
      %v10174 = vadd.f32 0.0, %v10173
      %v10175 = vpop.f32.mrf.mxu0
      %v10176 = vadd.f32 0.0, %v10175
      %10177 = vmatmul.bf16.gmra.mxu0 %v10062
      %v10178 = vpop.f32.mrf.mxu0
      %v10179 = vadd.f32 0.0, %v10178
      %v10180 = vpop.f32.mrf.mxu0
      %v10181 = vadd.f32 0.0, %v10180
      %10182 = vmatmul.bf16.gmra.mxu0 %v10065
      %v10183 = vpop.f32.mrf.mxu0
      %v10184 = vadd.f32 0.0, %v10183
      %v10185 = vpop.f32.mrf.mxu0
      %v10186 = vadd.f32 0.0, %v10185
      %10187 = vmatmul.bf16.gmra.mxu0 %v10068
      %v10188 = vpop.f32.mrf.mxu0
      %v10189 = vadd.f32 0.0, %v10188
      %v10190 = vpop.f32.mrf.mxu0
      %v10191 = vadd.f32 0.0, %v10190
      %10192 = vmatmul.bf16.gmra.mxu0 %v10071
      %v10193 = vpop.f32.mrf.mxu0
      %v10194 = vadd.f32 0.0, %v10193
      %v10195 = vpop.f32.mrf.mxu0
      %v10196 = vadd.f32 0.0, %v10195
      %10197 = vmatmul.bf16.gmra.mxu0 %v10074
      %v10198 = vpop.f32.mrf.mxu0
      %v10199 = vadd.f32 0.0, %v10198
      %v10200 = vpop.f32.mrf.mxu0
      %v10201 = vadd.f32 0.0, %v10200
      %10202 = vmatmul.bf16.gmra.mxu0 %v10077
      %v10203 = vpop.f32.mrf.mxu0
      %v10204 = vadd.f32 0.0, %v10203
      %v10205 = vpop.f32.mrf.mxu0
      %v10206 = vadd.f32 0.0, %v10205
      %10207 = vmatmul.bf16.gmra.mxu0 %v10080
      %v10208 = vpop.f32.mrf.mxu0
      %v10209 = vadd.f32 0.0, %v10208
      %v10210 = vpop.f32.mrf.mxu0
      %v10211 = vadd.f32 0.0, %v10210
      %10212 = vmatmul.bf16.gmra.mxu0 %v10083
      %v10213 = vpop.f32.mrf.mxu0
      %v10214 = vadd.f32 0.0, %v10213
      %v10215 = vpop.f32.mrf.mxu0
      %v10216 = vadd.f32 0.0, %v10215
      %10217 = vmatmul.bf16.gmra.mxu0 %v10086
      %v10218 = vpop.f32.mrf.mxu0
      %v10219 = vadd.f32 0.0, %v10218
      %v10220 = vpop.f32.mrf.mxu0
      %v10221 = vadd.f32 0.0, %v10220
      %10222 = vmatmul.bf16.gmra.mxu0 %v10089
      %v10223 = vpop.f32.mrf.mxu0
      %v10224 = vadd.f32 0.0, %v10223
      %v10225 = vpop.f32.mrf.mxu0
      %v10226 = vadd.f32 0.0, %v10225
      %10227 = vmatmul.bf16.gmra.mxu0 %v10092
      %v10228 = vpop.f32.mrf.mxu0
      %v10229 = vadd.f32 0.0, %v10228
      %v10230 = vpop.f32.mrf.mxu0
      %v10231 = vadd.f32 0.0, %v10230
      %10232 = vmatmul.bf16.gmra.mxu0 %v10095
      %v10233 = vpop.f32.mrf.mxu0
      %v10234 = vadd.f32 0.0, %v10233
      %v10235 = vpop.f32.mrf.mxu0
      %v10236 = vadd.f32 0.0, %v10235
      %10237 = vmatmul.bf16.gmra.mxu0 %v10098
      %v10238 = vpop.f32.mrf.mxu0
      %v10239 = vadd.f32 0.0, %v10238
      %v10240 = vpop.f32.mrf.mxu0
      %v10241 = vadd.f32 0.0, %v10240
      %10242 = vmatmul.bf16.gmra.mxu0 %v10101
      %v10243 = vpop.f32.mrf.mxu0
      %v10244 = vadd.f32 0.0, %v10243
      %v10245 = vpop.f32.mrf.mxu0
      %v10246 = vadd.f32 0.0, %v10245
      %10247 = vmatmul.bf16.gmra.mxu0 %v10104
      %v10248 = vpop.f32.mrf.mxu0
      %v10249 = vadd.f32 0.0, %v10248
      %v10250 = vpop.f32.mrf.mxu0
      %v10251 = vadd.f32 0.0, %v10250
      %10252 = vmatmul.bf16.gmra.mxu0 %v10107
      %v10253 = vpop.f32.mrf.mxu0
      %v10254 = vadd.f32 0.0, %v10253
      %v10255 = vpop.f32.mrf.mxu0
      %v10256 = vadd.f32 0.0, %v10255
      %10257 = vmatmul.bf16.gmra.mxu0 %v10110
      %v10258 = vpop.f32.mrf.mxu0
      %v10259 = vadd.f32 0.0, %v10258
      %v10260 = vpop.f32.mrf.mxu0
      %v10261 = vadd.f32 0.0, %v10260
      %10262 = vmatmul.bf16.gmra.mxu0 %v10113
      %v10263 = vpop.f32.mrf.mxu0
      %v10264 = vadd.f32 0.0, %v10263
      %v10265 = vpop.f32.mrf.mxu0
      %v10266 = vadd.f32 0.0, %v10265
      %10267 = vmatmul.bf16.gmra.mxu0 %v10116
      %v10268 = vpop.f32.mrf.mxu0
      %v10269 = vadd.f32 0.0, %v10268
      %v10270 = vpop.f32.mrf.mxu0
      %v10271 = vadd.f32 0.0, %v10270
      %10272 = vmatmul.bf16.gmra.mxu0 %v10119
      %v10273 = vpop.f32.mrf.mxu0
      %v10274 = vadd.f32 0.0, %v10273
      %v10275 = vpop.f32.mrf.mxu0
      %v10276 = vadd.f32 0.0, %v10275
      %10277 = vmatmul.bf16.gmra.mxu0 %v10122
      %v10278 = vpop.f32.mrf.mxu0
      %v10279 = vadd.f32 0.0, %v10278
      %v10280 = vpop.f32.mrf.mxu0
      %v10281 = vadd.f32 0.0, %v10280
      %10282 = vmatmul.bf16.gmra.mxu0 %v10125
      %v10283 = vpop.f32.mrf.mxu0
      %v10284 = vadd.f32 0.0, %v10283
      %v10285 = vpop.f32.mrf.mxu0
      %v10286 = vadd.f32 0.0, %v10285
      %10287 = vmatmul.bf16.gmra.mxu0 %v10128
      %v10288 = vpop.f32.mrf.mxu0
      %v10289 = vadd.f32 0.0, %v10288
      %v10290 = vpop.f32.mrf.mxu0
      %v10291 = vadd.f32 0.0, %v10290
      %10292 = vmatmul.bf16.gmra.mxu0 %v10131
      %v10293 = vpop.f32.mrf.mxu0
      %v10294 = vadd.f32 0.0, %v10293
      %v10295 = vpop.f32.mrf.mxu0
      %v10296 = vadd.f32 0.0, %v10295
      %10297 = vmatmul.bf16.gmra.mxu0 %v10134
      %v10298 = vpop.f32.mrf.mxu0
      %v10299 = vadd.f32 0.0, %v10298
      %v10300 = vpop.f32.mrf.mxu0
      %v10301 = vadd.f32 0.0, %v10300
      %10302 = vmatmul.bf16.gmra.mxu0 %v10137
      %v10303 = vpop.f32.mrf.mxu0
      %v10304 = vadd.f32 0.0, %v10303
      %v10305 = vpop.f32.mrf.mxu0
      %v10306 = vadd.f32 0.0, %v10305
      %10307 = vdwg.mxu0
      %v10308 = vadd.f32 %v9907, %v10149
      %v10309 = vadd.f32 %v9908, %v10151
      %v10310 = vadd.f32 %v9909, %v10154
      %v10311 = vadd.f32 %v9910, %v10156
      %v10312 = vadd.f32 %v9911, %v10159
      %v10313 = vadd.f32 %v9912, %v10161
      %v10314 = vadd.f32 %v9913, %v10164
      %v10315 = vadd.f32 %v9914, %v10166
      %v10316 = vadd.f32 %v9915, %v10169
      %v10317 = vadd.f32 %v9916, %v10171
      %v10318 = vadd.f32 %v9917, %v10174
      %v10319 = vadd.f32 %v9918, %v10176
      %v10320 = vadd.f32 %v9919, %v10179
      %v10321 = vadd.f32 %v9920, %v10181
      %v10322 = vadd.f32 %v9921, %v10184
      %v10323 = vadd.f32 %v9922, %v10186
      %v10324 = vadd.f32 %v9923, %v10189
      %v10325 = vadd.f32 %v9924, %v10191
      %v10326 = vadd.f32 %v9925, %v10194
      %v10327 = vadd.f32 %v9926, %v10196
      %v10328 = vadd.f32 %v9927, %v10199
      %v10329 = vadd.f32 %v9928, %v10201
      %v10330 = vadd.f32 %v9929, %v10204
      %v10331 = vadd.f32 %v9930, %v10206
      %v10332 = vadd.f32 %v9931, %v10209
      %v10333 = vadd.f32 %v9932, %v10211
      %v10334 = vadd.f32 %v9933, %v10214
      %v10335 = vadd.f32 %v9934, %v10216
      %v10336 = vadd.f32 %v9935, %v10219
      %v10337 = vadd.f32 %v9936, %v10221
      %v10338 = vadd.f32 %v9937, %v10224
      %v10339 = vadd.f32 %v9938, %v10226
      %v10340 = vadd.f32 %v9939, %v10229
      %v10341 = vadd.f32 %v9940, %v10231
      %v10342 = vadd.f32 %v9941, %v10234
      %v10343 = vadd.f32 %v9942, %v10236
      %v10344 = vadd.f32 %v9943, %v10239
      %v10345 = vadd.f32 %v9944, %v10241
      %v10346 = vadd.f32 %v9945, %v10244
      %v10347 = vadd.f32 %v9946, %v10246
      %v10348 = vadd.f32 %v9947, %v10249
      %v10349 = vadd.f32 %v9948, %v10251
      %v10350 = vadd.f32 %v9949, %v10254
      %v10351 = vadd.f32 %v9950, %v10256
      %v10352 = vadd.f32 %v9951, %v10259
      %v10353 = vadd.f32 %v9952, %v10261
      %v10354 = vadd.f32 %v9953, %v10264
      %v10355 = vadd.f32 %v9954, %v10266
      %v10356 = vadd.f32 %v9955, %v10269
      %v10357 = vadd.f32 %v9956, %v10271
      %v10358 = vadd.f32 %v9957, %v10274
      %v10359 = vadd.f32 %v9958, %v10276
      %v10360 = vadd.f32 %v9959, %v10279
      %v10361 = vadd.f32 %v9960, %v10281
      %v10362 = vadd.f32 %v9961, %v10284
      %v10363 = vadd.f32 %v9962, %v10286
      %v10364 = vadd.f32 %v9963, %v10289
      %v10365 = vadd.f32 %v9964, %v10291
      %v10366 = vadd.f32 %v9965, %v10294
      %v10367 = vadd.f32 %v9966, %v10296
      %v10368 = vadd.f32 %v9967, %v10299
      %v10369 = vadd.f32 %v9968, %v10301
      %v10370 = vadd.f32 %v9969, %v10304
      %v10371 = vadd.f32 %v9970, %v10306
      %v10372 = vrot.slane %v6750, 7
      %v10373 = vor.u32 %v10372, %v6358
      %v10374 = vsel %vm5602, %v5697, %v10373
      %v10375 = vrot.slane %v7781, 7
      %v10376 = vor.u32 %v10375, %v7784
      %v10377 = vsel %vm5602, %v10372, %v10376
      %v10378 = vrot.slane %v7790, 7
      %v10379 = vor.u32 %v10378, %v7793
      %v10380 = vsel %vm5602, %v10375, %v10379
      %v10381 = vrot.slane %v7799, 7
      %v10382 = vor.u32 %v10381, %v7802
      %v10383 = vsel %vm5602, %v10378, %v10382
      %v10384 = vrot.slane %v7808, 7
      %v10385 = vor.u32 %v10384, %v7811
      %v10386 = vsel %vm5602, %v10381, %v10385
      %v10387 = vrot.slane %v7817, 7
      %v10388 = vor.u32 %v10387, %v7820
      %v10389 = vsel %vm5602, %v10384, %v10388
      %v10390 = vrot.slane %v8666, 7
      %v10391 = vor.u32 %v10390, %v8669
      %v10392 = vsel %vm5602, %v10387, %v10391
      %v10395 = vunpack.c.l.b16 %v749
      %v10396 = vunpack.c.l.b16 %v750
      %v10397 = vpack.c.b16 %v10396, %v10395
      %v10400 = vsel %vm823, %v10374, 0
      %v10403 = vsel %vm823, %v10377, 0
      %v10406 = vsel %vm823, %v10380, 0
      %v10409 = vsel %vm823, %v10383, 0
      %v10412 = vsel %vm823, %v10386, 0
      %v10415 = vsel %vm823, %v10389, 0
      %v10418 = vsel %vm823, %v10392, 0
      %10420 = vmatpush.bf16.msra.mxu0 0
      %10421 = vmatpush.bf16.msra.mxu0 0
      %10422 = vmatpush.bf16.msra.mxu0 0
      %10423 = vmatpush.bf16.msra.mxu0 0
      %10424 = vmatpush.bf16.msra.mxu0 0
      %10425 = vmatpush.bf16.msra.mxu0 0
      %10426 = vmatpush.bf16.msra.mxu0 0
      %10427 = vmatpush.bf16.msra.mxu0 %v10397
      %10428 = vmatmul.bf16.gmra.mxu0 %v5728
      %v10429 = vpop.f32.mrf.mxu0
      %v10430 = vadd.f32 0.0, %v10429
      %v10431 = vpop.f32.mrf.mxu0
      %v10432 = vadd.f32 0.0, %v10431
      %10433 = vmatmul.bf16.gmra.mxu0 %v5731
      %v10434 = vpop.f32.mrf.mxu0
      %v10435 = vadd.f32 0.0, %v10434
      %v10436 = vpop.f32.mrf.mxu0
      %v10437 = vadd.f32 0.0, %v10436
      %10438 = vmatmul.bf16.gmra.mxu0 %v5734
      %v10439 = vpop.f32.mrf.mxu0
      %v10440 = vadd.f32 0.0, %v10439
      %v10441 = vpop.f32.mrf.mxu0
      %v10442 = vadd.f32 0.0, %v10441
      %10443 = vmatmul.bf16.gmra.mxu0 %v5737
      %v10444 = vpop.f32.mrf.mxu0
      %v10445 = vadd.f32 0.0, %v10444
      %v10446 = vpop.f32.mrf.mxu0
      %v10447 = vadd.f32 0.0, %v10446
      %10448 = vmatmul.bf16.gmra.mxu0 %v5740
      %v10449 = vpop.f32.mrf.mxu0
      %v10450 = vadd.f32 0.0, %v10449
      %v10451 = vpop.f32.mrf.mxu0
      %v10452 = vadd.f32 0.0, %v10451
      %10453 = vmatmul.bf16.gmra.mxu0 %v5743
      %v10454 = vpop.f32.mrf.mxu0
      %v10455 = vadd.f32 0.0, %v10454
      %v10456 = vpop.f32.mrf.mxu0
      %v10457 = vadd.f32 0.0, %v10456
      %10458 = vmatmul.bf16.gmra.mxu0 %v5746
      %v10459 = vpop.f32.mrf.mxu0
      %v10460 = vadd.f32 0.0, %v10459
      %v10461 = vpop.f32.mrf.mxu0
      %v10462 = vadd.f32 0.0, %v10461
      %10463 = vmatmul.bf16.gmra.mxu0 %v5749
      %v10464 = vpop.f32.mrf.mxu0
      %v10465 = vadd.f32 0.0, %v10464
      %v10466 = vpop.f32.mrf.mxu0
      %v10467 = vadd.f32 0.0, %v10466
      %10468 = vmatmul.bf16.gmra.mxu0 %v5752
      %v10469 = vpop.f32.mrf.mxu0
      %v10470 = vadd.f32 0.0, %v10469
      %v10471 = vpop.f32.mrf.mxu0
      %v10472 = vadd.f32 0.0, %v10471
      %10473 = vmatmul.bf16.gmra.mxu0 %v5755
      %v10474 = vpop.f32.mrf.mxu0
      %v10475 = vadd.f32 0.0, %v10474
      %v10476 = vpop.f32.mrf.mxu0
      %v10477 = vadd.f32 0.0, %v10476
      %10478 = vmatmul.bf16.gmra.mxu0 %v5758
      %v10479 = vpop.f32.mrf.mxu0
      %v10480 = vadd.f32 0.0, %v10479
      %v10481 = vpop.f32.mrf.mxu0
      %v10482 = vadd.f32 0.0, %v10481
      %10483 = vmatmul.bf16.gmra.mxu0 %v5761
      %v10484 = vpop.f32.mrf.mxu0
      %v10485 = vadd.f32 0.0, %v10484
      %v10486 = vpop.f32.mrf.mxu0
      %v10487 = vadd.f32 0.0, %v10486
      %10488 = vmatmul.bf16.gmra.mxu0 %v5764
      %v10489 = vpop.f32.mrf.mxu0
      %v10490 = vadd.f32 0.0, %v10489
      %v10491 = vpop.f32.mrf.mxu0
      %v10492 = vadd.f32 0.0, %v10491
      %10493 = vmatmul.bf16.gmra.mxu0 %v5767
      %v10494 = vpop.f32.mrf.mxu0
      %v10495 = vadd.f32 0.0, %v10494
      %v10496 = vpop.f32.mrf.mxu0
      %v10497 = vadd.f32 0.0, %v10496
      %10498 = vmatmul.bf16.gmra.mxu0 %v5770
      %v10499 = vpop.f32.mrf.mxu0
      %v10500 = vadd.f32 0.0, %v10499
      %v10501 = vpop.f32.mrf.mxu0
      %v10502 = vadd.f32 0.0, %v10501
      %10503 = vmatmul.bf16.gmra.mxu0 %v5773
      %v10504 = vpop.f32.mrf.mxu0
      %v10505 = vadd.f32 0.0, %v10504
      %v10506 = vpop.f32.mrf.mxu0
      %v10507 = vadd.f32 0.0, %v10506
      %10508 = vmatmul.bf16.gmra.mxu0 %v5776
      %v10509 = vpop.f32.mrf.mxu0
      %v10510 = vadd.f32 0.0, %v10509
      %v10511 = vpop.f32.mrf.mxu0
      %v10512 = vadd.f32 0.0, %v10511
      %10513 = vmatmul.bf16.gmra.mxu0 %v5779
      %v10514 = vpop.f32.mrf.mxu0
      %v10515 = vadd.f32 0.0, %v10514
      %v10516 = vpop.f32.mrf.mxu0
      %v10517 = vadd.f32 0.0, %v10516
      %10518 = vmatmul.bf16.gmra.mxu0 %v5782
      %v10519 = vpop.f32.mrf.mxu0
      %v10520 = vadd.f32 0.0, %v10519
      %v10521 = vpop.f32.mrf.mxu0
      %v10522 = vadd.f32 0.0, %v10521
      %10523 = vmatmul.bf16.gmra.mxu0 %v5785
      %v10524 = vpop.f32.mrf.mxu0
      %v10525 = vadd.f32 0.0, %v10524
      %v10526 = vpop.f32.mrf.mxu0
      %v10527 = vadd.f32 0.0, %v10526
      %10528 = vmatmul.bf16.gmra.mxu0 %v5788
      %v10529 = vpop.f32.mrf.mxu0
      %v10530 = vadd.f32 0.0, %v10529
      %v10531 = vpop.f32.mrf.mxu0
      %v10532 = vadd.f32 0.0, %v10531
      %10533 = vmatmul.bf16.gmra.mxu0 %v5791
      %v10534 = vpop.f32.mrf.mxu0
      %v10535 = vadd.f32 0.0, %v10534
      %v10536 = vpop.f32.mrf.mxu0
      %v10537 = vadd.f32 0.0, %v10536
      %10538 = vmatmul.bf16.gmra.mxu0 %v5794
      %v10539 = vpop.f32.mrf.mxu0
      %v10540 = vadd.f32 0.0, %v10539
      %v10541 = vpop.f32.mrf.mxu0
      %v10542 = vadd.f32 0.0, %v10541
      %10543 = vmatmul.bf16.gmra.mxu0 %v5797
      %v10544 = vpop.f32.mrf.mxu0
      %v10545 = vadd.f32 0.0, %v10544
      %v10546 = vpop.f32.mrf.mxu0
      %v10547 = vadd.f32 0.0, %v10546
      %10548 = vmatmul.bf16.gmra.mxu0 %v5800
      %v10549 = vpop.f32.mrf.mxu0
      %v10550 = vadd.f32 0.0, %v10549
      %v10551 = vpop.f32.mrf.mxu0
      %v10552 = vadd.f32 0.0, %v10551
      %10553 = vmatmul.bf16.gmra.mxu0 %v10400
      %v10554 = vpop.f32.mrf.mxu0
      %v10555 = vadd.f32 0.0, %v10554
      %v10556 = vpop.f32.mrf.mxu0
      %v10557 = vadd.f32 0.0, %v10556
      %10558 = vmatmul.bf16.gmra.mxu0 %v10403
      %v10559 = vpop.f32.mrf.mxu0
      %v10560 = vadd.f32 0.0, %v10559
      %v10561 = vpop.f32.mrf.mxu0
      %v10562 = vadd.f32 0.0, %v10561
      %10563 = vmatmul.bf16.gmra.mxu0 %v10406
      %v10564 = vpop.f32.mrf.mxu0
      %v10565 = vadd.f32 0.0, %v10564
      %v10566 = vpop.f32.mrf.mxu0
      %v10567 = vadd.f32 0.0, %v10566
      %10568 = vmatmul.bf16.gmra.mxu0 %v10409
      %v10569 = vpop.f32.mrf.mxu0
      %v10570 = vadd.f32 0.0, %v10569
      %v10571 = vpop.f32.mrf.mxu0
      %v10572 = vadd.f32 0.0, %v10571
      %10573 = vmatmul.bf16.gmra.mxu0 %v10412
      %v10574 = vpop.f32.mrf.mxu0
      %v10575 = vadd.f32 0.0, %v10574
      %v10576 = vpop.f32.mrf.mxu0
      %v10577 = vadd.f32 0.0, %v10576
      %10578 = vmatmul.bf16.gmra.mxu0 %v10415
      %v10579 = vpop.f32.mrf.mxu0
      %v10580 = vadd.f32 0.0, %v10579
      %v10581 = vpop.f32.mrf.mxu0
      %v10582 = vadd.f32 0.0, %v10581
      %10583 = vmatmul.bf16.gmra.mxu0 %v10418
      %v10584 = vpop.f32.mrf.mxu0
      %v10585 = vadd.f32 0.0, %v10584
      %v10586 = vpop.f32.mrf.mxu0
      %v10587 = vadd.f32 0.0, %v10586
      %10588 = vdwg.mxu0
      %v10589 = vadd.f32 %v10308, %v10430
      %v10590 = vadd.f32 %v10309, %v10432
      %v10591 = vadd.f32 %v10310, %v10435
      %v10592 = vadd.f32 %v10311, %v10437
      %v10593 = vadd.f32 %v10312, %v10440
      %v10594 = vadd.f32 %v10313, %v10442
      %v10595 = vadd.f32 %v10314, %v10445
      %v10596 = vadd.f32 %v10315, %v10447
      %v10597 = vadd.f32 %v10316, %v10450
      %v10598 = vadd.f32 %v10317, %v10452
      %v10599 = vadd.f32 %v10318, %v10455
      %v10600 = vadd.f32 %v10319, %v10457
      %v10601 = vadd.f32 %v10320, %v10460
      %v10602 = vadd.f32 %v10321, %v10462
      %v10603 = vadd.f32 %v10322, %v10465
      %v10604 = vadd.f32 %v10323, %v10467
      %v10605 = vadd.f32 %v10324, %v10470
      %v10606 = vadd.f32 %v10325, %v10472
      %v10607 = vadd.f32 %v10326, %v10475
      %v10608 = vadd.f32 %v10327, %v10477
      %v10609 = vadd.f32 %v10328, %v10480
      %v10610 = vadd.f32 %v10329, %v10482
      %v10611 = vadd.f32 %v10330, %v10485
      %v10612 = vadd.f32 %v10331, %v10487
      %v10613 = vadd.f32 %v10332, %v10490
      %v10614 = vadd.f32 %v10333, %v10492
      %v10615 = vadd.f32 %v10334, %v10495
      %v10616 = vadd.f32 %v10335, %v10497
      %v10617 = vadd.f32 %v10336, %v10500
      %v10618 = vadd.f32 %v10337, %v10502
      %v10619 = vadd.f32 %v10338, %v10505
      %v10620 = vadd.f32 %v10339, %v10507
      %v10621 = vadd.f32 %v10340, %v10510
      %v10622 = vadd.f32 %v10341, %v10512
      %v10623 = vadd.f32 %v10342, %v10515
      %v10624 = vadd.f32 %v10343, %v10517
      %v10625 = vadd.f32 %v10344, %v10520
      %v10626 = vadd.f32 %v10345, %v10522
      %v10627 = vadd.f32 %v10346, %v10525
      %v10628 = vadd.f32 %v10347, %v10527
      %v10629 = vadd.f32 %v10348, %v10530
      %v10630 = vadd.f32 %v10349, %v10532
      %v10631 = vadd.f32 %v10350, %v10535
      %v10632 = vadd.f32 %v10351, %v10537
      %v10633 = vadd.f32 %v10352, %v10540
      %v10634 = vadd.f32 %v10353, %v10542
      %v10635 = vadd.f32 %v10354, %v10545
      %v10636 = vadd.f32 %v10355, %v10547
      %v10637 = vadd.f32 %v10356, %v10550
      %v10638 = vadd.f32 %v10357, %v10552
      %v10639 = vadd.f32 %v10358, %v10555
      %v10640 = vadd.f32 %v10359, %v10557
      %v10641 = vadd.f32 %v10360, %v10560
      %v10642 = vadd.f32 %v10361, %v10562
      %v10643 = vadd.f32 %v10362, %v10565
      %v10644 = vadd.f32 %v10363, %v10567
      %v10645 = vadd.f32 %v10364, %v10570
      %v10646 = vadd.f32 %v10365, %v10572
      %v10647 = vadd.f32 %v10366, %v10575
      %v10648 = vadd.f32 %v10367, %v10577
      %v10649 = vadd.f32 %v10368, %v10580
      %v10650 = vadd.f32 %v10369, %v10582
      %v10651 = vadd.f32 %v10370, %v10585
      %v10652 = vadd.f32 %v10371, %v10587
      %v10653 = vld [vmem:[%s362] sm:$0xff]
      %v10654 = vld [vmem:[%s362 + $0x8] sm:$0xff]
      %v10655 = vld [vmem:[%s362 + $0x10] sm:$0xff]
      %v10656 = vld [vmem:[%s362 + $0x18] sm:$0xff]
      %v10657 = vld [vmem:[%s362 + $0x20] sm:$0xff]
      %v10658 = vld [vmem:[%s362 + $0x28] sm:$0xff]
      %v10659 = vld [vmem:[%s362 + $0x30] sm:$0xff]
      %v10660 = vld [vmem:[%s362 + $0x38] sm:$0xff]
      %v10661 = vld [vmem:[%s362 + $0x40] sm:$0xff]
      %v10662 = vld [vmem:[%s362 + $0x48] sm:$0xff]
      %v10663 = vld [vmem:[%s362 + $0x50] sm:$0xff]
      %v10664 = vld [vmem:[%s362 + $0x58] sm:$0xff]
      %v10665 = vld [vmem:[%s362 + $0x60] sm:$0xff]
      %v10666 = vld [vmem:[%s362 + $0x68] sm:$0xff]
      %v10667 = vld [vmem:[%s362 + $0x70] sm:$0xff]
      %v10668 = vld [vmem:[%s362 + $0x78] sm:$0xff]
      %v10669 = vld [vmem:[%s362 + $0x80] sm:$0xff]
      %v10670 = vld [vmem:[%s362 + $0x88] sm:$0xff]
      %v10671 = vld [vmem:[%s362 + $0x90] sm:$0xff]
      %v10672 = vld [vmem:[%s362 + $0x98] sm:$0xff]
      %v10673 = vld [vmem:[%s362 + $0xa0] sm:$0xff]
      %v10674 = vld [vmem:[%s362 + $0xa8] sm:$0xff]
      %v10675 = vld [vmem:[%s362 + $0xb0] sm:$0xff]
      %v10676 = vld [vmem:[%s362 + $0xb8] sm:$0xff]
      %v10677 = vld [vmem:[%s362 + $0xc0] sm:$0xff]
      %v10678 = vld [vmem:[%s362 + $0xc8] sm:$0xff]
      %v10679 = vld [vmem:[%s362 + $0xd0] sm:$0xff]
      %v10680 = vld [vmem:[%s362 + $0xd8] sm:$0xff]
      %v10681 = vld [vmem:[%s362 + $0xe0] sm:$0xff]
      %v10682 = vld [vmem:[%s362 + $0xe8] sm:$0xff]
      %v10683 = vld [vmem:[%s362 + $0xf0] sm:$0xff]
      %v10684 = vld [vmem:[%s362 + $0xf8] sm:$0xff]
      %v10685 = vld [vmem:[%s362 + $0x100] sm:$0xff]
      %v10686 = vld [vmem:[%s362 + $0x108] sm:$0xff]
      %v10687 = vld [vmem:[%s362 + $0x110] sm:$0xff]
      %v10688 = vld [vmem:[%s362 + $0x118] sm:$0xff]
      %v10689 = vld [vmem:[%s362 + $0x120] sm:$0xff]
      %v10690 = vld [vmem:[%s362 + $0x128] sm:$0xff]
      %v10691 = vld [vmem:[%s362 + $0x130] sm:$0xff]
      %v10692 = vld [vmem:[%s362 + $0x138] sm:$0xff]
      %v10693 = vld [vmem:[%s362 + $0x140] sm:$0xff]
      %v10694 = vld [vmem:[%s362 + $0x148] sm:$0xff]
      %v10695 = vld [vmem:[%s362 + $0x150] sm:$0xff]
      %v10696 = vld [vmem:[%s362 + $0x158] sm:$0xff]
      %v10697 = vld [vmem:[%s362 + $0x160] sm:$0xff]
      %v10698 = vld [vmem:[%s362 + $0x168] sm:$0xff]
      %v10699 = vld [vmem:[%s362 + $0x170] sm:$0xff]
      %v10700 = vld [vmem:[%s362 + $0x178] sm:$0xff]
      %v10701 = vld [vmem:[%s362 + $0x180] sm:$0xff]
      %v10702 = vld [vmem:[%s362 + $0x188] sm:$0xff]
      %v10703 = vld [vmem:[%s362 + $0x190] sm:$0xff]
      %v10704 = vld [vmem:[%s362 + $0x198] sm:$0xff]
      %v10705 = vld [vmem:[%s362 + $0x1a0] sm:$0xff]
      %v10706 = vld [vmem:[%s362 + $0x1a8] sm:$0xff]
      %v10707 = vld [vmem:[%s362 + $0x1b0] sm:$0xff]
      %v10708 = vld [vmem:[%s362 + $0x1b8] sm:$0xff]
      %v10709 = vld [vmem:[%s362 + $0x1c0] sm:$0xff]
      %v10710 = vld [vmem:[%s362 + $0x1c8] sm:$0xff]
      %v10711 = vld [vmem:[%s362 + $0x1d0] sm:$0xff]
      %v10712 = vld [vmem:[%s362 + $0x1d8] sm:$0xff]
      %v10713 = vld [vmem:[%s362 + $0x1e0] sm:$0xff]
      %v10714 = vld [vmem:[%s362 + $0x1e8] sm:$0xff]
      %v10715 = vld [vmem:[%s362 + $0x1f0] sm:$0xff]
      %v10716 = vld [vmem:[%s362 + $0x1f8] sm:$0xff]
      %10718 = vset.pattern.permute.xlu0 0
      %10719 = vperm.xlu0 %10718, %v10653
      %v10720 = vpop.permute.xlu0 %10719
      %10723 = vset.pattern.permute.xlu0 0
      %10724 = vperm.xlu0 %10723, %v10654
      %v10725 = vpop.permute.xlu0 %10724
      %10728 = vset.pattern.permute.xlu0 0
      %10729 = vperm.xlu0 %10728, %v10655
      %v10730 = vpop.permute.xlu0 %10729
      %10733 = vset.pattern.permute.xlu0 0
      %10734 = vperm.xlu0 %10733, %v10656
      %v10735 = vpop.permute.xlu0 %10734
      %10738 = vset.pattern.permute.xlu0 0
      %10739 = vperm.xlu0 %10738, %v10657
      %v10740 = vpop.permute.xlu0 %10739
      %10743 = vset.pattern.permute.xlu0 0
      %10744 = vperm.xlu0 %10743, %v10658
      %v10745 = vpop.permute.xlu0 %10744
      %10748 = vset.pattern.permute.xlu0 0
      %10749 = vperm.xlu0 %10748, %v10659
      %v10750 = vpop.permute.xlu0 %10749
      %10753 = vset.pattern.permute.xlu0 0
      %10754 = vperm.xlu0 %10753, %v10660
      %v10755 = vpop.permute.xlu0 %10754
      %10758 = vset.pattern.permute.xlu0 0
      %10759 = vperm.xlu0 %10758, %v10661
      %v10760 = vpop.permute.xlu0 %10759
      %10763 = vset.pattern.permute.xlu0 0
      %10764 = vperm.xlu0 %10763, %v10662
      %v10765 = vpop.permute.xlu0 %10764
      %10768 = vset.pattern.permute.xlu0 0
      %10769 = vperm.xlu0 %10768, %v10663
      %v10770 = vpop.permute.xlu0 %10769
      %10773 = vset.pattern.permute.xlu0 0
      %10774 = vperm.xlu0 %10773, %v10664
      %v10775 = vpop.permute.xlu0 %10774
      %10778 = vset.pattern.permute.xlu0 0
      %10779 = vperm.xlu0 %10778, %v10665
      %v10780 = vpop.permute.xlu0 %10779
      %10783 = vset.pattern.permute.xlu0 0
      %10784 = vperm.xlu0 %10783, %v10666
      %v10785 = vpop.permute.xlu0 %10784
      %10788 = vset.pattern.permute.xlu0 0
      %10789 = vperm.xlu0 %10788, %v10667
      %v10790 = vpop.permute.xlu0 %10789
      %10793 = vset.pattern.permute.xlu0 0
      %10794 = vperm.xlu0 %10793, %v10668
      %v10795 = vpop.permute.xlu0 %10794
      %10798 = vset.pattern.permute.xlu0 0
      %10799 = vperm.xlu0 %10798, %v10669
      %v10800 = vpop.permute.xlu0 %10799
      %10803 = vset.pattern.permute.xlu0 0
      %10804 = vperm.xlu0 %10803, %v10670
      %v10805 = vpop.permute.xlu0 %10804
      %10808 = vset.pattern.permute.xlu0 0
      %10809 = vperm.xlu0 %10808, %v10671
      %v10810 = vpop.permute.xlu0 %10809
      %10813 = vset.pattern.permute.xlu0 0
      %10814 = vperm.xlu0 %10813, %v10672
      %v10815 = vpop.permute.xlu0 %10814
      %10818 = vset.pattern.permute.xlu0 0
      %10819 = vperm.xlu0 %10818, %v10673
      %v10820 = vpop.permute.xlu0 %10819
      %10823 = vset.pattern.permute.xlu0 0
      %10824 = vperm.xlu0 %10823, %v10674
      %v10825 = vpop.permute.xlu0 %10824
      %10828 = vset.pattern.permute.xlu0 0
      %10829 = vperm.xlu0 %10828, %v10675
      %v10830 = vpop.permute.xlu0 %10829
      %10833 = vset.pattern.permute.xlu0 0
      %10834 = vperm.xlu0 %10833, %v10676
      %v10835 = vpop.permute.xlu0 %10834
      %10838 = vset.pattern.permute.xlu0 0
      %10839 = vperm.xlu0 %10838, %v10677
      %v10840 = vpop.permute.xlu0 %10839
      %10843 = vset.pattern.permute.xlu0 0
      %10844 = vperm.xlu0 %10843, %v10678
      %v10845 = vpop.permute.xlu0 %10844
      %10848 = vset.pattern.permute.xlu0 0
      %10849 = vperm.xlu0 %10848, %v10679
      %v10850 = vpop.permute.xlu0 %10849
      %10853 = vset.pattern.permute.xlu0 0
      %10854 = vperm.xlu0 %10853, %v10680
      %v10855 = vpop.permute.xlu0 %10854
      %10858 = vset.pattern.permute.xlu0 0
      %10859 = vperm.xlu0 %10858, %v10681
      %v10860 = vpop.permute.xlu0 %10859
      %10863 = vset.pattern.permute.xlu0 0
      %10864 = vperm.xlu0 %10863, %v10682
      %v10865 = vpop.permute.xlu0 %10864
      %10868 = vset.pattern.permute.xlu0 0
      %10869 = vperm.xlu0 %10868, %v10683
      %v10870 = vpop.permute.xlu0 %10869
      %10873 = vset.pattern.permute.xlu0 0
      %10874 = vperm.xlu0 %10873, %v10684
      %v10875 = vpop.permute.xlu0 %10874
      %10878 = vset.pattern.permute.xlu0 0
      %10879 = vperm.xlu0 %10878, %v10685
      %v10880 = vpop.permute.xlu0 %10879
      %10883 = vset.pattern.permute.xlu0 0
      %10884 = vperm.xlu0 %10883, %v10686
      %v10885 = vpop.permute.xlu0 %10884
      %10888 = vset.pattern.permute.xlu0 0
      %10889 = vperm.xlu0 %10888, %v10687
      %v10890 = vpop.permute.xlu0 %10889
      %10893 = vset.pattern.permute.xlu0 0
      %10894 = vperm.xlu0 %10893, %v10688
      %v10895 = vpop.permute.xlu0 %10894
      %10898 = vset.pattern.permute.xlu0 0
      %10899 = vperm.xlu0 %10898, %v10689
      %v10900 = vpop.permute.xlu0 %10899
      %10903 = vset.pattern.permute.xlu0 0
      %10904 = vperm.xlu0 %10903, %v10690
      %v10905 = vpop.permute.xlu0 %10904
      %10908 = vset.pattern.permute.xlu0 0
      %10909 = vperm.xlu0 %10908, %v10691
      %v10910 = vpop.permute.xlu0 %10909
      %10913 = vset.pattern.permute.xlu0 0
      %10914 = vperm.xlu0 %10913, %v10692
      %v10915 = vpop.permute.xlu0 %10914
      %10918 = vset.pattern.permute.xlu0 0
      %10919 = vperm.xlu0 %10918, %v10693
      %v10920 = vpop.permute.xlu0 %10919
      %10923 = vset.pattern.permute.xlu0 0
      %10924 = vperm.xlu0 %10923, %v10694
      %v10925 = vpop.permute.xlu0 %10924
      %10928 = vset.pattern.permute.xlu0 0
      %10929 = vperm.xlu0 %10928, %v10695
      %v10930 = vpop.permute.xlu0 %10929
      %10933 = vset.pattern.permute.xlu0 0
      %10934 = vperm.xlu0 %10933, %v10696
      %v10935 = vpop.permute.xlu0 %10934
      %10938 = vset.pattern.permute.xlu0 0
      %10939 = vperm.xlu0 %10938, %v10697
      %v10940 = vpop.permute.xlu0 %10939
      %10943 = vset.pattern.permute.xlu0 0
      %10944 = vperm.xlu0 %10943, %v10698
      %v10945 = vpop.permute.xlu0 %10944
      %10948 = vset.pattern.permute.xlu0 0
      %10949 = vperm.xlu0 %10948, %v10699
      %v10950 = vpop.permute.xlu0 %10949
      %10953 = vset.pattern.permute.xlu0 0
      %10954 = vperm.xlu0 %10953, %v10700
      %v10955 = vpop.permute.xlu0 %10954
      %10958 = vset.pattern.permute.xlu0 0
      %10959 = vperm.xlu0 %10958, %v10701
      %v10960 = vpop.permute.xlu0 %10959
      %10963 = vset.pattern.permute.xlu0 0
      %10964 = vperm.xlu0 %10963, %v10702
      %v10965 = vpop.permute.xlu0 %10964
      %10968 = vset.pattern.permute.xlu0 0
      %10969 = vperm.xlu0 %10968, %v10703
      %v10970 = vpop.permute.xlu0 %10969
      %10973 = vset.pattern.permute.xlu0 0
      %10974 = vperm.xlu0 %10973, %v10704
      %v10975 = vpop.permute.xlu0 %10974
      %10978 = vset.pattern.permute.xlu0 0
      %10979 = vperm.xlu0 %10978, %v10705
      %v10980 = vpop.permute.xlu0 %10979
      %10983 = vset.pattern.permute.xlu0 0
      %10984 = vperm.xlu0 %10983, %v10706
      %v10985 = vpop.permute.xlu0 %10984
      %10988 = vset.pattern.permute.xlu0 0
      %10989 = vperm.xlu0 %10988, %v10707
      %v10990 = vpop.permute.xlu0 %10989
      %10993 = vset.pattern.permute.xlu0 0
      %10994 = vperm.xlu0 %10993, %v10708
      %v10995 = vpop.permute.xlu0 %10994
      %10998 = vset.pattern.permute.xlu0 0
      %10999 = vperm.xlu0 %10998, %v10709
      %v11000 = vpop.permute.xlu0 %10999
      %11003 = vset.pattern.permute.xlu0 0
      %11004 = vperm.xlu0 %11003, %v10710
      %v11005 = vpop.permute.xlu0 %11004
      %11008 = vset.pattern.permute.xlu0 0
      %11009 = vperm.xlu0 %11008, %v10711
      %v11010 = vpop.permute.xlu0 %11009
      %11013 = vset.pattern.permute.xlu0 0
      %11014 = vperm.xlu0 %11013, %v10712
      %v11015 = vpop.permute.xlu0 %11014
      %11018 = vset.pattern.permute.xlu0 0
      %11019 = vperm.xlu0 %11018, %v10713
      %v11020 = vpop.permute.xlu0 %11019
      %11023 = vset.pattern.permute.xlu0 0
      %11024 = vperm.xlu0 %11023, %v10714
      %v11025 = vpop.permute.xlu0 %11024
      %11028 = vset.pattern.permute.xlu0 0
      %11029 = vperm.xlu0 %11028, %v10715
      %v11030 = vpop.permute.xlu0 %11029
      %11033 = vset.pattern.permute.xlu0 0
      %11034 = vperm.xlu0 %11033, %v10716
      %v11035 = vpop.permute.xlu0 %11034
      %v11037 = vmul.f32 %v10589, %v10720
      %v11038 = vmul.f32 %v10590, %v10725
      %v11039 = vmul.f32 %v10591, %v10730
      %v11040 = vmul.f32 %v10592, %v10735
      %v11041 = vmul.f32 %v10593, %v10740
      %v11042 = vmul.f32 %v10594, %v10745
      %v11043 = vmul.f32 %v10595, %v10750
      %v11044 = vmul.f32 %v10596, %v10755
      %v11045 = vmul.f32 %v10597, %v10760
      %v11046 = vmul.f32 %v10598, %v10765
      %v11047 = vmul.f32 %v10599, %v10770
      %v11048 = vmul.f32 %v10600, %v10775
      %v11049 = vmul.f32 %v10601, %v10780
      %v11050 = vmul.f32 %v10602, %v10785
      %v11051 = vmul.f32 %v10603, %v10790
      %v11052 = vmul.f32 %v10604, %v10795
      %v11053 = vmul.f32 %v10605, %v10800
      %v11054 = vmul.f32 %v10606, %v10805
      %v11055 = vmul.f32 %v10607, %v10810
      %v11056 = vmul.f32 %v10608, %v10815
      %v11057 = vmul.f32 %v10609, %v10820
      %v11058 = vmul.f32 %v10610, %v10825
      %v11059 = vmul.f32 %v10611, %v10830
      %v11060 = vmul.f32 %v10612, %v10835
      %v11061 = vmul.f32 %v10613, %v10840
      %v11062 = vmul.f32 %v10614, %v10845
      %v11063 = vmul.f32 %v10615, %v10850
      %v11064 = vmul.f32 %v10616, %v10855
      %v11065 = vmul.f32 %v10617, %v10860
      %v11066 = vmul.f32 %v10618, %v10865
      %v11067 = vmul.f32 %v10619, %v10870
      %v11068 = vmul.f32 %v10620, %v10875
      %v11069 = vmul.f32 %v10621, %v10880
      %v11070 = vmul.f32 %v10622, %v10885
      %v11071 = vmul.f32 %v10623, %v10890
      %v11072 = vmul.f32 %v10624, %v10895
      %v11073 = vmul.f32 %v10625, %v10900
      %v11074 = vmul.f32 %v10626, %v10905
      %v11075 = vmul.f32 %v10627, %v10910
      %v11076 = vmul.f32 %v10628, %v10915
      %v11077 = vmul.f32 %v10629, %v10920
      %v11078 = vmul.f32 %v10630, %v10925
      %v11079 = vmul.f32 %v10631, %v10930
      %v11080 = vmul.f32 %v10632, %v10935
      %v11081 = vmul.f32 %v10633, %v10940
      %v11082 = vmul.f32 %v10634, %v10945
      %v11083 = vmul.f32 %v10635, %v10950
      %v11084 = vmul.f32 %v10636, %v10955
      %v11085 = vmul.f32 %v10637, %v10960
      %v11086 = vmul.f32 %v10638, %v10965
      %v11087 = vmul.f32 %v10639, %v10970
      %v11088 = vmul.f32 %v10640, %v10975
      %v11089 = vmul.f32 %v10641, %v10980
      %v11090 = vmul.f32 %v10642, %v10985
      %v11091 = vmul.f32 %v10643, %v10990
      %v11092 = vmul.f32 %v10644, %v10995
      %v11093 = vmul.f32 %v10645, %v11000
      %v11094 = vmul.f32 %v10646, %v11005
      %v11095 = vmul.f32 %v10647, %v11010
      %v11096 = vmul.f32 %v10648, %v11015
      %v11097 = vmul.f32 %v10649, %v11020
      %v11098 = vmul.f32 %v10650, %v11025
      %v11099 = vmul.f32 %v10651, %v11030
      %v11100 = vmul.f32 %v10652, %v11035
      %11101 = vst.msk [vmem:[%s368] sm:$0xff] %vm823, %v11037
      %11102 = vst.msk [vmem:[%s368 + $0x8] sm:$0xff] %vm823, %v11038
      %11103 = vst.msk [vmem:[%s368 + $0x10] sm:$0xff] %vm823, %v11039
      %11104 = vst.msk [vmem:[%s368 + $0x18] sm:$0xff] %vm823, %v11040
      %11105 = vst.msk [vmem:[%s368 + $0x20] sm:$0xff] %vm823, %v11041
      %11106 = vst.msk [vmem:[%s368 + $0x28] sm:$0xff] %vm823, %v11042
      %11107 = vst.msk [vmem:[%s368 + $0x30] sm:$0xff] %vm823, %v11043
      %11108 = vst.msk [vmem:[%s368 + $0x38] sm:$0xff] %vm823, %v11044
      %11109 = vst.msk [vmem:[%s368 + $0x40] sm:$0xff] %vm823, %v11045
      %11110 = vst.msk [vmem:[%s368 + $0x48] sm:$0xff] %vm823, %v11046
      %11111 = vst.msk [vmem:[%s368 + $0x50] sm:$0xff] %vm823, %v11047
      %11112 = vst.msk [vmem:[%s368 + $0x58] sm:$0xff] %vm823, %v11048
      %11113 = vst.msk [vmem:[%s368 + $0x60] sm:$0xff] %vm823, %v11049
      %11114 = vst.msk [vmem:[%s368 + $0x68] sm:$0xff] %vm823, %v11050
      %11115 = vst.msk [vmem:[%s368 + $0x70] sm:$0xff] %vm823, %v11051
      %11116 = vst.msk [vmem:[%s368 + $0x78] sm:$0xff] %vm823, %v11052
      %11117 = vst.msk [vmem:[%s368 + $0x80] sm:$0xff] %vm823, %v11053
      %11118 = vst.msk [vmem:[%s368 + $0x88] sm:$0xff] %vm823, %v11054
      %11119 = vst.msk [vmem:[%s368 + $0x90] sm:$0xff] %vm823, %v11055
      %11120 = vst.msk [vmem:[%s368 + $0x98] sm:$0xff] %vm823, %v11056
      %11121 = vst.msk [vmem:[%s368 + $0xa0] sm:$0xff] %vm823, %v11057
      %11122 = vst.msk [vmem:[%s368 + $0xa8] sm:$0xff] %vm823, %v11058
      %11123 = vst.msk [vmem:[%s368 + $0xb0] sm:$0xff] %vm823, %v11059
      %11124 = vst.msk [vmem:[%s368 + $0xb8] sm:$0xff] %vm823, %v11060
      %11125 = vst.msk [vmem:[%s368 + $0xc0] sm:$0xff] %vm823, %v11061
      %11126 = vst.msk [vmem:[%s368 + $0xc8] sm:$0xff] %vm823, %v11062
      %11127 = vst.msk [vmem:[%s368 + $0xd0] sm:$0xff] %vm823, %v11063
      %11128 = vst.msk [vmem:[%s368 + $0xd8] sm:$0xff] %vm823, %v11064
      %11129 = vst.msk [vmem:[%s368 + $0xe0] sm:$0xff] %vm823, %v11065
      %11130 = vst.msk [vmem:[%s368 + $0xe8] sm:$0xff] %vm823, %v11066
      %11131 = vst.msk [vmem:[%s368 + $0xf0] sm:$0xff] %vm823, %v11067
      %11132 = vst.msk [vmem:[%s368 + $0xf8] sm:$0xff] %vm823, %v11068
      %11133 = vst.msk [vmem:[%s368 + $0x100] sm:$0xff] %vm823, %v11069
      %11134 = vst.msk [vmem:[%s368 + $0x108] sm:$0xff] %vm823, %v11070
      %11135 = vst.msk [vmem:[%s368 + $0x110] sm:$0xff] %vm823, %v11071
      %11136 = vst.msk [vmem:[%s368 + $0x118] sm:$0xff] %vm823, %v11072
      %11137 = vst.msk [vmem:[%s368 + $0x120] sm:$0xff] %vm823, %v11073
      %11138 = vst.msk [vmem:[%s368 + $0x128] sm:$0xff] %vm823, %v11074
      %11139 = vst.msk [vmem:[%s368 + $0x130] sm:$0xff] %vm823, %v11075
      %11140 = vst.msk [vmem:[%s368 + $0x138] sm:$0xff] %vm823, %v11076
      %11141 = vst.msk [vmem:[%s368 + $0x140] sm:$0xff] %vm823, %v11077
      %11142 = vst.msk [vmem:[%s368 + $0x148] sm:$0xff] %vm823, %v11078
      %11143 = vst.msk [vmem:[%s368 + $0x150] sm:$0xff] %vm823, %v11079
      %11144 = vst.msk [vmem:[%s368 + $0x158] sm:$0xff] %vm823, %v11080
      %11145 = vst.msk [vmem:[%s368 + $0x160] sm:$0xff] %vm823, %v11081
      %11146 = vst.msk [vmem:[%s368 + $0x168] sm:$0xff] %vm823, %v11082
      %11147 = vst.msk [vmem:[%s368 + $0x170] sm:$0xff] %vm823, %v11083
      %11148 = vst.msk [vmem:[%s368 + $0x178] sm:$0xff] %vm823, %v11084
      %11149 = vst.msk [vmem:[%s368 + $0x180] sm:$0xff] %vm823, %v11085
      %11150 = vst.msk [vmem:[%s368 + $0x188] sm:$0xff] %vm823, %v11086
      %11151 = vst.msk [vmem:[%s368 + $0x190] sm:$0xff] %vm823, %v11087
      %11152 = vst.msk [vmem:[%s368 + $0x198] sm:$0xff] %vm823, %v11088
      %11153 = vst.msk [vmem:[%s368 + $0x1a0] sm:$0xff] %vm823, %v11089
      %11154 = vst.msk [vmem:[%s368 + $0x1a8] sm:$0xff] %vm823, %v11090
      %11155 = vst.msk [vmem:[%s368 + $0x1b0] sm:$0xff] %vm823, %v11091
      %11156 = vst.msk [vmem:[%s368 + $0x1b8] sm:$0xff] %vm823, %v11092
      %11157 = vst.msk [vmem:[%s368 + $0x1c0] sm:$0xff] %vm823, %v11093
      %11158 = vst.msk [vmem:[%s368 + $0x1c8] sm:$0xff] %vm823, %v11094
      %11159 = vst.msk [vmem:[%s368 + $0x1d0] sm:$0xff] %vm823, %v11095
      %11160 = vst.msk [vmem:[%s368 + $0x1d8] sm:$0xff] %vm823, %v11096
      %11161 = vst.msk [vmem:[%s368 + $0x1e0] sm:$0xff] %vm823, %v11097
      %11162 = vst.msk [vmem:[%s368 + $0x1e8] sm:$0xff] %vm823, %v11098
      %11163 = vst.msk [vmem:[%s368 + $0x1f0] sm:$0xff] %vm823, %v11099
      %11164 = vst.msk [vmem:[%s368 + $0x1f8] sm:$0xff] %vm823, %v11100
      %v11165 = vsel %vm823, %v11037, 0.0
      %v11166 = vsel %vm823, %v11038, 0.0
      %v11167 = vadd.f32 %v11165, %v11166
      %v11168 = vsel %vm823, %v11039, 0.0
      %v11169 = vadd.f32 %v11167, %v11168
      %v11170 = vsel %vm823, %v11040, 0.0
      %v11171 = vadd.f32 %v11169, %v11170
      %v11172 = vsel %vm823, %v11041, 0.0
      %v11173 = vadd.f32 %v11171, %v11172
      %v11174 = vsel %vm823, %v11042, 0.0
      %v11175 = vadd.f32 %v11173, %v11174
      %v11176 = vsel %vm823, %v11043, 0.0
      %v11177 = vadd.f32 %v11175, %v11176
      %v11178 = vsel %vm823, %v11044, 0.0
      %v11179 = vadd.f32 %v11177, %v11178
      %v11180 = vsel %vm823, %v11045, 0.0
      %v11181 = vadd.f32 %v11179, %v11180
      %v11182 = vsel %vm823, %v11046, 0.0
      %v11183 = vadd.f32 %v11181, %v11182
      %v11184 = vsel %vm823, %v11047, 0.0
      %v11185 = vadd.f32 %v11183, %v11184
      %v11186 = vsel %vm823, %v11048, 0.0
      %v11187 = vadd.f32 %v11185, %v11186
      %v11188 = vsel %vm823, %v11049, 0.0
      %v11189 = vadd.f32 %v11187, %v11188
      %v11190 = vsel %vm823, %v11050, 0.0
      %v11191 = vadd.f32 %v11189, %v11190
      %v11192 = vsel %vm823, %v11051, 0.0
      %v11193 = vadd.f32 %v11191, %v11192
      %v11194 = vsel %vm823, %v11052, 0.0
      %v11195 = vadd.f32 %v11193, %v11194
      %v11196 = vsel %vm823, %v11053, 0.0
      %v11197 = vadd.f32 %v11195, %v11196
      %v11198 = vsel %vm823, %v11054, 0.0
      %v11199 = vadd.f32 %v11197, %v11198
      %v11200 = vsel %vm823, %v11055, 0.0
      %v11201 = vadd.f32 %v11199, %v11200
      %v11202 = vsel %vm823, %v11056, 0.0
      %v11203 = vadd.f32 %v11201, %v11202
      %v11204 = vsel %vm823, %v11057, 0.0
      %v11205 = vadd.f32 %v11203, %v11204
      %v11206 = vsel %vm823, %v11058, 0.0
      %v11207 = vadd.f32 %v11205, %v11206
      %v11208 = vsel %vm823, %v11059, 0.0
      %v11209 = vadd.f32 %v11207, %v11208
      %v11210 = vsel %vm823, %v11060, 0.0
      %v11211 = vadd.f32 %v11209, %v11210
      %v11212 = vsel %vm823, %v11061, 0.0
      %v11213 = vadd.f32 %v11211, %v11212
      %v11214 = vsel %vm823, %v11062, 0.0
      %v11215 = vadd.f32 %v11213, %v11214
      %v11216 = vsel %vm823, %v11063, 0.0
      %v11217 = vadd.f32 %v11215, %v11216
      %v11218 = vsel %vm823, %v11064, 0.0
      %v11219 = vadd.f32 %v11217, %v11218
      %v11220 = vsel %vm823, %v11065, 0.0
      %v11221 = vadd.f32 %v11219, %v11220
      %v11222 = vsel %vm823, %v11066, 0.0
      %v11223 = vadd.f32 %v11221, %v11222
      %v11224 = vsel %vm823, %v11067, 0.0
      %v11225 = vadd.f32 %v11223, %v11224
      %v11226 = vsel %vm823, %v11068, 0.0
      %v11227 = vadd.f32 %v11225, %v11226
      %v11228 = vsel %vm823, %v11069, 0.0
      %v11229 = vadd.f32 %v11227, %v11228
      %v11230 = vsel %vm823, %v11070, 0.0
      %v11231 = vadd.f32 %v11229, %v11230
      %v11232 = vsel %vm823, %v11071, 0.0
      %v11233 = vadd.f32 %v11231, %v11232
      %v11234 = vsel %vm823, %v11072, 0.0
      %v11235 = vadd.f32 %v11233, %v11234
      %v11236 = vsel %vm823, %v11073, 0.0
      %v11237 = vadd.f32 %v11235, %v11236
      %v11238 = vsel %vm823, %v11074, 0.0
      %v11239 = vadd.f32 %v11237, %v11238
      %v11240 = vsel %vm823, %v11075, 0.0
      %v11241 = vadd.f32 %v11239, %v11240
      %v11242 = vsel %vm823, %v11076, 0.0
      %v11243 = vadd.f32 %v11241, %v11242
      %v11244 = vsel %vm823, %v11077, 0.0
      %v11245 = vadd.f32 %v11243, %v11244
      %v11246 = vsel %vm823, %v11078, 0.0
      %v11247 = vadd.f32 %v11245, %v11246
      %v11248 = vsel %vm823, %v11079, 0.0
      %v11249 = vadd.f32 %v11247, %v11248
      %v11250 = vsel %vm823, %v11080, 0.0
      %v11251 = vadd.f32 %v11249, %v11250
      %v11252 = vsel %vm823, %v11081, 0.0
      %v11253 = vadd.f32 %v11251, %v11252
      %v11254 = vsel %vm823, %v11082, 0.0
      %v11255 = vadd.f32 %v11253, %v11254
      %v11256 = vsel %vm823, %v11083, 0.0
      %v11257 = vadd.f32 %v11255, %v11256
      %v11258 = vsel %vm823, %v11084, 0.0
      %v11259 = vadd.f32 %v11257, %v11258
      %v11260 = vsel %vm823, %v11085, 0.0
      %v11261 = vadd.f32 %v11259, %v11260
      %v11262 = vsel %vm823, %v11086, 0.0
      %v11263 = vadd.f32 %v11261, %v11262
      %v11264 = vsel %vm823, %v11087, 0.0
      %v11265 = vadd.f32 %v11263, %v11264
      %v11266 = vsel %vm823, %v11088, 0.0
      %v11267 = vadd.f32 %v11265, %v11266
      %v11268 = vsel %vm823, %v11089, 0.0
      %v11269 = vadd.f32 %v11267, %v11268
      %v11270 = vsel %vm823, %v11090, 0.0
      %v11271 = vadd.f32 %v11269, %v11270
      %v11272 = vsel %vm823, %v11091, 0.0
      %v11273 = vadd.f32 %v11271, %v11272
      %v11274 = vsel %vm823, %v11092, 0.0
      %v11275 = vadd.f32 %v11273, %v11274
      %v11276 = vsel %vm823, %v11093, 0.0
      %v11277 = vadd.f32 %v11275, %v11276
      %v11278 = vsel %vm823, %v11094, 0.0
      %v11279 = vadd.f32 %v11277, %v11278
      %v11280 = vsel %vm823, %v11095, 0.0
      %v11281 = vadd.f32 %v11279, %v11280
      %v11282 = vsel %vm823, %v11096, 0.0
      %v11283 = vadd.f32 %v11281, %v11282
      %v11284 = vsel %vm823, %v11097, 0.0
      %v11285 = vadd.f32 %v11283, %v11284
      %v11286 = vsel %vm823, %v11098, 0.0
      %v11287 = vadd.f32 %v11285, %v11286
      %v11288 = vsel %vm823, %v11099, 0.0
      %v11289 = vadd.f32 %v11287, %v11288
      %v11290 = vsel %vm823, %v11100, 0.0
      %v11291 = vadd.f32 %v11289, %v11290
      %v11292 = vrot.slane %v11291, 4
      %v11293 = vadd.f32 %v11291, %v11292
      %v11294 = vrot.slane %v11293, 2
      %v11295 = vadd.f32 %v11293, %v11294
      %v11296 = vrot.slane %v11295, 1
      %v11297 = vadd.f32 %v11295, %v11296
      %v11298 = vmul.f32 %v11037, %v11037
      %v11299 = vmul.f32 %v11038, %v11038
      %v11300 = vmul.f32 %v11039, %v11039
      %v11301 = vmul.f32 %v11040, %v11040
      %v11302 = vmul.f32 %v11041, %v11041
      %v11303 = vmul.f32 %v11042, %v11042
      %v11304 = vmul.f32 %v11043, %v11043
      %v11305 = vmul.f32 %v11044, %v11044
      %v11306 = vmul.f32 %v11045, %v11045
      %v11307 = vmul.f32 %v11046, %v11046
      %v11308 = vmul.f32 %v11047, %v11047
      %v11309 = vmul.f32 %v11048, %v11048
      %v11310 = vmul.f32 %v11049, %v11049
      %v11311 = vmul.f32 %v11050, %v11050
      %v11312 = vmul.f32 %v11051, %v11051
      %v11313 = vmul.f32 %v11052, %v11052
      %v11314 = vmul.f32 %v11053, %v11053
      %v11315 = vmul.f32 %v11054, %v11054
      %v11316 = vmul.f32 %v11055, %v11055
      %v11317 = vmul.f32 %v11056, %v11056
      %v11318 = vmul.f32 %v11057, %v11057
      %v11319 = vmul.f32 %v11058, %v11058
      %v11320 = vmul.f32 %v11059, %v11059
      %v11321 = vmul.f32 %v11060, %v11060
      %v11322 = vmul.f32 %v11061, %v11061
      %v11323 = vmul.f32 %v11062, %v11062
      %v11324 = vmul.f32 %v11063, %v11063
      %v11325 = vmul.f32 %v11064, %v11064
      %v11326 = vmul.f32 %v11065, %v11065
      %v11327 = vmul.f32 %v11066, %v11066
      %v11328 = vmul.f32 %v11067, %v11067
      %v11329 = vmul.f32 %v11068, %v11068
      %v11330 = vmul.f32 %v11069, %v11069
      %v11331 = vmul.f32 %v11070, %v11070
      %v11332 = vmul.f32 %v11071, %v11071
      %v11333 = vmul.f32 %v11072, %v11072
      %v11334 = vmul.f32 %v11073, %v11073
      %v11335 = vmul.f32 %v11074, %v11074
      %v11336 = vmul.f32 %v11075, %v11075
      %v11337 = vmul.f32 %v11076, %v11076
      %v11338 = vmul.f32 %v11077, %v11077
      %v11339 = vmul.f32 %v11078, %v11078
      %v11340 = vmul.f32 %v11079, %v11079
      %v11341 = vmul.f32 %v11080, %v11080
      %v11342 = vmul.f32 %v11081, %v11081
      %v11343 = vmul.f32 %v11082, %v11082
      %v11344 = vmul.f32 %v11083, %v11083
      %v11345 = vmul.f32 %v11084, %v11084
      %v11346 = vmul.f32 %v11085, %v11085
      %v11347 = vmul.f32 %v11086, %v11086
      %v11348 = vmul.f32 %v11087, %v11087
      %v11349 = vmul.f32 %v11088, %v11088
      %v11350 = vmul.f32 %v11089, %v11089
      %v11351 = vmul.f32 %v11090, %v11090
      %v11352 = vmul.f32 %v11091, %v11091
      %v11353 = vmul.f32 %v11092, %v11092
      %v11354 = vmul.f32 %v11093, %v11093
      %v11355 = vmul.f32 %v11094, %v11094
      %v11356 = vmul.f32 %v11095, %v11095
      %v11357 = vmul.f32 %v11096, %v11096
      %v11358 = vmul.f32 %v11097, %v11097
      %v11359 = vmul.f32 %v11098, %v11098
      %v11360 = vmul.f32 %v11099, %v11099
      %v11361 = vmul.f32 %v11100, %v11100
      %v11362 = vsel %vm823, %v11298, 0.0
      %v11363 = vsel %vm823, %v11299, 0.0
      %v11364 = vadd.f32 %v11362, %v11363
      %v11365 = vsel %vm823, %v11300, 0.0
      %v11366 = vadd.f32 %v11364, %v11365
      %v11367 = vsel %vm823, %v11301, 0.0
      %v11368 = vadd.f32 %v11366, %v11367
      %v11369 = vsel %vm823, %v11302, 0.0
      %v11370 = vadd.f32 %v11368, %v11369
      %v11371 = vsel %vm823, %v11303, 0.0
      %v11372 = vadd.f32 %v11370, %v11371
      %v11373 = vsel %vm823, %v11304, 0.0
      %v11374 = vadd.f32 %v11372, %v11373
      %v11375 = vsel %vm823, %v11305, 0.0
      %v11376 = vadd.f32 %v11374, %v11375
      %v11377 = vsel %vm823, %v11306, 0.0
      %v11378 = vadd.f32 %v11376, %v11377
      %v11379 = vsel %vm823, %v11307, 0.0
      %v11380 = vadd.f32 %v11378, %v11379
      %v11381 = vsel %vm823, %v11308, 0.0
      %v11382 = vadd.f32 %v11380, %v11381
      %v11383 = vsel %vm823, %v11309, 0.0
      %v11384 = vadd.f32 %v11382, %v11383
      %v11385 = vsel %vm823, %v11310, 0.0
      %v11386 = vadd.f32 %v11384, %v11385
      %v11387 = vsel %vm823, %v11311, 0.0
      %v11388 = vadd.f32 %v11386, %v11387
      %v11389 = vsel %vm823, %v11312, 0.0
      %v11390 = vadd.f32 %v11388, %v11389
      %v11391 = vsel %vm823, %v11313, 0.0
      %v11392 = vadd.f32 %v11390, %v11391
      %v11393 = vsel %vm823, %v11314, 0.0
      %v11394 = vadd.f32 %v11392, %v11393
      %v11395 = vsel %vm823, %v11315, 0.0
      %v11396 = vadd.f32 %v11394, %v11395
      %v11397 = vsel %vm823, %v11316, 0.0
      %v11398 = vadd.f32 %v11396, %v11397
      %v11399 = vsel %vm823, %v11317, 0.0
      %v11400 = vadd.f32 %v11398, %v11399
      %v11401 = vsel %vm823, %v11318, 0.0
      %v11402 = vadd.f32 %v11400, %v11401
      %v11403 = vsel %vm823, %v11319, 0.0
      %v11404 = vadd.f32 %v11402, %v11403
      %v11405 = vsel %vm823, %v11320, 0.0
      %v11406 = vadd.f32 %v11404, %v11405
      %v11407 = vsel %vm823, %v11321, 0.0
      %v11408 = vadd.f32 %v11406, %v11407
      %v11409 = vsel %vm823, %v11322, 0.0
      %v11410 = vadd.f32 %v11408, %v11409
      %v11411 = vsel %vm823, %v11323, 0.0
      %v11412 = vadd.f32 %v11410, %v11411
      %v11413 = vsel %vm823, %v11324, 0.0
      %v11414 = vadd.f32 %v11412, %v11413
      %v11415 = vsel %vm823, %v11325, 0.0
      %v11416 = vadd.f32 %v11414, %v11415
      %v11417 = vsel %vm823, %v11326, 0.0
      %v11418 = vadd.f32 %v11416, %v11417
      %v11419 = vsel %vm823, %v11327, 0.0
      %v11420 = vadd.f32 %v11418, %v11419
      %v11421 = vsel %vm823, %v11328, 0.0
      %v11422 = vadd.f32 %v11420, %v11421
      %v11423 = vsel %vm823, %v11329, 0.0
      %v11424 = vadd.f32 %v11422, %v11423
      %v11425 = vsel %vm823, %v11330, 0.0
      %v11426 = vadd.f32 %v11424, %v11425
      %v11427 = vsel %vm823, %v11331, 0.0
      %v11428 = vadd.f32 %v11426, %v11427
      %v11429 = vsel %vm823, %v11332, 0.0
      %v11430 = vadd.f32 %v11428, %v11429
      %v11431 = vsel %vm823, %v11333, 0.0
      %v11432 = vadd.f32 %v11430, %v11431
      %v11433 = vsel %vm823, %v11334, 0.0
      %v11434 = vadd.f32 %v11432, %v11433
      %v11435 = vsel %vm823, %v11335, 0.0
      %v11436 = vadd.f32 %v11434, %v11435
      %v11437 = vsel %vm823, %v11336, 0.0
      %v11438 = vadd.f32 %v11436, %v11437
      %v11439 = vsel %vm823, %v11337, 0.0
      %v11440 = vadd.f32 %v11438, %v11439
      %v11441 = vsel %vm823, %v11338, 0.0
      %v11442 = vadd.f32 %v11440, %v11441
      %v11443 = vsel %vm823, %v11339, 0.0
      %v11444 = vadd.f32 %v11442, %v11443
      %v11445 = vsel %vm823, %v11340, 0.0
      %v11446 = vadd.f32 %v11444, %v11445
      %v11447 = vsel %vm823, %v11341, 0.0
      %v11448 = vadd.f32 %v11446, %v11447
      %v11449 = vsel %vm823, %v11342, 0.0
      %v11450 = vadd.f32 %v11448, %v11449
      %v11451 = vsel %vm823, %v11343, 0.0
      %v11452 = vadd.f32 %v11450, %v11451
      %v11453 = vsel %vm823, %v11344, 0.0
      %v11454 = vadd.f32 %v11452, %v11453
      %v11455 = vsel %vm823, %v11345, 0.0
      %v11456 = vadd.f32 %v11454, %v11455
      %v11457 = vsel %vm823, %v11346, 0.0
      %v11458 = vadd.f32 %v11456, %v11457
      %v11459 = vsel %vm823, %v11347, 0.0
      %v11460 = vadd.f32 %v11458, %v11459
      %v11461 = vsel %vm823, %v11348, 0.0
      %v11462 = vadd.f32 %v11460, %v11461
      %v11463 = vsel %vm823, %v11349, 0.0
      %v11464 = vadd.f32 %v11462, %v11463
      %v11465 = vsel %vm823, %v11350, 0.0
      %v11466 = vadd.f32 %v11464, %v11465
      %v11467 = vsel %vm823, %v11351, 0.0
      %v11468 = vadd.f32 %v11466, %v11467
      %v11469 = vsel %vm823, %v11352, 0.0
      %v11470 = vadd.f32 %v11468, %v11469
      %v11471 = vsel %vm823, %v11353, 0.0
      %v11472 = vadd.f32 %v11470, %v11471
      %v11473 = vsel %vm823, %v11354, 0.0
      %v11474 = vadd.f32 %v11472, %v11473
      %v11475 = vsel %vm823, %v11355, 0.0
      %v11476 = vadd.f32 %v11474, %v11475
      %v11477 = vsel %vm823, %v11356, 0.0
      %v11478 = vadd.f32 %v11476, %v11477
      %v11479 = vsel %vm823, %v11357, 0.0
      %v11480 = vadd.f32 %v11478, %v11479
      %v11481 = vsel %vm823, %v11358, 0.0
      %v11482 = vadd.f32 %v11480, %v11481
      %v11483 = vsel %vm823, %v11359, 0.0
      %v11484 = vadd.f32 %v11482, %v11483
      %v11485 = vsel %vm823, %v11360, 0.0
      %v11486 = vadd.f32 %v11484, %v11485
      %v11487 = vsel %vm823, %v11361, 0.0
      %v11488 = vadd.f32 %v11486, %v11487
      %v11489 = vrot.slane %v11488, 4
      %v11490 = vadd.f32 %v11488, %v11489
      %v11491 = vrot.slane %v11490, 2
      %v11492 = vadd.f32 %v11490, %v11491
      %v11493 = vrot.slane %v11492, 1
      %v11494 = vadd.f32 %v11492, %v11493
      %vm11495 = vcmask 1040384
      %v11496 = vsel %vm11495, %v11297, %v11494
      %vm11497 = vcmask 123904
      %11498 = vst.msk [vmem:[%s373] sm:$0x3] %vm11497, %v11496
      %s11499 = smul.u32 64, %s18
      %p11500 = scmp.lt.s32.totalorder %s11499, 255
      %s11501 = scalar_select %p11500, %s11499, 255
      %s11502 = smul.addr %s11501, 8
      %s11503 = scalar_lea.vmem %s5, %s11502
      %p11504 = scmp.lt.s32.totalorder %s18, 3
      %s11505 = scalar_select %p11504, %s18, 3
      %s11506 = smul.addr %s11505, 2
      %s11507 = scalar_lea.vmem %s6, %s11506
      // Predicated region
      $region41: #{output_transition_edge_forward.4} parent=39 // pred_check
        %p11508 = pneg %p173
      $region42: #{output_transition_edge_forward.4} parent=39 // pred_check_branch
        %11510 = sbr.rel (%p11508) target = $region44
      $region43: #{output_transition_edge_forward.4} parent=39 // pred_region
        %s11511 = smul.u32 64, %s18
      $region44: #{output_transition_edge_forward.4} parent=39 // pred_fallthru
        _
      // Predicated region
      $region45: #{output_transition_edge_forward.4} parent=39 // pred_check
        %p11512 = pneg %p199
      $region46: #{output_transition_edge_forward.4} parent=39 // pred_check_branch
        %11514 = sbr.rel (%p11512) target = $region48
      $region47: #{output_transition_edge_forward.4} parent=39 // pred_region
        _
      $region48: #{output_transition_edge_forward.4} parent=39 // pred_fallthru
        _
    $region40: #{output_transition_edge_forward.4} parent=5 // pred_fallthru
      _
    %p11515 = scmp.le.s32.totalorder 2, %s13
    // Predicated region
    $region49: #{output_transition_edge_forward.4} parent=5 // pred_check
      %p11516 = pneg %p11515
    $region50: #{output_transition_edge_forward.4} parent=5 // pred_check_branch
      %11518 = sbr.rel (%p11516) target = $region52
    $region51: #{output_transition_edge_forward.4} parent=5 // pred_region
      %s11519 = ssub.s32 %s13, 2
      // Predicated region
      $region53: #{output_transition_edge_forward.4} parent=51 // pred_check
        %p11520 = pneg %p179
      $region54: #{output_transition_edge_forward.4} parent=51 // pred_check_branch
        %11522 = sbr.rel (%p11520) target = $region56
      $region55: #{output_transition_edge_forward.4} parent=51 // pred_region
        %s11523 = smul.u32 64, %s19
        %p11524 = scmp.lt.s32.totalorder %s11523, 255
        %s11525 = scalar_select %p11524, %s11523, 255
        %s11526 = smul.addr %s11525, 8
        %s11527 = scalar_lea.vmem %s5, %s11526
      $region56: #{output_transition_edge_forward.4} parent=51 // pred_fallthru
        _
      // Predicated region
      $region57: #{output_transition_edge_forward.4} parent=51 // pred_check
        %p11528 = pneg %p205
      $region58: #{output_transition_edge_forward.4} parent=51 // pred_check_branch
        %11530 = sbr.rel (%p11528) target = $region60
      $region59: #{output_transition_edge_forward.4} parent=51 // pred_region
        %p11531 = scmp.lt.s32.totalorder %s19, 3
        %s11532 = scalar_select %p11531, %s19, 3
        %s11533 = smul.addr %s11532, 2
        %s11534 = scalar_lea.vmem %s6, %s11533
      $region60: #{output_transition_edge_forward.4} parent=51 // pred_fallthru
        _
    $region52: #{output_transition_edge_forward.4} parent=5 // pred_fallthru
      _
  $region6: #{output_transition_edge_forward.4} parent=0 // loop_footer
    %s17 = sadd.s32 1, %s13
  $region7: #{output_transition_edge_forward.4} parent=0 // loop_footer_branch
    %12 = sbr.rel target = $region3
  $region8: #{output_transition_edge_forward.4} parent=0 // loop_exit
    _

</llo_original>
